<compile_context>
chip_gen: v6e
topology: v6e:2x2x1
jax: 0.10.0
libtpu: 0.0.40
codegen_flags: <defaults>
</compile_context>

<pallas_src>
import functools

import jax
import jax.numpy as jnp
from jax import lax
from jax.experimental import pallas as pl
from jax.experimental.pallas import tpu as pltpu

_BN_EPS = 1e-5
_LEAK = 0.2


# ----------------------------- Pallas kernel --------------------------------

def _conv_kernel(x_ref, w_ref, cb_ref, z_ref, *maybe_st,
                 k, boh, ow, cin, cout, apply_act, with_stats):
    """Stride-1 conv (tap-sum of MXU matmuls) + bias, optional input LeakyReLU,
    plus optional per-channel sum / sumsq accumulation for BatchNorm.

    x_ref : (1, HP, WP, Cin)    bf16  padded image, resident across row blocks
    w_ref : (k*k, Cin, Cout)    bf16  per-tap weight matrices
    cb_ref: (1, Cout)           f32   conv bias (zeros when torch conv has none)
    z_ref : (1, boh*ow, Cout)   bf16/f32  conv output rows for this row block
    st_ref: (1, 2, Cout)        f32   rows 0/1 = per-image sum / sum of squares
    """
    r = pl.program_id(1)
    r0 = pl.multiple_of(r * boh, boh)

    # Input band covering the receptive field of `boh` output rows (halo k-1).
    band = x_ref[0, pl.ds(r0, boh + k - 1), :, :]
    if apply_act:
        bf = band.astype(jnp.float32)
        band = jnp.where(bf >= 0.0, bf, _LEAK * bf).astype(jnp.bfloat16)

    # Patch rows come from register slices of the VMEM-resident band.
    acc = jnp.zeros((boh * ow, cout), jnp.float32)
    for kh in range(k):
        for kw in range(k):
            a = band[kh:kh + boh, kw:kw + ow, :].reshape(boh * ow, cin)
            acc = acc + jnp.dot(a, w_ref[kh * k + kw],
                                preferred_element_type=jnp.float32)
    z = acc + cb_ref[...]                                   # (boh*ow, Cout) f32
    z_ref[...] = z.reshape(1, boh * ow, cout).astype(z_ref.dtype)

    if with_stats:
        st_ref = maybe_st[0]

        @pl.when(r == 0)
        def _():
            st_ref[...] = jnp.zeros_like(st_ref)

        zsum = jnp.sum(z, axis=0, keepdims=True)
        zsq = jnp.sum(z * z, axis=0, keepdims=True)
        st_ref[...] += jnp.concatenate([zsum, zsq], axis=0).reshape(1, 2, cout)


# ------------------------------ layer wrapper --------------------------------

def _pick_row_block(oh, ow, max_flat=1024):
    """Row-block height: whole image when small, else largest divisor of oh
    whose flat row block stays sublane-aligned and <= max_flat rows."""
    if oh * ow <= max_flat:
        return oh
    best = None
    for c in range(1, oh + 1):
        if oh % c == 0 and (c * ow) % 8 == 0 and c * ow <= max_flat:
            best = c
    return best if best is not None else oh


def _conv_call(x_nhwc, w_taps, cbias, k, apply_act, with_stats, out_dtype):
    """x_nhwc: (N, HP, WP, Cin) bf16 already padded (+space-to-depth'ed)."""
    n, hp, wp, cin = x_nhwc.shape
    oh, ow = hp - k + 1, wp - k + 1
    cout = w_taps.shape[-1]
    boh = _pick_row_block(oh, ow)
    nrb = oh // boh

    kernel = functools.partial(_conv_kernel, k=k, boh=boh, ow=ow,
                               cin=cin, cout=cout, apply_act=apply_act,
                               with_stats=with_stats)

    out_specs = [pl.BlockSpec((1, boh * ow, cout), lambda b, r: (b, r, 0))]
    out_shape = [jax.ShapeDtypeStruct((n, oh * ow, cout), out_dtype)]
    if with_stats:
        out_specs.append(pl.BlockSpec((1, 2, cout), lambda b, r: (b, 0, 0)))
        out_shape.append(jax.ShapeDtypeStruct((n, 2, cout), jnp.float32))

    outs = pl.pallas_call(
        kernel,
        grid=(n, nrb),
        in_specs=[
            pl.BlockSpec((1, hp, wp, cin), lambda b, r: (b, 0, 0, 0)),
            pl.BlockSpec((k * k, cin, cout), lambda b, r: (0, 0, 0)),
            pl.BlockSpec((1, cout), lambda b, r: (0, 0)),
        ],
        out_specs=out_specs,
        out_shape=out_shape,
        compiler_params=pltpu.CompilerParams(
            dimension_semantics=("parallel", "arbitrary"),
            vmem_limit_bytes=32 * 1024 * 1024,
        ),
    )(x_nhwc, w_taps, cbias)

    z_flat = outs[0]
    stats = outs[1] if with_stats else None
    return z_flat.reshape(n, oh, ow, cout), stats


# ----------------------------- JAX glue (prep) -------------------------------

def _space_to_depth2(x):
    n, h, w, c = x.shape
    x = x.reshape(n, h // 2, 2, w // 2, 2, c)
    x = jnp.transpose(x, (0, 1, 3, 2, 4, 5))
    return x.reshape(n, h // 2, w // 2, 4 * c)


def _prep_w_stride2(w):
    """torch Conv2d weight (Cout, Cin, 4, 4), stride 2 -> (4, 4*Cin, Cout)."""
    co, ci = w.shape[0], w.shape[1]
    w4 = jnp.transpose(w, (2, 3, 1, 0))          # (kh, kw, ci, co)
    w4 = w4.reshape(2, 2, 2, 2, ci, co)          # (a, dh, b, dw, ci, co)
    w4 = jnp.transpose(w4, (0, 2, 1, 3, 4, 5))   # (a, b, dh, dw, ci, co)
    return w4.reshape(4, 4 * ci, co)


def _prep_w_stride1(w):
    """torch Conv2d weight (Cout, Cin, 4, 4), stride 1 -> (16, Cin, Cout)."""
    co, ci = w.shape[0], w.shape[1]
    return jnp.transpose(w, (2, 3, 1, 0)).reshape(16, ci, co)


def nlayer_discriminator_fwd(x_nchw, layers):
    """layers: list of dicts {w, b, gamma, beta, stride} matching the torch model."""
    h = jnp.transpose(x_nchw, (0, 2, 3, 1)).astype(jnp.float32)   # NHWC
    scale, bias = None, None      # folded BN affine of the previous layer
    apply_act = False             # LeakyReLU folded into the consumer kernel
    n_total = len(layers)

    for li, p in enumerate(layers):
        w, b, gamma, beta, stride = p["w"], p["b"], p["gamma"], p["beta"], p["stride"]
        cout = w.shape[0]
        is_last = li == n_total - 1

        if scale is not None:
            # One FMA pass, fused by XLA with the pad / space-to-depth below.
            h = h.astype(jnp.float32) * scale + bias
        hp = jnp.pad(h, ((0, 0), (1, 1), (1, 1), (0, 0)))
        if stride == 2:
            assert hp.shape[1] % 2 == 0 and hp.shape[2] % 2 == 0, \
                "stride-2 path needs even padded spatial dims"
            hp = _space_to_depth2(hp)
            w_taps, k_eff = _prep_w_stride2(w), 2
        else:
            w_taps, k_eff = _prep_w_stride1(w), 4

        # Lane-dense store for tiny channel counts (the final 1-channel conv).
        cout_pad = cout if cout >= 8 else 128
        if cout_pad != cout:
            w_taps = jnp.pad(w_taps, ((0, 0), (0, 0), (0, cout_pad - cout)))
        cb = jnp.zeros((cout_pad,), jnp.float32)
        if b is not None:
            cb = cb.at[:cout].set(b)
        cb = cb.reshape(1, cout_pad)

        with_stats = gamma is not None
        out_dtype = jnp.float32 if is_last else jnp.bfloat16
        z, stats = _conv_call(hp.astype(jnp.bfloat16),
                              w_taps.astype(jnp.bfloat16),
                              cb, k_eff, apply_act, with_stats, out_dtype)

        if with_stats:
            nimg, oh, ow, _ = z.shape
            cnt = nimg * oh * ow
            s = jnp.sum(stats[:, 0, :], axis=0)
            ss = jnp.sum(stats[:, 1, :], axis=0)
            mean = s / cnt
            var = ss / cnt - mean * mean                     # biased, f32
            scale = gamma * lax.rsqrt(var + _BN_EPS)
            bias = beta - mean * scale
        else:
            scale, bias = None, None

        apply_act = True
        h = z[..., :cout] if cout_pad != cout else z

    return jnp.transpose(h.astype(jnp.float32), (0, 3, 1, 2))   # back to NCHW


# --------------------------- pure-JAX reference ------------------------------

def _reference(x, layers):
    h = x
    for li, p in enumerate(layers):
        h = lax.conv_general_dilated(
            h, p["w"], window_strides=(p["stride"],) * 2,
            padding=((1, 1), (1, 1)),
            dimension_numbers=("NCHW", "OIHW", "NCHW"))
        if p["b"] is not None:
            h = h + p["b"].reshape(1, -1, 1, 1)
        if p["gamma"] is not None:
            mean = h.mean(axis=(0, 2, 3), keepdims=True)
            var = ((h - mean) ** 2).mean(axis=(0, 2, 3), keepdims=True)
            h = (h - mean) * lax.rsqrt(var + _BN_EPS)
            h = h * p["gamma"].reshape(1, -1, 1, 1) + p["beta"].reshape(1, -1, 1, 1)
        if li < len(layers) - 1:
            h = jnp.where(h >= 0.0, h, _LEAK * h)
    return h


# ---------------------------------- main -------------------------------------

if __name__ == "__main__":
    key = jax.random.PRNGKey(0)
    keys = jax.random.split(key, 22)

    N, input_nc, H, W = 2, 3, 32, 32
    ndf, n_layers = 16, 3                 # small ndf for the demo (torch default 64)

    # Channel / stride plan exactly as in NLayerDiscriminator.__init__.
    chans, strides = [input_nc, ndf], [2]
    for n in range(1, n_layers):
        chans.append(ndf * min(2 ** n, 8)); strides.append(2)
    chans.append(ndf * min(2 ** n_layers, 8)); strides.append(1)
    chans.append(1); strides.append(1)
    n_total = len(strides)
    has_bias = [True] + [False] * (n_total - 2) + [True]   # BatchNorm2d => no conv bias
    has_bn = [False] + [True] * (n_total - 2) + [False]

    layers = []
    ki = 0
    for i in range(n_total):
        cin, cout = chans[i], chans[i + 1]
        w = 0.05 * jax.random.normal(keys[ki], (cout, cin, 4, 4), jnp.float32)
        b = (0.1 * jax.random.normal(keys[ki + 1], (cout,), jnp.float32)
             if has_bias[i] else None)
        if has_bn[i]:
            gamma = 1.0 + 0.1 * jax.random.normal(keys[ki + 2], (cout,), jnp.float32)
            beta = 0.1 * jax.random.normal(keys[ki + 3], (cout,), jnp.float32)
        else:
            gamma = beta = None
        ki += 4
        layers.append(dict(w=w, b=b, gamma=gamma, beta=beta, stride=strides[i]))

    x = jax.random.normal(keys[20], (N, input_nc, H, W), jnp.float32)

    fwd = jax.jit(lambda xx: nlayer_discriminator_fwd(xx, layers))
    out = jax.block_until_ready(fwd(x))

    ref = _reference(x, layers)
    assert out.shape == ref.shape == (N, 1, 2, 2), (out.shape, ref.shape)
    max_err = float(jnp.max(jnp.abs(out - ref)))
    assert jnp.allclose(out, ref, rtol=5e-2, atol=5e-2), max_err

    print("KERNEL_OK")
</pallas_src>

<mosaic_0001>
module attributes {stable_mosaic.version = 11 : i64} {
  func.func @_conv_kernel(%arg0: i32, %arg1: i32, %arg2: memref<1x17x17x12xbf16, #tpu.memory_space<vmem>>, %arg3: memref<4x12x16xbf16, #tpu.memory_space<vmem>>, %arg4: memref<1x16xf32, #tpu.memory_space<vmem>>, %arg5: memref<1x256x16xbf16, #tpu.memory_space<vmem>>) attributes {dimension_semantics = [#tpu.dimension_semantics<parallel>, #tpu.dimension_semantics<arbitrary>], iteration_bounds = array<i64: 2, 1>, scalar_prefetch = 0 : i64, scratch_operands = 0 : i64, tpu.core_type = #tpu.core_type<tc>, window_params = [{transform_indices = @transform_0, window_bounds = array<i64: 1, 17, 17, 12>}, {pipeline_mode = #tpu.pipeline_mode<synchronous>, transform_indices = @transform_1, window_bounds = array<i64: 4, 12, 16>}, {pipeline_mode = #tpu.pipeline_mode<synchronous>, transform_indices = @transform_2, window_bounds = array<i64: 1, 16>}, {transform_indices = @transform_3, window_bounds = array<i64: 1, 256, 16>}]} {
    %c16_i32 = arith.constant 16 : i32
    %0 = arith.muli %arg1, %c16_i32 : i32
    %1 = tpu.assume_multiple %0, 16 : i32
    %c0 = arith.constant 0 : index
    %2 = arith.index_cast %1 : i32 to index
    %c0_0 = arith.constant 0 : index
    %c0_1 = arith.constant 0 : index
    %3 = vector.load %arg2[%c0, %2, %c0_0, %c0_1] : memref<1x17x17x12xbf16, #tpu.memory_space<vmem>>, vector<1x17x17x12xbf16>
    %4 = vector.shape_cast %3 : vector<1x17x17x12xbf16> to vector<17x17x12xbf16>
    %cst = arith.constant 0.000000e+00 : f32
    %5 = vector.broadcast %cst : f32 to vector<256x16xf32>
    %6 = vector.extract_strided_slice %4 {offsets = [0, 0, 0], sizes = [16, 16, 12], strides = [1, 1, 1]} : vector<17x17x12xbf16> to vector<16x16x12xbf16>
    %7 = vector.shape_cast %6 : vector<16x16x12xbf16> to vector<256x12xbf16>
    %c0_2 = arith.constant 0 : index
    %c0_3 = arith.constant 0 : index
    %c0_4 = arith.constant 0 : index
    %8 = vector.load %arg3[%c0_2, %c0_3, %c0_4] : memref<4x12x16xbf16, #tpu.memory_space<vmem>>, vector<1x12x16xbf16>
    %9 = vector.shape_cast %8 : vector<1x12x16xbf16> to vector<12x16xbf16>
    %cst_5 = arith.constant dense<0.000000e+00> : vector<256x16xf32>
    %10 = tpu.matmul %7, %9, %cst_5 {dimension_numbers = #tpu.dot_dimension_numbers<[1], [0], [0], [1], [0, 0, 1, 1], [], []>} : vector<256x12xbf16>, vector<12x16xbf16>, vector<256x16xf32> -> vector<256x16xf32>
    %11 = arith.addf %5, %10 : vector<256x16xf32>
    %12 = vector.extract_strided_slice %4 {offsets = [0, 1, 0], sizes = [16, 16, 12], strides = [1, 1, 1]} : vector<17x17x12xbf16> to vector<16x16x12xbf16>
    %13 = vector.shape_cast %12 : vector<16x16x12xbf16> to vector<256x12xbf16>
    %c1 = arith.constant 1 : index
    %c0_6 = arith.constant 0 : index
    %c0_7 = arith.constant 0 : index
    %14 = vector.load %arg3[%c1, %c0_6, %c0_7] : memref<4x12x16xbf16, #tpu.memory_space<vmem>>, vector<1x12x16xbf16>
    %15 = vector.shape_cast %14 : vector<1x12x16xbf16> to vector<12x16xbf16>
    %cst_8 = arith.constant dense<0.000000e+00> : vector<256x16xf32>
    %16 = tpu.matmul %13, %15, %cst_8 {dimension_numbers = #tpu.dot_dimension_numbers<[1], [0], [0], [1], [0, 0, 1, 1], [], []>} : vector<256x12xbf16>, vector<12x16xbf16>, vector<256x16xf32> -> vector<256x16xf32>
    %17 = arith.addf %11, %16 : vector<256x16xf32>
    %18 = vector.extract_strided_slice %4 {offsets = [1, 0, 0], sizes = [16, 16, 12], strides = [1, 1, 1]} : vector<17x17x12xbf16> to vector<16x16x12xbf16>
    %19 = vector.shape_cast %18 : vector<16x16x12xbf16> to vector<256x12xbf16>
    %c2 = arith.constant 2 : index
    %c0_9 = arith.constant 0 : index
    %c0_10 = arith.constant 0 : index
    %20 = vector.load %arg3[%c2, %c0_9, %c0_10] : memref<4x12x16xbf16, #tpu.memory_space<vmem>>, vector<1x12x16xbf16>
    %21 = vector.shape_cast %20 : vector<1x12x16xbf16> to vector<12x16xbf16>
    %cst_11 = arith.constant dense<0.000000e+00> : vector<256x16xf32>
    %22 = tpu.matmul %19, %21, %cst_11 {dimension_numbers = #tpu.dot_dimension_numbers<[1], [0], [0], [1], [0, 0, 1, 1], [], []>} : vector<256x12xbf16>, vector<12x16xbf16>, vector<256x16xf32> -> vector<256x16xf32>
    %23 = arith.addf %17, %22 : vector<256x16xf32>
    %24 = vector.extract_strided_slice %4 {offsets = [1, 1, 0], sizes = [16, 16, 12], strides = [1, 1, 1]} : vector<17x17x12xbf16> to vector<16x16x12xbf16>
    %25 = vector.shape_cast %24 : vector<16x16x12xbf16> to vector<256x12xbf16>
    %c3 = arith.constant 3 : index
    %c0_12 = arith.constant 0 : index
    %c0_13 = arith.constant 0 : index
    %26 = vector.load %arg3[%c3, %c0_12, %c0_13] : memref<4x12x16xbf16, #tpu.memory_space<vmem>>, vector<1x12x16xbf16>
    %27 = vector.shape_cast %26 : vector<1x12x16xbf16> to vector<12x16xbf16>
    %cst_14 = arith.constant dense<0.000000e+00> : vector<256x16xf32>
    %28 = tpu.matmul %25, %27, %cst_14 {dimension_numbers = #tpu.dot_dimension_numbers<[1], [0], [0], [1], [0, 0, 1, 1], [], []>} : vector<256x12xbf16>, vector<12x16xbf16>, vector<256x16xf32> -> vector<256x16xf32>
    %29 = arith.addf %23, %28 : vector<256x16xf32>
    %c0_15 = arith.constant 0 : index
    %c0_16 = arith.constant 0 : index
    %30 = vector.load %arg4[%c0_15, %c0_16] : memref<1x16xf32, #tpu.memory_space<vmem>>, vector<1x16xf32>
    %31 = vector.broadcast %30 : vector<1x16xf32> to vector<256x16xf32>
    %32 = arith.addf %29, %31 : vector<256x16xf32>
    %33 = vector.shape_cast %32 : vector<256x16xf32> to vector<1x256x16xf32>
    %34 = arith.truncf %33 : vector<1x256x16xf32> to vector<1x256x16xbf16>
    %c0_17 = arith.constant 0 : index
    %c0_18 = arith.constant 0 : index
    %c0_19 = arith.constant 0 : index
    %35 = vector.load %arg5[%c0_17, %c0_18, %c0_19] : memref<1x256x16xbf16, #tpu.memory_space<vmem>>, vector<1x256x16xbf16>
    tpu.vector_store %arg5[%c0_17, %c0_18, %c0_19], %34 {strides = array<i32>} : memref<1x256x16xbf16, #tpu.memory_space<vmem>>, vector<1x256x16xbf16>,
    return
  }
  func.func @transform_0(%arg0: i32, %arg1: i32) -> (i32, i32, i32, i32) {
    %c0_i32 = arith.constant 0 : i32
    %c0_i32_0 = arith.constant 0 : i32
    %c0_i32_1 = arith.constant 0 : i32
    %c0_i32_2 = arith.constant 0 : i32
    return %arg0, %c0_i32, %c0_i32_0, %c0_i32_1 : i32, i32, i32, i32
  }
  func.func @transform_1(%arg0: i32, %arg1: i32) -> (i32, i32, i32) {
    %c0_i32 = arith.constant 0 : i32
    %c0_i32_0 = arith.constant 0 : i32
    %c0_i32_1 = arith.constant 0 : i32
    %c0_i32_2 = arith.constant 0 : i32
    return %c0_i32, %c0_i32_0, %c0_i32_1 : i32, i32, i32
  }
  func.func @transform_2(%arg0: i32, %arg1: i32) -> (i32, i32) {
    %c0_i32 = arith.constant 0 : i32
    %c0_i32_0 = arith.constant 0 : i32
    %c0_i32_1 = arith.constant 0 : i32
    return %c0_i32, %c0_i32_0 : i32, i32
  }
  func.func @transform_3(%arg0: i32, %arg1: i32) -> (i32, i32, i32) {
    %c0_i32 = arith.constant 0 : i32
    %c0_i32_0 = arith.constant 0 : i32
    return %arg0, %arg1, %c0_i32 : i32, i32, i32
  }
}

module attributes {stable_mosaic.version = 11 : i64} {
  func.func @_conv_kernel(%arg0: i32, %arg1: i32, %arg2: memref<1x9x9x64xbf16, #tpu.memory_space<vmem>>, %arg3: memref<4x64x32xbf16, #tpu.memory_space<vmem>>, %arg4: memref<1x32xf32, #tpu.memory_space<vmem>>, %arg5: memref<1x64x32xbf16, #tpu.memory_space<vmem>>, %arg6: memref<1x2x32xf32, #tpu.memory_space<vmem>>) attributes {dimension_semantics = [#tpu.dimension_semantics<parallel>, #tpu.dimension_semantics<arbitrary>], iteration_bounds = array<i64: 2, 1>, scalar_prefetch = 0 : i64, scratch_operands = 0 : i64, tpu.core_type = #tpu.core_type<tc>, window_params = [{transform_indices = @transform_0, window_bounds = array<i64: 1, 9, 9, 64>}, {pipeline_mode = #tpu.pipeline_mode<synchronous>, transform_indices = @transform_1, window_bounds = array<i64: 4, 64, 32>}, {pipeline_mode = #tpu.pipeline_mode<synchronous>, transform_indices = @transform_2, window_bounds = array<i64: 1, 32>}, {transform_indices = @transform_3, window_bounds = array<i64: 1, 64, 32>}, {transform_indices = @transform_4, window_bounds = array<i64: 1, 2, 32>}]} {
    %c8_i32 = arith.constant 8 : i32
    %0 = arith.muli %arg1, %c8_i32 : i32
    %1 = tpu.assume_multiple %0, 8 : i32
    %c0 = arith.constant 0 : index
    %2 = arith.index_cast %1 : i32 to index
    %c0_0 = arith.constant 0 : index
    %c0_1 = arith.constant 0 : index
    %3 = vector.load %arg2[%c0, %2, %c0_0, %c0_1] : memref<1x9x9x64xbf16, #tpu.memory_space<vmem>>, vector<1x9x9x64xbf16>
    %4 = vector.shape_cast %3 : vector<1x9x9x64xbf16> to vector<9x9x64xbf16>
    %5 = arith.extf %4 : vector<9x9x64xbf16> to vector<9x9x64xf32>
    %cst = arith.constant 0.000000e+00 : f32
    %6 = vector.broadcast %cst : f32 to vector<9x9x64xf32>
    %7 = arith.cmpf oge, %5, %6 : vector<9x9x64xf32>
    %cst_2 = arith.constant 2.000000e-01 : f32
    %8 = vector.broadcast %cst_2 : f32 to vector<9x9x64xf32>
    %9 = arith.mulf %8, %5 : vector<9x9x64xf32>
    %10 = arith.select %7, %5, %9 : vector<9x9x64xi1>, vector<9x9x64xf32>
    %11 = arith.truncf %10 : vector<9x9x64xf32> to vector<9x9x64xbf16>
    %cst_3 = arith.constant 0.000000e+00 : f32
    %12 = vector.broadcast %cst_3 : f32 to vector<64x32xf32>
    %13 = vector.extract_strided_slice %11 {offsets = [0, 0, 0], sizes = [8, 8, 64], strides = [1, 1, 1]} : vector<9x9x64xbf16> to vector<8x8x64xbf16>
    %14 = vector.shape_cast %13 : vector<8x8x64xbf16> to vector<64x64xbf16>
    %c0_4 = arith.constant 0 : index
    %c0_5 = arith.constant 0 : index
    %c0_6 = arith.constant 0 : index
    %15 = vector.load %arg3[%c0_4, %c0_5, %c0_6] : memref<4x64x32xbf16, #tpu.memory_space<vmem>>, vector<1x64x32xbf16>
    %16 = vector.shape_cast %15 : vector<1x64x32xbf16> to vector<64x32xbf16>
    %cst_7 = arith.constant dense<0.000000e+00> : vector<64x32xf32>
    %17 = tpu.matmul %14, %16, %cst_7 {dimension_numbers = #tpu.dot_dimension_numbers<[1], [0], [0], [1], [0, 0, 1, 1], [], []>} : vector<64x64xbf16>, vector<64x32xbf16>, vector<64x32xf32> -> vector<64x32xf32>
    %18 = arith.addf %12, %17 : vector<64x32xf32>
    %19 = vector.extract_strided_slice %11 {offsets = [0, 1, 0], sizes = [8, 8, 64], strides = [1, 1, 1]} : vector<9x9x64xbf16> to vector<8x8x64xbf16>
    %20 = vector.shape_cast %19 : vector<8x8x64xbf16> to vector<64x64xbf16>
    %c1 = arith.constant 1 : index
    %c0_8 = arith.constant 0 : index
    %c0_9 = arith.constant 0 : index
    %21 = vector.load %arg3[%c1, %c0_8, %c0_9] : memref<4x64x32xbf16, #tpu.memory_space<vmem>>, vector<1x64x32xbf16>
    %22 = vector.shape_cast %21 : vector<1x64x32xbf16> to vector<64x32xbf16>
    %cst_10 = arith.constant dense<0.000000e+00> : vector<64x32xf32>
    %23 = tpu.matmul %20, %22, %cst_10 {dimension_numbers = #tpu.dot_dimension_numbers<[1], [0], [0], [1], [0, 0, 1, 1], [], []>} : vector<64x64xbf16>, vector<64x32xbf16>, vector<64x32xf32> -> vector<64x32xf32>
    %24 = arith.addf %18, %23 : vector<64x32xf32>
    %25 = vector.extract_strided_slice %11 {offsets = [1, 0, 0], sizes = [8, 8, 64], strides = [1, 1, 1]} : vector<9x9x64xbf16> to vector<8x8x64xbf16>
    %26 = vector.shape_cast %25 : vector<8x8x64xbf16> to vector<64x64xbf16>
    %c2 = arith.constant 2 : index
    %c0_11 = arith.constant 0 : index
    %c0_12 = arith.constant 0 : index
    %27 = vector.load %arg3[%c2, %c0_11, %c0_12] : memref<4x64x32xbf16, #tpu.memory_space<vmem>>, vector<1x64x32xbf16>
    %28 = vector.shape_cast %27 : vector<1x64x32xbf16> to vector<64x32xbf16>
    %cst_13 = arith.constant dense<0.000000e+00> : vector<64x32xf32>
    %29 = tpu.matmul %26, %28, %cst_13 {dimension_numbers = #tpu.dot_dimension_numbers<[1], [0], [0], [1], [0, 0, 1, 1], [], []>} : vector<64x64xbf16>, vector<64x32xbf16>, vector<64x32xf32> -> vector<64x32xf32>
    %30 = arith.addf %24, %29 : vector<64x32xf32>
    %31 = vector.extract_strided_slice %11 {offsets = [1, 1, 0], sizes = [8, 8, 64], strides = [1, 1, 1]} : vector<9x9x64xbf16> to vector<8x8x64xbf16>
    %32 = vector.shape_cast %31 : vector<8x8x64xbf16> to vector<64x64xbf16>
    %c3 = arith.constant 3 : index
    %c0_14 = arith.constant 0 : index
    %c0_15 = arith.constant 0 : index
    %33 = vector.load %arg3[%c3, %c0_14, %c0_15] : memref<4x64x32xbf16, #tpu.memory_space<vmem>>, vector<1x64x32xbf16>
    %34 = vector.shape_cast %33 : vector<1x64x32xbf16> to vector<64x32xbf16>
    %cst_16 = arith.constant dense<0.000000e+00> : vector<64x32xf32>
    %35 = tpu.matmul %32, %34, %cst_16 {dimension_numbers = #tpu.dot_dimension_numbers<[1], [0], [0], [1], [0, 0, 1, 1], [], []>} : vector<64x64xbf16>, vector<64x32xbf16>, vector<64x32xf32> -> vector<64x32xf32>
    %36 = arith.addf %30, %35 : vector<64x32xf32>
    %c0_17 = arith.constant 0 : index
    %c0_18 = arith.constant 0 : index
    %37 = vector.load %arg4[%c0_17, %c0_18] : memref<1x32xf32, #tpu.memory_space<vmem>>, vector<1x32xf32>
    %38 = vector.broadcast %37 : vector<1x32xf32> to vector<64x32xf32>
    %39 = arith.addf %36, %38 : vector<64x32xf32>
    %40 = vector.shape_cast %39 : vector<64x32xf32> to vector<1x64x32xf32>
    %41 = arith.truncf %40 : vector<1x64x32xf32> to vector<1x64x32xbf16>
    %c0_19 = arith.constant 0 : index
    %c0_20 = arith.constant 0 : index
    %c0_21 = arith.constant 0 : index
    %42 = vector.load %arg5[%c0_19, %c0_20, %c0_21] : memref<1x64x32xbf16, #tpu.memory_space<vmem>>, vector<1x64x32xbf16>
    tpu.vector_store %arg5[%c0_19, %c0_20, %c0_21], %41 {strides = array<i32>} : memref<1x64x32xbf16, #tpu.memory_space<vmem>>, vector<1x64x32xbf16>,
    %c0_i32 = arith.constant 0 : i32
    %43 = arith.cmpi eq, %arg1, %c0_i32 : i32
    %44 = arith.extui %43 : i1 to i32
    %c0_i32_22 = arith.constant 0 : i32
    %45 = arith.cmpi ne, %44, %c0_i32_22 : i32
    scf.if %45 {
      %cst_31 = arith.constant 0.000000e+00 : f32
      %56 = vector.broadcast %cst_31 : f32 to vector<1x2x32xf32>
      %c0_32 = arith.constant 0 : index
      %c0_33 = arith.constant 0 : index
      %c0_34 = arith.constant 0 : index
      %57 = vector.load %arg6[%c0_32, %c0_33, %c0_34] : memref<1x2x32xf32, #tpu.memory_space<vmem>>, vector<1x2x32xf32>
      tpu.vector_store %arg6[%c0_32, %c0_33, %c0_34], %56 {strides = array<i32>} : memref<1x2x32xf32, #tpu.memory_space<vmem>>, vector<1x2x32xf32>,
    } else {
    }
    %cst_23 = arith.constant dense<0.000000e+00> : vector<32xf32>
    %46 = vector.multi_reduction <add>, %39, %cst_23 [0] : vector<64x32xf32> to vector<32xf32>
    %47 = vector.shape_cast %46 : vector<32xf32> to vector<1x32xf32>
    %48 = arith.mulf %39, %39 : vector<64x32xf32>
    %cst_24 = arith.constant dense<0.000000e+00> : vector<32xf32>
    %49 = vector.multi_reduction <add>, %48, %cst_24 [0] : vector<64x32xf32> to vector<32xf32>
    %50 = vector.shape_cast %49 : vector<32xf32> to vector<1x32xf32>
    %c0_25 = arith.constant 0 : index
    %c0_26 = arith.constant 0 : index
    %c0_27 = arith.constant 0 : index
    %51 = vector.load %arg6[%c0_25, %c0_26, %c0_27] : memref<1x2x32xf32, #tpu.memory_space<vmem>>, vector<1x2x32xf32>
    %52 = tpu.concatenate %47, %50 in 0 : vector<1x32xf32>, vector<1x32xf32> -> vector<2x32xf32>
    %53 = vector.shape_cast %52 : vector<2x32xf32> to vector<1x2x32xf32>
    %54 = arith.addf %51, %53 : vector<1x2x32xf32>
    %c0_28 = arith.constant 0 : index
    %c0_29 = arith.constant 0 : index
    %c0_30 = arith.constant 0 : index
    %55 = vector.load %arg6[%c0_28, %c0_29, %c0_30] : memref<1x2x32xf32, #tpu.memory_space<vmem>>, vector<1x2x32xf32>
    tpu.vector_store %arg6[%c0_28, %c0_29, %c0_30], %54 {strides = array<i32>} : memref<1x2x32xf32, #tpu.memory_space<vmem>>, vector<1x2x32xf32>,
    return
  }
  func.func @transform_0(%arg0: i32, %arg1: i32) -> (i32, i32, i32, i32) {
    %c0_i32 = arith.constant 0 : i32
    %c0_i32_0 = arith.constant 0 : i32
    %c0_i32_1 = arith.constant 0 : i32
    %c0_i32_2 = arith.constant 0 : i32
    return %arg0, %c0_i32, %c0_i32_0, %c0_i32_1 : i32, i32, i32, i32
  }
  func.func @transform_1(%arg0: i32, %arg1: i32) -> (i32, i32, i32) {
    %c0_i32 = arith.constant 0 : i32
    %c0_i32_0 = arith.constant 0 : i32
    %c0_i32_1 = arith.constant 0 : i32
    %c0_i32_2 = arith.constant 0 : i32
    return %c0_i32, %c0_i32_0, %c0_i32_1 : i32, i32, i32
  }
  func.func @transform_2(%arg0: i32, %arg1: i32) -> (i32, i32) {
    %c0_i32 = arith.constant 0 : i32
    %c0_i32_0 = arith.constant 0 : i32
    %c0_i32_1 = arith.constant 0 : i32
    return %c0_i32, %c0_i32_0 : i32, i32
  }
  func.func @transform_3(%arg0: i32, %arg1: i32) -> (i32, i32, i32) {
    %c0_i32 = arith.constant 0 : i32
    %c0_i32_0 = arith.constant 0 : i32
    return %arg0, %arg1, %c0_i32 : i32, i32, i32
  }
  func.func @transform_4(%arg0: i32, %arg1: i32) -> (i32, i32, i32) {
    %c0_i32 = arith.constant 0 : i32
    %c0_i32_0 = arith.constant 0 : i32
    %c0_i32_1 = arith.constant 0 : i32
    return %arg0, %c0_i32, %c0_i32_0 : i32, i32, i32
  }
}

module attributes {stable_mosaic.version = 11 : i64} {
  func.func @_conv_kernel(%arg0: i32, %arg1: i32, %arg2: memref<1x5x5x128xbf16, #tpu.memory_space<vmem>>, %arg3: memref<4x128x64xbf16, #tpu.memory_space<vmem>>, %arg4: memref<1x64xf32, #tpu.memory_space<vmem>>, %arg5: memref<1x16x64xbf16, #tpu.memory_space<vmem>>, %arg6: memref<1x2x64xf32, #tpu.memory_space<vmem>>) attributes {dimension_semantics = [#tpu.dimension_semantics<parallel>, #tpu.dimension_semantics<arbitrary>], iteration_bounds = array<i64: 2, 1>, scalar_prefetch = 0 : i64, scratch_operands = 0 : i64, tpu.core_type = #tpu.core_type<tc>, window_params = [{transform_indices = @transform_0, window_bounds = array<i64: 1, 5, 5, 128>}, {pipeline_mode = #tpu.pipeline_mode<synchronous>, transform_indices = @transform_1, window_bounds = array<i64: 4, 128, 64>}, {pipeline_mode = #tpu.pipeline_mode<synchronous>, transform_indices = @transform_2, window_bounds = array<i64: 1, 64>}, {transform_indices = @transform_3, window_bounds = array<i64: 1, 16, 64>}, {transform_indices = @transform_4, window_bounds = array<i64: 1, 2, 64>}]} {
    %c4_i32 = arith.constant 4 : i32
    %0 = arith.muli %arg1, %c4_i32 : i32
    %1 = tpu.assume_multiple %0, 4 : i32
    %c0 = arith.constant 0 : index
    %2 = arith.index_cast %1 : i32 to index
    %c0_0 = arith.constant 0 : index
    %c0_1 = arith.constant 0 : index
    %3 = vector.load %arg2[%c0, %2, %c0_0, %c0_1] : memref<1x5x5x128xbf16, #tpu.memory_space<vmem>>, vector<1x5x5x128xbf16>
    %4 = vector.shape_cast %3 : vector<1x5x5x128xbf16> to vector<5x5x128xbf16>
    %5 = arith.extf %4 : vector<5x5x128xbf16> to vector<5x5x128xf32>
    %cst = arith.constant 0.000000e+00 : f32
    %6 = vector.broadcast %cst : f32 to vector<5x5x128xf32>
    %7 = arith.cmpf oge, %5, %6 : vector<5x5x128xf32>
    %cst_2 = arith.constant 2.000000e-01 : f32
    %8 = vector.broadcast %cst_2 : f32 to vector<5x5x128xf32>
    %9 = arith.mulf %8, %5 : vector<5x5x128xf32>
    %10 = arith.select %7, %5, %9 : vector<5x5x128xi1>, vector<5x5x128xf32>
    %11 = arith.truncf %10 : vector<5x5x128xf32> to vector<5x5x128xbf16>
    %cst_3 = arith.constant 0.000000e+00 : f32
    %12 = vector.broadcast %cst_3 : f32 to vector<16x64xf32>
    %13 = vector.extract_strided_slice %11 {offsets = [0, 0, 0], sizes = [4, 4, 128], strides = [1, 1, 1]} : vector<5x5x128xbf16> to vector<4x4x128xbf16>
    %14 = vector.shape_cast %13 : vector<4x4x128xbf16> to vector<16x128xbf16>
    %c0_4 = arith.constant 0 : index
    %c0_5 = arith.constant 0 : index
    %c0_6 = arith.constant 0 : index
    %15 = vector.load %arg3[%c0_4, %c0_5, %c0_6] : memref<4x128x64xbf16, #tpu.memory_space<vmem>>, vector<1x128x64xbf16>
    %16 = vector.shape_cast %15 : vector<1x128x64xbf16> to vector<128x64xbf16>
    %cst_7 = arith.constant dense<0.000000e+00> : vector<16x64xf32>
    %17 = tpu.matmul %14, %16, %cst_7 {dimension_numbers = #tpu.dot_dimension_numbers<[1], [0], [0], [1], [0, 0, 1, 1], [], []>} : vector<16x128xbf16>, vector<128x64xbf16>, vector<16x64xf32> -> vector<16x64xf32>
    %18 = arith.addf %12, %17 : vector<16x64xf32>
    %19 = vector.extract_strided_slice %11 {offsets = [0, 1, 0], sizes = [4, 4, 128], strides = [1, 1, 1]} : vector<5x5x128xbf16> to vector<4x4x128xbf16>
    %20 = vector.shape_cast %19 : vector<4x4x128xbf16> to vector<16x128xbf16>
    %c1 = arith.constant 1 : index
    %c0_8 = arith.constant 0 : index
    %c0_9 = arith.constant 0 : index
    %21 = vector.load %arg3[%c1, %c0_8, %c0_9] : memref<4x128x64xbf16, #tpu.memory_space<vmem>>, vector<1x128x64xbf16>
    %22 = vector.shape_cast %21 : vector<1x128x64xbf16> to vector<128x64xbf16>
    %cst_10 = arith.constant dense<0.000000e+00> : vector<16x64xf32>
    %23 = tpu.matmul %20, %22, %cst_10 {dimension_numbers = #tpu.dot_dimension_numbers<[1], [0], [0], [1], [0, 0, 1, 1], [], []>} : vector<16x128xbf16>, vector<128x64xbf16>, vector<16x64xf32> -> vector<16x64xf32>
    %24 = arith.addf %18, %23 : vector<16x64xf32>
    %25 = vector.extract_strided_slice %11 {offsets = [1, 0, 0], sizes = [4, 4, 128], strides = [1, 1, 1]} : vector<5x5x128xbf16> to vector<4x4x128xbf16>
    %26 = vector.shape_cast %25 : vector<4x4x128xbf16> to vector<16x128xbf16>
    %c2 = arith.constant 2 : index
    %c0_11 = arith.constant 0 : index
    %c0_12 = arith.constant 0 : index
    %27 = vector.load %arg3[%c2, %c0_11, %c0_12] : memref<4x128x64xbf16, #tpu.memory_space<vmem>>, vector<1x128x64xbf16>
    %28 = vector.shape_cast %27 : vector<1x128x64xbf16> to vector<128x64xbf16>
    %cst_13 = arith.constant dense<0.000000e+00> : vector<16x64xf32>
    %29 = tpu.matmul %26, %28, %cst_13 {dimension_numbers = #tpu.dot_dimension_numbers<[1], [0], [0], [1], [0, 0, 1, 1], [], []>} : vector<16x128xbf16>, vector<128x64xbf16>, vector<16x64xf32> -> vector<16x64xf32>
    %30 = arith.addf %24, %29 : vector<16x64xf32>
    %31 = vector.extract_strided_slice %11 {offsets = [1, 1, 0], sizes = [4, 4, 128], strides = [1, 1, 1]} : vector<5x5x128xbf16> to vector<4x4x128xbf16>
    %32 = vector.shape_cast %31 : vector<4x4x128xbf16> to vector<16x128xbf16>
    %c3 = arith.constant 3 : index
    %c0_14 = arith.constant 0 : index
    %c0_15 = arith.constant 0 : index
    %33 = vector.load %arg3[%c3, %c0_14, %c0_15] : memref<4x128x64xbf16, #tpu.memory_space<vmem>>, vector<1x128x64xbf16>
    %34 = vector.shape_cast %33 : vector<1x128x64xbf16> to vector<128x64xbf16>
    %cst_16 = arith.constant dense<0.000000e+00> : vector<16x64xf32>
    %35 = tpu.matmul %32, %34, %cst_16 {dimension_numbers = #tpu.dot_dimension_numbers<[1], [0], [0], [1], [0, 0, 1, 1], [], []>} : vector<16x128xbf16>, vector<128x64xbf16>, vector<16x64xf32> -> vector<16x64xf32>
    %36 = arith.addf %30, %35 : vector<16x64xf32>
    %c0_17 = arith.constant 0 : index
    %c0_18 = arith.constant 0 : index
    %37 = vector.load %arg4[%c0_17, %c0_18] : memref<1x64xf32, #tpu.memory_space<vmem>>, vector<1x64xf32>
    %38 = vector.broadcast %37 : vector<1x64xf32> to vector<16x64xf32>
    %39 = arith.addf %36, %38 : vector<16x64xf32>
    %40 = vector.shape_cast %39 : vector<16x64xf32> to vector<1x16x64xf32>
    %41 = arith.truncf %40 : vector<1x16x64xf32> to vector<1x16x64xbf16>
    %c0_19 = arith.constant 0 : index
    %c0_20 = arith.constant 0 : index
    %c0_21 = arith.constant 0 : index
    %42 = vector.load %arg5[%c0_19, %c0_20, %c0_21] : memref<1x16x64xbf16, #tpu.memory_space<vmem>>, vector<1x16x64xbf16>
    tpu.vector_store %arg5[%c0_19, %c0_20, %c0_21], %41 {strides = array<i32>} : memref<1x16x64xbf16, #tpu.memory_space<vmem>>, vector<1x16x64xbf16>,
    %c0_i32 = arith.constant 0 : i32
    %43 = arith.cmpi eq, %arg1, %c0_i32 : i32
    %44 = arith.extui %43 : i1 to i32
    %c0_i32_22 = arith.constant 0 : i32
    %45 = arith.cmpi ne, %44, %c0_i32_22 : i32
    scf.if %45 {
      %cst_31 = arith.constant 0.000000e+00 : f32
      %56 = vector.broadcast %cst_31 : f32 to vector<1x2x64xf32>
      %c0_32 = arith.constant 0 : index
      %c0_33 = arith.constant 0 : index
      %c0_34 = arith.constant 0 : index
      %57 = vector.load %arg6[%c0_32, %c0_33, %c0_34] : memref<1x2x64xf32, #tpu.memory_space<vmem>>, vector<1x2x64xf32>
      tpu.vector_store %arg6[%c0_32, %c0_33, %c0_34], %56 {strides = array<i32>} : memref<1x2x64xf32, #tpu.memory_space<vmem>>, vector<1x2x64xf32>,
    } else {
    }
    %cst_23 = arith.constant dense<0.000000e+00> : vector<64xf32>
    %46 = vector.multi_reduction <add>, %39, %cst_23 [0] : vector<16x64xf32> to vector<64xf32>
    %47 = vector.shape_cast %46 : vector<64xf32> to vector<1x64xf32>
    %48 = arith.mulf %39, %39 : vector<16x64xf32>
    %cst_24 = arith.constant dense<0.000000e+00> : vector<64xf32>
    %49 = vector.multi_reduction <add>, %48, %cst_24 [0] : vector<16x64xf32> to vector<64xf32>
    %50 = vector.shape_cast %49 : vector<64xf32> to vector<1x64xf32>
    %c0_25 = arith.constant 0 : index
    %c0_26 = arith.constant 0 : index
    %c0_27 = arith.constant 0 : index
    %51 = vector.load %arg6[%c0_25, %c0_26, %c0_27] : memref<1x2x64xf32, #tpu.memory_space<vmem>>, vector<1x2x64xf32>
    %52 = tpu.concatenate %47, %50 in 0 : vector<1x64xf32>, vector<1x64xf32> -> vector<2x64xf32>
    %53 = vector.shape_cast %52 : vector<2x64xf32> to vector<1x2x64xf32>
    %54 = arith.addf %51, %53 : vector<1x2x64xf32>
    %c0_28 = arith.constant 0 : index
    %c0_29 = arith.constant 0 : index
    %c0_30 = arith.constant 0 : index
    %55 = vector.load %arg6[%c0_28, %c0_29, %c0_30] : memref<1x2x64xf32, #tpu.memory_space<vmem>>, vector<1x2x64xf32>
    tpu.vector_store %arg6[%c0_28, %c0_29, %c0_30], %54 {strides = array<i32>} : memref<1x2x64xf32, #tpu.memory_space<vmem>>, vector<1x2x64xf32>,
    return
  }
  func.func @transform_0(%arg0: i32, %arg1: i32) -> (i32, i32, i32, i32) {
    %c0_i32 = arith.constant 0 : i32
    %c0_i32_0 = arith.constant 0 : i32
    %c0_i32_1 = arith.constant 0 : i32
    %c0_i32_2 = arith.constant 0 : i32
    return %arg0, %c0_i32, %c0_i32_0, %c0_i32_1 : i32, i32, i32, i32
  }
  func.func @transform_1(%arg0: i32, %arg1: i32) -> (i32, i32, i32) {
    %c0_i32 = arith.constant 0 : i32
    %c0_i32_0 = arith.constant 0 : i32
    %c0_i32_1 = arith.constant 0 : i32
    %c0_i32_2 = arith.constant 0 : i32
    return %c0_i32, %c0_i32_0, %c0_i32_1 : i32, i32, i32
  }
  func.func @transform_2(%arg0: i32, %arg1: i32) -> (i32, i32) {
    %c0_i32 = arith.constant 0 : i32
    %c0_i32_0 = arith.constant 0 : i32
    %c0_i32_1 = arith.constant 0 : i32
    return %c0_i32, %c0_i32_0 : i32, i32
  }
  func.func @transform_3(%arg0: i32, %arg1: i32) -> (i32, i32, i32) {
    %c0_i32 = arith.constant 0 : i32
    %c0_i32_0 = arith.constant 0 : i32
    return %arg0, %arg1, %c0_i32 : i32, i32, i32
  }
  func.func @transform_4(%arg0: i32, %arg1: i32) -> (i32, i32, i32) {
    %c0_i32 = arith.constant 0 : i32
    %c0_i32_0 = arith.constant 0 : i32
    %c0_i32_1 = arith.constant 0 : i32
    return %arg0, %c0_i32, %c0_i32_0 : i32, i32, i32
  }
}

module attributes {stable_mosaic.version = 11 : i64} {
  func.func @_conv_kernel(%arg0: i32, %arg1: i32, %arg2: memref<1x6x6x64xbf16, #tpu.memory_space<vmem>>, %arg3: memref<16x64x128xbf16, #tpu.memory_space<vmem>>, %arg4: memref<1x128xf32, #tpu.memory_space<vmem>>, %arg5: memref<1x9x128xbf16, #tpu.memory_space<vmem>>, %arg6: memref<1x2x128xf32, #tpu.memory_space<vmem>>) attributes {dimension_semantics = [#tpu.dimension_semantics<parallel>, #tpu.dimension_semantics<arbitrary>], iteration_bounds = array<i64: 2, 1>, scalar_prefetch = 0 : i64, scratch_operands = 0 : i64, tpu.core_type = #tpu.core_type<tc>, window_params = [{transform_indices = @transform_0, window_bounds = array<i64: 1, 6, 6, 64>}, {pipeline_mode = #tpu.pipeline_mode<synchronous>, transform_indices = @transform_1, window_bounds = array<i64: 16, 64, 128>}, {pipeline_mode = #tpu.pipeline_mode<synchronous>, transform_indices = @transform_2, window_bounds = array<i64: 1, 128>}, {transform_indices = @transform_3, window_bounds = array<i64: 1, 9, 128>}, {transform_indices = @transform_4, window_bounds = array<i64: 1, 2, 128>}]} {
    %c3_i32 = arith.constant 3 : i32
    %0 = arith.muli %arg1, %c3_i32 : i32
    %1 = tpu.assume_multiple %0, 3 : i32
    %c0 = arith.constant 0 : index
    %2 = arith.index_cast %1 : i32 to index
    %c0_0 = arith.constant 0 : index
    %c0_1 = arith.constant 0 : index
    %3 = vector.load %arg2[%c0, %2, %c0_0, %c0_1] : memref<1x6x6x64xbf16, #tpu.memory_space<vmem>>, vector<1x6x6x64xbf16>
    %4 = vector.shape_cast %3 : vector<1x6x6x64xbf16> to vector<6x6x64xbf16>
    %5 = arith.extf %4 : vector<6x6x64xbf16> to vector<6x6x64xf32>
    %cst = arith.constant 0.000000e+00 : f32
    %6 = vector.broadcast %cst : f32 to vector<6x6x64xf32>
    %7 = arith.cmpf oge, %5, %6 : vector<6x6x64xf32>
    %cst_2 = arith.constant 2.000000e-01 : f32
    %8 = vector.broadcast %cst_2 : f32 to vector<6x6x64xf32>
    %9 = arith.mulf %8, %5 : vector<6x6x64xf32>
    %10 = arith.select %7, %5, %9 : vector<6x6x64xi1>, vector<6x6x64xf32>
    %11 = arith.truncf %10 : vector<6x6x64xf32> to vector<6x6x64xbf16>
    %cst_3 = arith.constant 0.000000e+00 : f32
    %12 = vector.broadcast %cst_3 : f32 to vector<9x128xf32>
    %13 = vector.extract_strided_slice %11 {offsets = [0, 0, 0], sizes = [3, 3, 64], strides = [1, 1, 1]} : vector<6x6x64xbf16> to vector<3x3x64xbf16>
    %14 = vector.shape_cast %13 : vector<3x3x64xbf16> to vector<9x64xbf16>
    %c0_4 = arith.constant 0 : index
    %c0_5 = arith.constant 0 : index
    %c0_6 = arith.constant 0 : index
    %15 = vector.load %arg3[%c0_4, %c0_5, %c0_6] : memref<16x64x128xbf16, #tpu.memory_space<vmem>>, vector<1x64x128xbf16>
    %16 = vector.shape_cast %15 : vector<1x64x128xbf16> to vector<64x128xbf16>
    %cst_7 = arith.constant dense<0.000000e+00> : vector<9x128xf32>
    %17 = tpu.matmul %14, %16, %cst_7 {dimension_numbers = #tpu.dot_dimension_numbers<[1], [0], [0], [1], [0, 0, 1, 1], [], []>} : vector<9x64xbf16>, vector<64x128xbf16>, vector<9x128xf32> -> vector<9x128xf32>
    %18 = arith.addf %12, %17 : vector<9x128xf32>
    %19 = vector.extract_strided_slice %11 {offsets = [0, 1, 0], sizes = [3, 3, 64], strides = [1, 1, 1]} : vector<6x6x64xbf16> to vector<3x3x64xbf16>
    %20 = vector.shape_cast %19 : vector<3x3x64xbf16> to vector<9x64xbf16>
    %c1 = arith.constant 1 : index
    %c0_8 = arith.constant 0 : index
    %c0_9 = arith.constant 0 : index
    %21 = vector.load %arg3[%c1, %c0_8, %c0_9] : memref<16x64x128xbf16, #tpu.memory_space<vmem>>, vector<1x64x128xbf16>
    %22 = vector.shape_cast %21 : vector<1x64x128xbf16> to vector<64x128xbf16>
    %cst_10 = arith.constant dense<0.000000e+00> : vector<9x128xf32>
    %23 = tpu.matmul %20, %22, %cst_10 {dimension_numbers = #tpu.dot_dimension_numbers<[1], [0], [0], [1], [0, 0, 1, 1], [], []>} : vector<9x64xbf16>, vector<64x128xbf16>, vector<9x128xf32> -> vector<9x128xf32>
    %24 = arith.addf %18, %23 : vector<9x128xf32>
    %25 = vector.extract_strided_slice %11 {offsets = [0, 2, 0], sizes = [3, 3, 64], strides = [1, 1, 1]} : vector<6x6x64xbf16> to vector<3x3x64xbf16>
    %26 = vector.shape_cast %25 : vector<3x3x64xbf16> to vector<9x64xbf16>
    %c2 = arith.constant 2 : index
    %c0_11 = arith.constant 0 : index
    %c0_12 = arith.constant 0 : index
    %27 = vector.load %arg3[%c2, %c0_11, %c0_12] : memref<16x64x128xbf16, #tpu.memory_space<vmem>>, vector<1x64x128xbf16>
    %28 = vector.shape_cast %27 : vector<1x64x128xbf16> to vector<64x128xbf16>
    %cst_13 = arith.constant dense<0.000000e+00> : vector<9x128xf32>
    %29 = tpu.matmul %26, %28, %cst_13 {dimension_numbers = #tpu.dot_dimension_numbers<[1], [0], [0], [1], [0, 0, 1, 1], [], []>} : vector<9x64xbf16>, vector<64x128xbf16>, vector<9x128xf32> -> vector<9x128xf32>
    %30 = arith.addf %24, %29 : vector<9x128xf32>
    %31 = vector.extract_strided_slice %11 {offsets = [0, 3, 0], sizes = [3, 3, 64], strides = [1, 1, 1]} : vector<6x6x64xbf16> to vector<3x3x64xbf16>
    %32 = vector.shape_cast %31 : vector<3x3x64xbf16> to vector<9x64xbf16>
    %c3 = arith.constant 3 : index
    %c0_14 = arith.constant 0 : index
    %c0_15 = arith.constant 0 : index
    %33 = vector.load %arg3[%c3, %c0_14, %c0_15] : memref<16x64x128xbf16, #tpu.memory_space<vmem>>, vector<1x64x128xbf16>
    %34 = vector.shape_cast %33 : vector<1x64x128xbf16> to vector<64x128xbf16>
    %cst_16 = arith.constant dense<0.000000e+00> : vector<9x128xf32>
    %35 = tpu.matmul %32, %34, %cst_16 {dimension_numbers = #tpu.dot_dimension_numbers<[1], [0], [0], [1], [0, 0, 1, 1], [], []>} : vector<9x64xbf16>, vector<64x128xbf16>, vector<9x128xf32> -> vector<9x128xf32>
    %36 = arith.addf %30, %35 : vector<9x128xf32>
    %37 = vector.extract_strided_slice %11 {offsets = [1, 0, 0], sizes = [3, 3, 64], strides = [1, 1, 1]} : vector<6x6x64xbf16> to vector<3x3x64xbf16>
    %38 = vector.shape_cast %37 : vector<3x3x64xbf16> to vector<9x64xbf16>
    %c4 = arith.constant 4 : index
    %c0_17 = arith.constant 0 : index
    %c0_18 = arith.constant 0 : index
    %39 = vector.load %arg3[%c4, %c0_17, %c0_18] : memref<16x64x128xbf16, #tpu.memory_space<vmem>>, vector<1x64x128xbf16>
    %40 = vector.shape_cast %39 : vector<1x64x128xbf16> to vector<64x128xbf16>
    %cst_19 = arith.constant dense<0.000000e+00> : vector<9x128xf32>
    %41 = tpu.matmul %38, %40, %cst_19 {dimension_numbers = #tpu.dot_dimension_numbers<[1], [0], [0], [1], [0, 0, 1, 1], [], []>} : vector<9x64xbf16>, vector<64x128xbf16>, vector<9x128xf32> -> vector<9x128xf32>
    %42 = arith.addf %36, %41 : vector<9x128xf32>
    %43 = vector.extract_strided_slice %11 {offsets = [1, 1, 0], sizes = [3, 3, 64], strides = [1, 1, 1]} : vector<6x6x64xbf16> to vector<3x3x64xbf16>
    %44 = vector.shape_cast %43 : vector<3x3x64xbf16> to vector<9x64xbf16>
    %c5 = arith.constant 5 : index
    %c0_20 = arith.constant 0 : index
    %c0_21 = arith.constant 0 : index
    %45 = vector.load %arg3[%c5, %c0_20, %c0_21] : memref<16x64x128xbf16, #tpu.memory_space<vmem>>, vector<1x64x128xbf16>
    %46 = vector.shape_cast %45 : vector<1x64x128xbf16> to vector<64x128xbf16>
    %cst_22 = arith.constant dense<0.000000e+00> : vector<9x128xf32>
    %47 = tpu.matmul %44, %46, %cst_22 {dimension_numbers = #tpu.dot_dimension_numbers<[1], [0], [0], [1], [0, 0, 1, 1], [], []>} : vector<9x64xbf16>, vector<64x128xbf16>, vector<9x128xf32> -> vector<9x128xf32>
    %48 = arith.addf %42, %47 : vector<9x128xf32>
    %49 = vector.extract_strided_slice %11 {offsets = [1, 2, 0], sizes = [3, 3, 64], strides = [1, 1, 1]} : vector<6x6x64xbf16> to vector<3x3x64xbf16>
    %50 = vector.shape_cast %49 : vector<3x3x64xbf16> to vector<9x64xbf16>
    %c6 = arith.constant 6 : index
    %c0_23 = arith.constant 0 : index
    %c0_24 = arith.constant 0 : index
    %51 = vector.load %arg3[%c6, %c0_23, %c0_24] : memref<16x64x128xbf16, #tpu.memory_space<vmem>>, vector<1x64x128xbf16>
    %52 = vector.shape_cast %51 : vector<1x64x128xbf16> to vector<64x128xbf16>
    %cst_25 = arith.constant dense<0.000000e+00> : vector<9x128xf32>
    %53 = tpu.matmul %50, %52, %cst_25 {dimension_numbers = #tpu.dot_dimension_numbers<[1], [0], [0], [1], [0, 0, 1, 1], [], []>} : vector<9x64xbf16>, vector<64x128xbf16>, vector<9x128xf32> -> vector<9x128xf32>
    %54 = arith.addf %48, %53 : vector<9x128xf32>
    %55 = vector.extract_strided_slice %11 {offsets = [1, 3, 0], sizes = [3, 3, 64], strides = [1, 1, 1]} : vector<6x6x64xbf16> to vector<3x3x64xbf16>
    %56 = vector.shape_cast %55 : vector<3x3x64xbf16> to vector<9x64xbf16>
    %c7 = arith.constant 7 : index
    %c0_26 = arith.constant 0 : index
    %c0_27 = arith.constant 0 : index
    %57 = vector.load %arg3[%c7, %c0_26, %c0_27] : memref<16x64x128xbf16, #tpu.memory_space<vmem>>, vector<1x64x128xbf16>
    %58 = vector.shape_cast %57 : vector<1x64x128xbf16> to vector<64x128xbf16>
    %cst_28 = arith.constant dense<0.000000e+00> : vector<9x128xf32>
    %59 = tpu.matmul %56, %58, %cst_28 {dimension_numbers = #tpu.dot_dimension_numbers<[1], [0], [0], [1], [0, 0, 1, 1], [], []>} : vector<9x64xbf16>, vector<64x128xbf16>, vector<9x128xf32> -> vector<9x128xf32>
    %60 = arith.addf %54, %59 : vector<9x128xf32>
    %61 = vector.extract_strided_slice %11 {offsets = [2, 0, 0], sizes = [3, 3, 64], strides = [1, 1, 1]} : vector<6x6x64xbf16> to vector<3x3x64xbf16>
    %62 = vector.shape_cast %61 : vector<3x3x64xbf16> to vector<9x64xbf16>
    %c8 = arith.constant 8 : index
    %c0_29 = arith.constant 0 : index
    %c0_30 = arith.constant 0 : index
    %63 = vector.load %arg3[%c8, %c0_29, %c0_30] : memref<16x64x128xbf16, #tpu.memory_space<vmem>>, vector<1x64x128xbf16>
    %64 = vector.shape_cast %63 : vector<1x64x128xbf16> to vector<64x128xbf16>
    %cst_31 = arith.constant dense<0.000000e+00> : vector<9x128xf32>
    %65 = tpu.matmul %62, %64, %cst_31 {dimension_numbers = #tpu.dot_dimension_numbers<[1], [0], [0], [1], [0, 0, 1, 1], [], []>} : vector<9x64xbf16>, vector<64x128xbf16>, vector<9x128xf32> -> vector<9x128xf32>
    %66 = arith.addf %60, %65 : vector<9x128xf32>
    %67 = vector.extract_strided_slice %11 {offsets = [2, 1, 0], sizes = [3, 3, 64], strides = [1, 1, 1]} : vector<6x6x64xbf16> to vector<3x3x64xbf16>
    %68 = vector.shape_cast %67 : vector<3x3x64xbf16> to vector<9x64xbf16>
    %c9 = arith.constant 9 : index
    %c0_32 = arith.constant 0 : index
    %c0_33 = arith.constant 0 : index
    %69 = vector.load %arg3[%c9, %c0_32, %c0_33] : memref<16x64x128xbf16, #tpu.memory_space<vmem>>, vector<1x64x128xbf16>
    %70 = vector.shape_cast %69 : vector<1x64x128xbf16> to vector<64x128xbf16>
    %cst_34 = arith.constant dense<0.000000e+00> : vector<9x128xf32>
    %71 = tpu.matmul %68, %70, %cst_34 {dimension_numbers = #tpu.dot_dimension_numbers<[1], [0], [0], [1], [0, 0, 1, 1], [], []>} : vector<9x64xbf16>, vector<64x128xbf16>, vector<9x128xf32> -> vector<9x128xf32>
    %72 = arith.addf %66, %71 : vector<9x128xf32>
    %73 = vector.extract_strided_slice %11 {offsets = [2, 2, 0], sizes = [3, 3, 64], strides = [1, 1, 1]} : vector<6x6x64xbf16> to vector<3x3x64xbf16>
    %74 = vector.shape_cast %73 : vector<3x3x64xbf16> to vector<9x64xbf16>
    %c10 = arith.constant 10 : index
    %c0_35 = arith.constant 0 : index
    %c0_36 = arith.constant 0 : index
    %75 = vector.load %arg3[%c10, %c0_35, %c0_36] : memref<16x64x128xbf16, #tpu.memory_space<vmem>>, vector<1x64x128xbf16>
    %76 = vector.shape_cast %75 : vector<1x64x128xbf16> to vector<64x128xbf16>
    %cst_37 = arith.constant dense<0.000000e+00> : vector<9x128xf32>
    %77 = tpu.matmul %74, %76, %cst_37 {dimension_numbers = #tpu.dot_dimension_numbers<[1], [0], [0], [1], [0, 0, 1, 1], [], []>} : vector<9x64xbf16>, vector<64x128xbf16>, vector<9x128xf32> -> vector<9x128xf32>
    %78 = arith.addf %72, %77 : vector<9x128xf32>
    %79 = vector.extract_strided_slice %11 {offsets = [2, 3, 0], sizes = [3, 3, 64], strides = [1, 1, 1]} : vector<6x6x64xbf16> to vector<3x3x64xbf16>
    %80 = vector.shape_cast %79 : vector<3x3x64xbf16> to vector<9x64xbf16>
    %c11 = arith.constant 11 : index
    %c0_38 = arith.constant 0 : index
    %c0_39 = arith.constant 0 : index
    %81 = vector.load %arg3[%c11, %c0_38, %c0_39] : memref<16x64x128xbf16, #tpu.memory_space<vmem>>, vector<1x64x128xbf16>
    %82 = vector.shape_cast %81 : vector<1x64x128xbf16> to vector<64x128xbf16>
    %cst_40 = arith.constant dense<0.000000e+00> : vector<9x128xf32>
    %83 = tpu.matmul %80, %82, %cst_40 {dimension_numbers = #tpu.dot_dimension_numbers<[1], [0], [0], [1], [0, 0, 1, 1], [], []>} : vector<9x64xbf16>, vector<64x128xbf16>, vector<9x128xf32> -> vector<9x128xf32>
    %84 = arith.addf %78, %83 : vector<9x128xf32>
    %85 = vector.extract_strided_slice %11 {offsets = [3, 0, 0], sizes = [3, 3, 64], strides = [1, 1, 1]} : vector<6x6x64xbf16> to vector<3x3x64xbf16>
    %86 = vector.shape_cast %85 : vector<3x3x64xbf16> to vector<9x64xbf16>
    %c12 = arith.constant 12 : index
    %c0_41 = arith.constant 0 : index
    %c0_42 = arith.constant 0 : index
    %87 = vector.load %arg3[%c12, %c0_41, %c0_42] : memref<16x64x128xbf16, #tpu.memory_space<vmem>>, vector<1x64x128xbf16>
    %88 = vector.shape_cast %87 : vector<1x64x128xbf16> to vector<64x128xbf16>
    %cst_43 = arith.constant dense<0.000000e+00> : vector<9x128xf32>
    %89 = tpu.matmul %86, %88, %cst_43 {dimension_numbers = #tpu.dot_dimension_numbers<[1], [0], [0], [1], [0, 0, 1, 1], [], []>} : vector<9x64xbf16>, vector<64x128xbf16>, vector<9x128xf32> -> vector<9x128xf32>
    %90 = arith.addf %84, %89 : vector<9x128xf32>
    %91 = vector.extract_strided_slice %11 {offsets = [3, 1, 0], sizes = [3, 3, 64], strides = [1, 1, 1]} : vector<6x6x64xbf16> to vector<3x3x64xbf16>
    %92 = vector.shape_cast %91 : vector<3x3x64xbf16> to vector<9x64xbf16>
    %c13 = arith.constant 13 : index
    %c0_44 = arith.constant 0 : index
    %c0_45 = arith.constant 0 : index
    %93 = vector.load %arg3[%c13, %c0_44, %c0_45] : memref<16x64x128xbf16, #tpu.memory_space<vmem>>, vector<1x64x128xbf16>
    %94 = vector.shape_cast %93 : vector<1x64x128xbf16> to vector<64x128xbf16>
    %cst_46 = arith.constant dense<0.000000e+00> : vector<9x128xf32>
    %95 = tpu.matmul %92, %94, %cst_46 {dimension_numbers = #tpu.dot_dimension_numbers<[1], [0], [0], [1], [0, 0, 1, 1], [], []>} : vector<9x64xbf16>, vector<64x128xbf16>, vector<9x128xf32> -> vector<9x128xf32>
    %96 = arith.addf %90, %95 : vector<9x128xf32>
    %97 = vector.extract_strided_slice %11 {offsets = [3, 2, 0], sizes = [3, 3, 64], strides = [1, 1, 1]} : vector<6x6x64xbf16> to vector<3x3x64xbf16>
    %98 = vector.shape_cast %97 : vector<3x3x64xbf16> to vector<9x64xbf16>
    %c14 = arith.constant 14 : index
    %c0_47 = arith.constant 0 : index
    %c0_48 = arith.constant 0 : index
    %99 = vector.load %arg3[%c14, %c0_47, %c0_48] : memref<16x64x128xbf16, #tpu.memory_space<vmem>>, vector<1x64x128xbf16>
    %100 = vector.shape_cast %99 : vector<1x64x128xbf16> to vector<64x128xbf16>
    %cst_49 = arith.constant dense<0.000000e+00> : vector<9x128xf32>
    %101 = tpu.matmul %98, %100, %cst_49 {dimension_numbers = #tpu.dot_dimension_numbers<[1], [0], [0], [1], [0, 0, 1, 1], [], []>} : vector<9x64xbf16>, vector<64x128xbf16>, vector<9x128xf32> -> vector<9x128xf32>
    %102 = arith.addf %96, %101 : vector<9x128xf32>
    %103 = vector.extract_strided_slice %11 {offsets = [3, 3, 0], sizes = [3, 3, 64], strides = [1, 1, 1]} : vector<6x6x64xbf16> to vector<3x3x64xbf16>
    %104 = vector.shape_cast %103 : vector<3x3x64xbf16> to vector<9x64xbf16>
    %c15 = arith.constant 15 : index
    %c0_50 = arith.constant 0 : index
    %c0_51 = arith.constant 0 : index
    %105 = vector.load %arg3[%c15, %c0_50, %c0_51] : memref<16x64x128xbf16, #tpu.memory_space<vmem>>, vector<1x64x128xbf16>
    %106 = vector.shape_cast %105 : vector<1x64x128xbf16> to vector<64x128xbf16>
    %cst_52 = arith.constant dense<0.000000e+00> : vector<9x128xf32>
    %107 = tpu.matmul %104, %106, %cst_52 {dimension_numbers = #tpu.dot_dimension_numbers<[1], [0], [0], [1], [0, 0, 1, 1], [], []>} : vector<9x64xbf16>, vector<64x128xbf16>, vector<9x128xf32> -> vector<9x128xf32>
    %108 = arith.addf %102, %107 : vector<9x128xf32>
    %c0_53 = arith.constant 0 : index
    %c0_54 = arith.constant 0 : index
    %109 = vector.load %arg4[%c0_53, %c0_54] : memref<1x128xf32, #tpu.memory_space<vmem>>, vector<1x128xf32>
    %110 = vector.broadcast %109 : vector<1x128xf32> to vector<9x128xf32>
    %111 = arith.addf %108, %110 : vector<9x128xf32>
    %112 = vector.shape_cast %111 : vector<9x128xf32> to vector<1x9x128xf32>
    %113 = arith.truncf %112 : vector<1x9x128xf32> to vector<1x9x128xbf16>
    %c0_55 = arith.constant 0 : index
    %c0_56 = arith.constant 0 : index
    %c0_57 = arith.constant 0 : index
    %114 = vector.load %arg5[%c0_55, %c0_56, %c0_57] : memref<1x9x128xbf16, #tpu.memory_space<vmem>>, vector<1x9x128xbf16>
    tpu.vector_store %arg5[%c0_55, %c0_56, %c0_57], %113 {strides = array<i32>} : memref<1x9x128xbf16, #tpu.memory_space<vmem>>, vector<1x9x128xbf16>,
    %c0_i32 = arith.constant 0 : i32
    %115 = arith.cmpi eq, %arg1, %c0_i32 : i32
    %116 = arith.extui %115 : i1 to i32
    %c0_i32_58 = arith.constant 0 : i32
    %117 = arith.cmpi ne, %116, %c0_i32_58 : i32
    scf.if %117 {
      %cst_67 = arith.constant 0.000000e+00 : f32
      %128 = vector.broadcast %cst_67 : f32 to vector<1x2x128xf32>
      %c0_68 = arith.constant 0 : index
      %c0_69 = arith.constant 0 : index
      %c0_70 = arith.constant 0 : index
      %129 = vector.load %arg6[%c0_68, %c0_69, %c0_70] : memref<1x2x128xf32, #tpu.memory_space<vmem>>, vector<1x2x128xf32>
      tpu.vector_store %arg6[%c0_68, %c0_69, %c0_70], %128 {strides = array<i32>} : memref<1x2x128xf32, #tpu.memory_space<vmem>>, vector<1x2x128xf32>,
    } else {
    }
    %cst_59 = arith.constant dense<0.000000e+00> : vector<128xf32>
    %118 = vector.multi_reduction <add>, %111, %cst_59 [0] : vector<9x128xf32> to vector<128xf32>
    %119 = vector.shape_cast %118 : vector<128xf32> to vector<1x128xf32>
    %120 = arith.mulf %111, %111 : vector<9x128xf32>
    %cst_60 = arith.constant dense<0.000000e+00> : vector<128xf32>
    %121 = vector.multi_reduction <add>, %120, %cst_60 [0] : vector<9x128xf32> to vector<128xf32>
    %122 = vector.shape_cast %121 : vector<128xf32> to vector<1x128xf32>
    %c0_61 = arith.constant 0 : index
    %c0_62 = arith.constant 0 : index
    %c0_63 = arith.constant 0 : index
    %123 = vector.load %arg6[%c0_61, %c0_62, %c0_63] : memref<1x2x128xf32, #tpu.memory_space<vmem>>, vector<1x2x128xf32>
    %124 = tpu.concatenate %119, %122 in 0 : vector<1x128xf32>, vector<1x128xf32> -> vector<2x128xf32>
    %125 = vector.shape_cast %124 : vector<2x128xf32> to vector<1x2x128xf32>
    %126 = arith.addf %123, %125 : vector<1x2x128xf32>
    %c0_64 = arith.constant 0 : index
    %c0_65 = arith.constant 0 : index
    %c0_66 = arith.constant 0 : index
    %127 = vector.load %arg6[%c0_64, %c0_65, %c0_66] : memref<1x2x128xf32, #tpu.memory_space<vmem>>, vector<1x2x128xf32>
    tpu.vector_store %arg6[%c0_64, %c0_65, %c0_66], %126 {strides = array<i32>} : memref<1x2x128xf32, #tpu.memory_space<vmem>>, vector<1x2x128xf32>,
    return
  }
  func.func @transform_0(%arg0: i32, %arg1: i32) -> (i32, i32, i32, i32) {
    %c0_i32 = arith.constant 0 : i32
    %c0_i32_0 = arith.constant 0 : i32
    %c0_i32_1 = arith.constant 0 : i32
    %c0_i32_2 = arith.constant 0 : i32
    return %arg0, %c0_i32, %c0_i32_0, %c0_i32_1 : i32, i32, i32, i32
  }
  func.func @transform_1(%arg0: i32, %arg1: i32) -> (i32, i32, i32) {
    %c0_i32 = arith.constant 0 : i32
    %c0_i32_0 = arith.constant 0 : i32
    %c0_i32_1 = arith.constant 0 : i32
    %c0_i32_2 = arith.constant 0 : i32
    return %c0_i32, %c0_i32_0, %c0_i32_1 : i32, i32, i32
  }
  func.func @transform_2(%arg0: i32, %arg1: i32) -> (i32, i32) {
    %c0_i32 = arith.constant 0 : i32
    %c0_i32_0 = arith.constant 0 : i32
    %c0_i32_1 = arith.constant 0 : i32
    return %c0_i32, %c0_i32_0 : i32, i32
  }
  func.func @transform_3(%arg0: i32, %arg1: i32) -> (i32, i32, i32) {
    %c0_i32 = arith.constant 0 : i32
    %c0_i32_0 = arith.constant 0 : i32
    return %arg0, %arg1, %c0_i32 : i32, i32, i32
  }
  func.func @transform_4(%arg0: i32, %arg1: i32) -> (i32, i32, i32) {
    %c0_i32 = arith.constant 0 : i32
    %c0_i32_0 = arith.constant 0 : i32
    %c0_i32_1 = arith.constant 0 : i32
    return %arg0, %c0_i32, %c0_i32_0 : i32, i32, i32
  }
}

module attributes {stable_mosaic.version = 11 : i64} {
  func.func @_conv_kernel(%arg0: i32, %arg1: i32, %arg2: memref<1x5x5x128xbf16, #tpu.memory_space<vmem>>, %arg3: memref<16x128x128xbf16, #tpu.memory_space<vmem>>, %arg4: memref<1x128xf32, #tpu.memory_space<vmem>>, %arg5: memref<1x4x128xf32, #tpu.memory_space<vmem>>) attributes {dimension_semantics = [#tpu.dimension_semantics<parallel>, #tpu.dimension_semantics<arbitrary>], iteration_bounds = array<i64: 2, 1>, scalar_prefetch = 0 : i64, scratch_operands = 0 : i64, tpu.core_type = #tpu.core_type<tc>, window_params = [{transform_indices = @transform_0, window_bounds = array<i64: 1, 5, 5, 128>}, {pipeline_mode = #tpu.pipeline_mode<synchronous>, transform_indices = @transform_1, window_bounds = array<i64: 16, 128, 128>}, {pipeline_mode = #tpu.pipeline_mode<synchronous>, transform_indices = @transform_2, window_bounds = array<i64: 1, 128>}, {transform_indices = @transform_3, window_bounds = array<i64: 1, 4, 128>}]} {
    %c2_i32 = arith.constant 2 : i32
    %0 = arith.muli %arg1, %c2_i32 : i32
    %1 = tpu.assume_multiple %0, 2 : i32
    %c0 = arith.constant 0 : index
    %2 = arith.index_cast %1 : i32 to index
    %c0_0 = arith.constant 0 : index
    %c0_1 = arith.constant 0 : index
    %3 = vector.load %arg2[%c0, %2, %c0_0, %c0_1] : memref<1x5x5x128xbf16, #tpu.memory_space<vmem>>, vector<1x5x5x128xbf16>
    %4 = vector.shape_cast %3 : vector<1x5x5x128xbf16> to vector<5x5x128xbf16>
    %5 = arith.extf %4 : vector<5x5x128xbf16> to vector<5x5x128xf32>
    %cst = arith.constant 0.000000e+00 : f32
    %6 = vector.broadcast %cst : f32 to vector<5x5x128xf32>
    %7 = arith.cmpf oge, %5, %6 : vector<5x5x128xf32>
    %cst_2 = arith.constant 2.000000e-01 : f32
    %8 = vector.broadcast %cst_2 : f32 to vector<5x5x128xf32>
    %9 = arith.mulf %8, %5 : vector<5x5x128xf32>
    %10 = arith.select %7, %5, %9 : vector<5x5x128xi1>, vector<5x5x128xf32>
    %11 = arith.truncf %10 : vector<5x5x128xf32> to vector<5x5x128xbf16>
    %cst_3 = arith.constant 0.000000e+00 : f32
    %12 = vector.broadcast %cst_3 : f32 to vector<4x128xf32>
    %13 = vector.extract_strided_slice %11 {offsets = [0, 0, 0], sizes = [2, 2, 128], strides = [1, 1, 1]} : vector<5x5x128xbf16> to vector<2x2x128xbf16>
    %14 = vector.shape_cast %13 : vector<2x2x128xbf16> to vector<4x128xbf16>
    %c0_4 = arith.constant 0 : index
    %c0_5 = arith.constant 0 : index
    %c0_6 = arith.constant 0 : index
    %15 = vector.load %arg3[%c0_4, %c0_5, %c0_6] : memref<16x128x128xbf16, #tpu.memory_space<vmem>>, vector<1x128x128xbf16>
    %16 = vector.shape_cast %15 : vector<1x128x128xbf16> to vector<128x128xbf16>
    %cst_7 = arith.constant dense<0.000000e+00> : vector<4x128xf32>
    %17 = tpu.matmul %14, %16, %cst_7 {dimension_numbers = #tpu.dot_dimension_numbers<[1], [0], [0], [1], [0, 0, 1, 1], [], []>} : vector<4x128xbf16>, vector<128x128xbf16>, vector<4x128xf32> -> vector<4x128xf32>
    %18 = arith.addf %12, %17 : vector<4x128xf32>
    %19 = vector.extract_strided_slice %11 {offsets = [0, 1, 0], sizes = [2, 2, 128], strides = [1, 1, 1]} : vector<5x5x128xbf16> to vector<2x2x128xbf16>
    %20 = vector.shape_cast %19 : vector<2x2x128xbf16> to vector<4x128xbf16>
    %c1 = arith.constant 1 : index
    %c0_8 = arith.constant 0 : index
    %c0_9 = arith.constant 0 : index
    %21 = vector.load %arg3[%c1, %c0_8, %c0_9] : memref<16x128x128xbf16, #tpu.memory_space<vmem>>, vector<1x128x128xbf16>
    %22 = vector.shape_cast %21 : vector<1x128x128xbf16> to vector<128x128xbf16>
    %cst_10 = arith.constant dense<0.000000e+00> : vector<4x128xf32>
    %23 = tpu.matmul %20, %22, %cst_10 {dimension_numbers = #tpu.dot_dimension_numbers<[1], [0], [0], [1], [0, 0, 1, 1], [], []>} : vector<4x128xbf16>, vector<128x128xbf16>, vector<4x128xf32> -> vector<4x128xf32>
    %24 = arith.addf %18, %23 : vector<4x128xf32>
    %25 = vector.extract_strided_slice %11 {offsets = [0, 2, 0], sizes = [2, 2, 128], strides = [1, 1, 1]} : vector<5x5x128xbf16> to vector<2x2x128xbf16>
    %26 = vector.shape_cast %25 : vector<2x2x128xbf16> to vector<4x128xbf16>
    %c2 = arith.constant 2 : index
    %c0_11 = arith.constant 0 : index
    %c0_12 = arith.constant 0 : index
    %27 = vector.load %arg3[%c2, %c0_11, %c0_12] : memref<16x128x128xbf16, #tpu.memory_space<vmem>>, vector<1x128x128xbf16>
    %28 = vector.shape_cast %27 : vector<1x128x128xbf16> to vector<128x128xbf16>
    %cst_13 = arith.constant dense<0.000000e+00> : vector<4x128xf32>
    %29 = tpu.matmul %26, %28, %cst_13 {dimension_numbers = #tpu.dot_dimension_numbers<[1], [0], [0], [1], [0, 0, 1, 1], [], []>} : vector<4x128xbf16>, vector<128x128xbf16>, vector<4x128xf32> -> vector<4x128xf32>
    %30 = arith.addf %24, %29 : vector<4x128xf32>
    %31 = vector.extract_strided_slice %11 {offsets = [0, 3, 0], sizes = [2, 2, 128], strides = [1, 1, 1]} : vector<5x5x128xbf16> to vector<2x2x128xbf16>
    %32 = vector.shape_cast %31 : vector<2x2x128xbf16> to vector<4x128xbf16>
    %c3 = arith.constant 3 : index
    %c0_14 = arith.constant 0 : index
    %c0_15 = arith.constant 0 : index
    %33 = vector.load %arg3[%c3, %c0_14, %c0_15] : memref<16x128x128xbf16, #tpu.memory_space<vmem>>, vector<1x128x128xbf16>
    %34 = vector.shape_cast %33 : vector<1x128x128xbf16> to vector<128x128xbf16>
    %cst_16 = arith.constant dense<0.000000e+00> : vector<4x128xf32>
    %35 = tpu.matmul %32, %34, %cst_16 {dimension_numbers = #tpu.dot_dimension_numbers<[1], [0], [0], [1], [0, 0, 1, 1], [], []>} : vector<4x128xbf16>, vector<128x128xbf16>, vector<4x128xf32> -> vector<4x128xf32>
    %36 = arith.addf %30, %35 : vector<4x128xf32>
    %37 = vector.extract_strided_slice %11 {offsets = [1, 0, 0], sizes = [2, 2, 128], strides = [1, 1, 1]} : vector<5x5x128xbf16> to vector<2x2x128xbf16>
    %38 = vector.shape_cast %37 : vector<2x2x128xbf16> to vector<4x128xbf16>
    %c4 = arith.constant 4 : index
    %c0_17 = arith.constant 0 : index
    %c0_18 = arith.constant 0 : index
    %39 = vector.load %arg3[%c4, %c0_17, %c0_18] : memref<16x128x128xbf16, #tpu.memory_space<vmem>>, vector<1x128x128xbf16>
    %40 = vector.shape_cast %39 : vector<1x128x128xbf16> to vector<128x128xbf16>
    %cst_19 = arith.constant dense<0.000000e+00> : vector<4x128xf32>
    %41 = tpu.matmul %38, %40, %cst_19 {dimension_numbers = #tpu.dot_dimension_numbers<[1], [0], [0], [1], [0, 0, 1, 1], [], []>} : vector<4x128xbf16>, vector<128x128xbf16>, vector<4x128xf32> -> vector<4x128xf32>
    %42 = arith.addf %36, %41 : vector<4x128xf32>
    %43 = vector.extract_strided_slice %11 {offsets = [1, 1, 0], sizes = [2, 2, 128], strides = [1, 1, 1]} : vector<5x5x128xbf16> to vector<2x2x128xbf16>
    %44 = vector.shape_cast %43 : vector<2x2x128xbf16> to vector<4x128xbf16>
    %c5 = arith.constant 5 : index
    %c0_20 = arith.constant 0 : index
    %c0_21 = arith.constant 0 : index
    %45 = vector.load %arg3[%c5, %c0_20, %c0_21] : memref<16x128x128xbf16, #tpu.memory_space<vmem>>, vector<1x128x128xbf16>
    %46 = vector.shape_cast %45 : vector<1x128x128xbf16> to vector<128x128xbf16>
    %cst_22 = arith.constant dense<0.000000e+00> : vector<4x128xf32>
    %47 = tpu.matmul %44, %46, %cst_22 {dimension_numbers = #tpu.dot_dimension_numbers<[1], [0], [0], [1], [0, 0, 1, 1], [], []>} : vector<4x128xbf16>, vector<128x128xbf16>, vector<4x128xf32> -> vector<4x128xf32>
    %48 = arith.addf %42, %47 : vector<4x128xf32>
    %49 = vector.extract_strided_slice %11 {offsets = [1, 2, 0], sizes = [2, 2, 128], strides = [1, 1, 1]} : vector<5x5x128xbf16> to vector<2x2x128xbf16>
    %50 = vector.shape_cast %49 : vector<2x2x128xbf16> to vector<4x128xbf16>
    %c6 = arith.constant 6 : index
    %c0_23 = arith.constant 0 : index
    %c0_24 = arith.constant 0 : index
    %51 = vector.load %arg3[%c6, %c0_23, %c0_24] : memref<16x128x128xbf16, #tpu.memory_space<vmem>>, vector<1x128x128xbf16>
    %52 = vector.shape_cast %51 : vector<1x128x128xbf16> to vector<128x128xbf16>
    %cst_25 = arith.constant dense<0.000000e+00> : vector<4x128xf32>
    %53 = tpu.matmul %50, %52, %cst_25 {dimension_numbers = #tpu.dot_dimension_numbers<[1], [0], [0], [1], [0, 0, 1, 1], [], []>} : vector<4x128xbf16>, vector<128x128xbf16>, vector<4x128xf32> -> vector<4x128xf32>
    %54 = arith.addf %48, %53 : vector<4x128xf32>
    %55 = vector.extract_strided_slice %11 {offsets = [1, 3, 0], sizes = [2, 2, 128], strides = [1, 1, 1]} : vector<5x5x128xbf16> to vector<2x2x128xbf16>
    %56 = vector.shape_cast %55 : vector<2x2x128xbf16> to vector<4x128xbf16>
    %c7 = arith.constant 7 : index
    %c0_26 = arith.constant 0 : index
    %c0_27 = arith.constant 0 : index
    %57 = vector.load %arg3[%c7, %c0_26, %c0_27] : memref<16x128x128xbf16, #tpu.memory_space<vmem>>, vector<1x128x128xbf16>
    %58 = vector.shape_cast %57 : vector<1x128x128xbf16> to vector<128x128xbf16>
    %cst_28 = arith.constant dense<0.000000e+00> : vector<4x128xf32>
    %59 = tpu.matmul %56, %58, %cst_28 {dimension_numbers = #tpu.dot_dimension_numbers<[1], [0], [0], [1], [0, 0, 1, 1], [], []>} : vector<4x128xbf16>, vector<128x128xbf16>, vector<4x128xf32> -> vector<4x128xf32>
    %60 = arith.addf %54, %59 : vector<4x128xf32>
    %61 = vector.extract_strided_slice %11 {offsets = [2, 0, 0], sizes = [2, 2, 128], strides = [1, 1, 1]} : vector<5x5x128xbf16> to vector<2x2x128xbf16>
    %62 = vector.shape_cast %61 : vector<2x2x128xbf16> to vector<4x128xbf16>
    %c8 = arith.constant 8 : index
    %c0_29 = arith.constant 0 : index
    %c0_30 = arith.constant 0 : index
    %63 = vector.load %arg3[%c8, %c0_29, %c0_30] : memref<16x128x128xbf16, #tpu.memory_space<vmem>>, vector<1x128x128xbf16>
    %64 = vector.shape_cast %63 : vector<1x128x128xbf16> to vector<128x128xbf16>
    %cst_31 = arith.constant dense<0.000000e+00> : vector<4x128xf32>
    %65 = tpu.matmul %62, %64, %cst_31 {dimension_numbers = #tpu.dot_dimension_numbers<[1], [0], [0], [1], [0, 0, 1, 1], [], []>} : vector<4x128xbf16>, vector<128x128xbf16>, vector<4x128xf32> -> vector<4x128xf32>
    %66 = arith.addf %60, %65 : vector<4x128xf32>
    %67 = vector.extract_strided_slice %11 {offsets = [2, 1, 0], sizes = [2, 2, 128], strides = [1, 1, 1]} : vector<5x5x128xbf16> to vector<2x2x128xbf16>
    %68 = vector.shape_cast %67 : vector<2x2x128xbf16> to vector<4x128xbf16>
    %c9 = arith.constant 9 : index
    %c0_32 = arith.constant 0 : index
    %c0_33 = arith.constant 0 : index
    %69 = vector.load %arg3[%c9, %c0_32, %c0_33] : memref<16x128x128xbf16, #tpu.memory_space<vmem>>, vector<1x128x128xbf16>
    %70 = vector.shape_cast %69 : vector<1x128x128xbf16> to vector<128x128xbf16>
    %cst_34 = arith.constant dense<0.000000e+00> : vector<4x128xf32>
    %71 = tpu.matmul %68, %70, %cst_34 {dimension_numbers = #tpu.dot_dimension_numbers<[1], [0], [0], [1], [0, 0, 1, 1], [], []>} : vector<4x128xbf16>, vector<128x128xbf16>, vector<4x128xf32> -> vector<4x128xf32>
    %72 = arith.addf %66, %71 : vector<4x128xf32>
    %73 = vector.extract_strided_slice %11 {offsets = [2, 2, 0], sizes = [2, 2, 128], strides = [1, 1, 1]} : vector<5x5x128xbf16> to vector<2x2x128xbf16>
    %74 = vector.shape_cast %73 : vector<2x2x128xbf16> to vector<4x128xbf16>
    %c10 = arith.constant 10 : index
    %c0_35 = arith.constant 0 : index
    %c0_36 = arith.constant 0 : index
    %75 = vector.load %arg3[%c10, %c0_35, %c0_36] : memref<16x128x128xbf16, #tpu.memory_space<vmem>>, vector<1x128x128xbf16>
    %76 = vector.shape_cast %75 : vector<1x128x128xbf16> to vector<128x128xbf16>
    %cst_37 = arith.constant dense<0.000000e+00> : vector<4x128xf32>
    %77 = tpu.matmul %74, %76, %cst_37 {dimension_numbers = #tpu.dot_dimension_numbers<[1], [0], [0], [1], [0, 0, 1, 1], [], []>} : vector<4x128xbf16>, vector<128x128xbf16>, vector<4x128xf32> -> vector<4x128xf32>
    %78 = arith.addf %72, %77 : vector<4x128xf32>
    %79 = vector.extract_strided_slice %11 {offsets = [2, 3, 0], sizes = [2, 2, 128], strides = [1, 1, 1]} : vector<5x5x128xbf16> to vector<2x2x128xbf16>
    %80 = vector.shape_cast %79 : vector<2x2x128xbf16> to vector<4x128xbf16>
    %c11 = arith.constant 11 : index
    %c0_38 = arith.constant 0 : index
    %c0_39 = arith.constant 0 : index
    %81 = vector.load %arg3[%c11, %c0_38, %c0_39] : memref<16x128x128xbf16, #tpu.memory_space<vmem>>, vector<1x128x128xbf16>
    %82 = vector.shape_cast %81 : vector<1x128x128xbf16> to vector<128x128xbf16>
    %cst_40 = arith.constant dense<0.000000e+00> : vector<4x128xf32>
    %83 = tpu.matmul %80, %82, %cst_40 {dimension_numbers = #tpu.dot_dimension_numbers<[1], [0], [0], [1], [0, 0, 1, 1], [], []>} : vector<4x128xbf16>, vector<128x128xbf16>, vector<4x128xf32> -> vector<4x128xf32>
    %84 = arith.addf %78, %83 : vector<4x128xf32>
    %85 = vector.extract_strided_slice %11 {offsets = [3, 0, 0], sizes = [2, 2, 128], strides = [1, 1, 1]} : vector<5x5x128xbf16> to vector<2x2x128xbf16>
    %86 = vector.shape_cast %85 : vector<2x2x128xbf16> to vector<4x128xbf16>
    %c12 = arith.constant 12 : index
    %c0_41 = arith.constant 0 : index
    %c0_42 = arith.constant 0 : index
    %87 = vector.load %arg3[%c12, %c0_41, %c0_42] : memref<16x128x128xbf16, #tpu.memory_space<vmem>>, vector<1x128x128xbf16>
    %88 = vector.shape_cast %87 : vector<1x128x128xbf16> to vector<128x128xbf16>
    %cst_43 = arith.constant dense<0.000000e+00> : vector<4x128xf32>
    %89 = tpu.matmul %86, %88, %cst_43 {dimension_numbers = #tpu.dot_dimension_numbers<[1], [0], [0], [1], [0, 0, 1, 1], [], []>} : vector<4x128xbf16>, vector<128x128xbf16>, vector<4x128xf32> -> vector<4x128xf32>
    %90 = arith.addf %84, %89 : vector<4x128xf32>
    %91 = vector.extract_strided_slice %11 {offsets = [3, 1, 0], sizes = [2, 2, 128], strides = [1, 1, 1]} : vector<5x5x128xbf16> to vector<2x2x128xbf16>
    %92 = vector.shape_cast %91 : vector<2x2x128xbf16> to vector<4x128xbf16>
    %c13 = arith.constant 13 : index
    %c0_44 = arith.constant 0 : index
    %c0_45 = arith.constant 0 : index
    %93 = vector.load %arg3[%c13, %c0_44, %c0_45] : memref<16x128x128xbf16, #tpu.memory_space<vmem>>, vector<1x128x128xbf16>
    %94 = vector.shape_cast %93 : vector<1x128x128xbf16> to vector<128x128xbf16>
    %cst_46 = arith.constant dense<0.000000e+00> : vector<4x128xf32>
    %95 = tpu.matmul %92, %94, %cst_46 {dimension_numbers = #tpu.dot_dimension_numbers<[1], [0], [0], [1], [0, 0, 1, 1], [], []>} : vector<4x128xbf16>, vector<128x128xbf16>, vector<4x128xf32> -> vector<4x128xf32>
    %96 = arith.addf %90, %95 : vector<4x128xf32>
    %97 = vector.extract_strided_slice %11 {offsets = [3, 2, 0], sizes = [2, 2, 128], strides = [1, 1, 1]} : vector<5x5x128xbf16> to vector<2x2x128xbf16>
    %98 = vector.shape_cast %97 : vector<2x2x128xbf16> to vector<4x128xbf16>
    %c14 = arith.constant 14 : index
    %c0_47 = arith.constant 0 : index
    %c0_48 = arith.constant 0 : index
    %99 = vector.load %arg3[%c14, %c0_47, %c0_48] : memref<16x128x128xbf16, #tpu.memory_space<vmem>>, vector<1x128x128xbf16>
    %100 = vector.shape_cast %99 : vector<1x128x128xbf16> to vector<128x128xbf16>
    %cst_49 = arith.constant dense<0.000000e+00> : vector<4x128xf32>
    %101 = tpu.matmul %98, %100, %cst_49 {dimension_numbers = #tpu.dot_dimension_numbers<[1], [0], [0], [1], [0, 0, 1, 1], [], []>} : vector<4x128xbf16>, vector<128x128xbf16>, vector<4x128xf32> -> vector<4x128xf32>
    %102 = arith.addf %96, %101 : vector<4x128xf32>
    %103 = vector.extract_strided_slice %11 {offsets = [3, 3, 0], sizes = [2, 2, 128], strides = [1, 1, 1]} : vector<5x5x128xbf16> to vector<2x2x128xbf16>
    %104 = vector.shape_cast %103 : vector<2x2x128xbf16> to vector<4x128xbf16>
    %c15 = arith.constant 15 : index
    %c0_50 = arith.constant 0 : index
    %c0_51 = arith.constant 0 : index
    %105 = vector.load %arg3[%c15, %c0_50, %c0_51] : memref<16x128x128xbf16, #tpu.memory_space<vmem>>, vector<1x128x128xbf16>
    %106 = vector.shape_cast %105 : vector<1x128x128xbf16> to vector<128x128xbf16>
    %cst_52 = arith.constant dense<0.000000e+00> : vector<4x128xf32>
    %107 = tpu.matmul %104, %106, %cst_52 {dimension_numbers = #tpu.dot_dimension_numbers<[1], [0], [0], [1], [0, 0, 1, 1], [], []>} : vector<4x128xbf16>, vector<128x128xbf16>, vector<4x128xf32> -> vector<4x128xf32>
    %108 = arith.addf %102, %107 : vector<4x128xf32>
    %c0_53 = arith.constant 0 : index
    %c0_54 = arith.constant 0 : index
    %109 = vector.load %arg4[%c0_53, %c0_54] : memref<1x128xf32, #tpu.memory_space<vmem>>, vector<1x128xf32>
    %110 = vector.broadcast %109 : vector<1x128xf32> to vector<4x128xf32>
    %111 = arith.addf %108, %110 : vector<4x128xf32>
    %112 = vector.shape_cast %111 : vector<4x128xf32> to vector<1x4x128xf32>
    %c0_55 = arith.constant 0 : index
    %c0_56 = arith.constant 0 : index
    %c0_57 = arith.constant 0 : index
    %113 = vector.load %arg5[%c0_55, %c0_56, %c0_57] : memref<1x4x128xf32, #tpu.memory_space<vmem>>, vector<1x4x128xf32>
    tpu.vector_store %arg5[%c0_55, %c0_56, %c0_57], %112 {strides = array<i32>} : memref<1x4x128xf32, #tpu.memory_space<vmem>>, vector<1x4x128xf32>,
    return
  }
  func.func @transform_0(%arg0: i32, %arg1: i32) -> (i32, i32, i32, i32) {
    %c0_i32 = arith.constant 0 : i32
    %c0_i32_0 = arith.constant 0 : i32
    %c0_i32_1 = arith.constant 0 : i32
    %c0_i32_2 = arith.constant 0 : i32
    return %arg0, %c0_i32, %c0_i32_0, %c0_i32_1 : i32, i32, i32, i32
  }
  func.func @transform_1(%arg0: i32, %arg1: i32) -> (i32, i32, i32) {
    %c0_i32 = arith.constant 0 : i32
    %c0_i32_0 = arith.constant 0 : i32
    %c0_i32_1 = arith.constant 0 : i32
    %c0_i32_2 = arith.constant 0 : i32
    return %c0_i32, %c0_i32_0, %c0_i32_1 : i32, i32, i32
  }
  func.func @transform_2(%arg0: i32, %arg1: i32) -> (i32, i32) {
    %c0_i32 = arith.constant 0 : i32
    %c0_i32_0 = arith.constant 0 : i32
    %c0_i32_1 = arith.constant 0 : i32
    return %c0_i32, %c0_i32_0 : i32, i32
  }
  func.func @transform_3(%arg0: i32, %arg1: i32) -> (i32, i32, i32) {
    %c0_i32 = arith.constant 0 : i32
    %c0_i32_0 = arith.constant 0 : i32
    return %arg0, %arg1, %c0_i32 : i32, i32, i32
  }
}

</mosaic_0001>

<llo_original>
// kernel: _lambda_.5
$region0: #{_lambda_.5}
  #allocation0 [shape = 'u32[]', space=smem, size = 0x4, offset = 0x4, fixed_abs, tag = 'smem constant byte address 0x4 - core index']
  #allocation1 [shape = 'u32[144,128]{1,0:T(1,128)}', space=vmem, size = 0x12000, scoped, tag = 'internal scratch']
  %s0 = inlined_call_operand.vmem [shape: bf16[2,17,17,12], index: 0, kind: input, shape index: {}]
  %s1 = inlined_call_operand.vmem [shape: bf16[4,12,16], index: 1, kind: input, shape index: {}]
  %s2 = inlined_call_operand.vmem [shape: f32[1,16], index: 2, kind: input, shape index: {}]
  %s3 = inlined_call_operand.vmem [shape: bf16[2,256,16], index: 3, kind: output, shape index: {}]
  %s4 = sld [smem:[#allocation0]]
  $region45: #{_lambda_.5} parent=0
    _
  %s6 = ssub.s32 1, %s4
  %s7 = scalar_select 0, %s6, %s4
  loop: start=0, step=1, limit=4
  $region2: #{_lambda_.5} parent=0 // loop_pre_header
    _
  $region3: #{_lambda_.5} parent=0 // loop_header
    %s9 = sphi 0, %s13
    %p10 = scmp.ge.s32.totalorder %s9, 4
    %s16 = sphi 0, %s28
    %s17 = sphi 0, %s24
    %s18 = sphi 0, %s16
    %s19 = sphi 0, %s17
    %s20 = sphi 0, %s18
    %s21 = sphi 0, %s19
    %s31 = sphi 0, %s33
    %s34 = sphi 0, %s31
    %s35 = sphi 0, %s34
    %s51 = sphi 0, %s35
    %s55 = sphi 0, %s55
    %s57 = sphi 0, %s55
    %s58 = sphi 0, %s57
    %s72 = sphi 0, %s58
    %s76 = sphi 0, %s76
    %s78 = sphi 0, %s76
    %s79 = sphi 0, %s78
    %s93 = sphi 0, %s79
    %s101 = sphi 0, %s103
    %s104 = sphi 0, %s101
    %s105 = sphi 0, %s104
    %s121 = sphi 0, %s105
  $region4: #{_lambda_.5} parent=0 // loop_header_branch
    %12 = sbr.rel (%p10) target = $region8
  $region5: #{_lambda_.5} parent=0 // loop_body
    %s14 = ssub.s32 %s9, 1
    %s15 = ssub.s32 %s9, 2
    %s22 = sadd.s32 1, %s17
    %p23 = scmp.ge.s32.totalorder %s22, 1
    %s24 = scalar_select %p23, 0, %s22
    %s25 = sadd.s32 1, %s16
    %s26 = scalar_select %p23, %s25, %s16
    %p27 = scmp.ge.s32.totalorder %s26, 2
    %s28 = scalar_select %p27, 0, %s26
    %s29 = ssub.s32 %s16, %s28
    %p30 = scmp.eq.s32.totalorder %s29, 0
    %s32 = sadd.s32 %s31, 1
    %s33 = scalar_select %p30, %s31, %s32
    %p36 = pneg %p30
    %p37 = scmp.eq.s32.totalorder %s9, 1
    %p38 = por %p36, %p37
    %p39 = scmp.ne.s32.totalorder %s31, %s34
    %p40 = scmp.eq.s32.totalorder %s9, 0
    %p41 = por %p39, %p40
    %p42 = scmp.ne.s32.totalorder %s31, %s34
    %p43 = scmp.eq.s32.totalorder %s14, 1
    %p44 = por %p42, %p43
    %p45 = scmp.ne.s32.totalorder %s34, %s35
    %p46 = scmp.eq.s32.totalorder %s14, 0
    %p47 = por %p45, %p46
    %p48 = scmp.ne.s32.totalorder %s34, %s35
    %p49 = scmp.eq.s32.totalorder %s15, 1
    %p50 = por %p48, %p49
    %p52 = scmp.ne.s32.totalorder %s35, %s51
    %p53 = scmp.eq.s32.totalorder %s15, 0
    %p54 = por %p52, %p53
    %s56 = sadd.s32 %s55, 1
    %p59 = scmp.eq.s32.totalorder %s9, 1
    %p60 = scmp.ne.s32.totalorder %s55, %s57
    %p61 = scmp.eq.s32.totalorder %s9, 0
    %p62 = por %p60, %p61
    %p63 = scmp.ne.s32.totalorder %s55, %s57
    %p64 = scmp.eq.s32.totalorder %s14, 1
    %p65 = por %p63, %p64
    %p66 = scmp.ne.s32.totalorder %s57, %s58
    %p67 = scmp.eq.s32.totalorder %s14, 0
    %p68 = por %p66, %p67
    %p69 = scmp.ne.s32.totalorder %s57, %s58
    %p70 = scmp.eq.s32.totalorder %s15, 1
    %p71 = por %p69, %p70
    %p73 = scmp.ne.s32.totalorder %s58, %s72
    %p74 = scmp.eq.s32.totalorder %s15, 0
    %p75 = por %p73, %p74
    %s77 = sadd.s32 %s76, 1
    %p80 = scmp.eq.s32.totalorder %s9, 1
    %p81 = scmp.ne.s32.totalorder %s76, %s78
    %p82 = scmp.eq.s32.totalorder %s9, 0
    %p83 = por %p81, %p82
    %p84 = scmp.ne.s32.totalorder %s76, %s78
    %p85 = scmp.eq.s32.totalorder %s14, 1
    %p86 = por %p84, %p85
    %p87 = scmp.ne.s32.totalorder %s78, %s79
    %p88 = scmp.eq.s32.totalorder %s14, 0
    %p89 = por %p87, %p88
    %p90 = scmp.ne.s32.totalorder %s78, %s79
    %p91 = scmp.eq.s32.totalorder %s15, 1
    %p92 = por %p90, %p91
    %p94 = scmp.ne.s32.totalorder %s79, %s93
    %p95 = scmp.eq.s32.totalorder %s15, 0
    %p96 = por %p94, %p95
    %s97 = ssub.s32 %s16, %s28
    %s98 = ssub.s32 %s17, %s24
    %s99 = sor.u32 %s97, %s98
    %p100 = scmp.eq.s32.totalorder %s99, 0
    %s102 = sadd.s32 %s101, 1
    %s103 = scalar_select %p100, %s101, %s102
    %p106 = pneg %p100
    %p107 = scmp.eq.s32.totalorder %s9, 1
    %p108 = por %p106, %p107
    %p109 = scmp.ne.s32.totalorder %s101, %s104
    %p110 = scmp.eq.s32.totalorder %s9, 0
    %p111 = por %p109, %p110
    %p112 = scmp.ne.s32.totalorder %s101, %s104
    %p113 = scmp.eq.s32.totalorder %s14, 1
    %p114 = por %p112, %p113
    %p115 = scmp.ne.s32.totalorder %s104, %s105
    %p116 = scmp.eq.s32.totalorder %s14, 0
    %p117 = por %p115, %p116
    %p118 = scmp.ne.s32.totalorder %s104, %s105
    %p119 = scmp.eq.s32.totalorder %s15, 1
    %p120 = por %p118, %p119
    %p122 = scmp.ne.s32.totalorder %s105, %s121
    %p123 = scmp.eq.s32.totalorder %s15, 0
    %p124 = por %p122, %p123
    %p125 = scmp.le.s32.totalorder 1, %s9
    %p126 = scmp.lt.s32.totalorder %s9, 3
    %p127 = pnand %p125, %p126
    %p128 = pneg %p127
    // Predicated region
    $region9: #{_lambda_.5} parent=5 // pred_check
      _
    $region10: #{_lambda_.5} parent=5 // pred_check_branch
      %130 = sbr.rel (%p127) target = $region12
    $region11: #{_lambda_.5} parent=5 // pred_region
      %s131 = ssub.s32 %s9, 1
      // Predicated region
      $region13: #{_lambda_.5} parent=11 // pred_check
        %p132 = pneg %p68
      $region14: #{_lambda_.5} parent=11 // pred_check_branch
        %134 = sbr.rel (%p132) target = $region16
      $region15: #{_lambda_.5} parent=11 // pred_region
        _
      $region16: #{_lambda_.5} parent=11 // pred_fallthru
        _
      // Predicated region
      $region17: #{_lambda_.5} parent=11 // pred_check
        %p135 = pneg %p89
      $region18: #{_lambda_.5} parent=11 // pred_check_branch
        %137 = sbr.rel (%p135) target = $region20
      $region19: #{_lambda_.5} parent=11 // pred_region
        _
      $region20: #{_lambda_.5} parent=11 // pred_fallthru
        _
    $region12: #{_lambda_.5} parent=5 // pred_fallthru
      _
    %p138 = scmp.lt.s32.totalorder %s9, 2
    // Predicated region
    $region21: #{_lambda_.5} parent=5 // pred_check
      %p139 = pneg %p138
    $region22: #{_lambda_.5} parent=5 // pred_check_branch
      %141 = sbr.rel (%p139) target = $region24
    $region23: #{_lambda_.5} parent=5 // pred_region
      // Predicated region
      $region25: #{_lambda_.5} parent=23 // pred_check
        %p142 = pneg %p41
      $region26: #{_lambda_.5} parent=23 // pred_check_branch
        %144 = sbr.rel (%p142) target = $region28
      $region27: #{_lambda_.5} parent=23 // pred_region
        %p145 = scmp.lt.s32.totalorder %s16, 1
        %s146 = scalar_select %p145, %s16, 1
        %s147 = smul.addr %s146, 51
        %s148 = smul.addr %s147, 4
        %s149 = scalar_lea.vmem %s0, %s148
      $region28: #{_lambda_.5} parent=23 // pred_fallthru
        _
    $region24: #{_lambda_.5} parent=5 // pred_fallthru
      _
    %p150 = scmp.le.s32.totalorder 1, %s9
    %p151 = scmp.lt.s32.totalorder %s9, 3
    %p152 = pnand %p150, %p151
    %p153 = pneg %p152
    // Predicated region
    $region29: #{_lambda_.5} parent=5 // pred_check
      _
    $region30: #{_lambda_.5} parent=5 // pred_check_branch
      %155 = sbr.rel (%p152) target = $region32
    $region31: #{_lambda_.5} parent=5 // pred_region
      %s156 = ssub.s32 %s9, 1
      %p157 = scmp.lt.s32.totalorder %s18, 1
      %s158 = scalar_select %p157, %s18, 1
      %s159 = smul.addr %s158, 51
      %s160 = smul.addr %s159, 4
      %s161 = scalar_lea.vmem %s0, %s160
      %p162 = pneg %p47
      %p163 = pneg %p44
      %p164 = pneg %p68
      %p165 = pneg %p65
      %p166 = pneg %p89
      %p167 = pneg %p86
      %p168 = pneg %p117
      %p169 = pneg %p114
      %s170 = smul.u32 32, %s19
      %p171 = scmp.lt.s32.totalorder %s18, 1
      %s172 = scalar_select %p171, %s18, 1
      %p173 = scmp.lt.s32.totalorder %s170, 31
      %s174 = scalar_select %p173, %s170, 31
      %s175 = smul.addr %s172, 32
      %s176 = sadd.s32 %s174, %s175
      %s177 = smul.addr %s176, 4
      %s178 = scalar_lea.vmem %s3, %s177
      %p179 = scmp.lt.s32.totalorder %s18, 1
      %s180 = scalar_select %p179, %s18, 1
      %s181 = smul.addr %s180, 51
      %s182 = smul.addr %s181, 4
      %s183 = scalar_lea.vmem %s0, %s182
      %s184 = smul.u32 32, %s19
      %p185 = scmp.lt.s32.totalorder %s18, 1
      %s186 = scalar_select %p185, %s18, 1
      %p187 = scmp.lt.s32.totalorder %s184, 31
      %s188 = scalar_select %p187, %s184, 31
      %s189 = smul.addr %s186, 32
      %s190 = sadd.s32 %s188, %s189
      %s191 = smul.addr %s190, 4
      %s192 = scalar_lea.vmem %s3, %s191
      %s193 = smul.u32 32, %s19
      %s195 = smul.u32 %s19, 16
      %s196 = smul.u32 %s195, 3
      %s197 = smul.addr %s196, 4
      %s198 = scalar_lea.vmem %s183, %s197
      %v199 = vld [vmem:[%s198] sm:$0xf]
      %v200 = vld [vmem:[%s198 + $0x4] sm:$0xf]
      %v201 = vld [vmem:[%s198 + $0x8] sm:$0x1]
      %v202 = vld [vmem:[%s198 + $0xc] sm:$0xf]
      %v203 = vld [vmem:[%s198 + $0x10] sm:$0xf]
      %v204 = vld [vmem:[%s198 + $0x14] sm:$0x1]
      %v205 = vld [vmem:[%s198 + $0x18] sm:$0xf]
      %v206 = vld [vmem:[%s198 + $0x1c] sm:$0xf]
      %v207 = vld [vmem:[%s198 + $0x20] sm:$0x1]
      %v208 = vld [vmem:[%s198 + $0x24] sm:$0xf]
      %v209 = vld [vmem:[%s198 + $0x28] sm:$0xf]
      %v210 = vld [vmem:[%s198 + $0x2c] sm:$0x1]
      %v211 = vld [vmem:[%s198 + $0x30] sm:$0xf]
      %v212 = vld [vmem:[%s198 + $0x34] sm:$0xf]
      %v213 = vld [vmem:[%s198 + $0x38] sm:$0x1]
      %v214 = vld [vmem:[%s198 + $0x3c] sm:$0xf]
      %v215 = vld [vmem:[%s198 + $0x40] sm:$0xf]
      %v216 = vld [vmem:[%s198 + $0x44] sm:$0x1]
      %v217 = vld [vmem:[%s198 + $0x48] sm:$0xf]
      %v218 = vld [vmem:[%s198 + $0x4c] sm:$0xf]
      %v219 = vld [vmem:[%s198 + $0x50] sm:$0x1]
      %v220 = vld [vmem:[%s198 + $0x54] sm:$0xf]
      %v221 = vld [vmem:[%s198 + $0x58] sm:$0xf]
      %v222 = vld [vmem:[%s198 + $0x5c] sm:$0x1]
      %v223 = vld [vmem:[%s198 + $0x60] sm:$0xf]
      %v224 = vld [vmem:[%s198 + $0x64] sm:$0xf]
      %v225 = vld [vmem:[%s198 + $0x68] sm:$0x1]
      %v226 = vld [vmem:[%s198 + $0x6c] sm:$0xf]
      %v227 = vld [vmem:[%s198 + $0x70] sm:$0xf]
      %v228 = vld [vmem:[%s198 + $0x74] sm:$0x1]
      %v229 = vld [vmem:[%s198 + $0x78] sm:$0xf]
      %v230 = vld [vmem:[%s198 + $0x7c] sm:$0xf]
      %v231 = vld [vmem:[%s198 + $0x80] sm:$0x1]
      %v232 = vld [vmem:[%s198 + $0x84] sm:$0xf]
      %v233 = vld [vmem:[%s198 + $0x88] sm:$0xf]
      %v234 = vld [vmem:[%s198 + $0x8c] sm:$0x1]
      %v235 = vld [vmem:[%s198 + $0x90] sm:$0xf]
      %v236 = vld [vmem:[%s198 + $0x94] sm:$0xf]
      %v237 = vld [vmem:[%s198 + $0x98] sm:$0x1]
      %v238 = vld [vmem:[%s198 + $0x9c] sm:$0xf]
      %v239 = vld [vmem:[%s198 + $0xa0] sm:$0xf]
      %v240 = vld [vmem:[%s198 + $0xa4] sm:$0x1]
      %v241 = vld [vmem:[%s198 + $0xa8] sm:$0xf]
      %v242 = vld [vmem:[%s198 + $0xac] sm:$0xf]
      %v243 = vld [vmem:[%s198 + $0xb0] sm:$0x1]
      %v244 = vld [vmem:[%s198 + $0xb4] sm:$0xf]
      %v245 = vld [vmem:[%s198 + $0xb8] sm:$0xf]
      %v246 = vld [vmem:[%s198 + $0xbc] sm:$0x1]
      %v247 = vld [vmem:[%s198 + $0xc0] sm:$0xf]
      %v248 = vld [vmem:[%s198 + $0xc4] sm:$0xf]
      %v249 = vld [vmem:[%s198 + $0xc8] sm:$0x1]
      %v250 = vld [vmem:[%s1] sm:$0xf]
      %v251 = vld [vmem:[%s1 + $0x4] sm:$0x3]
      %vm252 = vsmask.f32 3328
      %vm253 = vsmask.f32 7440
      %vm254 = vmor %vm252, %vm253
      %v256 = vshrl.u32 %v199, 16
      %v258 = vrot.slane %v256, 4
      %v259 = vshll.u32 %v199, 16
      %v261 = vrot.slane %v259, 5
      %v262 = vor.u32 %v258, %v261
      %v263 = vrot.slane %v262, 4
      %v265 = vshll.u32 %v200, 16
      %v267 = vrot.slane %v265, 5
      %v268 = vsel %vm254, %v263, %v267
      %v269 = vshrl.u32 %v200, 16
      %v271 = vrot.slane %v269, 4
      %v272 = vor.u32 %v271, %v267
      %v273 = vrot.slane %v272, 4
      %v275 = vshll.u32 %v201, 16
      %v277 = vrot.slane %v275, 5
      %v278 = vsel %vm254, %v273, %v277
      %v280 = vshrl.u32 %v202, 16
      %v282 = vrot.slane %v280, 4
      %v283 = vshll.u32 %v202, 16
      %v285 = vrot.slane %v283, 5
      %v286 = vor.u32 %v282, %v285
      %v287 = vrot.slane %v286, 4
      %v289 = vshll.u32 %v203, 16
      %v291 = vrot.slane %v289, 5
      %v292 = vsel %vm254, %v287, %v291
      %v293 = vshrl.u32 %v203, 16
      %v295 = vrot.slane %v293, 4
      %v296 = vor.u32 %v295, %v291
      %v297 = vrot.slane %v296, 4
      %v299 = vshll.u32 %v204, 16
      %v301 = vrot.slane %v299, 5
      %v302 = vsel %vm254, %v297, %v301
      %v304 = vshrl.u32 %v205, 16
      %v306 = vrot.slane %v304, 4
      %v307 = vshll.u32 %v205, 16
      %v309 = vrot.slane %v307, 5
      %v310 = vor.u32 %v306, %v309
      %v311 = vrot.slane %v310, 4
      %v313 = vshll.u32 %v206, 16
      %v315 = vrot.slane %v313, 5
      %v316 = vsel %vm254, %v311, %v315
      %v317 = vshrl.u32 %v206, 16
      %v319 = vrot.slane %v317, 4
      %v320 = vor.u32 %v319, %v315
      %v321 = vrot.slane %v320, 4
      %v323 = vshll.u32 %v207, 16
      %v325 = vrot.slane %v323, 5
      %v326 = vsel %vm254, %v321, %v325
      %v328 = vshrl.u32 %v208, 16
      %v330 = vrot.slane %v328, 4
      %v331 = vshll.u32 %v208, 16
      %v333 = vrot.slane %v331, 5
      %v334 = vor.u32 %v330, %v333
      %v335 = vrot.slane %v334, 4
      %v337 = vshll.u32 %v209, 16
      %v339 = vrot.slane %v337, 5
      %v340 = vsel %vm254, %v335, %v339
      %v341 = vshrl.u32 %v209, 16
      %v343 = vrot.slane %v341, 4
      %v344 = vor.u32 %v343, %v339
      %v345 = vrot.slane %v344, 4
      %v347 = vshll.u32 %v210, 16
      %v349 = vrot.slane %v347, 5
      %v350 = vsel %vm254, %v345, %v349
      %v352 = vshrl.u32 %v211, 16
      %v354 = vrot.slane %v352, 4
      %v355 = vshll.u32 %v211, 16
      %v357 = vrot.slane %v355, 5
      %v358 = vor.u32 %v354, %v357
      %v359 = vrot.slane %v358, 4
      %v361 = vshll.u32 %v212, 16
      %v363 = vrot.slane %v361, 5
      %v364 = vsel %vm254, %v359, %v363
      %v365 = vshrl.u32 %v212, 16
      %v367 = vrot.slane %v365, 4
      %v368 = vor.u32 %v367, %v363
      %v369 = vrot.slane %v368, 4
      %v371 = vshll.u32 %v213, 16
      %v373 = vrot.slane %v371, 5
      %v374 = vsel %vm254, %v369, %v373
      %v376 = vshrl.u32 %v214, 16
      %v378 = vrot.slane %v376, 4
      %v379 = vshll.u32 %v214, 16
      %v381 = vrot.slane %v379, 5
      %v382 = vor.u32 %v378, %v381
      %v383 = vrot.slane %v382, 4
      %v385 = vshll.u32 %v215, 16
      %v387 = vrot.slane %v385, 5
      %v388 = vsel %vm254, %v383, %v387
      %v389 = vshrl.u32 %v215, 16
      %v391 = vrot.slane %v389, 4
      %v392 = vor.u32 %v391, %v387
      %v393 = vrot.slane %v392, 4
      %v395 = vshll.u32 %v216, 16
      %v397 = vrot.slane %v395, 5
      %v398 = vsel %vm254, %v393, %v397
      %v400 = vshrl.u32 %v217, 16
      %v402 = vrot.slane %v400, 4
      %v403 = vshll.u32 %v217, 16
      %v405 = vrot.slane %v403, 5
      %v406 = vor.u32 %v402, %v405
      %v407 = vrot.slane %v406, 4
      %v409 = vshll.u32 %v218, 16
      %v411 = vrot.slane %v409, 5
      %v412 = vsel %vm254, %v407, %v411
      %v413 = vshrl.u32 %v218, 16
      %v415 = vrot.slane %v413, 4
      %v416 = vor.u32 %v415, %v411
      %v417 = vrot.slane %v416, 4
      %v419 = vshll.u32 %v219, 16
      %v421 = vrot.slane %v419, 5
      %v422 = vsel %vm254, %v417, %v421
      %v424 = vshrl.u32 %v220, 16
      %v426 = vrot.slane %v424, 4
      %v427 = vshll.u32 %v220, 16
      %v429 = vrot.slane %v427, 5
      %v430 = vor.u32 %v426, %v429
      %v431 = vrot.slane %v430, 4
      %v433 = vshll.u32 %v221, 16
      %v435 = vrot.slane %v433, 5
      %v436 = vsel %vm254, %v431, %v435
      %v437 = vshrl.u32 %v221, 16
      %v439 = vrot.slane %v437, 4
      %v440 = vor.u32 %v439, %v435
      %v441 = vrot.slane %v440, 4
      %v443 = vshll.u32 %v222, 16
      %v445 = vrot.slane %v443, 5
      %v446 = vsel %vm254, %v441, %v445
      %v448 = vshrl.u32 %v223, 16
      %v450 = vrot.slane %v448, 4
      %v451 = vshll.u32 %v223, 16
      %v453 = vrot.slane %v451, 5
      %v454 = vor.u32 %v450, %v453
      %v455 = vrot.slane %v454, 4
      %v457 = vshll.u32 %v224, 16
      %v459 = vrot.slane %v457, 5
      %v460 = vsel %vm254, %v455, %v459
      %v461 = vshrl.u32 %v224, 16
      %v463 = vrot.slane %v461, 4
      %v464 = vor.u32 %v463, %v459
      %v465 = vrot.slane %v464, 4
      %v467 = vshll.u32 %v225, 16
      %v469 = vrot.slane %v467, 5
      %v470 = vsel %vm254, %v465, %v469
      %v472 = vshrl.u32 %v226, 16
      %v474 = vrot.slane %v472, 4
      %v475 = vshll.u32 %v226, 16
      %v477 = vrot.slane %v475, 5
      %v478 = vor.u32 %v474, %v477
      %v479 = vrot.slane %v478, 4
      %v481 = vshll.u32 %v227, 16
      %v483 = vrot.slane %v481, 5
      %v484 = vsel %vm254, %v479, %v483
      %v485 = vshrl.u32 %v227, 16
      %v487 = vrot.slane %v485, 4
      %v488 = vor.u32 %v487, %v483
      %v489 = vrot.slane %v488, 4
      %v491 = vshll.u32 %v228, 16
      %v493 = vrot.slane %v491, 5
      %v494 = vsel %vm254, %v489, %v493
      %v496 = vshrl.u32 %v229, 16
      %v498 = vrot.slane %v496, 4
      %v499 = vshll.u32 %v229, 16
      %v501 = vrot.slane %v499, 5
      %v502 = vor.u32 %v498, %v501
      %v503 = vrot.slane %v502, 4
      %v505 = vshll.u32 %v230, 16
      %v507 = vrot.slane %v505, 5
      %v508 = vsel %vm254, %v503, %v507
      %v509 = vshrl.u32 %v230, 16
      %v511 = vrot.slane %v509, 4
      %v512 = vor.u32 %v511, %v507
      %v513 = vrot.slane %v512, 4
      %v515 = vshll.u32 %v231, 16
      %v517 = vrot.slane %v515, 5
      %v518 = vsel %vm254, %v513, %v517
      %v520 = vshrl.u32 %v232, 16
      %v522 = vrot.slane %v520, 4
      %v523 = vshll.u32 %v232, 16
      %v525 = vrot.slane %v523, 5
      %v526 = vor.u32 %v522, %v525
      %v527 = vrot.slane %v526, 4
      %v529 = vshll.u32 %v233, 16
      %v531 = vrot.slane %v529, 5
      %v532 = vsel %vm254, %v527, %v531
      %v533 = vshrl.u32 %v233, 16
      %v535 = vrot.slane %v533, 4
      %v536 = vor.u32 %v535, %v531
      %v537 = vrot.slane %v536, 4
      %v539 = vshll.u32 %v234, 16
      %v541 = vrot.slane %v539, 5
      %v542 = vsel %vm254, %v537, %v541
      %v544 = vshrl.u32 %v235, 16
      %v546 = vrot.slane %v544, 4
      %v547 = vshll.u32 %v235, 16
      %v549 = vrot.slane %v547, 5
      %v550 = vor.u32 %v546, %v549
      %v551 = vrot.slane %v550, 4
      %v553 = vshll.u32 %v236, 16
      %v555 = vrot.slane %v553, 5
      %v556 = vsel %vm254, %v551, %v555
      %v557 = vshrl.u32 %v236, 16
      %v559 = vrot.slane %v557, 4
      %v560 = vor.u32 %v559, %v555
      %v561 = vrot.slane %v560, 4
      %v563 = vshll.u32 %v237, 16
      %v565 = vrot.slane %v563, 5
      %v566 = vsel %vm254, %v561, %v565
      %v568 = vshrl.u32 %v238, 16
      %v570 = vrot.slane %v568, 4
      %v571 = vshll.u32 %v238, 16
      %v573 = vrot.slane %v571, 5
      %v574 = vor.u32 %v570, %v573
      %v575 = vrot.slane %v574, 4
      %v577 = vshll.u32 %v239, 16
      %v579 = vrot.slane %v577, 5
      %v580 = vsel %vm254, %v575, %v579
      %v581 = vshrl.u32 %v239, 16
      %v583 = vrot.slane %v581, 4
      %v584 = vor.u32 %v583, %v579
      %v585 = vrot.slane %v584, 4
      %v587 = vshll.u32 %v240, 16
      %v589 = vrot.slane %v587, 5
      %v590 = vsel %vm254, %v585, %v589
      %v592 = vshrl.u32 %v241, 16
      %v594 = vrot.slane %v592, 4
      %v595 = vshll.u32 %v241, 16
      %v597 = vrot.slane %v595, 5
      %v598 = vor.u32 %v594, %v597
      %v599 = vrot.slane %v598, 4
      %v601 = vshll.u32 %v242, 16
      %v603 = vrot.slane %v601, 5
      %v604 = vsel %vm254, %v599, %v603
      %v605 = vshrl.u32 %v242, 16
      %v607 = vrot.slane %v605, 4
      %v608 = vor.u32 %v607, %v603
      %v609 = vrot.slane %v608, 4
      %v611 = vshll.u32 %v243, 16
      %v613 = vrot.slane %v611, 5
      %v614 = vsel %vm254, %v609, %v613
      %v616 = vshrl.u32 %v244, 16
      %v618 = vrot.slane %v616, 4
      %v619 = vshll.u32 %v244, 16
      %v621 = vrot.slane %v619, 5
      %v622 = vor.u32 %v618, %v621
      %v623 = vrot.slane %v622, 4
      %v625 = vshll.u32 %v245, 16
      %v627 = vrot.slane %v625, 5
      %v628 = vsel %vm254, %v623, %v627
      %v629 = vshrl.u32 %v245, 16
      %v631 = vrot.slane %v629, 4
      %v632 = vor.u32 %v631, %v627
      %v633 = vrot.slane %v632, 4
      %v635 = vshll.u32 %v246, 16
      %v637 = vrot.slane %v635, 5
      %v638 = vsel %vm254, %v633, %v637
      %s639 = scalar_lea.vmem %s1, 8
      %v640 = vld [vmem:[%s639] sm:$0xf]
      %v641 = vld [vmem:[%s639 + $0x4] sm:$0x3]
      %v642 = vunpack.c.l.b16 %v268
      %v643 = vunpack.c.l.b16 %v278
      %v644 = vunpack.c.l.b16 %v292
      %v645 = vunpack.c.l.b16 %v302
      %v646 = vunpack.c.l.b16 %v316
      %v647 = vunpack.c.l.b16 %v326
      %v648 = vunpack.c.l.b16 %v340
      %v649 = vunpack.c.l.b16 %v350
      %v650 = vunpack.c.l.b16 %v364
      %v651 = vunpack.c.l.b16 %v374
      %v652 = vunpack.c.l.b16 %v388
      %v653 = vunpack.c.l.b16 %v398
      %v654 = vunpack.c.l.b16 %v412
      %v655 = vunpack.c.l.b16 %v422
      %v656 = vunpack.c.l.b16 %v436
      %v657 = vunpack.c.l.b16 %v446
      %v658 = vunpack.c.l.b16 %v460
      %v659 = vunpack.c.l.b16 %v470
      %v660 = vunpack.c.l.b16 %v484
      %v661 = vunpack.c.l.b16 %v494
      %v662 = vunpack.c.l.b16 %v508
      %v663 = vunpack.c.l.b16 %v518
      %v664 = vunpack.c.l.b16 %v532
      %v665 = vunpack.c.l.b16 %v542
      %v666 = vunpack.c.l.b16 %v556
      %v667 = vunpack.c.l.b16 %v566
      %v668 = vunpack.c.l.b16 %v580
      %v669 = vunpack.c.l.b16 %v590
      %v670 = vunpack.c.l.b16 %v604
      %v671 = vunpack.c.l.b16 %v614
      %v672 = vunpack.c.l.b16 %v628
      %v673 = vunpack.c.l.b16 %v638
      %v674 = vpack.c.b16 %v643, %v642
      %v675 = vpack.c.b16 %v645, %v644
      %v676 = vpack.c.b16 %v647, %v646
      %v677 = vpack.c.b16 %v649, %v648
      %v678 = vpack.c.b16 %v651, %v650
      %v679 = vpack.c.b16 %v653, %v652
      %v680 = vpack.c.b16 %v655, %v654
      %v681 = vpack.c.b16 %v657, %v656
      %v682 = vpack.c.b16 %v659, %v658
      %v683 = vpack.c.b16 %v661, %v660
      %v684 = vpack.c.b16 %v663, %v662
      %v685 = vpack.c.b16 %v665, %v664
      %v686 = vpack.c.b16 %v667, %v666
      %v687 = vpack.c.b16 %v669, %v668
      %v688 = vpack.c.b16 %v671, %v670
      %v689 = vpack.c.b16 %v673, %v672
      %v692 = vunpack.c.l.b16 %v640
      %v693 = vunpack.c.l.b16 %v641
      %v694 = vpack.c.b16 %v693, %v692
      %vm695 = vcmask 97280
      %v697 = vsel %vm695, %v674, 0
      %v700 = vsel %vm695, %v675, 0
      %v703 = vsel %vm695, %v676, 0
      %v706 = vsel %vm695, %v677, 0
      %v709 = vsel %vm695, %v678, 0
      %v712 = vsel %vm695, %v679, 0
      %v715 = vsel %vm695, %v680, 0
      %v718 = vsel %vm695, %v681, 0
      %v721 = vsel %vm695, %v682, 0
      %v724 = vsel %vm695, %v683, 0
      %v727 = vsel %vm695, %v684, 0
      %v730 = vsel %vm695, %v685, 0
      %v733 = vsel %vm695, %v686, 0
      %v736 = vsel %vm695, %v687, 0
      %v739 = vsel %vm695, %v688, 0
      %v742 = vsel %vm695, %v689, 0
      %vm744 = vcmask 1045504
      %v746 = vsel %vm744, %v694, 0
      %748 = vmatprep.subr.bf16.mxu0 0
      %749 = vmatpush1.bf16.msra.mxu0 0
      %750 = vmatprep.subr.bf16.mxu0 0
      %751 = vmatpush1.bf16.msra.mxu0 0
      %752 = vmatprep.subr.bf16.mxu0 0
      %753 = vmatpush1.bf16.msra.mxu0 0
      %754 = vmatprep.subr.bf16.mxu0 0
      %755 = vmatpush1.bf16.msra.mxu0 0
      %756 = vmatprep.subr.bf16.mxu0 0
      %757 = vmatpush1.bf16.msra.mxu0 0
      %758 = vmatprep.subr.bf16.mxu0 0
      %759 = vmatpush1.bf16.msra.mxu0 0
      %760 = vmatprep.subr.bf16.mxu0 0
      %761 = vmatpush1.bf16.msra.mxu0 0
      %762 = vmatprep.subr.bf16.mxu0 0
      %763 = vmatpush1.bf16.msra.mxu0 %v746
      %764 = vmatprep.subr.bf16.mxu0 0
      %765 = vmatpush2.bf16.msra.mxu0 0
      %766 = vmatprep.subr.bf16.mxu0 0
      %767 = vmatpush2.bf16.msra.mxu0 0
      %768 = vmatprep.subr.bf16.mxu0 0
      %769 = vmatpush2.bf16.msra.mxu0 0
      %770 = vmatprep.subr.bf16.mxu0 0
      %771 = vmatpush2.bf16.msra.mxu0 0
      %772 = vmatprep.subr.bf16.mxu0 0
      %773 = vmatpush2.bf16.msra.mxu0 0
      %774 = vmatprep.subr.bf16.mxu0 0
      %775 = vmatpush2.bf16.msra.mxu0 0
      %776 = vmatprep.subr.bf16.mxu0 0
      %777 = vmatpush2.bf16.msra.mxu0 0
      %778 = vmatprep.subr.bf16.mxu0 0
      %779 = vmatpush2.bf16.msra.mxu0 0
      %780 = vmatprep.mubr.bf16.mxu0 0
      %781 = vmatmul.mubr.bf16.gmra.mxu0 %v697
      %v782 = vpop.f32.mrf.mxu0
      %v783 = vadd.f32 0.0, %v782
      %v784 = vpop.f32.mrf.mxu0
      %v785 = vpop.f32.mrf.mxu0
      %v786 = vadd.f32 0.0, %v785
      %v787 = vpop.f32.mrf.mxu0
      %788 = vmatprep.mubr.bf16.mxu0 0
      %789 = vmatmul.mubr.bf16.gmra.mxu0 %v700
      %v790 = vpop.f32.mrf.mxu0
      %v791 = vadd.f32 0.0, %v790
      %v792 = vpop.f32.mrf.mxu0
      %v793 = vpop.f32.mrf.mxu0
      %v794 = vadd.f32 0.0, %v793
      %v795 = vpop.f32.mrf.mxu0
      %796 = vmatprep.mubr.bf16.mxu0 0
      %797 = vmatmul.mubr.bf16.gmra.mxu0 %v703
      %v798 = vpop.f32.mrf.mxu0
      %v799 = vadd.f32 0.0, %v798
      %v800 = vpop.f32.mrf.mxu0
      %v801 = vpop.f32.mrf.mxu0
      %v802 = vadd.f32 0.0, %v801
      %v803 = vpop.f32.mrf.mxu0
      %804 = vmatprep.mubr.bf16.mxu0 0
      %805 = vmatmul.mubr.bf16.gmra.mxu0 %v706
      %v806 = vpop.f32.mrf.mxu0
      %v807 = vadd.f32 0.0, %v806
      %v808 = vpop.f32.mrf.mxu0
      %v809 = vpop.f32.mrf.mxu0
      %v810 = vadd.f32 0.0, %v809
      %v811 = vpop.f32.mrf.mxu0
      %812 = vmatprep.mubr.bf16.mxu0 0
      %813 = vmatmul.mubr.bf16.gmra.mxu0 %v709
      %v814 = vpop.f32.mrf.mxu0
      %v815 = vadd.f32 0.0, %v814
      %v816 = vpop.f32.mrf.mxu0
      %v817 = vpop.f32.mrf.mxu0
      %v818 = vadd.f32 0.0, %v817
      %v819 = vpop.f32.mrf.mxu0
      %820 = vmatprep.mubr.bf16.mxu0 0
      %821 = vmatmul.mubr.bf16.gmra.mxu0 %v712
      %v822 = vpop.f32.mrf.mxu0
      %v823 = vadd.f32 0.0, %v822
      %v824 = vpop.f32.mrf.mxu0
      %v825 = vpop.f32.mrf.mxu0
      %v826 = vadd.f32 0.0, %v825
      %v827 = vpop.f32.mrf.mxu0
      %828 = vmatprep.mubr.bf16.mxu0 0
      %829 = vmatmul.mubr.bf16.gmra.mxu0 %v715
      %v830 = vpop.f32.mrf.mxu0
      %v831 = vadd.f32 0.0, %v830
      %v832 = vpop.f32.mrf.mxu0
      %v833 = vpop.f32.mrf.mxu0
      %v834 = vadd.f32 0.0, %v833
      %v835 = vpop.f32.mrf.mxu0
      %836 = vmatprep.mubr.bf16.mxu0 0
      %837 = vmatmul.mubr.bf16.gmra.mxu0 %v718
      %v838 = vpop.f32.mrf.mxu0
      %v839 = vadd.f32 0.0, %v838
      %v840 = vpop.f32.mrf.mxu0
      %v841 = vpop.f32.mrf.mxu0
      %v842 = vadd.f32 0.0, %v841
      %v843 = vpop.f32.mrf.mxu0
      %844 = vmatprep.mubr.bf16.mxu0 0
      %845 = vmatmul.mubr.bf16.gmra.mxu0 %v721
      %v846 = vpop.f32.mrf.mxu0
      %v847 = vadd.f32 0.0, %v846
      %v848 = vpop.f32.mrf.mxu0
      %v849 = vpop.f32.mrf.mxu0
      %v850 = vadd.f32 0.0, %v849
      %v851 = vpop.f32.mrf.mxu0
      %852 = vmatprep.mubr.bf16.mxu0 0
      %853 = vmatmul.mubr.bf16.gmra.mxu0 %v724
      %v854 = vpop.f32.mrf.mxu0
      %v855 = vadd.f32 0.0, %v854
      %v856 = vpop.f32.mrf.mxu0
      %v857 = vpop.f32.mrf.mxu0
      %v858 = vadd.f32 0.0, %v857
      %v859 = vpop.f32.mrf.mxu0
      %860 = vmatprep.mubr.bf16.mxu0 0
      %861 = vmatmul.mubr.bf16.gmra.mxu0 %v727
      %v862 = vpop.f32.mrf.mxu0
      %v863 = vadd.f32 0.0, %v862
      %v864 = vpop.f32.mrf.mxu0
      %v865 = vpop.f32.mrf.mxu0
      %v866 = vadd.f32 0.0, %v865
      %v867 = vpop.f32.mrf.mxu0
      %868 = vmatprep.mubr.bf16.mxu0 0
      %869 = vmatmul.mubr.bf16.gmra.mxu0 %v730
      %v870 = vpop.f32.mrf.mxu0
      %v871 = vadd.f32 0.0, %v870
      %v872 = vpop.f32.mrf.mxu0
      %v873 = vpop.f32.mrf.mxu0
      %v874 = vadd.f32 0.0, %v873
      %v875 = vpop.f32.mrf.mxu0
      %876 = vmatprep.mubr.bf16.mxu0 0
      %877 = vmatmul.mubr.bf16.gmra.mxu0 %v733
      %v878 = vpop.f32.mrf.mxu0
      %v879 = vadd.f32 0.0, %v878
      %v880 = vpop.f32.mrf.mxu0
      %v881 = vpop.f32.mrf.mxu0
      %v882 = vadd.f32 0.0, %v881
      %v883 = vpop.f32.mrf.mxu0
      %884 = vmatprep.mubr.bf16.mxu0 0
      %885 = vmatmul.mubr.bf16.gmra.mxu0 %v736
      %v886 = vpop.f32.mrf.mxu0
      %v887 = vadd.f32 0.0, %v886
      %v888 = vpop.f32.mrf.mxu0
      %v889 = vpop.f32.mrf.mxu0
      %v890 = vadd.f32 0.0, %v889
      %v891 = vpop.f32.mrf.mxu0
      %892 = vmatprep.mubr.bf16.mxu0 0
      %893 = vmatmul.mubr.bf16.gmra.mxu0 %v739
      %v894 = vpop.f32.mrf.mxu0
      %v895 = vadd.f32 0.0, %v894
      %v896 = vpop.f32.mrf.mxu0
      %v897 = vpop.f32.mrf.mxu0
      %v898 = vadd.f32 0.0, %v897
      %v899 = vpop.f32.mrf.mxu0
      %900 = vmatprep.mubr.bf16.mxu0 0
      %901 = vmatmul.mubr.bf16.gmra.mxu0 %v742
      %v902 = vpop.f32.mrf.mxu0
      %v903 = vadd.f32 0.0, %v902
      %v904 = vpop.f32.mrf.mxu0
      %v905 = vpop.f32.mrf.mxu0
      %v906 = vadd.f32 0.0, %v905
      %v907 = vpop.f32.mrf.mxu0
      %908 = vdwg.mxu0
      %v941 = vunpack.c.l.b16 %v199
      %v942 = vunpack.c.l.b16 %v200
      %v943 = vunpack.c.l.b16 %v202
      %v944 = vunpack.c.l.b16 %v203
      %v945 = vunpack.c.l.b16 %v205
      %v946 = vunpack.c.l.b16 %v206
      %v947 = vunpack.c.l.b16 %v208
      %v948 = vunpack.c.l.b16 %v209
      %v949 = vunpack.c.l.b16 %v211
      %v950 = vunpack.c.l.b16 %v212
      %v951 = vunpack.c.l.b16 %v214
      %v952 = vunpack.c.l.b16 %v215
      %v953 = vunpack.c.l.b16 %v217
      %v954 = vunpack.c.l.b16 %v218
      %v955 = vunpack.c.l.b16 %v220
      %v956 = vunpack.c.l.b16 %v221
      %v957 = vunpack.c.l.b16 %v223
      %v958 = vunpack.c.l.b16 %v224
      %v959 = vunpack.c.l.b16 %v226
      %v960 = vunpack.c.l.b16 %v227
      %v961 = vunpack.c.l.b16 %v229
      %v962 = vunpack.c.l.b16 %v230
      %v963 = vunpack.c.l.b16 %v232
      %v964 = vunpack.c.l.b16 %v233
      %v965 = vunpack.c.l.b16 %v235
      %v966 = vunpack.c.l.b16 %v236
      %v967 = vunpack.c.l.b16 %v238
      %v968 = vunpack.c.l.b16 %v239
      %v969 = vunpack.c.l.b16 %v241
      %v970 = vunpack.c.l.b16 %v242
      %v971 = vunpack.c.l.b16 %v244
      %v972 = vunpack.c.l.b16 %v245
      %v973 = vpack.c.b16 %v942, %v941
      %v974 = vpack.c.b16 %v944, %v943
      %v975 = vpack.c.b16 %v946, %v945
      %v976 = vpack.c.b16 %v948, %v947
      %v977 = vpack.c.b16 %v950, %v949
      %v978 = vpack.c.b16 %v952, %v951
      %v979 = vpack.c.b16 %v954, %v953
      %v980 = vpack.c.b16 %v956, %v955
      %v981 = vpack.c.b16 %v958, %v957
      %v982 = vpack.c.b16 %v960, %v959
      %v983 = vpack.c.b16 %v962, %v961
      %v984 = vpack.c.b16 %v964, %v963
      %v985 = vpack.c.b16 %v966, %v965
      %v986 = vpack.c.b16 %v968, %v967
      %v987 = vpack.c.b16 %v970, %v969
      %v988 = vpack.c.b16 %v972, %v971
      %v991 = vunpack.c.l.b16 %v250
      %v992 = vunpack.c.l.b16 %v251
      %v993 = vpack.c.b16 %v992, %v991
      %v995 = vsel %vm695, %v973, 0
      %v998 = vsel %vm695, %v974, 0
      %v1001 = vsel %vm695, %v975, 0
      %v1004 = vsel %vm695, %v976, 0
      %v1007 = vsel %vm695, %v977, 0
      %v1010 = vsel %vm695, %v978, 0
      %v1013 = vsel %vm695, %v979, 0
      %v1016 = vsel %vm695, %v980, 0
      %v1019 = vsel %vm695, %v981, 0
      %v1022 = vsel %vm695, %v982, 0
      %v1025 = vsel %vm695, %v983, 0
      %v1028 = vsel %vm695, %v984, 0
      %v1031 = vsel %vm695, %v985, 0
      %v1034 = vsel %vm695, %v986, 0
      %v1037 = vsel %vm695, %v987, 0
      %v1040 = vsel %vm695, %v988, 0
      %v1043 = vsel %vm744, %v993, 0
      %1045 = vmatprep.subr.bf16.mxu0 0
      %1046 = vmatpush1.bf16.msra.mxu0 0
      %1047 = vmatprep.subr.bf16.mxu0 0
      %1048 = vmatpush1.bf16.msra.mxu0 0
      %1049 = vmatprep.subr.bf16.mxu0 0
      %1050 = vmatpush1.bf16.msra.mxu0 0
      %1051 = vmatprep.subr.bf16.mxu0 0
      %1052 = vmatpush1.bf16.msra.mxu0 0
      %1053 = vmatprep.subr.bf16.mxu0 0
      %1054 = vmatpush1.bf16.msra.mxu0 0
      %1055 = vmatprep.subr.bf16.mxu0 0
      %1056 = vmatpush1.bf16.msra.mxu0 0
      %1057 = vmatprep.subr.bf16.mxu0 0
      %1058 = vmatpush1.bf16.msra.mxu0 0
      %1059 = vmatprep.subr.bf16.mxu0 0
      %1060 = vmatpush1.bf16.msra.mxu0 %v1043
      %1061 = vmatprep.subr.bf16.mxu0 0
      %1062 = vmatpush2.bf16.msra.mxu0 0
      %1063 = vmatprep.subr.bf16.mxu0 0
      %1064 = vmatpush2.bf16.msra.mxu0 0
      %1065 = vmatprep.subr.bf16.mxu0 0
      %1066 = vmatpush2.bf16.msra.mxu0 0
      %1067 = vmatprep.subr.bf16.mxu0 0
      %1068 = vmatpush2.bf16.msra.mxu0 0
      %1069 = vmatprep.subr.bf16.mxu0 0
      %1070 = vmatpush2.bf16.msra.mxu0 0
      %1071 = vmatprep.subr.bf16.mxu0 0
      %1072 = vmatpush2.bf16.msra.mxu0 0
      %1073 = vmatprep.subr.bf16.mxu0 0
      %1074 = vmatpush2.bf16.msra.mxu0 0
      %1075 = vmatprep.subr.bf16.mxu0 0
      %1076 = vmatpush2.bf16.msra.mxu0 0
      %1077 = vmatprep.mubr.bf16.mxu0 0
      %1078 = vmatmul.mubr.bf16.gmra.mxu0 %v995
      %v1079 = vpop.f32.mrf.mxu0
      %v1080 = vadd.f32 %v783, %v1079
      %v1081 = vpop.f32.mrf.mxu0
      %v1082 = vpop.f32.mrf.mxu0
      %v1083 = vadd.f32 %v786, %v1082
      %v1084 = vpop.f32.mrf.mxu0
      %1085 = vmatprep.mubr.bf16.mxu0 0
      %1086 = vmatmul.mubr.bf16.gmra.mxu0 %v998
      %v1087 = vpop.f32.mrf.mxu0
      %v1088 = vadd.f32 %v791, %v1087
      %v1089 = vpop.f32.mrf.mxu0
      %v1090 = vpop.f32.mrf.mxu0
      %v1091 = vadd.f32 %v794, %v1090
      %v1092 = vpop.f32.mrf.mxu0
      %1093 = vmatprep.mubr.bf16.mxu0 0
      %1094 = vmatmul.mubr.bf16.gmra.mxu0 %v1001
      %v1095 = vpop.f32.mrf.mxu0
      %v1096 = vadd.f32 %v799, %v1095
      %v1097 = vpop.f32.mrf.mxu0
      %v1098 = vpop.f32.mrf.mxu0
      %v1099 = vadd.f32 %v802, %v1098
      %v1100 = vpop.f32.mrf.mxu0
      %1101 = vmatprep.mubr.bf16.mxu0 0
      %1102 = vmatmul.mubr.bf16.gmra.mxu0 %v1004
      %v1103 = vpop.f32.mrf.mxu0
      %v1104 = vadd.f32 %v807, %v1103
      %v1105 = vpop.f32.mrf.mxu0
      %v1106 = vpop.f32.mrf.mxu0
      %v1107 = vadd.f32 %v810, %v1106
      %v1108 = vpop.f32.mrf.mxu0
      %1109 = vmatprep.mubr.bf16.mxu0 0
      %1110 = vmatmul.mubr.bf16.gmra.mxu0 %v1007
      %v1111 = vpop.f32.mrf.mxu0
      %v1112 = vadd.f32 %v815, %v1111
      %v1113 = vpop.f32.mrf.mxu0
      %v1114 = vpop.f32.mrf.mxu0
      %v1115 = vadd.f32 %v818, %v1114
      %v1116 = vpop.f32.mrf.mxu0
      %1117 = vmatprep.mubr.bf16.mxu0 0
      %1118 = vmatmul.mubr.bf16.gmra.mxu0 %v1010
      %v1119 = vpop.f32.mrf.mxu0
      %v1120 = vadd.f32 %v823, %v1119
      %v1121 = vpop.f32.mrf.mxu0
      %v1122 = vpop.f32.mrf.mxu0
      %v1123 = vadd.f32 %v826, %v1122
      %v1124 = vpop.f32.mrf.mxu0
      %1125 = vmatprep.mubr.bf16.mxu0 0
      %1126 = vmatmul.mubr.bf16.gmra.mxu0 %v1013
      %v1127 = vpop.f32.mrf.mxu0
      %v1128 = vadd.f32 %v831, %v1127
      %v1129 = vpop.f32.mrf.mxu0
      %v1130 = vpop.f32.mrf.mxu0
      %v1131 = vadd.f32 %v834, %v1130
      %v1132 = vpop.f32.mrf.mxu0
      %1133 = vmatprep.mubr.bf16.mxu0 0
      %1134 = vmatmul.mubr.bf16.gmra.mxu0 %v1016
      %v1135 = vpop.f32.mrf.mxu0
      %v1136 = vadd.f32 %v839, %v1135
      %v1137 = vpop.f32.mrf.mxu0
      %v1138 = vpop.f32.mrf.mxu0
      %v1139 = vadd.f32 %v842, %v1138
      %v1140 = vpop.f32.mrf.mxu0
      %1141 = vmatprep.mubr.bf16.mxu0 0
      %1142 = vmatmul.mubr.bf16.gmra.mxu0 %v1019
      %v1143 = vpop.f32.mrf.mxu0
      %v1144 = vadd.f32 %v847, %v1143
      %v1145 = vpop.f32.mrf.mxu0
      %v1146 = vpop.f32.mrf.mxu0
      %v1147 = vadd.f32 %v850, %v1146
      %v1148 = vpop.f32.mrf.mxu0
      %1149 = vmatprep.mubr.bf16.mxu0 0
      %1150 = vmatmul.mubr.bf16.gmra.mxu0 %v1022
      %v1151 = vpop.f32.mrf.mxu0
      %v1152 = vadd.f32 %v855, %v1151
      %v1153 = vpop.f32.mrf.mxu0
      %v1154 = vpop.f32.mrf.mxu0
      %v1155 = vadd.f32 %v858, %v1154
      %v1156 = vpop.f32.mrf.mxu0
      %1157 = vmatprep.mubr.bf16.mxu0 0
      %1158 = vmatmul.mubr.bf16.gmra.mxu0 %v1025
      %v1159 = vpop.f32.mrf.mxu0
      %v1160 = vadd.f32 %v863, %v1159
      %v1161 = vpop.f32.mrf.mxu0
      %v1162 = vpop.f32.mrf.mxu0
      %v1163 = vadd.f32 %v866, %v1162
      %v1164 = vpop.f32.mrf.mxu0
      %1165 = vmatprep.mubr.bf16.mxu0 0
      %1166 = vmatmul.mubr.bf16.gmra.mxu0 %v1028
      %v1167 = vpop.f32.mrf.mxu0
      %v1168 = vadd.f32 %v871, %v1167
      %v1169 = vpop.f32.mrf.mxu0
      %v1170 = vpop.f32.mrf.mxu0
      %v1171 = vadd.f32 %v874, %v1170
      %v1172 = vpop.f32.mrf.mxu0
      %1173 = vmatprep.mubr.bf16.mxu0 0
      %1174 = vmatmul.mubr.bf16.gmra.mxu0 %v1031
      %v1175 = vpop.f32.mrf.mxu0
      %v1176 = vadd.f32 %v879, %v1175
      %v1177 = vpop.f32.mrf.mxu0
      %v1178 = vpop.f32.mrf.mxu0
      %v1179 = vadd.f32 %v882, %v1178
      %v1180 = vpop.f32.mrf.mxu0
      %1181 = vmatprep.mubr.bf16.mxu0 0
      %1182 = vmatmul.mubr.bf16.gmra.mxu0 %v1034
      %v1183 = vpop.f32.mrf.mxu0
      %v1184 = vadd.f32 %v887, %v1183
      %v1185 = vpop.f32.mrf.mxu0
      %v1186 = vpop.f32.mrf.mxu0
      %v1187 = vadd.f32 %v890, %v1186
      %v1188 = vpop.f32.mrf.mxu0
      %1189 = vmatprep.mubr.bf16.mxu0 0
      %1190 = vmatmul.mubr.bf16.gmra.mxu0 %v1037
      %v1191 = vpop.f32.mrf.mxu0
      %v1192 = vadd.f32 %v895, %v1191
      %v1193 = vpop.f32.mrf.mxu0
      %v1194 = vpop.f32.mrf.mxu0
      %v1195 = vadd.f32 %v898, %v1194
      %v1196 = vpop.f32.mrf.mxu0
      %1197 = vmatprep.mubr.bf16.mxu0 0
      %1198 = vmatmul.mubr.bf16.gmra.mxu0 %v1040
      %v1199 = vpop.f32.mrf.mxu0
      %v1200 = vadd.f32 %v903, %v1199
      %v1201 = vpop.f32.mrf.mxu0
      %v1202 = vpop.f32.mrf.mxu0
      %v1203 = vadd.f32 %v906, %v1202
      %v1204 = vpop.f32.mrf.mxu0
      %1205 = vdwg.mxu0
      %s1206 = scalar_lea.vmem %s1, 16
      %v1207 = vld [vmem:[%s1206] sm:$0xf]
      %v1208 = vld [vmem:[%s1206 + $0x4] sm:$0x3]
      %v1211 = vunpack.c.l.b16 %v247
      %v1212 = vunpack.c.l.b16 %v248
      %v1213 = vpack.c.b16 %v1212, %v1211
      %v1216 = vunpack.c.l.b16 %v1207
      %v1217 = vunpack.c.l.b16 %v1208
      %v1218 = vpack.c.b16 %v1217, %v1216
      %v1220 = vsel %vm695, %v1213, 0
      %v1223 = vsel %vm744, %v1218, 0
      %1225 = vmatprep.subr.bf16.mxu0 0
      %1226 = vmatpush1.bf16.msra.mxu0 0
      %1227 = vmatprep.subr.bf16.mxu0 0
      %1228 = vmatpush1.bf16.msra.mxu0 0
      %1229 = vmatprep.subr.bf16.mxu0 0
      %1230 = vmatpush1.bf16.msra.mxu0 0
      %1231 = vmatprep.subr.bf16.mxu0 0
      %1232 = vmatpush1.bf16.msra.mxu0 0
      %1233 = vmatprep.subr.bf16.mxu0 0
      %1234 = vmatpush1.bf16.msra.mxu0 0
      %1235 = vmatprep.subr.bf16.mxu0 0
      %1236 = vmatpush1.bf16.msra.mxu0 0
      %1237 = vmatprep.subr.bf16.mxu0 0
      %1238 = vmatpush1.bf16.msra.mxu0 0
      %1239 = vmatprep.subr.bf16.mxu0 0
      %1240 = vmatpush1.bf16.msra.mxu0 %v1223
      %1241 = vmatprep.subr.bf16.mxu0 0
      %1242 = vmatpush2.bf16.msra.mxu0 0
      %1243 = vmatprep.subr.bf16.mxu0 0
      %1244 = vmatpush2.bf16.msra.mxu0 0
      %1245 = vmatprep.subr.bf16.mxu0 0
      %1246 = vmatpush2.bf16.msra.mxu0 0
      %1247 = vmatprep.subr.bf16.mxu0 0
      %1248 = vmatpush2.bf16.msra.mxu0 0
      %1249 = vmatprep.subr.bf16.mxu0 0
      %1250 = vmatpush2.bf16.msra.mxu0 0
      %1251 = vmatprep.subr.bf16.mxu0 0
      %1252 = vmatpush2.bf16.msra.mxu0 0
      %1253 = vmatprep.subr.bf16.mxu0 0
      %1254 = vmatpush2.bf16.msra.mxu0 0
      %1255 = vmatprep.subr.bf16.mxu0 0
      %1256 = vmatpush2.bf16.msra.mxu0 0
      %1257 = vmatprep.mubr.bf16.mxu0 0
      %1258 = vmatmul.mubr.bf16.gmra.mxu0 %v998
      %v1259 = vpop.f32.mrf.mxu0
      %v1260 = vadd.f32 0.0, %v1259
      %v1261 = vpop.f32.mrf.mxu0
      %v1262 = vpop.f32.mrf.mxu0
      %v1263 = vadd.f32 0.0, %v1262
      %v1264 = vpop.f32.mrf.mxu0
      %1265 = vmatprep.mubr.bf16.mxu0 0
      %1266 = vmatmul.mubr.bf16.gmra.mxu0 %v1001
      %v1267 = vpop.f32.mrf.mxu0
      %v1268 = vadd.f32 0.0, %v1267
      %v1269 = vpop.f32.mrf.mxu0
      %v1270 = vpop.f32.mrf.mxu0
      %v1271 = vadd.f32 0.0, %v1270
      %v1272 = vpop.f32.mrf.mxu0
      %1273 = vmatprep.mubr.bf16.mxu0 0
      %1274 = vmatmul.mubr.bf16.gmra.mxu0 %v1004
      %v1275 = vpop.f32.mrf.mxu0
      %v1276 = vadd.f32 0.0, %v1275
      %v1277 = vpop.f32.mrf.mxu0
      %v1278 = vpop.f32.mrf.mxu0
      %v1279 = vadd.f32 0.0, %v1278
      %v1280 = vpop.f32.mrf.mxu0
      %1281 = vmatprep.mubr.bf16.mxu0 0
      %1282 = vmatmul.mubr.bf16.gmra.mxu0 %v1007
      %v1283 = vpop.f32.mrf.mxu0
      %v1284 = vadd.f32 0.0, %v1283
      %v1285 = vpop.f32.mrf.mxu0
      %v1286 = vpop.f32.mrf.mxu0
      %v1287 = vadd.f32 0.0, %v1286
      %v1288 = vpop.f32.mrf.mxu0
      %1289 = vmatprep.mubr.bf16.mxu0 0
      %1290 = vmatmul.mubr.bf16.gmra.mxu0 %v1010
      %v1291 = vpop.f32.mrf.mxu0
      %v1292 = vadd.f32 0.0, %v1291
      %v1293 = vpop.f32.mrf.mxu0
      %v1294 = vpop.f32.mrf.mxu0
      %v1295 = vadd.f32 0.0, %v1294
      %v1296 = vpop.f32.mrf.mxu0
      %1297 = vmatprep.mubr.bf16.mxu0 0
      %1298 = vmatmul.mubr.bf16.gmra.mxu0 %v1013
      %v1299 = vpop.f32.mrf.mxu0
      %v1300 = vadd.f32 0.0, %v1299
      %v1301 = vpop.f32.mrf.mxu0
      %v1302 = vpop.f32.mrf.mxu0
      %v1303 = vadd.f32 0.0, %v1302
      %v1304 = vpop.f32.mrf.mxu0
      %1305 = vmatprep.mubr.bf16.mxu0 0
      %1306 = vmatmul.mubr.bf16.gmra.mxu0 %v1016
      %v1307 = vpop.f32.mrf.mxu0
      %v1308 = vadd.f32 0.0, %v1307
      %v1309 = vpop.f32.mrf.mxu0
      %v1310 = vpop.f32.mrf.mxu0
      %v1311 = vadd.f32 0.0, %v1310
      %v1312 = vpop.f32.mrf.mxu0
      %1313 = vmatprep.mubr.bf16.mxu0 0
      %1314 = vmatmul.mubr.bf16.gmra.mxu0 %v1019
      %v1315 = vpop.f32.mrf.mxu0
      %v1316 = vadd.f32 0.0, %v1315
      %v1317 = vpop.f32.mrf.mxu0
      %v1318 = vpop.f32.mrf.mxu0
      %v1319 = vadd.f32 0.0, %v1318
      %v1320 = vpop.f32.mrf.mxu0
      %1321 = vmatprep.mubr.bf16.mxu0 0
      %1322 = vmatmul.mubr.bf16.gmra.mxu0 %v1022
      %v1323 = vpop.f32.mrf.mxu0
      %v1324 = vadd.f32 0.0, %v1323
      %v1325 = vpop.f32.mrf.mxu0
      %v1326 = vpop.f32.mrf.mxu0
      %v1327 = vadd.f32 0.0, %v1326
      %v1328 = vpop.f32.mrf.mxu0
      %1329 = vmatprep.mubr.bf16.mxu0 0
      %1330 = vmatmul.mubr.bf16.gmra.mxu0 %v1025
      %v1331 = vpop.f32.mrf.mxu0
      %v1332 = vadd.f32 0.0, %v1331
      %v1333 = vpop.f32.mrf.mxu0
      %v1334 = vpop.f32.mrf.mxu0
      %v1335 = vadd.f32 0.0, %v1334
      %v1336 = vpop.f32.mrf.mxu0
      %1337 = vmatprep.mubr.bf16.mxu0 0
      %1338 = vmatmul.mubr.bf16.gmra.mxu0 %v1028
      %v1339 = vpop.f32.mrf.mxu0
      %v1340 = vadd.f32 0.0, %v1339
      %v1341 = vpop.f32.mrf.mxu0
      %v1342 = vpop.f32.mrf.mxu0
      %v1343 = vadd.f32 0.0, %v1342
      %v1344 = vpop.f32.mrf.mxu0
      %1345 = vmatprep.mubr.bf16.mxu0 0
      %1346 = vmatmul.mubr.bf16.gmra.mxu0 %v1031
      %v1347 = vpop.f32.mrf.mxu0
      %v1348 = vadd.f32 0.0, %v1347
      %v1349 = vpop.f32.mrf.mxu0
      %v1350 = vpop.f32.mrf.mxu0
      %v1351 = vadd.f32 0.0, %v1350
      %v1352 = vpop.f32.mrf.mxu0
      %1353 = vmatprep.mubr.bf16.mxu0 0
      %1354 = vmatmul.mubr.bf16.gmra.mxu0 %v1034
      %v1355 = vpop.f32.mrf.mxu0
      %v1356 = vadd.f32 0.0, %v1355
      %v1357 = vpop.f32.mrf.mxu0
      %v1358 = vpop.f32.mrf.mxu0
      %v1359 = vadd.f32 0.0, %v1358
      %v1360 = vpop.f32.mrf.mxu0
      %1361 = vmatprep.mubr.bf16.mxu0 0
      %1362 = vmatmul.mubr.bf16.gmra.mxu0 %v1037
      %v1363 = vpop.f32.mrf.mxu0
      %v1364 = vadd.f32 0.0, %v1363
      %v1365 = vpop.f32.mrf.mxu0
      %v1366 = vpop.f32.mrf.mxu0
      %v1367 = vadd.f32 0.0, %v1366
      %v1368 = vpop.f32.mrf.mxu0
      %1369 = vmatprep.mubr.bf16.mxu0 0
      %1370 = vmatmul.mubr.bf16.gmra.mxu0 %v1040
      %v1371 = vpop.f32.mrf.mxu0
      %v1372 = vadd.f32 0.0, %v1371
      %v1373 = vpop.f32.mrf.mxu0
      %v1374 = vpop.f32.mrf.mxu0
      %v1375 = vadd.f32 0.0, %v1374
      %v1376 = vpop.f32.mrf.mxu0
      %1377 = vmatprep.mubr.bf16.mxu0 0
      %1378 = vmatmul.mubr.bf16.gmra.mxu0 %v1220
      %v1379 = vpop.f32.mrf.mxu0
      %v1380 = vadd.f32 0.0, %v1379
      %v1381 = vpop.f32.mrf.mxu0
      %v1382 = vpop.f32.mrf.mxu0
      %v1383 = vadd.f32 0.0, %v1382
      %v1384 = vpop.f32.mrf.mxu0
      %1385 = vdwg.mxu0
      %v1386 = vadd.f32 %v1080, %v1260
      %v1387 = vadd.f32 %v1083, %v1263
      %v1388 = vadd.f32 %v1088, %v1268
      %v1389 = vadd.f32 %v1091, %v1271
      %v1390 = vadd.f32 %v1096, %v1276
      %v1391 = vadd.f32 %v1099, %v1279
      %v1392 = vadd.f32 %v1104, %v1284
      %v1393 = vadd.f32 %v1107, %v1287
      %v1394 = vadd.f32 %v1112, %v1292
      %v1395 = vadd.f32 %v1115, %v1295
      %v1396 = vadd.f32 %v1120, %v1300
      %v1397 = vadd.f32 %v1123, %v1303
      %v1398 = vadd.f32 %v1128, %v1308
      %v1399 = vadd.f32 %v1131, %v1311
      %v1400 = vadd.f32 %v1136, %v1316
      %v1401 = vadd.f32 %v1139, %v1319
      %v1402 = vadd.f32 %v1144, %v1324
      %v1403 = vadd.f32 %v1147, %v1327
      %v1404 = vadd.f32 %v1152, %v1332
      %v1405 = vadd.f32 %v1155, %v1335
      %v1406 = vadd.f32 %v1160, %v1340
      %v1407 = vadd.f32 %v1163, %v1343
      %v1408 = vadd.f32 %v1168, %v1348
      %v1409 = vadd.f32 %v1171, %v1351
      %v1410 = vadd.f32 %v1176, %v1356
      %v1411 = vadd.f32 %v1179, %v1359
      %v1412 = vadd.f32 %v1184, %v1364
      %v1413 = vadd.f32 %v1187, %v1367
      %v1414 = vadd.f32 %v1192, %v1372
      %v1415 = vadd.f32 %v1195, %v1375
      %v1416 = vadd.f32 %v1200, %v1380
      %v1417 = vadd.f32 %v1203, %v1383
      %v1419 = vshrl.u32 %v247, 16
      %v1421 = vrot.slane %v1419, 4
      %v1422 = vshll.u32 %v247, 16
      %v1424 = vrot.slane %v1422, 5
      %v1425 = vor.u32 %v1421, %v1424
      %v1426 = vrot.slane %v1425, 4
      %v1428 = vshll.u32 %v248, 16
      %v1430 = vrot.slane %v1428, 5
      %v1431 = vsel %vm254, %v1426, %v1430
      %v1432 = vshrl.u32 %v248, 16
      %v1434 = vrot.slane %v1432, 4
      %v1435 = vor.u32 %v1434, %v1430
      %v1436 = vrot.slane %v1435, 4
      %v1438 = vshll.u32 %v249, 16
      %v1440 = vrot.slane %v1438, 5
      %v1441 = vsel %vm254, %v1436, %v1440
      %s1442 = scalar_lea.vmem %s1, 24
      %v1443 = vld [vmem:[%s1442] sm:$0xf]
      %v1444 = vld [vmem:[%s1442 + $0x4] sm:$0x3]
      %v1445 = vunpack.c.l.b16 %v1431
      %v1446 = vunpack.c.l.b16 %v1441
      %v1447 = vpack.c.b16 %v1446, %v1445
      %v1450 = vunpack.c.l.b16 %v1443
      %v1451 = vunpack.c.l.b16 %v1444
      %v1452 = vpack.c.b16 %v1451, %v1450
      %v1454 = vsel %vm695, %v1447, 0
      %v1457 = vsel %vm744, %v1452, 0
      %1459 = vmatprep.subr.bf16.mxu0 0
      %1460 = vmatpush1.bf16.msra.mxu0 0
      %1461 = vmatprep.subr.bf16.mxu0 0
      %1462 = vmatpush1.bf16.msra.mxu0 0
      %1463 = vmatprep.subr.bf16.mxu0 0
      %1464 = vmatpush1.bf16.msra.mxu0 0
      %1465 = vmatprep.subr.bf16.mxu0 0
      %1466 = vmatpush1.bf16.msra.mxu0 0
      %1467 = vmatprep.subr.bf16.mxu0 0
      %1468 = vmatpush1.bf16.msra.mxu0 0
      %1469 = vmatprep.subr.bf16.mxu0 0
      %1470 = vmatpush1.bf16.msra.mxu0 0
      %1471 = vmatprep.subr.bf16.mxu0 0
      %1472 = vmatpush1.bf16.msra.mxu0 0
      %1473 = vmatprep.subr.bf16.mxu0 0
      %1474 = vmatpush1.bf16.msra.mxu0 %v1457
      %1475 = vmatprep.subr.bf16.mxu0 0
      %1476 = vmatpush2.bf16.msra.mxu0 0
      %1477 = vmatprep.subr.bf16.mxu0 0
      %1478 = vmatpush2.bf16.msra.mxu0 0
      %1479 = vmatprep.subr.bf16.mxu0 0
      %1480 = vmatpush2.bf16.msra.mxu0 0
      %1481 = vmatprep.subr.bf16.mxu0 0
      %1482 = vmatpush2.bf16.msra.mxu0 0
      %1483 = vmatprep.subr.bf16.mxu0 0
      %1484 = vmatpush2.bf16.msra.mxu0 0
      %1485 = vmatprep.subr.bf16.mxu0 0
      %1486 = vmatpush2.bf16.msra.mxu0 0
      %1487 = vmatprep.subr.bf16.mxu0 0
      %1488 = vmatpush2.bf16.msra.mxu0 0
      %1489 = vmatprep.subr.bf16.mxu0 0
      %1490 = vmatpush2.bf16.msra.mxu0 0
      %1491 = vmatprep.mubr.bf16.mxu0 0
      %1492 = vmatmul.mubr.bf16.gmra.mxu0 %v700
      %v1493 = vpop.f32.mrf.mxu0
      %v1494 = vadd.f32 0.0, %v1493
      %v1495 = vpop.f32.mrf.mxu0
      %v1496 = vpop.f32.mrf.mxu0
      %v1497 = vadd.f32 0.0, %v1496
      %v1498 = vpop.f32.mrf.mxu0
      %1499 = vmatprep.mubr.bf16.mxu0 0
      %1500 = vmatmul.mubr.bf16.gmra.mxu0 %v703
      %v1501 = vpop.f32.mrf.mxu0
      %v1502 = vadd.f32 0.0, %v1501
      %v1503 = vpop.f32.mrf.mxu0
      %v1504 = vpop.f32.mrf.mxu0
      %v1505 = vadd.f32 0.0, %v1504
      %v1506 = vpop.f32.mrf.mxu0
      %1507 = vmatprep.mubr.bf16.mxu0 0
      %1508 = vmatmul.mubr.bf16.gmra.mxu0 %v706
      %v1509 = vpop.f32.mrf.mxu0
      %v1510 = vadd.f32 0.0, %v1509
      %v1511 = vpop.f32.mrf.mxu0
      %v1512 = vpop.f32.mrf.mxu0
      %v1513 = vadd.f32 0.0, %v1512
      %v1514 = vpop.f32.mrf.mxu0
      %1515 = vmatprep.mubr.bf16.mxu0 0
      %1516 = vmatmul.mubr.bf16.gmra.mxu0 %v709
      %v1517 = vpop.f32.mrf.mxu0
      %v1518 = vadd.f32 0.0, %v1517
      %v1519 = vpop.f32.mrf.mxu0
      %v1520 = vpop.f32.mrf.mxu0
      %v1521 = vadd.f32 0.0, %v1520
      %v1522 = vpop.f32.mrf.mxu0
      %1523 = vmatprep.mubr.bf16.mxu0 0
      %1524 = vmatmul.mubr.bf16.gmra.mxu0 %v712
      %v1525 = vpop.f32.mrf.mxu0
      %v1526 = vadd.f32 0.0, %v1525
      %v1527 = vpop.f32.mrf.mxu0
      %v1528 = vpop.f32.mrf.mxu0
      %v1529 = vadd.f32 0.0, %v1528
      %v1530 = vpop.f32.mrf.mxu0
      %1531 = vmatprep.mubr.bf16.mxu0 0
      %1532 = vmatmul.mubr.bf16.gmra.mxu0 %v715
      %v1533 = vpop.f32.mrf.mxu0
      %v1534 = vadd.f32 0.0, %v1533
      %v1535 = vpop.f32.mrf.mxu0
      %v1536 = vpop.f32.mrf.mxu0
      %v1537 = vadd.f32 0.0, %v1536
      %v1538 = vpop.f32.mrf.mxu0
      %1539 = vmatprep.mubr.bf16.mxu0 0
      %1540 = vmatmul.mubr.bf16.gmra.mxu0 %v718
      %v1541 = vpop.f32.mrf.mxu0
      %v1542 = vadd.f32 0.0, %v1541
      %v1543 = vpop.f32.mrf.mxu0
      %v1544 = vpop.f32.mrf.mxu0
      %v1545 = vadd.f32 0.0, %v1544
      %v1546 = vpop.f32.mrf.mxu0
      %1547 = vmatprep.mubr.bf16.mxu0 0
      %1548 = vmatmul.mubr.bf16.gmra.mxu0 %v721
      %v1549 = vpop.f32.mrf.mxu0
      %v1550 = vadd.f32 0.0, %v1549
      %v1551 = vpop.f32.mrf.mxu0
      %v1552 = vpop.f32.mrf.mxu0
      %v1553 = vadd.f32 0.0, %v1552
      %v1554 = vpop.f32.mrf.mxu0
      %1555 = vmatprep.mubr.bf16.mxu0 0
      %1556 = vmatmul.mubr.bf16.gmra.mxu0 %v724
      %v1557 = vpop.f32.mrf.mxu0
      %v1558 = vadd.f32 0.0, %v1557
      %v1559 = vpop.f32.mrf.mxu0
      %v1560 = vpop.f32.mrf.mxu0
      %v1561 = vadd.f32 0.0, %v1560
      %v1562 = vpop.f32.mrf.mxu0
      %1563 = vmatprep.mubr.bf16.mxu0 0
      %1564 = vmatmul.mubr.bf16.gmra.mxu0 %v727
      %v1565 = vpop.f32.mrf.mxu0
      %v1566 = vadd.f32 0.0, %v1565
      %v1567 = vpop.f32.mrf.mxu0
      %v1568 = vpop.f32.mrf.mxu0
      %v1569 = vadd.f32 0.0, %v1568
      %v1570 = vpop.f32.mrf.mxu0
      %1571 = vmatprep.mubr.bf16.mxu0 0
      %1572 = vmatmul.mubr.bf16.gmra.mxu0 %v730
      %v1573 = vpop.f32.mrf.mxu0
      %v1574 = vadd.f32 0.0, %v1573
      %v1575 = vpop.f32.mrf.mxu0
      %v1576 = vpop.f32.mrf.mxu0
      %v1577 = vadd.f32 0.0, %v1576
      %v1578 = vpop.f32.mrf.mxu0
      %1579 = vmatprep.mubr.bf16.mxu0 0
      %1580 = vmatmul.mubr.bf16.gmra.mxu0 %v733
      %v1581 = vpop.f32.mrf.mxu0
      %v1582 = vadd.f32 0.0, %v1581
      %v1583 = vpop.f32.mrf.mxu0
      %v1584 = vpop.f32.mrf.mxu0
      %v1585 = vadd.f32 0.0, %v1584
      %v1586 = vpop.f32.mrf.mxu0
      %1587 = vmatprep.mubr.bf16.mxu0 0
      %1588 = vmatmul.mubr.bf16.gmra.mxu0 %v736
      %v1589 = vpop.f32.mrf.mxu0
      %v1590 = vadd.f32 0.0, %v1589
      %v1591 = vpop.f32.mrf.mxu0
      %v1592 = vpop.f32.mrf.mxu0
      %v1593 = vadd.f32 0.0, %v1592
      %v1594 = vpop.f32.mrf.mxu0
      %1595 = vmatprep.mubr.bf16.mxu0 0
      %1596 = vmatmul.mubr.bf16.gmra.mxu0 %v739
      %v1597 = vpop.f32.mrf.mxu0
      %v1598 = vadd.f32 0.0, %v1597
      %v1599 = vpop.f32.mrf.mxu0
      %v1600 = vpop.f32.mrf.mxu0
      %v1601 = vadd.f32 0.0, %v1600
      %v1602 = vpop.f32.mrf.mxu0
      %1603 = vmatprep.mubr.bf16.mxu0 0
      %1604 = vmatmul.mubr.bf16.gmra.mxu0 %v742
      %v1605 = vpop.f32.mrf.mxu0
      %v1606 = vadd.f32 0.0, %v1605
      %v1607 = vpop.f32.mrf.mxu0
      %v1608 = vpop.f32.mrf.mxu0
      %v1609 = vadd.f32 0.0, %v1608
      %v1610 = vpop.f32.mrf.mxu0
      %1611 = vmatprep.mubr.bf16.mxu0 0
      %1612 = vmatmul.mubr.bf16.gmra.mxu0 %v1454
      %v1613 = vpop.f32.mrf.mxu0
      %v1614 = vadd.f32 0.0, %v1613
      %v1615 = vpop.f32.mrf.mxu0
      %v1616 = vpop.f32.mrf.mxu0
      %v1617 = vadd.f32 0.0, %v1616
      %v1618 = vpop.f32.mrf.mxu0
      %1619 = vdwg.mxu0
      %v1620 = vadd.f32 %v1386, %v1494
      %v1621 = vadd.f32 %v1387, %v1497
      %v1622 = vadd.f32 %v1388, %v1502
      %v1623 = vadd.f32 %v1389, %v1505
      %v1624 = vadd.f32 %v1390, %v1510
      %v1625 = vadd.f32 %v1391, %v1513
      %v1626 = vadd.f32 %v1392, %v1518
      %v1627 = vadd.f32 %v1393, %v1521
      %v1628 = vadd.f32 %v1394, %v1526
      %v1629 = vadd.f32 %v1395, %v1529
      %v1630 = vadd.f32 %v1396, %v1534
      %v1631 = vadd.f32 %v1397, %v1537
      %v1632 = vadd.f32 %v1398, %v1542
      %v1633 = vadd.f32 %v1399, %v1545
      %v1634 = vadd.f32 %v1400, %v1550
      %v1635 = vadd.f32 %v1401, %v1553
      %v1636 = vadd.f32 %v1402, %v1558
      %v1637 = vadd.f32 %v1403, %v1561
      %v1638 = vadd.f32 %v1404, %v1566
      %v1639 = vadd.f32 %v1405, %v1569
      %v1640 = vadd.f32 %v1406, %v1574
      %v1641 = vadd.f32 %v1407, %v1577
      %v1642 = vadd.f32 %v1408, %v1582
      %v1643 = vadd.f32 %v1409, %v1585
      %v1644 = vadd.f32 %v1410, %v1590
      %v1645 = vadd.f32 %v1411, %v1593
      %v1646 = vadd.f32 %v1412, %v1598
      %v1647 = vadd.f32 %v1413, %v1601
      %v1648 = vadd.f32 %v1414, %v1606
      %v1649 = vadd.f32 %v1415, %v1609
      %v1650 = vadd.f32 %v1416, %v1614
      %v1651 = vadd.f32 %v1417, %v1617
      %v1652 = vld [vmem:[%s2] sm:$0x1]
      %v1654 = vlaneseq
      %v1655 = vshrl.u32 %v1654, 7
      %v1656 = vsub.s32 0, %v1655
      %v1657 = vrot.slane %v1652, %v1656
      %v1659 = vadd.f32 %v1620, %v1657
      %v1660 = vadd.f32 %v1621, %v1657
      %v1661 = vadd.f32 %v1622, %v1657
      %v1662 = vadd.f32 %v1623, %v1657
      %v1663 = vadd.f32 %v1624, %v1657
      %v1664 = vadd.f32 %v1625, %v1657
      %v1665 = vadd.f32 %v1626, %v1657
      %v1666 = vadd.f32 %v1627, %v1657
      %v1667 = vadd.f32 %v1628, %v1657
      %v1668 = vadd.f32 %v1629, %v1657
      %v1669 = vadd.f32 %v1630, %v1657
      %v1670 = vadd.f32 %v1631, %v1657
      %v1671 = vadd.f32 %v1632, %v1657
      %v1672 = vadd.f32 %v1633, %v1657
      %v1673 = vadd.f32 %v1634, %v1657
      %v1674 = vadd.f32 %v1635, %v1657
      %v1675 = vadd.f32 %v1636, %v1657
      %v1676 = vadd.f32 %v1637, %v1657
      %v1677 = vadd.f32 %v1638, %v1657
      %v1678 = vadd.f32 %v1639, %v1657
      %v1679 = vadd.f32 %v1640, %v1657
      %v1680 = vadd.f32 %v1641, %v1657
      %v1681 = vadd.f32 %v1642, %v1657
      %v1682 = vadd.f32 %v1643, %v1657
      %v1683 = vadd.f32 %v1644, %v1657
      %v1684 = vadd.f32 %v1645, %v1657
      %v1685 = vadd.f32 %v1646, %v1657
      %v1686 = vadd.f32 %v1647, %v1657
      %v1687 = vadd.f32 %v1648, %v1657
      %v1688 = vadd.f32 %v1649, %v1657
      %v1689 = vadd.f32 %v1650, %v1657
      %v1690 = vadd.f32 %v1651, %v1657
      %v1691 = vpack.c.bf16 %v1660, %v1659
      %v1692 = vpack.c.bf16 %v1662, %v1661
      %v1693 = vpack.c.bf16 %v1664, %v1663
      %v1694 = vpack.c.bf16 %v1666, %v1665
      %v1695 = vpack.c.bf16 %v1668, %v1667
      %v1696 = vpack.c.bf16 %v1670, %v1669
      %v1697 = vpack.c.bf16 %v1672, %v1671
      %v1698 = vpack.c.bf16 %v1674, %v1673
      %v1699 = vpack.c.bf16 %v1676, %v1675
      %v1700 = vpack.c.bf16 %v1678, %v1677
      %v1701 = vpack.c.bf16 %v1680, %v1679
      %v1702 = vpack.c.bf16 %v1682, %v1681
      %v1703 = vpack.c.bf16 %v1684, %v1683
      %v1704 = vpack.c.bf16 %v1686, %v1685
      %v1705 = vpack.c.bf16 %v1688, %v1687
      %v1706 = vpack.c.bf16 %v1690, %v1689
      %v1723 = vunpack.c.l.b16 %v1691
      %v1724 = vunpack.c.h.b16 %v1691
      %v1725 = vunpack.c.l.b16 %v1692
      %v1726 = vunpack.c.h.b16 %v1692
      %v1727 = vunpack.c.l.b16 %v1693
      %v1728 = vunpack.c.h.b16 %v1693
      %v1729 = vunpack.c.l.b16 %v1694
      %v1730 = vunpack.c.h.b16 %v1694
      %v1731 = vunpack.c.l.b16 %v1695
      %v1732 = vunpack.c.h.b16 %v1695
      %v1733 = vunpack.c.l.b16 %v1696
      %v1734 = vunpack.c.h.b16 %v1696
      %v1735 = vunpack.c.l.b16 %v1697
      %v1736 = vunpack.c.h.b16 %v1697
      %v1737 = vunpack.c.l.b16 %v1698
      %v1738 = vunpack.c.h.b16 %v1698
      %v1739 = vunpack.c.l.b16 %v1699
      %v1740 = vunpack.c.h.b16 %v1699
      %v1741 = vunpack.c.l.b16 %v1700
      %v1742 = vunpack.c.h.b16 %v1700
      %v1743 = vunpack.c.l.b16 %v1701
      %v1744 = vunpack.c.h.b16 %v1701
      %v1745 = vunpack.c.l.b16 %v1702
      %v1746 = vunpack.c.h.b16 %v1702
      %v1747 = vunpack.c.l.b16 %v1703
      %v1748 = vunpack.c.h.b16 %v1703
      %v1749 = vunpack.c.l.b16 %v1704
      %v1750 = vunpack.c.h.b16 %v1704
      %v1751 = vunpack.c.l.b16 %v1705
      %v1752 = vunpack.c.h.b16 %v1705
      %v1753 = vunpack.c.l.b16 %v1706
      %v1754 = vunpack.c.h.b16 %v1706
      %v1755 = vpack.c.b16 %v1723, %v1723
      %v1756 = vpack.c.b16 %v1724, %v1724
      %v1757 = vpack.c.b16 %v1725, %v1725
      %v1758 = vpack.c.b16 %v1726, %v1726
      %v1759 = vpack.c.b16 %v1727, %v1727
      %v1760 = vpack.c.b16 %v1728, %v1728
      %v1761 = vpack.c.b16 %v1729, %v1729
      %v1762 = vpack.c.b16 %v1730, %v1730
      %v1763 = vpack.c.b16 %v1731, %v1731
      %v1764 = vpack.c.b16 %v1732, %v1732
      %v1765 = vpack.c.b16 %v1733, %v1733
      %v1766 = vpack.c.b16 %v1734, %v1734
      %v1767 = vpack.c.b16 %v1735, %v1735
      %v1768 = vpack.c.b16 %v1736, %v1736
      %v1769 = vpack.c.b16 %v1737, %v1737
      %v1770 = vpack.c.b16 %v1738, %v1738
      %v1771 = vpack.c.b16 %v1739, %v1739
      %v1772 = vpack.c.b16 %v1740, %v1740
      %v1773 = vpack.c.b16 %v1741, %v1741
      %v1774 = vpack.c.b16 %v1742, %v1742
      %v1775 = vpack.c.b16 %v1743, %v1743
      %v1776 = vpack.c.b16 %v1744, %v1744
      %v1777 = vpack.c.b16 %v1745, %v1745
      %v1778 = vpack.c.b16 %v1746, %v1746
      %v1779 = vpack.c.b16 %v1747, %v1747
      %v1780 = vpack.c.b16 %v1748, %v1748
      %v1781 = vpack.c.b16 %v1749, %v1749
      %v1782 = vpack.c.b16 %v1750, %v1750
      %v1783 = vpack.c.b16 %v1751, %v1751
      %v1784 = vpack.c.b16 %v1752, %v1752
      %v1785 = vpack.c.b16 %v1753, %v1753
      %v1786 = vpack.c.b16 %v1754, %v1754
      %vm1819 = vcmask 125952
      %1820 = vst.msk [vmem:[%s192] sm:$0xf] %vm1819, %v1755
      %1821 = vst.msk [vmem:[%s192 + $0x4] sm:$0xf] %vm1819, %v1756
      %1822 = vst.msk [vmem:[%s192 + $0x8] sm:$0xf] %vm1819, %v1757
      %1823 = vst.msk [vmem:[%s192 + $0xc] sm:$0xf] %vm1819, %v1758
      %1824 = vst.msk [vmem:[%s192 + $0x10] sm:$0xf] %vm1819, %v1759
      %1825 = vst.msk [vmem:[%s192 + $0x14] sm:$0xf] %vm1819, %v1760
      %1826 = vst.msk [vmem:[%s192 + $0x18] sm:$0xf] %vm1819, %v1761
      %1827 = vst.msk [vmem:[%s192 + $0x1c] sm:$0xf] %vm1819, %v1762
      %1828 = vst.msk [vmem:[%s192 + $0x20] sm:$0xf] %vm1819, %v1763
      %1829 = vst.msk [vmem:[%s192 + $0x24] sm:$0xf] %vm1819, %v1764
      %1830 = vst.msk [vmem:[%s192 + $0x28] sm:$0xf] %vm1819, %v1765
      %1831 = vst.msk [vmem:[%s192 + $0x2c] sm:$0xf] %vm1819, %v1766
      %1832 = vst.msk [vmem:[%s192 + $0x30] sm:$0xf] %vm1819, %v1767
      %1833 = vst.msk [vmem:[%s192 + $0x34] sm:$0xf] %vm1819, %v1768
      %1834 = vst.msk [vmem:[%s192 + $0x38] sm:$0xf] %vm1819, %v1769
      %1835 = vst.msk [vmem:[%s192 + $0x3c] sm:$0xf] %vm1819, %v1770
      %1836 = vst.msk [vmem:[%s192 + $0x40] sm:$0xf] %vm1819, %v1771
      %1837 = vst.msk [vmem:[%s192 + $0x44] sm:$0xf] %vm1819, %v1772
      %1838 = vst.msk [vmem:[%s192 + $0x48] sm:$0xf] %vm1819, %v1773
      %1839 = vst.msk [vmem:[%s192 + $0x4c] sm:$0xf] %vm1819, %v1774
      %1840 = vst.msk [vmem:[%s192 + $0x50] sm:$0xf] %vm1819, %v1775
      %1841 = vst.msk [vmem:[%s192 + $0x54] sm:$0xf] %vm1819, %v1776
      %1842 = vst.msk [vmem:[%s192 + $0x58] sm:$0xf] %vm1819, %v1777
      %1843 = vst.msk [vmem:[%s192 + $0x5c] sm:$0xf] %vm1819, %v1778
      %1844 = vst.msk [vmem:[%s192 + $0x60] sm:$0xf] %vm1819, %v1779
      %1845 = vst.msk [vmem:[%s192 + $0x64] sm:$0xf] %vm1819, %v1780
      %1846 = vst.msk [vmem:[%s192 + $0x68] sm:$0xf] %vm1819, %v1781
      %1847 = vst.msk [vmem:[%s192 + $0x6c] sm:$0xf] %vm1819, %v1782
      %1848 = vst.msk [vmem:[%s192 + $0x70] sm:$0xf] %vm1819, %v1783
      %1849 = vst.msk [vmem:[%s192 + $0x74] sm:$0xf] %vm1819, %v1784
      %1850 = vst.msk [vmem:[%s192 + $0x78] sm:$0xf] %vm1819, %v1785
      %1851 = vst.msk [vmem:[%s192 + $0x7c] sm:$0xf] %vm1819, %v1786
      %s1852 = smul.u32 32, %s19
      %p1853 = scmp.lt.s32.totalorder %s18, 1
      %s1854 = scalar_select %p1853, %s18, 1
      %p1855 = scmp.lt.s32.totalorder %s1852, 31
      %s1856 = scalar_select %p1855, %s1852, 31
      %s1857 = smul.addr %s1854, 32
      %s1858 = sadd.s32 %s1856, %s1857
      %s1859 = smul.addr %s1858, 4
      %s1860 = scalar_lea.vmem %s3, %s1859
      // Predicated region
      $region33: #{_lambda_.5} parent=31 // pred_check
        %p1861 = pneg %p114
      $region34: #{_lambda_.5} parent=31 // pred_check_branch
        %1863 = sbr.rel (%p1861) target = $region36
      $region35: #{_lambda_.5} parent=31 // pred_region
        %s1864 = smul.u32 32, %s19
      $region36: #{_lambda_.5} parent=31 // pred_fallthru
        _
    $region32: #{_lambda_.5} parent=5 // pred_fallthru
      _
    %p1865 = scmp.le.s32.totalorder 2, %s9
    // Predicated region
    $region37: #{_lambda_.5} parent=5 // pred_check
      %p1866 = pneg %p1865
    $region38: #{_lambda_.5} parent=5 // pred_check_branch
      %1868 = sbr.rel (%p1866) target = $region40
    $region39: #{_lambda_.5} parent=5 // pred_region
      %s1869 = ssub.s32 %s9, 2
      // Predicated region
      $region41: #{_lambda_.5} parent=39 // pred_check
        %p1870 = pneg %p120
      $region42: #{_lambda_.5} parent=39 // pred_check_branch
        %1872 = sbr.rel (%p1870) target = $region44
      $region43: #{_lambda_.5} parent=39 // pred_region
        %s1873 = smul.u32 32, %s21
        %p1874 = scmp.lt.s32.totalorder %s20, 1
        %s1875 = scalar_select %p1874, %s20, 1
        %p1876 = scmp.lt.s32.totalorder %s1873, 31
        %s1877 = scalar_select %p1876, %s1873, 31
        %s1878 = smul.addr %s1875, 32
        %s1879 = sadd.s32 %s1877, %s1878
        %s1880 = smul.addr %s1879, 4
        %s1881 = scalar_lea.vmem %s3, %s1880
      $region44: #{_lambda_.5} parent=39 // pred_fallthru
        _
    $region40: #{_lambda_.5} parent=5 // pred_fallthru
      _
  $region6: #{_lambda_.5} parent=0 // loop_footer
    %s13 = sadd.s32 1, %s9
  $region7: #{_lambda_.5} parent=0 // loop_footer_branch
    %8 = sbr.rel target = $region3
  $region8: #{_lambda_.5} parent=0 // loop_exit
    _

// kernel: _lambda_.6
$region0: #{_lambda_.6}
  #allocation0 [shape = 'u32[]', space=smem, size = 0x4, offset = 0x4, fixed_abs, tag = 'smem constant byte address 0x4 - core index']
  #allocation1 [shape = 'u32[144,128]{1,0:T(1,128)}', space=vmem, size = 0x12000, scoped, tag = 'internal scratch']
  %s0 = inlined_call_operand.vmem [shape: bf16[2,9,9,64], index: 0, kind: input, shape index: {}]
  %s1 = inlined_call_operand.vmem [shape: bf16[4,64,32], index: 1, kind: input, shape index: {}]
  %s2 = inlined_call_operand.vmem [shape: f32[1,32], index: 2, kind: input, shape index: {}]
  %s3 = inlined_call_operand.vmem [shape: bf16[2,64,32], index: 3, kind: output, shape index: {0}]
  %s4 = inlined_call_operand.vmem [shape: f32[2,2,32], index: 4, kind: output, shape index: {1}]
  %5 = xla_tuple %s3, %s4
  %s6 = sld [smem:[#allocation0]]
  $region57: #{_lambda_.6} parent=0
    _
  %s8 = ssub.s32 1, %s6
  %s9 = scalar_select 0, %s8, %s6
  loop: start=0, step=1, limit=4
  $region2: #{_lambda_.6} parent=0 // loop_pre_header
    _
  $region3: #{_lambda_.6} parent=0 // loop_header
    %s11 = sphi 0, %s15
    %p12 = scmp.ge.s32.totalorder %s11, 4
    %s18 = sphi 0, %s30
    %s19 = sphi 0, %s26
    %s20 = sphi 0, %s18
    %s21 = sphi 0, %s19
    %s22 = sphi 0, %s20
    %s23 = sphi 0, %s21
    %s33 = sphi 0, %s35
    %s36 = sphi 0, %s33
    %s37 = sphi 0, %s36
    %s53 = sphi 0, %s37
    %s57 = sphi 0, %s57
    %s59 = sphi 0, %s57
    %s60 = sphi 0, %s59
    %s74 = sphi 0, %s60
    %s78 = sphi 0, %s78
    %s80 = sphi 0, %s78
    %s81 = sphi 0, %s80
    %s95 = sphi 0, %s81
    %s103 = sphi 0, %s105
    %s106 = sphi 0, %s103
    %s107 = sphi 0, %s106
    %s123 = sphi 0, %s107
    %s129 = sphi 0, %s131
    %s132 = sphi 0, %s129
    %s133 = sphi 0, %s132
    %s149 = sphi 0, %s133
  $region4: #{_lambda_.6} parent=0 // loop_header_branch
    %14 = sbr.rel (%p12) target = $region8
  $region5: #{_lambda_.6} parent=0 // loop_body
    %s16 = ssub.s32 %s11, 1
    %s17 = ssub.s32 %s11, 2
    %s24 = sadd.s32 1, %s19
    %p25 = scmp.ge.s32.totalorder %s24, 1
    %s26 = scalar_select %p25, 0, %s24
    %s27 = sadd.s32 1, %s18
    %s28 = scalar_select %p25, %s27, %s18
    %p29 = scmp.ge.s32.totalorder %s28, 2
    %s30 = scalar_select %p29, 0, %s28
    %s31 = ssub.s32 %s18, %s30
    %p32 = scmp.eq.s32.totalorder %s31, 0
    %s34 = sadd.s32 %s33, 1
    %s35 = scalar_select %p32, %s33, %s34
    %p38 = pneg %p32
    %p39 = scmp.eq.s32.totalorder %s11, 1
    %p40 = por %p38, %p39
    %p41 = scmp.ne.s32.totalorder %s33, %s36
    %p42 = scmp.eq.s32.totalorder %s11, 0
    %p43 = por %p41, %p42
    %p44 = scmp.ne.s32.totalorder %s33, %s36
    %p45 = scmp.eq.s32.totalorder %s16, 1
    %p46 = por %p44, %p45
    %p47 = scmp.ne.s32.totalorder %s36, %s37
    %p48 = scmp.eq.s32.totalorder %s16, 0
    %p49 = por %p47, %p48
    %p50 = scmp.ne.s32.totalorder %s36, %s37
    %p51 = scmp.eq.s32.totalorder %s17, 1
    %p52 = por %p50, %p51
    %p54 = scmp.ne.s32.totalorder %s37, %s53
    %p55 = scmp.eq.s32.totalorder %s17, 0
    %p56 = por %p54, %p55
    %s58 = sadd.s32 %s57, 1
    %p61 = scmp.eq.s32.totalorder %s11, 1
    %p62 = scmp.ne.s32.totalorder %s57, %s59
    %p63 = scmp.eq.s32.totalorder %s11, 0
    %p64 = por %p62, %p63
    %p65 = scmp.ne.s32.totalorder %s57, %s59
    %p66 = scmp.eq.s32.totalorder %s16, 1
    %p67 = por %p65, %p66
    %p68 = scmp.ne.s32.totalorder %s59, %s60
    %p69 = scmp.eq.s32.totalorder %s16, 0
    %p70 = por %p68, %p69
    %p71 = scmp.ne.s32.totalorder %s59, %s60
    %p72 = scmp.eq.s32.totalorder %s17, 1
    %p73 = por %p71, %p72
    %p75 = scmp.ne.s32.totalorder %s60, %s74
    %p76 = scmp.eq.s32.totalorder %s17, 0
    %p77 = por %p75, %p76
    %s79 = sadd.s32 %s78, 1
    %p82 = scmp.eq.s32.totalorder %s11, 1
    %p83 = scmp.ne.s32.totalorder %s78, %s80
    %p84 = scmp.eq.s32.totalorder %s11, 0
    %p85 = por %p83, %p84
    %p86 = scmp.ne.s32.totalorder %s78, %s80
    %p87 = scmp.eq.s32.totalorder %s16, 1
    %p88 = por %p86, %p87
    %p89 = scmp.ne.s32.totalorder %s80, %s81
    %p90 = scmp.eq.s32.totalorder %s16, 0
    %p91 = por %p89, %p90
    %p92 = scmp.ne.s32.totalorder %s80, %s81
    %p93 = scmp.eq.s32.totalorder %s17, 1
    %p94 = por %p92, %p93
    %p96 = scmp.ne.s32.totalorder %s81, %s95
    %p97 = scmp.eq.s32.totalorder %s17, 0
    %p98 = por %p96, %p97
    %s99 = ssub.s32 %s18, %s30
    %s100 = ssub.s32 %s19, %s26
    %s101 = sor.u32 %s99, %s100
    %p102 = scmp.eq.s32.totalorder %s101, 0
    %s104 = sadd.s32 %s103, 1
    %s105 = scalar_select %p102, %s103, %s104
    %p108 = pneg %p102
    %p109 = scmp.eq.s32.totalorder %s11, 1
    %p110 = por %p108, %p109
    %p111 = scmp.ne.s32.totalorder %s103, %s106
    %p112 = scmp.eq.s32.totalorder %s11, 0
    %p113 = por %p111, %p112
    %p114 = scmp.ne.s32.totalorder %s103, %s106
    %p115 = scmp.eq.s32.totalorder %s16, 1
    %p116 = por %p114, %p115
    %p117 = scmp.ne.s32.totalorder %s106, %s107
    %p118 = scmp.eq.s32.totalorder %s16, 0
    %p119 = por %p117, %p118
    %p120 = scmp.ne.s32.totalorder %s106, %s107
    %p121 = scmp.eq.s32.totalorder %s17, 1
    %p122 = por %p120, %p121
    %p124 = scmp.ne.s32.totalorder %s107, %s123
    %p125 = scmp.eq.s32.totalorder %s17, 0
    %p126 = por %p124, %p125
    %s127 = ssub.s32 %s18, %s30
    %p128 = scmp.eq.s32.totalorder %s127, 0
    %s130 = sadd.s32 %s129, 1
    %s131 = scalar_select %p128, %s129, %s130
    %p134 = pneg %p128
    %p135 = scmp.eq.s32.totalorder %s11, 1
    %p136 = por %p134, %p135
    %p137 = scmp.ne.s32.totalorder %s129, %s132
    %p138 = scmp.eq.s32.totalorder %s11, 0
    %p139 = por %p137, %p138
    %p140 = scmp.ne.s32.totalorder %s129, %s132
    %p141 = scmp.eq.s32.totalorder %s16, 1
    %p142 = por %p140, %p141
    %p143 = scmp.ne.s32.totalorder %s132, %s133
    %p144 = scmp.eq.s32.totalorder %s16, 0
    %p145 = por %p143, %p144
    %p146 = scmp.ne.s32.totalorder %s132, %s133
    %p147 = scmp.eq.s32.totalorder %s17, 1
    %p148 = por %p146, %p147
    %p150 = scmp.ne.s32.totalorder %s133, %s149
    %p151 = scmp.eq.s32.totalorder %s17, 0
    %p152 = por %p150, %p151
    %p153 = scmp.le.s32.totalorder 1, %s11
    %p154 = scmp.lt.s32.totalorder %s11, 3
    %p155 = pnand %p153, %p154
    %p156 = pneg %p155
    // Predicated region
    $region9: #{_lambda_.6} parent=5 // pred_check
      _
    $region10: #{_lambda_.6} parent=5 // pred_check_branch
      %158 = sbr.rel (%p155) target = $region12
    $region11: #{_lambda_.6} parent=5 // pred_region
      %s159 = ssub.s32 %s11, 1
      // Predicated region
      $region13: #{_lambda_.6} parent=11 // pred_check
        %p160 = pneg %p70
      $region14: #{_lambda_.6} parent=11 // pred_check_branch
        %162 = sbr.rel (%p160) target = $region16
      $region15: #{_lambda_.6} parent=11 // pred_region
        _
      $region16: #{_lambda_.6} parent=11 // pred_fallthru
        _
      // Predicated region
      $region17: #{_lambda_.6} parent=11 // pred_check
        %p163 = pneg %p91
      $region18: #{_lambda_.6} parent=11 // pred_check_branch
        %165 = sbr.rel (%p163) target = $region20
      $region19: #{_lambda_.6} parent=11 // pred_region
        _
      $region20: #{_lambda_.6} parent=11 // pred_fallthru
        _
    $region12: #{_lambda_.6} parent=5 // pred_fallthru
      _
    %p166 = scmp.lt.s32.totalorder %s11, 2
    // Predicated region
    $region21: #{_lambda_.6} parent=5 // pred_check
      %p167 = pneg %p166
    $region22: #{_lambda_.6} parent=5 // pred_check_branch
      %169 = sbr.rel (%p167) target = $region24
    $region23: #{_lambda_.6} parent=5 // pred_region
      // Predicated region
      $region25: #{_lambda_.6} parent=23 // pred_check
        %p170 = pneg %p43
      $region26: #{_lambda_.6} parent=23 // pred_check_branch
        %172 = sbr.rel (%p170) target = $region28
      $region27: #{_lambda_.6} parent=23 // pred_region
        %p173 = scmp.lt.s32.totalorder %s18, 1
        %s174 = scalar_select %p173, %s18, 1
        %s175 = smul.addr %s174, 18
        %s176 = smul.addr %s175, 4
        %s177 = scalar_lea.vmem %s0, %s176
      $region28: #{_lambda_.6} parent=23 // pred_fallthru
        _
    $region24: #{_lambda_.6} parent=5 // pred_fallthru
      _
    %p178 = scmp.le.s32.totalorder 1, %s11
    %p179 = scmp.lt.s32.totalorder %s11, 3
    %p180 = pnand %p178, %p179
    %p181 = pneg %p180
    // Predicated region
    $region29: #{_lambda_.6} parent=5 // pred_check
      _
    $region30: #{_lambda_.6} parent=5 // pred_check_branch
      %183 = sbr.rel (%p180) target = $region32
    $region31: #{_lambda_.6} parent=5 // pred_region
      %s184 = ssub.s32 %s11, 1
      %p185 = scmp.lt.s32.totalorder %s20, 1
      %s186 = scalar_select %p185, %s20, 1
      %s187 = smul.addr %s186, 18
      %s188 = smul.addr %s187, 4
      %s189 = scalar_lea.vmem %s0, %s188
      %p190 = pneg %p49
      %p191 = pneg %p46
      %p192 = pneg %p70
      %p193 = pneg %p67
      %p194 = pneg %p91
      %p195 = pneg %p88
      %p196 = pneg %p119
      %p197 = pneg %p116
      %s198 = smul.u32 8, %s21
      %p199 = scmp.lt.s32.totalorder %s20, 1
      %s200 = scalar_select %p199, %s20, 1
      %p201 = scmp.lt.s32.totalorder %s198, 7
      %s202 = scalar_select %p201, %s198, 7
      %s203 = smul.addr %s200, 8
      %s204 = sadd.s32 %s202, %s203
      %s205 = smul.addr %s204, 4
      %s206 = scalar_lea.vmem %s3, %s205
      %p207 = pneg %p145
      %p208 = pneg %p142
      %p209 = scmp.lt.s32.totalorder %s20, 1
      %s210 = scalar_select %p209, %s20, 1
      %s211 = smul.addr %s210, 2
      %s212 = scalar_lea.vmem %s4, %s211
      %p213 = scmp.lt.s32.totalorder %s20, 1
      %s214 = scalar_select %p213, %s20, 1
      %s215 = smul.addr %s214, 18
      %s216 = smul.addr %s215, 4
      %s217 = scalar_lea.vmem %s0, %s216
      %s218 = smul.u32 8, %s21
      %p219 = scmp.lt.s32.totalorder %s20, 1
      %s220 = scalar_select %p219, %s20, 1
      %p221 = scmp.lt.s32.totalorder %s218, 7
      %s222 = scalar_select %p221, %s218, 7
      %s223 = smul.addr %s220, 8
      %s224 = sadd.s32 %s222, %s223
      %s225 = smul.addr %s224, 4
      %s226 = scalar_lea.vmem %s3, %s225
      %s227 = smul.u32 8, %s21
      %p228 = scmp.lt.s32.totalorder %s20, 1
      %s229 = scalar_select %p228, %s20, 1
      %s230 = smul.addr %s229, 2
      %s231 = scalar_lea.vmem %s4, %s230
      %s233 = smul.u32 %s21, 8
      %s234 = smul.u32 %s233, 2
      %s235 = smul.addr %s234, 4
      %s236 = scalar_lea.vmem %s217, %s235
      %v237 = vld [vmem:[%s236] sm:$0xf]
      %v238 = vld [vmem:[%s236 + $0x4] sm:$0x1]
      %v239 = vld [vmem:[%s236 + $0x8] sm:$0xf]
      %v240 = vld [vmem:[%s236 + $0xc] sm:$0x1]
      %v241 = vld [vmem:[%s236 + $0x10] sm:$0xf]
      %v242 = vld [vmem:[%s236 + $0x14] sm:$0x1]
      %v243 = vld [vmem:[%s236 + $0x18] sm:$0xf]
      %v244 = vld [vmem:[%s236 + $0x1c] sm:$0x1]
      %v245 = vld [vmem:[%s236 + $0x20] sm:$0xf]
      %v246 = vld [vmem:[%s236 + $0x24] sm:$0x1]
      %v247 = vld [vmem:[%s236 + $0x28] sm:$0xf]
      %v248 = vld [vmem:[%s236 + $0x2c] sm:$0x1]
      %v249 = vld [vmem:[%s236 + $0x30] sm:$0xf]
      %v250 = vld [vmem:[%s236 + $0x34] sm:$0x1]
      %v251 = vld [vmem:[%s236 + $0x38] sm:$0xf]
      %v252 = vld [vmem:[%s236 + $0x3c] sm:$0x1]
      %v253 = vld [vmem:[%s236 + $0x40] sm:$0xf]
      %v254 = vld [vmem:[%s236 + $0x44] sm:$0x1]
      %v255 = vunpack.c.l.bf16 %v237
      %v256 = vunpack.c.l.bf16 %v238
      %v257 = vunpack.c.l.bf16 %v239
      %v258 = vunpack.c.l.bf16 %v240
      %v259 = vunpack.c.l.bf16 %v241
      %v260 = vunpack.c.l.bf16 %v242
      %v261 = vunpack.c.l.bf16 %v243
      %v262 = vunpack.c.l.bf16 %v244
      %v263 = vunpack.c.l.bf16 %v245
      %v264 = vunpack.c.l.bf16 %v246
      %v265 = vunpack.c.l.bf16 %v247
      %v266 = vunpack.c.l.bf16 %v248
      %v267 = vunpack.c.l.bf16 %v249
      %v268 = vunpack.c.l.bf16 %v250
      %v269 = vunpack.c.l.bf16 %v251
      %v270 = vunpack.c.l.bf16 %v252
      %v271 = vunpack.c.l.bf16 %v253
      %v272 = vunpack.c.l.bf16 %v254
      %vm273 = vcmp.ge.f32.partialorder %v255, 0.0
      %vm274 = vcmp.ge.f32.partialorder %v256, 0.0
      %vm275 = vcmp.ge.f32.partialorder %v257, 0.0
      %vm276 = vcmp.ge.f32.partialorder %v258, 0.0
      %vm277 = vcmp.ge.f32.partialorder %v259, 0.0
      %vm278 = vcmp.ge.f32.partialorder %v260, 0.0
      %vm279 = vcmp.ge.f32.partialorder %v261, 0.0
      %vm280 = vcmp.ge.f32.partialorder %v262, 0.0
      %vm281 = vcmp.ge.f32.partialorder %v263, 0.0
      %vm282 = vcmp.ge.f32.partialorder %v264, 0.0
      %vm283 = vcmp.ge.f32.partialorder %v265, 0.0
      %vm284 = vcmp.ge.f32.partialorder %v266, 0.0
      %vm285 = vcmp.ge.f32.partialorder %v267, 0.0
      %vm286 = vcmp.ge.f32.partialorder %v268, 0.0
      %vm287 = vcmp.ge.f32.partialorder %v269, 0.0
      %vm288 = vcmp.ge.f32.partialorder %v270, 0.0
      %vm289 = vcmp.ge.f32.partialorder %v271, 0.0
      %vm290 = vcmp.ge.f32.partialorder %v272, 0.0
      %v291 = vmul.f32 %v255, 0.2
      %v292 = vmul.f32 %v256, 0.2
      %v293 = vmul.f32 %v257, 0.2
      %v294 = vmul.f32 %v258, 0.2
      %v295 = vmul.f32 %v259, 0.2
      %v296 = vmul.f32 %v260, 0.2
      %v297 = vmul.f32 %v261, 0.2
      %v298 = vmul.f32 %v262, 0.2
      %v299 = vmul.f32 %v263, 0.2
      %v300 = vmul.f32 %v264, 0.2
      %v301 = vmul.f32 %v265, 0.2
      %v302 = vmul.f32 %v266, 0.2
      %v303 = vmul.f32 %v267, 0.2
      %v304 = vmul.f32 %v268, 0.2
      %v305 = vmul.f32 %v269, 0.2
      %v306 = vmul.f32 %v270, 0.2
      %v307 = vmul.f32 %v271, 0.2
      %v308 = vmul.f32 %v272, 0.2
      %v309 = vsel %vm273, %v255, %v291
      %v310 = vsel %vm274, %v256, %v292
      %v311 = vsel %vm275, %v257, %v293
      %v312 = vsel %vm276, %v258, %v294
      %v313 = vsel %vm277, %v259, %v295
      %v314 = vsel %vm278, %v260, %v296
      %v315 = vsel %vm279, %v261, %v297
      %v316 = vsel %vm280, %v262, %v298
      %v317 = vsel %vm281, %v263, %v299
      %v318 = vsel %vm282, %v264, %v300
      %v319 = vsel %vm283, %v265, %v301
      %v320 = vsel %vm284, %v266, %v302
      %v321 = vsel %vm285, %v267, %v303
      %v322 = vsel %vm286, %v268, %v304
      %v323 = vsel %vm287, %v269, %v305
      %v324 = vsel %vm288, %v270, %v306
      %v325 = vsel %vm289, %v271, %v307
      %v326 = vsel %vm290, %v272, %v308
      %v327 = vpack.c.bf16 %v310, %v309
      %v328 = vpack.c.bf16 %v312, %v311
      %v329 = vpack.c.bf16 %v314, %v313
      %v330 = vpack.c.bf16 %v316, %v315
      %v331 = vpack.c.bf16 %v318, %v317
      %v332 = vpack.c.bf16 %v320, %v319
      %v333 = vpack.c.bf16 %v322, %v321
      %v334 = vpack.c.bf16 %v324, %v323
      %v335 = vpack.c.bf16 %v326, %v325
      %v336 = vld [vmem:[%s1] sm:$0xf]
      %v337 = vld [vmem:[%s1 + $0x4] sm:$0xf]
      %v338 = vld [vmem:[%s1 + $0x8] sm:$0xf]
      %v339 = vld [vmem:[%s1 + $0xc] sm:$0xf]
      %v340 = vld [vmem:[%s1 + $0x10] sm:$0xf]
      %v341 = vld [vmem:[%s1 + $0x14] sm:$0xf]
      %v342 = vld [vmem:[%s1 + $0x18] sm:$0xf]
      %v343 = vld [vmem:[%s1 + $0x1c] sm:$0xf]
      %v352 = vunpack.c.l.b16 %v327
      %v353 = vunpack.c.h.b16 %v327
      %v354 = vunpack.c.l.b16 %v328
      %v355 = vunpack.c.h.b16 %v328
      %v356 = vunpack.c.l.b16 %v329
      %v357 = vunpack.c.h.b16 %v329
      %v358 = vunpack.c.l.b16 %v330
      %v359 = vunpack.c.h.b16 %v330
      %v360 = vunpack.c.l.b16 %v331
      %v361 = vunpack.c.h.b16 %v331
      %v362 = vunpack.c.l.b16 %v332
      %v363 = vunpack.c.h.b16 %v332
      %v364 = vunpack.c.l.b16 %v333
      %v365 = vunpack.c.h.b16 %v333
      %v366 = vunpack.c.l.b16 %v334
      %v367 = vunpack.c.h.b16 %v334
      %v368 = vpack.c.b16 %v352, %v352
      %v369 = vpack.c.b16 %v353, %v353
      %v370 = vpack.c.b16 %v354, %v354
      %v371 = vpack.c.b16 %v355, %v355
      %v372 = vpack.c.b16 %v356, %v356
      %v373 = vpack.c.b16 %v357, %v357
      %v374 = vpack.c.b16 %v358, %v358
      %v375 = vpack.c.b16 %v359, %v359
      %v376 = vpack.c.b16 %v360, %v360
      %v377 = vpack.c.b16 %v361, %v361
      %v378 = vpack.c.b16 %v362, %v362
      %v379 = vpack.c.b16 %v363, %v363
      %v380 = vpack.c.b16 %v364, %v364
      %v381 = vpack.c.b16 %v365, %v365
      %v382 = vpack.c.b16 %v366, %v366
      %v383 = vpack.c.b16 %v367, %v367
      %vm384 = vsmask.f32 3328
      %vm385 = vsmask.f32 7440
      %vm386 = vmor %vm384, %vm385
      %v388 = vshrl.u32 %v368, 16
      %v390 = vrot.slane %v388, 4
      %v391 = vshll.u32 %v368, 16
      %v393 = vrot.slane %v391, 5
      %v394 = vor.u32 %v390, %v393
      %v395 = vrot.slane %v394, 4
      %v397 = vshll.u32 %v369, 16
      %v399 = vrot.slane %v397, 5
      %v400 = vsel %vm386, %v395, %v399
      %v402 = vshrl.u32 %v370, 16
      %v404 = vrot.slane %v402, 4
      %v405 = vshll.u32 %v370, 16
      %v407 = vrot.slane %v405, 5
      %v408 = vor.u32 %v404, %v407
      %v409 = vrot.slane %v408, 4
      %v411 = vshll.u32 %v371, 16
      %v413 = vrot.slane %v411, 5
      %v414 = vsel %vm386, %v409, %v413
      %v416 = vshrl.u32 %v372, 16
      %v418 = vrot.slane %v416, 4
      %v419 = vshll.u32 %v372, 16
      %v421 = vrot.slane %v419, 5
      %v422 = vor.u32 %v418, %v421
      %v423 = vrot.slane %v422, 4
      %v425 = vshll.u32 %v373, 16
      %v427 = vrot.slane %v425, 5
      %v428 = vsel %vm386, %v423, %v427
      %v430 = vshrl.u32 %v374, 16
      %v432 = vrot.slane %v430, 4
      %v433 = vshll.u32 %v374, 16
      %v435 = vrot.slane %v433, 5
      %v436 = vor.u32 %v432, %v435
      %v437 = vrot.slane %v436, 4
      %v439 = vshll.u32 %v375, 16
      %v441 = vrot.slane %v439, 5
      %v442 = vsel %vm386, %v437, %v441
      %v444 = vshrl.u32 %v376, 16
      %v446 = vrot.slane %v444, 4
      %v447 = vshll.u32 %v376, 16
      %v449 = vrot.slane %v447, 5
      %v450 = vor.u32 %v446, %v449
      %v451 = vrot.slane %v450, 4
      %v453 = vshll.u32 %v377, 16
      %v455 = vrot.slane %v453, 5
      %v456 = vsel %vm386, %v451, %v455
      %v458 = vshrl.u32 %v378, 16
      %v460 = vrot.slane %v458, 4
      %v461 = vshll.u32 %v378, 16
      %v463 = vrot.slane %v461, 5
      %v464 = vor.u32 %v460, %v463
      %v465 = vrot.slane %v464, 4
      %v467 = vshll.u32 %v379, 16
      %v469 = vrot.slane %v467, 5
      %v470 = vsel %vm386, %v465, %v469
      %v472 = vshrl.u32 %v380, 16
      %v474 = vrot.slane %v472, 4
      %v475 = vshll.u32 %v380, 16
      %v477 = vrot.slane %v475, 5
      %v478 = vor.u32 %v474, %v477
      %v479 = vrot.slane %v478, 4
      %v481 = vshll.u32 %v381, 16
      %v483 = vrot.slane %v481, 5
      %v484 = vsel %vm386, %v479, %v483
      %v486 = vshrl.u32 %v382, 16
      %v488 = vrot.slane %v486, 4
      %v489 = vshll.u32 %v382, 16
      %v491 = vrot.slane %v489, 5
      %v492 = vor.u32 %v488, %v491
      %v493 = vrot.slane %v492, 4
      %v495 = vshll.u32 %v383, 16
      %v497 = vrot.slane %v495, 5
      %v498 = vsel %vm386, %v493, %v497
      %s499 = scalar_lea.vmem %s1, 32
      %v500 = vld [vmem:[%s499] sm:$0xf]
      %v501 = vld [vmem:[%s499 + $0x4] sm:$0xf]
      %v502 = vld [vmem:[%s499 + $0x8] sm:$0xf]
      %v503 = vld [vmem:[%s499 + $0xc] sm:$0xf]
      %v504 = vld [vmem:[%s499 + $0x10] sm:$0xf]
      %v505 = vld [vmem:[%s499 + $0x14] sm:$0xf]
      %v506 = vld [vmem:[%s499 + $0x18] sm:$0xf]
      %v507 = vld [vmem:[%s499 + $0x1c] sm:$0xf]
      %v508 = vunpack.c.l.b16 %v400
      %v509 = vunpack.c.l.b16 %v414
      %v510 = vunpack.c.l.b16 %v428
      %v511 = vunpack.c.l.b16 %v442
      %v512 = vunpack.c.l.b16 %v456
      %v513 = vunpack.c.l.b16 %v470
      %v514 = vunpack.c.l.b16 %v484
      %v515 = vunpack.c.l.b16 %v498
      %v516 = vpack.c.b16 %v509, %v508
      %v517 = vpack.c.b16 %v511, %v510
      %v518 = vpack.c.b16 %v513, %v512
      %v519 = vpack.c.b16 %v515, %v514
      %v528 = vunpack.c.l.b16 %v500
      %v529 = vunpack.c.l.b16 %v501
      %v530 = vunpack.c.l.b16 %v502
      %v531 = vunpack.c.l.b16 %v503
      %v532 = vunpack.c.l.b16 %v504
      %v533 = vunpack.c.l.b16 %v505
      %v534 = vunpack.c.l.b16 %v506
      %v535 = vunpack.c.l.b16 %v507
      %v536 = vpack.c.b16 %v529, %v528
      %v537 = vpack.c.b16 %v531, %v530
      %v538 = vpack.c.b16 %v533, %v532
      %v539 = vpack.c.b16 %v535, %v534
      %vm544 = vcmask 523264
      %v546 = vsel %vm544, %v516, 0
      %v549 = vsel %vm544, %v517, 0
      %v552 = vsel %vm544, %v518, 0
      %v555 = vsel %vm544, %v519, 0
      %557 = vmatprep.subr.bf16.mxu0 0
      %558 = vmatpush1.bf16.msra.mxu0 0
      %559 = vmatprep.subr.bf16.mxu0 0
      %560 = vmatpush1.bf16.msra.mxu0 0
      %561 = vmatprep.subr.bf16.mxu0 0
      %562 = vmatpush1.bf16.msra.mxu0 0
      %563 = vmatprep.subr.bf16.mxu0 0
      %564 = vmatpush1.bf16.msra.mxu0 0
      %565 = vmatprep.subr.bf16.mxu0 0
      %566 = vmatpush1.bf16.msra.mxu0 %v539
      %567 = vmatprep.subr.bf16.mxu0 0
      %568 = vmatpush1.bf16.msra.mxu0 %v538
      %569 = vmatprep.subr.bf16.mxu0 0
      %570 = vmatpush1.bf16.msra.mxu0 %v537
      %571 = vmatprep.subr.bf16.mxu0 0
      %572 = vmatpush1.bf16.msra.mxu0 %v536
      %573 = vmatprep.subr.bf16.mxu0 0
      %574 = vmatpush2.bf16.msra.mxu0 0
      %575 = vmatprep.subr.bf16.mxu0 0
      %576 = vmatpush2.bf16.msra.mxu0 0
      %577 = vmatprep.subr.bf16.mxu0 0
      %578 = vmatpush2.bf16.msra.mxu0 0
      %579 = vmatprep.subr.bf16.mxu0 0
      %580 = vmatpush2.bf16.msra.mxu0 0
      %581 = vmatprep.subr.bf16.mxu0 0
      %582 = vmatpush2.bf16.msra.mxu0 0
      %583 = vmatprep.subr.bf16.mxu0 0
      %584 = vmatpush2.bf16.msra.mxu0 0
      %585 = vmatprep.subr.bf16.mxu0 0
      %586 = vmatpush2.bf16.msra.mxu0 0
      %587 = vmatprep.subr.bf16.mxu0 0
      %588 = vmatpush2.bf16.msra.mxu0 0
      %589 = vmatprep.mubr.bf16.mxu0 0
      %590 = vmatmul.mubr.bf16.gmra.mxu0 %v546
      %v591 = vpop.f32.mrf.mxu0
      %v592 = vadd.f32 0.0, %v591
      %v593 = vpop.f32.mrf.mxu0
      %v594 = vpop.f32.mrf.mxu0
      %v595 = vadd.f32 0.0, %v594
      %v596 = vpop.f32.mrf.mxu0
      %597 = vmatprep.mubr.bf16.mxu0 0
      %598 = vmatmul.mubr.bf16.gmra.mxu0 %v549
      %v599 = vpop.f32.mrf.mxu0
      %v600 = vadd.f32 0.0, %v599
      %v601 = vpop.f32.mrf.mxu0
      %v602 = vpop.f32.mrf.mxu0
      %v603 = vadd.f32 0.0, %v602
      %v604 = vpop.f32.mrf.mxu0
      %605 = vmatprep.mubr.bf16.mxu0 0
      %606 = vmatmul.mubr.bf16.gmra.mxu0 %v552
      %v607 = vpop.f32.mrf.mxu0
      %v608 = vadd.f32 0.0, %v607
      %v609 = vpop.f32.mrf.mxu0
      %v610 = vpop.f32.mrf.mxu0
      %v611 = vadd.f32 0.0, %v610
      %v612 = vpop.f32.mrf.mxu0
      %613 = vmatprep.mubr.bf16.mxu0 0
      %614 = vmatmul.mubr.bf16.gmra.mxu0 %v555
      %v615 = vpop.f32.mrf.mxu0
      %v616 = vadd.f32 0.0, %v615
      %v617 = vpop.f32.mrf.mxu0
      %v618 = vpop.f32.mrf.mxu0
      %v619 = vadd.f32 0.0, %v618
      %v620 = vpop.f32.mrf.mxu0
      %621 = vdwg.mxu0
      %v622 = vpack.c.b16 %v354, %v352
      %v623 = vpack.c.b16 %v358, %v356
      %v624 = vpack.c.b16 %v362, %v360
      %v625 = vpack.c.b16 %v366, %v364
      %v634 = vunpack.c.l.b16 %v336
      %v635 = vunpack.c.l.b16 %v337
      %v636 = vunpack.c.l.b16 %v338
      %v637 = vunpack.c.l.b16 %v339
      %v638 = vunpack.c.l.b16 %v340
      %v639 = vunpack.c.l.b16 %v341
      %v640 = vunpack.c.l.b16 %v342
      %v641 = vunpack.c.l.b16 %v343
      %v642 = vpack.c.b16 %v635, %v634
      %v643 = vpack.c.b16 %v637, %v636
      %v644 = vpack.c.b16 %v639, %v638
      %v645 = vpack.c.b16 %v641, %v640
      %v651 = vsel %vm544, %v622, 0
      %v654 = vsel %vm544, %v623, 0
      %v657 = vsel %vm544, %v624, 0
      %v660 = vsel %vm544, %v625, 0
      %662 = vmatprep.subr.bf16.mxu0 0
      %663 = vmatpush1.bf16.msra.mxu0 0
      %664 = vmatprep.subr.bf16.mxu0 0
      %665 = vmatpush1.bf16.msra.mxu0 0
      %666 = vmatprep.subr.bf16.mxu0 0
      %667 = vmatpush1.bf16.msra.mxu0 0
      %668 = vmatprep.subr.bf16.mxu0 0
      %669 = vmatpush1.bf16.msra.mxu0 0
      %670 = vmatprep.subr.bf16.mxu0 0
      %671 = vmatpush1.bf16.msra.mxu0 %v645
      %672 = vmatprep.subr.bf16.mxu0 0
      %673 = vmatpush1.bf16.msra.mxu0 %v644
      %674 = vmatprep.subr.bf16.mxu0 0
      %675 = vmatpush1.bf16.msra.mxu0 %v643
      %676 = vmatprep.subr.bf16.mxu0 0
      %677 = vmatpush1.bf16.msra.mxu0 %v642
      %678 = vmatprep.subr.bf16.mxu0 0
      %679 = vmatpush2.bf16.msra.mxu0 0
      %680 = vmatprep.subr.bf16.mxu0 0
      %681 = vmatpush2.bf16.msra.mxu0 0
      %682 = vmatprep.subr.bf16.mxu0 0
      %683 = vmatpush2.bf16.msra.mxu0 0
      %684 = vmatprep.subr.bf16.mxu0 0
      %685 = vmatpush2.bf16.msra.mxu0 0
      %686 = vmatprep.subr.bf16.mxu0 0
      %687 = vmatpush2.bf16.msra.mxu0 0
      %688 = vmatprep.subr.bf16.mxu0 0
      %689 = vmatpush2.bf16.msra.mxu0 0
      %690 = vmatprep.subr.bf16.mxu0 0
      %691 = vmatpush2.bf16.msra.mxu0 0
      %692 = vmatprep.subr.bf16.mxu0 0
      %693 = vmatpush2.bf16.msra.mxu0 0
      %694 = vmatprep.mubr.bf16.mxu0 0
      %695 = vmatmul.mubr.bf16.gmra.mxu0 %v651
      %v696 = vpop.f32.mrf.mxu0
      %v697 = vadd.f32 %v592, %v696
      %v698 = vpop.f32.mrf.mxu0
      %v699 = vpop.f32.mrf.mxu0
      %v700 = vadd.f32 %v595, %v699
      %v701 = vpop.f32.mrf.mxu0
      %702 = vmatprep.mubr.bf16.mxu0 0
      %703 = vmatmul.mubr.bf16.gmra.mxu0 %v654
      %v704 = vpop.f32.mrf.mxu0
      %v705 = vadd.f32 %v600, %v704
      %v706 = vpop.f32.mrf.mxu0
      %v707 = vpop.f32.mrf.mxu0
      %v708 = vadd.f32 %v603, %v707
      %v709 = vpop.f32.mrf.mxu0
      %710 = vmatprep.mubr.bf16.mxu0 0
      %711 = vmatmul.mubr.bf16.gmra.mxu0 %v657
      %v712 = vpop.f32.mrf.mxu0
      %v713 = vadd.f32 %v608, %v712
      %v714 = vpop.f32.mrf.mxu0
      %v715 = vpop.f32.mrf.mxu0
      %v716 = vadd.f32 %v611, %v715
      %v717 = vpop.f32.mrf.mxu0
      %718 = vmatprep.mubr.bf16.mxu0 0
      %719 = vmatmul.mubr.bf16.gmra.mxu0 %v660
      %v720 = vpop.f32.mrf.mxu0
      %v721 = vadd.f32 %v616, %v720
      %v722 = vpop.f32.mrf.mxu0
      %v723 = vpop.f32.mrf.mxu0
      %v724 = vadd.f32 %v619, %v723
      %v725 = vpop.f32.mrf.mxu0
      %726 = vdwg.mxu0
      %s727 = scalar_lea.vmem %s1, 64
      %v728 = vld [vmem:[%s727] sm:$0xf]
      %v729 = vld [vmem:[%s727 + $0x4] sm:$0xf]
      %v730 = vld [vmem:[%s727 + $0x8] sm:$0xf]
      %v731 = vld [vmem:[%s727 + $0xc] sm:$0xf]
      %v732 = vld [vmem:[%s727 + $0x10] sm:$0xf]
      %v733 = vld [vmem:[%s727 + $0x14] sm:$0xf]
      %v734 = vld [vmem:[%s727 + $0x18] sm:$0xf]
      %v735 = vld [vmem:[%s727 + $0x1c] sm:$0xf]
      %v737 = vunpack.c.l.b16 %v335
      %v738 = vpack.c.b16 %v356, %v354
      %v739 = vpack.c.b16 %v360, %v358
      %v740 = vpack.c.b16 %v364, %v362
      %v741 = vpack.c.b16 %v737, %v366
      %v750 = vunpack.c.l.b16 %v728
      %v751 = vunpack.c.l.b16 %v729
      %v752 = vunpack.c.l.b16 %v730
      %v753 = vunpack.c.l.b16 %v731
      %v754 = vunpack.c.l.b16 %v732
      %v755 = vunpack.c.l.b16 %v733
      %v756 = vunpack.c.l.b16 %v734
      %v757 = vunpack.c.l.b16 %v735
      %v758 = vpack.c.b16 %v751, %v750
      %v759 = vpack.c.b16 %v753, %v752
      %v760 = vpack.c.b16 %v755, %v754
      %v761 = vpack.c.b16 %v757, %v756
      %v767 = vsel %vm544, %v738, 0
      %v770 = vsel %vm544, %v739, 0
      %v773 = vsel %vm544, %v740, 0
      %v776 = vsel %vm544, %v741, 0
      %778 = vmatprep.subr.bf16.mxu0 0
      %779 = vmatpush1.bf16.msra.mxu0 0
      %780 = vmatprep.subr.bf16.mxu0 0
      %781 = vmatpush1.bf16.msra.mxu0 0
      %782 = vmatprep.subr.bf16.mxu0 0
      %783 = vmatpush1.bf16.msra.mxu0 0
      %784 = vmatprep.subr.bf16.mxu0 0
      %785 = vmatpush1.bf16.msra.mxu0 0
      %786 = vmatprep.subr.bf16.mxu0 0
      %787 = vmatpush1.bf16.msra.mxu0 %v761
      %788 = vmatprep.subr.bf16.mxu0 0
      %789 = vmatpush1.bf16.msra.mxu0 %v760
      %790 = vmatprep.subr.bf16.mxu0 0
      %791 = vmatpush1.bf16.msra.mxu0 %v759
      %792 = vmatprep.subr.bf16.mxu0 0
      %793 = vmatpush1.bf16.msra.mxu0 %v758
      %794 = vmatprep.subr.bf16.mxu0 0
      %795 = vmatpush2.bf16.msra.mxu0 0
      %796 = vmatprep.subr.bf16.mxu0 0
      %797 = vmatpush2.bf16.msra.mxu0 0
      %798 = vmatprep.subr.bf16.mxu0 0
      %799 = vmatpush2.bf16.msra.mxu0 0
      %800 = vmatprep.subr.bf16.mxu0 0
      %801 = vmatpush2.bf16.msra.mxu0 0
      %802 = vmatprep.subr.bf16.mxu0 0
      %803 = vmatpush2.bf16.msra.mxu0 0
      %804 = vmatprep.subr.bf16.mxu0 0
      %805 = vmatpush2.bf16.msra.mxu0 0
      %806 = vmatprep.subr.bf16.mxu0 0
      %807 = vmatpush2.bf16.msra.mxu0 0
      %808 = vmatprep.subr.bf16.mxu0 0
      %809 = vmatpush2.bf16.msra.mxu0 0
      %810 = vmatprep.mubr.bf16.mxu0 0
      %811 = vmatmul.mubr.bf16.gmra.mxu0 %v767
      %v812 = vpop.f32.mrf.mxu0
      %v813 = vadd.f32 0.0, %v812
      %v814 = vpop.f32.mrf.mxu0
      %v815 = vpop.f32.mrf.mxu0
      %v816 = vadd.f32 0.0, %v815
      %v817 = vpop.f32.mrf.mxu0
      %818 = vmatprep.mubr.bf16.mxu0 0
      %819 = vmatmul.mubr.bf16.gmra.mxu0 %v770
      %v820 = vpop.f32.mrf.mxu0
      %v821 = vadd.f32 0.0, %v820
      %v822 = vpop.f32.mrf.mxu0
      %v823 = vpop.f32.mrf.mxu0
      %v824 = vadd.f32 0.0, %v823
      %v825 = vpop.f32.mrf.mxu0
      %826 = vmatprep.mubr.bf16.mxu0 0
      %827 = vmatmul.mubr.bf16.gmra.mxu0 %v773
      %v828 = vpop.f32.mrf.mxu0
      %v829 = vadd.f32 0.0, %v828
      %v830 = vpop.f32.mrf.mxu0
      %v831 = vpop.f32.mrf.mxu0
      %v832 = vadd.f32 0.0, %v831
      %v833 = vpop.f32.mrf.mxu0
      %834 = vmatprep.mubr.bf16.mxu0 0
      %835 = vmatmul.mubr.bf16.gmra.mxu0 %v776
      %v836 = vpop.f32.mrf.mxu0
      %v837 = vadd.f32 0.0, %v836
      %v838 = vpop.f32.mrf.mxu0
      %v839 = vpop.f32.mrf.mxu0
      %v840 = vadd.f32 0.0, %v839
      %v841 = vpop.f32.mrf.mxu0
      %842 = vdwg.mxu0
      %v843 = vadd.f32 %v697, %v813
      %v844 = vadd.f32 %v700, %v816
      %v845 = vadd.f32 %v705, %v821
      %v846 = vadd.f32 %v708, %v824
      %v847 = vadd.f32 %v713, %v829
      %v848 = vadd.f32 %v716, %v832
      %v849 = vadd.f32 %v721, %v837
      %v850 = vadd.f32 %v724, %v840
      %v851 = vunpack.c.h.b16 %v335
      %v852 = vpack.c.b16 %v737, %v737
      %v853 = vpack.c.b16 %v851, %v851
      %v855 = vshrl.u32 %v852, 16
      %v857 = vrot.slane %v855, 4
      %v858 = vshll.u32 %v852, 16
      %v860 = vrot.slane %v858, 5
      %v861 = vor.u32 %v857, %v860
      %v862 = vrot.slane %v861, 4
      %v864 = vshll.u32 %v853, 16
      %v866 = vrot.slane %v864, 5
      %v867 = vsel %vm386, %v862, %v866
      %s868 = scalar_lea.vmem %s1, 96
      %v869 = vld [vmem:[%s868] sm:$0xf]
      %v870 = vld [vmem:[%s868 + $0x4] sm:$0xf]
      %v871 = vld [vmem:[%s868 + $0x8] sm:$0xf]
      %v872 = vld [vmem:[%s868 + $0xc] sm:$0xf]
      %v873 = vld [vmem:[%s868 + $0x10] sm:$0xf]
      %v874 = vld [vmem:[%s868 + $0x14] sm:$0xf]
      %v875 = vld [vmem:[%s868 + $0x18] sm:$0xf]
      %v876 = vld [vmem:[%s868 + $0x1c] sm:$0xf]
      %v877 = vunpack.c.l.b16 %v867
      %v878 = vpack.c.b16 %v510, %v509
      %v879 = vpack.c.b16 %v512, %v511
      %v880 = vpack.c.b16 %v514, %v513
      %v881 = vpack.c.b16 %v877, %v515
      %v890 = vunpack.c.l.b16 %v869
      %v891 = vunpack.c.l.b16 %v870
      %v892 = vunpack.c.l.b16 %v871
      %v893 = vunpack.c.l.b16 %v872
      %v894 = vunpack.c.l.b16 %v873
      %v895 = vunpack.c.l.b16 %v874
      %v896 = vunpack.c.l.b16 %v875
      %v897 = vunpack.c.l.b16 %v876
      %v898 = vpack.c.b16 %v891, %v890
      %v899 = vpack.c.b16 %v893, %v892
      %v900 = vpack.c.b16 %v895, %v894
      %v901 = vpack.c.b16 %v897, %v896
      %v907 = vsel %vm544, %v878, 0
      %v910 = vsel %vm544, %v879, 0
      %v913 = vsel %vm544, %v880, 0
      %v916 = vsel %vm544, %v881, 0
      %918 = vmatprep.subr.bf16.mxu0 0
      %919 = vmatpush1.bf16.msra.mxu0 0
      %920 = vmatprep.subr.bf16.mxu0 0
      %921 = vmatpush1.bf16.msra.mxu0 0
      %922 = vmatprep.subr.bf16.mxu0 0
      %923 = vmatpush1.bf16.msra.mxu0 0
      %924 = vmatprep.subr.bf16.mxu0 0
      %925 = vmatpush1.bf16.msra.mxu0 0
      %926 = vmatprep.subr.bf16.mxu0 0
      %927 = vmatpush1.bf16.msra.mxu0 %v901
      %928 = vmatprep.subr.bf16.mxu0 0
      %929 = vmatpush1.bf16.msra.mxu0 %v900
      %930 = vmatprep.subr.bf16.mxu0 0
      %931 = vmatpush1.bf16.msra.mxu0 %v899
      %932 = vmatprep.subr.bf16.mxu0 0
      %933 = vmatpush1.bf16.msra.mxu0 %v898
      %934 = vmatprep.subr.bf16.mxu0 0
      %935 = vmatpush2.bf16.msra.mxu0 0
      %936 = vmatprep.subr.bf16.mxu0 0
      %937 = vmatpush2.bf16.msra.mxu0 0
      %938 = vmatprep.subr.bf16.mxu0 0
      %939 = vmatpush2.bf16.msra.mxu0 0
      %940 = vmatprep.subr.bf16.mxu0 0
      %941 = vmatpush2.bf16.msra.mxu0 0
      %942 = vmatprep.subr.bf16.mxu0 0
      %943 = vmatpush2.bf16.msra.mxu0 0
      %944 = vmatprep.subr.bf16.mxu0 0
      %945 = vmatpush2.bf16.msra.mxu0 0
      %946 = vmatprep.subr.bf16.mxu0 0
      %947 = vmatpush2.bf16.msra.mxu0 0
      %948 = vmatprep.subr.bf16.mxu0 0
      %949 = vmatpush2.bf16.msra.mxu0 0
      %950 = vmatprep.mubr.bf16.mxu0 0
      %951 = vmatmul.mubr.bf16.gmra.mxu0 %v907
      %v952 = vpop.f32.mrf.mxu0
      %v953 = vadd.f32 0.0, %v952
      %v954 = vpop.f32.mrf.mxu0
      %v955 = vpop.f32.mrf.mxu0
      %v956 = vadd.f32 0.0, %v955
      %v957 = vpop.f32.mrf.mxu0
      %958 = vmatprep.mubr.bf16.mxu0 0
      %959 = vmatmul.mubr.bf16.gmra.mxu0 %v910
      %v960 = vpop.f32.mrf.mxu0
      %v961 = vadd.f32 0.0, %v960
      %v962 = vpop.f32.mrf.mxu0
      %v963 = vpop.f32.mrf.mxu0
      %v964 = vadd.f32 0.0, %v963
      %v965 = vpop.f32.mrf.mxu0
      %966 = vmatprep.mubr.bf16.mxu0 0
      %967 = vmatmul.mubr.bf16.gmra.mxu0 %v913
      %v968 = vpop.f32.mrf.mxu0
      %v969 = vadd.f32 0.0, %v968
      %v970 = vpop.f32.mrf.mxu0
      %v971 = vpop.f32.mrf.mxu0
      %v972 = vadd.f32 0.0, %v971
      %v973 = vpop.f32.mrf.mxu0
      %974 = vmatprep.mubr.bf16.mxu0 0
      %975 = vmatmul.mubr.bf16.gmra.mxu0 %v916
      %v976 = vpop.f32.mrf.mxu0
      %v977 = vadd.f32 0.0, %v976
      %v978 = vpop.f32.mrf.mxu0
      %v979 = vpop.f32.mrf.mxu0
      %v980 = vadd.f32 0.0, %v979
      %v981 = vpop.f32.mrf.mxu0
      %982 = vdwg.mxu0
      %v983 = vadd.f32 %v843, %v953
      %v984 = vadd.f32 %v844, %v956
      %v985 = vadd.f32 %v845, %v961
      %v986 = vadd.f32 %v846, %v964
      %v987 = vadd.f32 %v847, %v969
      %v988 = vadd.f32 %v848, %v972
      %v989 = vadd.f32 %v849, %v977
      %v990 = vadd.f32 %v850, %v980
      %v991 = vld [vmem:[%s2] sm:$0x1]
      %v993 = vlaneseq
      %v994 = vshrl.u32 %v993, 7
      %v995 = vsub.s32 0, %v994
      %v996 = vrot.slane %v991, %v995
      %v998 = vadd.f32 %v983, %v996
      %v999 = vadd.f32 %v984, %v996
      %v1000 = vadd.f32 %v985, %v996
      %v1001 = vadd.f32 %v986, %v996
      %v1002 = vadd.f32 %v987, %v996
      %v1003 = vadd.f32 %v988, %v996
      %v1004 = vadd.f32 %v989, %v996
      %v1005 = vadd.f32 %v990, %v996
      %v1006 = vpack.c.bf16 %v999, %v998
      %v1007 = vpack.c.bf16 %v1001, %v1000
      %v1008 = vpack.c.bf16 %v1003, %v1002
      %v1009 = vpack.c.bf16 %v1005, %v1004
      %v1014 = vunpack.c.l.b16 %v1006
      %v1015 = vunpack.c.h.b16 %v1006
      %v1016 = vunpack.c.l.b16 %v1007
      %v1017 = vunpack.c.h.b16 %v1007
      %v1018 = vunpack.c.l.b16 %v1008
      %v1019 = vunpack.c.h.b16 %v1008
      %v1020 = vunpack.c.l.b16 %v1009
      %v1021 = vunpack.c.h.b16 %v1009
      %v1022 = vpack.c.b16 %v1014, %v1014
      %v1023 = vpack.c.b16 %v1015, %v1015
      %v1024 = vpack.c.b16 %v1016, %v1016
      %v1025 = vpack.c.b16 %v1017, %v1017
      %v1026 = vpack.c.b16 %v1018, %v1018
      %v1027 = vpack.c.b16 %v1019, %v1019
      %v1028 = vpack.c.b16 %v1020, %v1020
      %v1029 = vpack.c.b16 %v1021, %v1021
      %vm1038 = vcmask 257024
      %1039 = vst.msk [vmem:[%s226] sm:$0xf] %vm1038, %v1022
      %1040 = vst.msk [vmem:[%s226 + $0x4] sm:$0xf] %vm1038, %v1023
      %1041 = vst.msk [vmem:[%s226 + $0x8] sm:$0xf] %vm1038, %v1024
      %1042 = vst.msk [vmem:[%s226 + $0xc] sm:$0xf] %vm1038, %v1025
      %1043 = vst.msk [vmem:[%s226 + $0x10] sm:$0xf] %vm1038, %v1026
      %1044 = vst.msk [vmem:[%s226 + $0x14] sm:$0xf] %vm1038, %v1027
      %1045 = vst.msk [vmem:[%s226 + $0x18] sm:$0xf] %vm1038, %v1028
      %1046 = vst.msk [vmem:[%s226 + $0x1c] sm:$0xf] %vm1038, %v1029
      %p1047 = scmp.eq.s32.totalorder %s21, 0
      // Predicated region
      $region33: #{_lambda_.6} parent=31 // pred_check
        %p1048 = pneg %p1047
      $region34: #{_lambda_.6} parent=31 // pred_check_branch
        %1050 = sbr.rel (%p1048) target = $region36
      $region35: #{_lambda_.6} parent=31 // pred_region
        %vm1051 = vcmask 254976
        %1052 = vst.msk [vmem:[%s231] sm:$0x3] %vm1051, 0.0
      $region36: #{_lambda_.6} parent=31 // pred_fallthru
        _
      %vm1053 = vcmask 261120
      %v1054 = vsel %vm1053, %v998, 0.0
      %v1055 = vsel %vm1053, %v999, 0.0
      %v1056 = vadd.f32 %v1054, %v1055
      %v1057 = vsel %vm1053, %v1000, 0.0
      %v1058 = vadd.f32 %v1056, %v1057
      %v1059 = vsel %vm1053, %v1001, 0.0
      %v1060 = vadd.f32 %v1058, %v1059
      %v1061 = vsel %vm1053, %v1002, 0.0
      %v1062 = vadd.f32 %v1060, %v1061
      %v1063 = vsel %vm1053, %v1003, 0.0
      %v1064 = vadd.f32 %v1062, %v1063
      %v1065 = vsel %vm1053, %v1004, 0.0
      %v1066 = vadd.f32 %v1064, %v1065
      %v1067 = vsel %vm1053, %v1005, 0.0
      %v1068 = vadd.f32 %v1066, %v1067
      %v1069 = vrot.slane %v1068, 4
      %v1070 = vadd.f32 %v1068, %v1069
      %v1071 = vrot.slane %v1070, 2
      %v1072 = vadd.f32 %v1070, %v1071
      %v1073 = vrot.slane %v1072, 1
      %v1074 = vadd.f32 %v1072, %v1073
      %v1075 = vmul.f32 %v998, %v998
      %v1076 = vmul.f32 %v999, %v999
      %v1077 = vmul.f32 %v1000, %v1000
      %v1078 = vmul.f32 %v1001, %v1001
      %v1079 = vmul.f32 %v1002, %v1002
      %v1080 = vmul.f32 %v1003, %v1003
      %v1081 = vmul.f32 %v1004, %v1004
      %v1082 = vmul.f32 %v1005, %v1005
      %v1083 = vsel %vm1053, %v1075, 0.0
      %v1084 = vsel %vm1053, %v1076, 0.0
      %v1085 = vadd.f32 %v1083, %v1084
      %v1086 = vsel %vm1053, %v1077, 0.0
      %v1087 = vadd.f32 %v1085, %v1086
      %v1088 = vsel %vm1053, %v1078, 0.0
      %v1089 = vadd.f32 %v1087, %v1088
      %v1090 = vsel %vm1053, %v1079, 0.0
      %v1091 = vadd.f32 %v1089, %v1090
      %v1092 = vsel %vm1053, %v1080, 0.0
      %v1093 = vadd.f32 %v1091, %v1092
      %v1094 = vsel %vm1053, %v1081, 0.0
      %v1095 = vadd.f32 %v1093, %v1094
      %v1096 = vsel %vm1053, %v1082, 0.0
      %v1097 = vadd.f32 %v1095, %v1096
      %v1098 = vrot.slane %v1097, 4
      %v1099 = vadd.f32 %v1097, %v1098
      %v1100 = vrot.slane %v1099, 2
      %v1101 = vadd.f32 %v1099, %v1100
      %v1102 = vrot.slane %v1101, 1
      %v1103 = vadd.f32 %v1101, %v1102
      %v1104 = vld [vmem:[%s231] sm:$0x3]
      %vm1105 = vcmask 1040384
      %v1106 = vsel %vm1105, %v1074, %v1103
      %v1107 = vadd.f32 %v1104, %v1106
      %vm1108 = vcmask 254976
      %1109 = vst.msk [vmem:[%s231] sm:$0x3] %vm1108, %v1107
      %s1110 = smul.u32 8, %s21
      %p1111 = scmp.lt.s32.totalorder %s20, 1
      %s1112 = scalar_select %p1111, %s20, 1
      %p1113 = scmp.lt.s32.totalorder %s1110, 7
      %s1114 = scalar_select %p1113, %s1110, 7
      %s1115 = smul.addr %s1112, 8
      %s1116 = sadd.s32 %s1114, %s1115
      %s1117 = smul.addr %s1116, 4
      %s1118 = scalar_lea.vmem %s3, %s1117
      %p1119 = scmp.lt.s32.totalorder %s20, 1
      %s1120 = scalar_select %p1119, %s20, 1
      %s1121 = smul.addr %s1120, 2
      %s1122 = scalar_lea.vmem %s4, %s1121
      // Predicated region
      $region37: #{_lambda_.6} parent=31 // pred_check
        %p1123 = pneg %p116
      $region38: #{_lambda_.6} parent=31 // pred_check_branch
        %1125 = sbr.rel (%p1123) target = $region40
      $region39: #{_lambda_.6} parent=31 // pred_region
        %s1126 = smul.u32 8, %s21
      $region40: #{_lambda_.6} parent=31 // pred_fallthru
        _
      // Predicated region
      $region41: #{_lambda_.6} parent=31 // pred_check
        %p1127 = pneg %p142
      $region42: #{_lambda_.6} parent=31 // pred_check_branch
        %1129 = sbr.rel (%p1127) target = $region44
      $region43: #{_lambda_.6} parent=31 // pred_region
        _
      $region44: #{_lambda_.6} parent=31 // pred_fallthru
        _
    $region32: #{_lambda_.6} parent=5 // pred_fallthru
      _
    %p1130 = scmp.le.s32.totalorder 2, %s11
    // Predicated region
    $region45: #{_lambda_.6} parent=5 // pred_check
      %p1131 = pneg %p1130
    $region46: #{_lambda_.6} parent=5 // pred_check_branch
      %1133 = sbr.rel (%p1131) target = $region48
    $region47: #{_lambda_.6} parent=5 // pred_region
      %s1134 = ssub.s32 %s11, 2
      // Predicated region
      $region49: #{_lambda_.6} parent=47 // pred_check
        %p1135 = pneg %p122
      $region50: #{_lambda_.6} parent=47 // pred_check_branch
        %1137 = sbr.rel (%p1135) target = $region52
      $region51: #{_lambda_.6} parent=47 // pred_region
        %s1138 = smul.u32 8, %s23
        %p1139 = scmp.lt.s32.totalorder %s22, 1
        %s1140 = scalar_select %p1139, %s22, 1
        %p1141 = scmp.lt.s32.totalorder %s1138, 7
        %s1142 = scalar_select %p1141, %s1138, 7
        %s1143 = smul.addr %s1140, 8
        %s1144 = sadd.s32 %s1142, %s1143
        %s1145 = smul.addr %s1144, 4
        %s1146 = scalar_lea.vmem %s3, %s1145
      $region52: #{_lambda_.6} parent=47 // pred_fallthru
        _
      // Predicated region
      $region53: #{_lambda_.6} parent=47 // pred_check
        %p1147 = pneg %p148
      $region54: #{_lambda_.6} parent=47 // pred_check_branch
        %1149 = sbr.rel (%p1147) target = $region56
      $region55: #{_lambda_.6} parent=47 // pred_region
        %p1150 = scmp.lt.s32.totalorder %s22, 1
        %s1151 = scalar_select %p1150, %s22, 1
        %s1152 = smul.addr %s1151, 2
        %s1153 = scalar_lea.vmem %s4, %s1152
      $region56: #{_lambda_.6} parent=47 // pred_fallthru
        _
    $region48: #{_lambda_.6} parent=5 // pred_fallthru
      _
  $region6: #{_lambda_.6} parent=0 // loop_footer
    %s15 = sadd.s32 1, %s11
  $region7: #{_lambda_.6} parent=0 // loop_footer_branch
    %10 = sbr.rel target = $region3
  $region8: #{_lambda_.6} parent=0 // loop_exit
    _

// kernel: _lambda_.7
$region0: #{_lambda_.7}
  #allocation0 [shape = 'u32[]', space=smem, size = 0x4, offset = 0x4, fixed_abs, tag = 'smem constant byte address 0x4 - core index']
  #allocation1 [shape = 'u32[144,128]{1,0:T(1,128)}', space=vmem, size = 0x12000, scoped, tag = 'internal scratch']
  %s0 = inlined_call_operand.vmem [shape: bf16[2,5,5,128], index: 0, kind: input, shape index: {}]
  %s1 = inlined_call_operand.vmem [shape: bf16[4,128,64], index: 1, kind: input, shape index: {}]
  %s2 = inlined_call_operand.vmem [shape: f32[1,64], index: 2, kind: input, shape index: {}]
  %s3 = inlined_call_operand.vmem [shape: bf16[2,16,64], index: 3, kind: output, shape index: {0}]
  %s4 = inlined_call_operand.vmem [shape: f32[2,2,64], index: 4, kind: output, shape index: {1}]
  %5 = xla_tuple %s3, %s4
  %s6 = sld [smem:[#allocation0]]
  $region57: #{_lambda_.7} parent=0
    _
  %s8 = ssub.s32 1, %s6
  %s9 = scalar_select 0, %s8, %s6
  loop: start=0, step=1, limit=4
  $region2: #{_lambda_.7} parent=0 // loop_pre_header
    _
  $region3: #{_lambda_.7} parent=0 // loop_header
    %s11 = sphi 0, %s15
    %p12 = scmp.ge.s32.totalorder %s11, 4
    %s18 = sphi 0, %s30
    %s19 = sphi 0, %s26
    %s20 = sphi 0, %s18
    %s21 = sphi 0, %s19
    %s22 = sphi 0, %s20
    %s23 = sphi 0, %s21
    %s33 = sphi 0, %s35
    %s36 = sphi 0, %s33
    %s37 = sphi 0, %s36
    %s53 = sphi 0, %s37
    %s57 = sphi 0, %s57
    %s59 = sphi 0, %s57
    %s60 = sphi 0, %s59
    %s74 = sphi 0, %s60
    %s78 = sphi 0, %s78
    %s80 = sphi 0, %s78
    %s81 = sphi 0, %s80
    %s95 = sphi 0, %s81
    %s103 = sphi 0, %s105
    %s106 = sphi 0, %s103
    %s107 = sphi 0, %s106
    %s123 = sphi 0, %s107
    %s129 = sphi 0, %s131
    %s132 = sphi 0, %s129
    %s133 = sphi 0, %s132
    %s149 = sphi 0, %s133
  $region4: #{_lambda_.7} parent=0 // loop_header_branch
    %14 = sbr.rel (%p12) target = $region8
  $region5: #{_lambda_.7} parent=0 // loop_body
    %s16 = ssub.s32 %s11, 1
    %s17 = ssub.s32 %s11, 2
    %s24 = sadd.s32 1, %s19
    %p25 = scmp.ge.s32.totalorder %s24, 1
    %s26 = scalar_select %p25, 0, %s24
    %s27 = sadd.s32 1, %s18
    %s28 = scalar_select %p25, %s27, %s18
    %p29 = scmp.ge.s32.totalorder %s28, 2
    %s30 = scalar_select %p29, 0, %s28
    %s31 = ssub.s32 %s18, %s30
    %p32 = scmp.eq.s32.totalorder %s31, 0
    %s34 = sadd.s32 %s33, 1
    %s35 = scalar_select %p32, %s33, %s34
    %p38 = pneg %p32
    %p39 = scmp.eq.s32.totalorder %s11, 1
    %p40 = por %p38, %p39
    %p41 = scmp.ne.s32.totalorder %s33, %s36
    %p42 = scmp.eq.s32.totalorder %s11, 0
    %p43 = por %p41, %p42
    %p44 = scmp.ne.s32.totalorder %s33, %s36
    %p45 = scmp.eq.s32.totalorder %s16, 1
    %p46 = por %p44, %p45
    %p47 = scmp.ne.s32.totalorder %s36, %s37
    %p48 = scmp.eq.s32.totalorder %s16, 0
    %p49 = por %p47, %p48
    %p50 = scmp.ne.s32.totalorder %s36, %s37
    %p51 = scmp.eq.s32.totalorder %s17, 1
    %p52 = por %p50, %p51
    %p54 = scmp.ne.s32.totalorder %s37, %s53
    %p55 = scmp.eq.s32.totalorder %s17, 0
    %p56 = por %p54, %p55
    %s58 = sadd.s32 %s57, 1
    %p61 = scmp.eq.s32.totalorder %s11, 1
    %p62 = scmp.ne.s32.totalorder %s57, %s59
    %p63 = scmp.eq.s32.totalorder %s11, 0
    %p64 = por %p62, %p63
    %p65 = scmp.ne.s32.totalorder %s57, %s59
    %p66 = scmp.eq.s32.totalorder %s16, 1
    %p67 = por %p65, %p66
    %p68 = scmp.ne.s32.totalorder %s59, %s60
    %p69 = scmp.eq.s32.totalorder %s16, 0
    %p70 = por %p68, %p69
    %p71 = scmp.ne.s32.totalorder %s59, %s60
    %p72 = scmp.eq.s32.totalorder %s17, 1
    %p73 = por %p71, %p72
    %p75 = scmp.ne.s32.totalorder %s60, %s74
    %p76 = scmp.eq.s32.totalorder %s17, 0
    %p77 = por %p75, %p76
    %s79 = sadd.s32 %s78, 1
    %p82 = scmp.eq.s32.totalorder %s11, 1
    %p83 = scmp.ne.s32.totalorder %s78, %s80
    %p84 = scmp.eq.s32.totalorder %s11, 0
    %p85 = por %p83, %p84
    %p86 = scmp.ne.s32.totalorder %s78, %s80
    %p87 = scmp.eq.s32.totalorder %s16, 1
    %p88 = por %p86, %p87
    %p89 = scmp.ne.s32.totalorder %s80, %s81
    %p90 = scmp.eq.s32.totalorder %s16, 0
    %p91 = por %p89, %p90
    %p92 = scmp.ne.s32.totalorder %s80, %s81
    %p93 = scmp.eq.s32.totalorder %s17, 1
    %p94 = por %p92, %p93
    %p96 = scmp.ne.s32.totalorder %s81, %s95
    %p97 = scmp.eq.s32.totalorder %s17, 0
    %p98 = por %p96, %p97
    %s99 = ssub.s32 %s18, %s30
    %s100 = ssub.s32 %s19, %s26
    %s101 = sor.u32 %s99, %s100
    %p102 = scmp.eq.s32.totalorder %s101, 0
    %s104 = sadd.s32 %s103, 1
    %s105 = scalar_select %p102, %s103, %s104
    %p108 = pneg %p102
    %p109 = scmp.eq.s32.totalorder %s11, 1
    %p110 = por %p108, %p109
    %p111 = scmp.ne.s32.totalorder %s103, %s106
    %p112 = scmp.eq.s32.totalorder %s11, 0
    %p113 = por %p111, %p112
    %p114 = scmp.ne.s32.totalorder %s103, %s106
    %p115 = scmp.eq.s32.totalorder %s16, 1
    %p116 = por %p114, %p115
    %p117 = scmp.ne.s32.totalorder %s106, %s107
    %p118 = scmp.eq.s32.totalorder %s16, 0
    %p119 = por %p117, %p118
    %p120 = scmp.ne.s32.totalorder %s106, %s107
    %p121 = scmp.eq.s32.totalorder %s17, 1
    %p122 = por %p120, %p121
    %p124 = scmp.ne.s32.totalorder %s107, %s123
    %p125 = scmp.eq.s32.totalorder %s17, 0
    %p126 = por %p124, %p125
    %s127 = ssub.s32 %s18, %s30
    %p128 = scmp.eq.s32.totalorder %s127, 0
    %s130 = sadd.s32 %s129, 1
    %s131 = scalar_select %p128, %s129, %s130
    %p134 = pneg %p128
    %p135 = scmp.eq.s32.totalorder %s11, 1
    %p136 = por %p134, %p135
    %p137 = scmp.ne.s32.totalorder %s129, %s132
    %p138 = scmp.eq.s32.totalorder %s11, 0
    %p139 = por %p137, %p138
    %p140 = scmp.ne.s32.totalorder %s129, %s132
    %p141 = scmp.eq.s32.totalorder %s16, 1
    %p142 = por %p140, %p141
    %p143 = scmp.ne.s32.totalorder %s132, %s133
    %p144 = scmp.eq.s32.totalorder %s16, 0
    %p145 = por %p143, %p144
    %p146 = scmp.ne.s32.totalorder %s132, %s133
    %p147 = scmp.eq.s32.totalorder %s17, 1
    %p148 = por %p146, %p147
    %p150 = scmp.ne.s32.totalorder %s133, %s149
    %p151 = scmp.eq.s32.totalorder %s17, 0
    %p152 = por %p150, %p151
    %p153 = scmp.le.s32.totalorder 1, %s11
    %p154 = scmp.lt.s32.totalorder %s11, 3
    %p155 = pnand %p153, %p154
    %p156 = pneg %p155
    // Predicated region
    $region9: #{_lambda_.7} parent=5 // pred_check
      _
    $region10: #{_lambda_.7} parent=5 // pred_check_branch
      %158 = sbr.rel (%p155) target = $region12
    $region11: #{_lambda_.7} parent=5 // pred_region
      %s159 = ssub.s32 %s11, 1
      // Predicated region
      $region13: #{_lambda_.7} parent=11 // pred_check
        %p160 = pneg %p70
      $region14: #{_lambda_.7} parent=11 // pred_check_branch
        %162 = sbr.rel (%p160) target = $region16
      $region15: #{_lambda_.7} parent=11 // pred_region
        _
      $region16: #{_lambda_.7} parent=11 // pred_fallthru
        _
      // Predicated region
      $region17: #{_lambda_.7} parent=11 // pred_check
        %p163 = pneg %p91
      $region18: #{_lambda_.7} parent=11 // pred_check_branch
        %165 = sbr.rel (%p163) target = $region20
      $region19: #{_lambda_.7} parent=11 // pred_region
        _
      $region20: #{_lambda_.7} parent=11 // pred_fallthru
        _
    $region12: #{_lambda_.7} parent=5 // pred_fallthru
      _
    %p166 = scmp.lt.s32.totalorder %s11, 2
    // Predicated region
    $region21: #{_lambda_.7} parent=5 // pred_check
      %p167 = pneg %p166
    $region22: #{_lambda_.7} parent=5 // pred_check_branch
      %169 = sbr.rel (%p167) target = $region24
    $region23: #{_lambda_.7} parent=5 // pred_region
      // Predicated region
      $region25: #{_lambda_.7} parent=23 // pred_check
        %p170 = pneg %p43
      $region26: #{_lambda_.7} parent=23 // pred_check_branch
        %172 = sbr.rel (%p170) target = $region28
      $region27: #{_lambda_.7} parent=23 // pred_region
        %p173 = scmp.lt.s32.totalorder %s18, 1
        %s174 = scalar_select %p173, %s18, 1
        %s175 = smul.addr %s174, 5
        %s176 = smul.addr %s175, 4
        %s177 = scalar_lea.vmem %s0, %s176
      $region28: #{_lambda_.7} parent=23 // pred_fallthru
        _
    $region24: #{_lambda_.7} parent=5 // pred_fallthru
      _
    %p178 = scmp.le.s32.totalorder 1, %s11
    %p179 = scmp.lt.s32.totalorder %s11, 3
    %p180 = pnand %p178, %p179
    %p181 = pneg %p180
    // Predicated region
    $region29: #{_lambda_.7} parent=5 // pred_check
      _
    $region30: #{_lambda_.7} parent=5 // pred_check_branch
      %183 = sbr.rel (%p180) target = $region32
    $region31: #{_lambda_.7} parent=5 // pred_region
      %s184 = ssub.s32 %s11, 1
      %p185 = scmp.lt.s32.totalorder %s20, 1
      %s186 = scalar_select %p185, %s20, 1
      %s187 = smul.addr %s186, 5
      %s188 = smul.addr %s187, 4
      %s189 = scalar_lea.vmem %s0, %s188
      %p190 = pneg %p49
      %p191 = pneg %p46
      %p192 = pneg %p70
      %p193 = pneg %p67
      %p194 = pneg %p91
      %p195 = pneg %p88
      %p196 = pneg %p119
      %p197 = pneg %p116
      %s198 = smul.u32 2, %s21
      %p199 = scmp.lt.s32.totalorder %s20, 1
      %s200 = scalar_select %p199, %s20, 1
      %p201 = scmp.lt.s32.totalorder %s198, 1
      %s202 = scalar_select %p201, %s198, 1
      %s203 = smul.addr %s200, 2
      %s204 = sadd.s32 %s202, %s203
      %s205 = smul.addr %s204, 4
      %s206 = scalar_lea.vmem %s3, %s205
      %p207 = pneg %p145
      %p208 = pneg %p142
      %p209 = scmp.lt.s32.totalorder %s20, 1
      %s210 = scalar_select %p209, %s20, 1
      %s211 = smul.addr %s210, 2
      %s212 = scalar_lea.vmem %s4, %s211
      %p213 = scmp.lt.s32.totalorder %s20, 1
      %s214 = scalar_select %p213, %s20, 1
      %s215 = smul.addr %s214, 5
      %s216 = smul.addr %s215, 4
      %s217 = scalar_lea.vmem %s0, %s216
      %s218 = smul.u32 2, %s21
      %p219 = scmp.lt.s32.totalorder %s20, 1
      %s220 = scalar_select %p219, %s20, 1
      %p221 = scmp.lt.s32.totalorder %s218, 1
      %s222 = scalar_select %p221, %s218, 1
      %s223 = smul.addr %s220, 2
      %s224 = sadd.s32 %s222, %s223
      %s225 = smul.addr %s224, 4
      %s226 = scalar_lea.vmem %s3, %s225
      %s227 = smul.u32 2, %s21
      %p228 = scmp.lt.s32.totalorder %s20, 1
      %s229 = scalar_select %p228, %s20, 1
      %s230 = smul.addr %s229, 2
      %s231 = scalar_lea.vmem %s4, %s230
      %s233 = smul.u32 %s21, 4
      %s234 = smul.addr %s233, 4
      %s235 = scalar_lea.vmem %s217, %s234
      %v236 = vld [vmem:[%s235] sm:$0x7]
      %v237 = vld [vmem:[%s235 + $0x4] sm:$0x7]
      %v238 = vld [vmem:[%s235 + $0x8] sm:$0x7]
      %v239 = vld [vmem:[%s235 + $0xc] sm:$0x7]
      %v240 = vld [vmem:[%s235 + $0x10] sm:$0x7]
      %v241 = vunpack.c.l.bf16 %v236
      %v242 = vunpack.c.l.bf16 %v237
      %v243 = vunpack.c.l.bf16 %v238
      %v244 = vunpack.c.l.bf16 %v239
      %v245 = vunpack.c.l.bf16 %v240
      %vm246 = vcmp.ge.f32.partialorder %v241, 0.0
      %vm247 = vcmp.ge.f32.partialorder %v242, 0.0
      %vm248 = vcmp.ge.f32.partialorder %v243, 0.0
      %vm249 = vcmp.ge.f32.partialorder %v244, 0.0
      %vm250 = vcmp.ge.f32.partialorder %v245, 0.0
      %v251 = vmul.f32 %v241, 0.2
      %v252 = vmul.f32 %v242, 0.2
      %v253 = vmul.f32 %v243, 0.2
      %v254 = vmul.f32 %v244, 0.2
      %v255 = vmul.f32 %v245, 0.2
      %v256 = vsel %vm246, %v241, %v251
      %v257 = vsel %vm247, %v242, %v252
      %v258 = vsel %vm248, %v243, %v253
      %v259 = vsel %vm249, %v244, %v254
      %v260 = vsel %vm250, %v245, %v255
      %v261 = vpack.c.bf16 %v256, %v256
      %v262 = vpack.c.bf16 %v257, %v257
      %v263 = vpack.c.bf16 %v258, %v258
      %v264 = vpack.c.bf16 %v259, %v259
      %v265 = vpack.c.bf16 %v260, %v260
      %v266 = vld [vmem:[%s1] sm:$0xf]
      %v267 = vld [vmem:[%s1 + $0x4] sm:$0xf]
      %v268 = vld [vmem:[%s1 + $0x8] sm:$0xf]
      %v269 = vld [vmem:[%s1 + $0xc] sm:$0xf]
      %v270 = vld [vmem:[%s1 + $0x10] sm:$0xf]
      %v271 = vld [vmem:[%s1 + $0x14] sm:$0xf]
      %v272 = vld [vmem:[%s1 + $0x18] sm:$0xf]
      %v273 = vld [vmem:[%s1 + $0x1c] sm:$0xf]
      %v274 = vld [vmem:[%s1 + $0x20] sm:$0xf]
      %v275 = vld [vmem:[%s1 + $0x24] sm:$0xf]
      %v276 = vld [vmem:[%s1 + $0x28] sm:$0xf]
      %v277 = vld [vmem:[%s1 + $0x2c] sm:$0xf]
      %v278 = vld [vmem:[%s1 + $0x30] sm:$0xf]
      %v279 = vld [vmem:[%s1 + $0x34] sm:$0xf]
      %v280 = vld [vmem:[%s1 + $0x38] sm:$0xf]
      %v281 = vld [vmem:[%s1 + $0x3c] sm:$0xf]
      %v287 = vunpack.c.l.s4 1983009808
      %v288 = vunpack.c.0.s8 %v287
      %v289 = vlaneseq
      %v290 = vshrl.u32 %v289, 7
      %v291 = vsub.s32 %v288, %v290
      %v292 = vrot.slane %v261, %v291
      %v293 = vcombine.high %v292, %v292
      %v295 = vunpack.c.l.s4 1983009808
      %v296 = vunpack.c.0.s8 %v295
      %v297 = vlaneseq
      %v298 = vshrl.u32 %v297, 7
      %v299 = vsub.s32 %v296, %v298
      %v300 = vrot.slane %v262, %v299
      %v301 = vcombine.high %v300, %v300
      %v303 = vunpack.c.l.s4 1983009808
      %v304 = vunpack.c.0.s8 %v303
      %v305 = vlaneseq
      %v306 = vshrl.u32 %v305, 7
      %v307 = vsub.s32 %v304, %v306
      %v308 = vrot.slane %v263, %v307
      %v309 = vcombine.high %v308, %v308
      %v311 = vunpack.c.l.s4 1983009808
      %v312 = vunpack.c.0.s8 %v311
      %v313 = vlaneseq
      %v314 = vshrl.u32 %v313, 7
      %v315 = vsub.s32 %v312, %v314
      %v316 = vrot.slane %v264, %v315
      %v317 = vcombine.high %v316, %v316
      %vm318 = vsmask.f32 1280
      %vm319 = vsmask.f32 3336
      %vm320 = vmor %vm318, %vm319
      %vm321 = vsmask.f32 5392
      %vm322 = vmor %vm320, %vm321
      %vm323 = vsmask.f32 7448
      %vm324 = vmor %vm322, %vm323
      %v326 = vshrl.u32 %v292, 16
      %v328 = vrot.slane %v326, 6
      %v329 = vshll.u32 %v292, 16
      %v331 = vrot.slane %v329, 7
      %v332 = vor.u32 %v328, %v331
      %v333 = vrot.slane %v332, 2
      %v335 = vshll.u32 %v293, 16
      %v337 = vrot.slane %v335, 7
      %v338 = vsel %vm324, %v333, %v337
      %v340 = vshrl.u32 %v300, 16
      %v342 = vrot.slane %v340, 6
      %v343 = vshll.u32 %v300, 16
      %v345 = vrot.slane %v343, 7
      %v346 = vor.u32 %v342, %v345
      %v347 = vrot.slane %v346, 2
      %v349 = vshll.u32 %v301, 16
      %v351 = vrot.slane %v349, 7
      %v352 = vsel %vm324, %v347, %v351
      %v354 = vshrl.u32 %v308, 16
      %v356 = vrot.slane %v354, 6
      %v357 = vshll.u32 %v308, 16
      %v359 = vrot.slane %v357, 7
      %v360 = vor.u32 %v356, %v359
      %v361 = vrot.slane %v360, 2
      %v363 = vshll.u32 %v309, 16
      %v365 = vrot.slane %v363, 7
      %v366 = vsel %vm324, %v361, %v365
      %v368 = vshrl.u32 %v316, 16
      %v370 = vrot.slane %v368, 6
      %v371 = vshll.u32 %v316, 16
      %v373 = vrot.slane %v371, 7
      %v374 = vor.u32 %v370, %v373
      %v375 = vrot.slane %v374, 2
      %v377 = vshll.u32 %v317, 16
      %v379 = vrot.slane %v377, 7
      %v380 = vsel %vm324, %v375, %v379
      %s381 = scalar_lea.vmem %s1, 64
      %v382 = vld [vmem:[%s381] sm:$0xf]
      %v383 = vld [vmem:[%s381 + $0x4] sm:$0xf]
      %v384 = vld [vmem:[%s381 + $0x8] sm:$0xf]
      %v385 = vld [vmem:[%s381 + $0xc] sm:$0xf]
      %v386 = vld [vmem:[%s381 + $0x10] sm:$0xf]
      %v387 = vld [vmem:[%s381 + $0x14] sm:$0xf]
      %v388 = vld [vmem:[%s381 + $0x18] sm:$0xf]
      %v389 = vld [vmem:[%s381 + $0x1c] sm:$0xf]
      %v390 = vld [vmem:[%s381 + $0x20] sm:$0xf]
      %v391 = vld [vmem:[%s381 + $0x24] sm:$0xf]
      %v392 = vld [vmem:[%s381 + $0x28] sm:$0xf]
      %v393 = vld [vmem:[%s381 + $0x2c] sm:$0xf]
      %v394 = vld [vmem:[%s381 + $0x30] sm:$0xf]
      %v395 = vld [vmem:[%s381 + $0x34] sm:$0xf]
      %v396 = vld [vmem:[%s381 + $0x38] sm:$0xf]
      %v397 = vld [vmem:[%s381 + $0x3c] sm:$0xf]
      %v398 = vcombine.low %v338, %v352
      %v399 = vcombine.low %v366, %v380
      %v401 = vunpack.c.l.s4 1983009808
      %v402 = vunpack.c.0.s8 %v401
      %v403 = vlaneseq
      %v404 = vshrl.u32 %v403, 7
      %v405 = vsub.s32 %v402, %v404
      %v406 = vrot.slane %v398, %v405
      %v408 = vunpack.c.l.s4 1983009808
      %v409 = vunpack.c.0.s8 %v408
      %v410 = vlaneseq
      %v411 = vshrl.u32 %v410, 7
      %v412 = vsub.s32 %v409, %v411
      %v413 = vrot.slane %v399, %v412
      %v414 = vcombine.low %v406, %v413
      %v432 = vunpack.c.l.b16 %v382
      %v433 = vunpack.c.l.b16 %v383
      %v434 = vunpack.c.l.b16 %v384
      %v435 = vunpack.c.l.b16 %v385
      %v436 = vunpack.c.l.b16 %v386
      %v437 = vunpack.c.l.b16 %v387
      %v438 = vunpack.c.l.b16 %v388
      %v439 = vunpack.c.l.b16 %v389
      %v440 = vunpack.c.l.b16 %v390
      %v441 = vunpack.c.l.b16 %v391
      %v442 = vunpack.c.l.b16 %v392
      %v443 = vunpack.c.l.b16 %v393
      %v444 = vunpack.c.l.b16 %v394
      %v445 = vunpack.c.l.b16 %v395
      %v446 = vunpack.c.l.b16 %v396
      %v447 = vunpack.c.l.b16 %v397
      %v448 = vpack.c.b16 %v433, %v432
      %v449 = vpack.c.b16 %v435, %v434
      %v450 = vpack.c.b16 %v437, %v436
      %v451 = vpack.c.b16 %v439, %v438
      %v452 = vpack.c.b16 %v441, %v440
      %v453 = vpack.c.b16 %v443, %v442
      %v454 = vpack.c.b16 %v445, %v444
      %v455 = vpack.c.b16 %v447, %v446
      %464 = vmatprep.subr.bf16.mxu0 0
      %465 = vmatpush1.bf16.msra.mxu0 %v455
      %466 = vmatprep.subr.bf16.mxu0 0
      %467 = vmatpush1.bf16.msra.mxu0 %v454
      %468 = vmatprep.subr.bf16.mxu0 0
      %469 = vmatpush1.bf16.msra.mxu0 %v453
      %470 = vmatprep.subr.bf16.mxu0 0
      %471 = vmatpush1.bf16.msra.mxu0 %v452
      %472 = vmatprep.subr.bf16.mxu0 0
      %473 = vmatpush1.bf16.msra.mxu0 %v451
      %474 = vmatprep.subr.bf16.mxu0 0
      %475 = vmatpush1.bf16.msra.mxu0 %v450
      %476 = vmatprep.subr.bf16.mxu0 0
      %477 = vmatpush1.bf16.msra.mxu0 %v449
      %478 = vmatprep.subr.bf16.mxu0 0
      %479 = vmatpush1.bf16.msra.mxu0 %v448
      %480 = vmatprep.subr.bf16.mxu0 0
      %481 = vmatpush2.bf16.msra.mxu0 0
      %482 = vmatprep.subr.bf16.mxu0 0
      %483 = vmatpush2.bf16.msra.mxu0 0
      %484 = vmatprep.subr.bf16.mxu0 0
      %485 = vmatpush2.bf16.msra.mxu0 0
      %486 = vmatprep.subr.bf16.mxu0 0
      %487 = vmatpush2.bf16.msra.mxu0 0
      %488 = vmatprep.subr.bf16.mxu0 0
      %489 = vmatpush2.bf16.msra.mxu0 0
      %490 = vmatprep.subr.bf16.mxu0 0
      %491 = vmatpush2.bf16.msra.mxu0 0
      %492 = vmatprep.subr.bf16.mxu0 0
      %493 = vmatpush2.bf16.msra.mxu0 0
      %494 = vmatprep.subr.bf16.mxu0 0
      %495 = vmatpush2.bf16.msra.mxu0 0
      %496 = vmatprep.mubr.bf16.mxu0 0
      %497 = vmatmul.mubr.bf16.gmra.mxu0 %v414
      %v498 = vpop.f32.mrf.mxu0
      %v499 = vadd.f32 0.0, %v498
      %v500 = vpop.f32.mrf.mxu0
      %v501 = vpop.f32.mrf.mxu0
      %v502 = vadd.f32 0.0, %v501
      %v503 = vpop.f32.mrf.mxu0
      %504 = vdwg.mxu0
      %v505 = vcombine.low %v261, %v262
      %v506 = vcombine.low %v263, %v264
      %v508 = vunpack.c.l.s4 1983009808
      %v509 = vunpack.c.0.s8 %v508
      %v510 = vlaneseq
      %v511 = vshrl.u32 %v510, 7
      %v512 = vsub.s32 %v509, %v511
      %v513 = vrot.slane %v505, %v512
      %v515 = vunpack.c.l.s4 1983009808
      %v516 = vunpack.c.0.s8 %v515
      %v517 = vlaneseq
      %v518 = vshrl.u32 %v517, 7
      %v519 = vsub.s32 %v516, %v518
      %v520 = vrot.slane %v506, %v519
      %v521 = vcombine.low %v513, %v520
      %v539 = vunpack.c.l.b16 %v266
      %v540 = vunpack.c.l.b16 %v267
      %v541 = vunpack.c.l.b16 %v268
      %v542 = vunpack.c.l.b16 %v269
      %v543 = vunpack.c.l.b16 %v270
      %v544 = vunpack.c.l.b16 %v271
      %v545 = vunpack.c.l.b16 %v272
      %v546 = vunpack.c.l.b16 %v273
      %v547 = vunpack.c.l.b16 %v274
      %v548 = vunpack.c.l.b16 %v275
      %v549 = vunpack.c.l.b16 %v276
      %v550 = vunpack.c.l.b16 %v277
      %v551 = vunpack.c.l.b16 %v278
      %v552 = vunpack.c.l.b16 %v279
      %v553 = vunpack.c.l.b16 %v280
      %v554 = vunpack.c.l.b16 %v281
      %v555 = vpack.c.b16 %v540, %v539
      %v556 = vpack.c.b16 %v542, %v541
      %v557 = vpack.c.b16 %v544, %v543
      %v558 = vpack.c.b16 %v546, %v545
      %v559 = vpack.c.b16 %v548, %v547
      %v560 = vpack.c.b16 %v550, %v549
      %v561 = vpack.c.b16 %v552, %v551
      %v562 = vpack.c.b16 %v554, %v553
      %571 = vmatprep.subr.bf16.mxu0 0
      %572 = vmatpush1.bf16.msra.mxu0 %v562
      %573 = vmatprep.subr.bf16.mxu0 0
      %574 = vmatpush1.bf16.msra.mxu0 %v561
      %575 = vmatprep.subr.bf16.mxu0 0
      %576 = vmatpush1.bf16.msra.mxu0 %v560
      %577 = vmatprep.subr.bf16.mxu0 0
      %578 = vmatpush1.bf16.msra.mxu0 %v559
      %579 = vmatprep.subr.bf16.mxu0 0
      %580 = vmatpush1.bf16.msra.mxu0 %v558
      %581 = vmatprep.subr.bf16.mxu0 0
      %582 = vmatpush1.bf16.msra.mxu0 %v557
      %583 = vmatprep.subr.bf16.mxu0 0
      %584 = vmatpush1.bf16.msra.mxu0 %v556
      %585 = vmatprep.subr.bf16.mxu0 0
      %586 = vmatpush1.bf16.msra.mxu0 %v555
      %587 = vmatprep.subr.bf16.mxu0 0
      %588 = vmatpush2.bf16.msra.mxu0 0
      %589 = vmatprep.subr.bf16.mxu0 0
      %590 = vmatpush2.bf16.msra.mxu0 0
      %591 = vmatprep.subr.bf16.mxu0 0
      %592 = vmatpush2.bf16.msra.mxu0 0
      %593 = vmatprep.subr.bf16.mxu0 0
      %594 = vmatpush2.bf16.msra.mxu0 0
      %595 = vmatprep.subr.bf16.mxu0 0
      %596 = vmatpush2.bf16.msra.mxu0 0
      %597 = vmatprep.subr.bf16.mxu0 0
      %598 = vmatpush2.bf16.msra.mxu0 0
      %599 = vmatprep.subr.bf16.mxu0 0
      %600 = vmatpush2.bf16.msra.mxu0 0
      %601 = vmatprep.subr.bf16.mxu0 0
      %602 = vmatpush2.bf16.msra.mxu0 0
      %603 = vmatprep.mubr.bf16.mxu0 0
      %604 = vmatmul.mubr.bf16.gmra.mxu0 %v521
      %v605 = vpop.f32.mrf.mxu0
      %v606 = vadd.f32 %v499, %v605
      %v607 = vpop.f32.mrf.mxu0
      %v608 = vpop.f32.mrf.mxu0
      %v609 = vadd.f32 %v502, %v608
      %v610 = vpop.f32.mrf.mxu0
      %611 = vdwg.mxu0
      %s612 = scalar_lea.vmem %s1, 128
      %v613 = vld [vmem:[%s612] sm:$0xf]
      %v614 = vld [vmem:[%s612 + $0x4] sm:$0xf]
      %v615 = vld [vmem:[%s612 + $0x8] sm:$0xf]
      %v616 = vld [vmem:[%s612 + $0xc] sm:$0xf]
      %v617 = vld [vmem:[%s612 + $0x10] sm:$0xf]
      %v618 = vld [vmem:[%s612 + $0x14] sm:$0xf]
      %v619 = vld [vmem:[%s612 + $0x18] sm:$0xf]
      %v620 = vld [vmem:[%s612 + $0x1c] sm:$0xf]
      %v621 = vld [vmem:[%s612 + $0x20] sm:$0xf]
      %v622 = vld [vmem:[%s612 + $0x24] sm:$0xf]
      %v623 = vld [vmem:[%s612 + $0x28] sm:$0xf]
      %v624 = vld [vmem:[%s612 + $0x2c] sm:$0xf]
      %v625 = vld [vmem:[%s612 + $0x30] sm:$0xf]
      %v626 = vld [vmem:[%s612 + $0x34] sm:$0xf]
      %v627 = vld [vmem:[%s612 + $0x38] sm:$0xf]
      %v628 = vld [vmem:[%s612 + $0x3c] sm:$0xf]
      %v630 = vcombine.low %v262, %v263
      %v631 = vcombine.low %v264, %v265
      %v633 = vunpack.c.l.s4 1983009808
      %v634 = vunpack.c.0.s8 %v633
      %v635 = vlaneseq
      %v636 = vshrl.u32 %v635, 7
      %v637 = vsub.s32 %v634, %v636
      %v638 = vrot.slane %v630, %v637
      %v640 = vunpack.c.l.s4 1983009808
      %v641 = vunpack.c.0.s8 %v640
      %v642 = vlaneseq
      %v643 = vshrl.u32 %v642, 7
      %v644 = vsub.s32 %v641, %v643
      %v645 = vrot.slane %v631, %v644
      %v646 = vcombine.low %v638, %v645
      %v664 = vunpack.c.l.b16 %v613
      %v665 = vunpack.c.l.b16 %v614
      %v666 = vunpack.c.l.b16 %v615
      %v667 = vunpack.c.l.b16 %v616
      %v668 = vunpack.c.l.b16 %v617
      %v669 = vunpack.c.l.b16 %v618
      %v670 = vunpack.c.l.b16 %v619
      %v671 = vunpack.c.l.b16 %v620
      %v672 = vunpack.c.l.b16 %v621
      %v673 = vunpack.c.l.b16 %v622
      %v674 = vunpack.c.l.b16 %v623
      %v675 = vunpack.c.l.b16 %v624
      %v676 = vunpack.c.l.b16 %v625
      %v677 = vunpack.c.l.b16 %v626
      %v678 = vunpack.c.l.b16 %v627
      %v679 = vunpack.c.l.b16 %v628
      %v680 = vpack.c.b16 %v665, %v664
      %v681 = vpack.c.b16 %v667, %v666
      %v682 = vpack.c.b16 %v669, %v668
      %v683 = vpack.c.b16 %v671, %v670
      %v684 = vpack.c.b16 %v673, %v672
      %v685 = vpack.c.b16 %v675, %v674
      %v686 = vpack.c.b16 %v677, %v676
      %v687 = vpack.c.b16 %v679, %v678
      %696 = vmatprep.subr.bf16.mxu0 0
      %697 = vmatpush1.bf16.msra.mxu0 %v687
      %698 = vmatprep.subr.bf16.mxu0 0
      %699 = vmatpush1.bf16.msra.mxu0 %v686
      %700 = vmatprep.subr.bf16.mxu0 0
      %701 = vmatpush1.bf16.msra.mxu0 %v685
      %702 = vmatprep.subr.bf16.mxu0 0
      %703 = vmatpush1.bf16.msra.mxu0 %v684
      %704 = vmatprep.subr.bf16.mxu0 0
      %705 = vmatpush1.bf16.msra.mxu0 %v683
      %706 = vmatprep.subr.bf16.mxu0 0
      %707 = vmatpush1.bf16.msra.mxu0 %v682
      %708 = vmatprep.subr.bf16.mxu0 0
      %709 = vmatpush1.bf16.msra.mxu0 %v681
      %710 = vmatprep.subr.bf16.mxu0 0
      %711 = vmatpush1.bf16.msra.mxu0 %v680
      %712 = vmatprep.subr.bf16.mxu0 0
      %713 = vmatpush2.bf16.msra.mxu0 0
      %714 = vmatprep.subr.bf16.mxu0 0
      %715 = vmatpush2.bf16.msra.mxu0 0
      %716 = vmatprep.subr.bf16.mxu0 0
      %717 = vmatpush2.bf16.msra.mxu0 0
      %718 = vmatprep.subr.bf16.mxu0 0
      %719 = vmatpush2.bf16.msra.mxu0 0
      %720 = vmatprep.subr.bf16.mxu0 0
      %721 = vmatpush2.bf16.msra.mxu0 0
      %722 = vmatprep.subr.bf16.mxu0 0
      %723 = vmatpush2.bf16.msra.mxu0 0
      %724 = vmatprep.subr.bf16.mxu0 0
      %725 = vmatpush2.bf16.msra.mxu0 0
      %726 = vmatprep.subr.bf16.mxu0 0
      %727 = vmatpush2.bf16.msra.mxu0 0
      %728 = vmatprep.mubr.bf16.mxu0 0
      %729 = vmatmul.mubr.bf16.gmra.mxu0 %v646
      %v730 = vpop.f32.mrf.mxu0
      %v731 = vadd.f32 0.0, %v730
      %v732 = vpop.f32.mrf.mxu0
      %v733 = vpop.f32.mrf.mxu0
      %v734 = vadd.f32 0.0, %v733
      %v735 = vpop.f32.mrf.mxu0
      %736 = vdwg.mxu0
      %v737 = vadd.f32 %v606, %v731
      %v738 = vadd.f32 %v609, %v734
      %v740 = vunpack.c.l.s4 1983009808
      %v741 = vunpack.c.0.s8 %v740
      %v742 = vlaneseq
      %v743 = vshrl.u32 %v742, 7
      %v744 = vsub.s32 %v741, %v743
      %v745 = vrot.slane %v265, %v744
      %v746 = vcombine.high %v745, %v745
      %v748 = vshrl.u32 %v745, 16
      %v750 = vrot.slane %v748, 6
      %v751 = vshll.u32 %v745, 16
      %v753 = vrot.slane %v751, 7
      %v754 = vor.u32 %v750, %v753
      %v755 = vrot.slane %v754, 2
      %v757 = vshll.u32 %v746, 16
      %v759 = vrot.slane %v757, 7
      %v760 = vsel %vm324, %v755, %v759
      %s761 = scalar_lea.vmem %s1, 192
      %v762 = vld [vmem:[%s761] sm:$0xf]
      %v763 = vld [vmem:[%s761 + $0x4] sm:$0xf]
      %v764 = vld [vmem:[%s761 + $0x8] sm:$0xf]
      %v765 = vld [vmem:[%s761 + $0xc] sm:$0xf]
      %v766 = vld [vmem:[%s761 + $0x10] sm:$0xf]
      %v767 = vld [vmem:[%s761 + $0x14] sm:$0xf]
      %v768 = vld [vmem:[%s761 + $0x18] sm:$0xf]
      %v769 = vld [vmem:[%s761 + $0x1c] sm:$0xf]
      %v770 = vld [vmem:[%s761 + $0x20] sm:$0xf]
      %v771 = vld [vmem:[%s761 + $0x24] sm:$0xf]
      %v772 = vld [vmem:[%s761 + $0x28] sm:$0xf]
      %v773 = vld [vmem:[%s761 + $0x2c] sm:$0xf]
      %v774 = vld [vmem:[%s761 + $0x30] sm:$0xf]
      %v775 = vld [vmem:[%s761 + $0x34] sm:$0xf]
      %v776 = vld [vmem:[%s761 + $0x38] sm:$0xf]
      %v777 = vld [vmem:[%s761 + $0x3c] sm:$0xf]
      %v778 = vcombine.low %v352, %v366
      %v779 = vcombine.low %v380, %v760
      %v781 = vunpack.c.l.s4 1983009808
      %v782 = vunpack.c.0.s8 %v781
      %v783 = vlaneseq
      %v784 = vshrl.u32 %v783, 7
      %v785 = vsub.s32 %v782, %v784
      %v786 = vrot.slane %v778, %v785
      %v788 = vunpack.c.l.s4 1983009808
      %v789 = vunpack.c.0.s8 %v788
      %v790 = vlaneseq
      %v791 = vshrl.u32 %v790, 7
      %v792 = vsub.s32 %v789, %v791
      %v793 = vrot.slane %v779, %v792
      %v794 = vcombine.low %v786, %v793
      %v812 = vunpack.c.l.b16 %v762
      %v813 = vunpack.c.l.b16 %v763
      %v814 = vunpack.c.l.b16 %v764
      %v815 = vunpack.c.l.b16 %v765
      %v816 = vunpack.c.l.b16 %v766
      %v817 = vunpack.c.l.b16 %v767
      %v818 = vunpack.c.l.b16 %v768
      %v819 = vunpack.c.l.b16 %v769
      %v820 = vunpack.c.l.b16 %v770
      %v821 = vunpack.c.l.b16 %v771
      %v822 = vunpack.c.l.b16 %v772
      %v823 = vunpack.c.l.b16 %v773
      %v824 = vunpack.c.l.b16 %v774
      %v825 = vunpack.c.l.b16 %v775
      %v826 = vunpack.c.l.b16 %v776
      %v827 = vunpack.c.l.b16 %v777
      %v828 = vpack.c.b16 %v813, %v812
      %v829 = vpack.c.b16 %v815, %v814
      %v830 = vpack.c.b16 %v817, %v816
      %v831 = vpack.c.b16 %v819, %v818
      %v832 = vpack.c.b16 %v821, %v820
      %v833 = vpack.c.b16 %v823, %v822
      %v834 = vpack.c.b16 %v825, %v824
      %v835 = vpack.c.b16 %v827, %v826
      %844 = vmatprep.subr.bf16.mxu0 0
      %845 = vmatpush1.bf16.msra.mxu0 %v835
      %846 = vmatprep.subr.bf16.mxu0 0
      %847 = vmatpush1.bf16.msra.mxu0 %v834
      %848 = vmatprep.subr.bf16.mxu0 0
      %849 = vmatpush1.bf16.msra.mxu0 %v833
      %850 = vmatprep.subr.bf16.mxu0 0
      %851 = vmatpush1.bf16.msra.mxu0 %v832
      %852 = vmatprep.subr.bf16.mxu0 0
      %853 = vmatpush1.bf16.msra.mxu0 %v831
      %854 = vmatprep.subr.bf16.mxu0 0
      %855 = vmatpush1.bf16.msra.mxu0 %v830
      %856 = vmatprep.subr.bf16.mxu0 0
      %857 = vmatpush1.bf16.msra.mxu0 %v829
      %858 = vmatprep.subr.bf16.mxu0 0
      %859 = vmatpush1.bf16.msra.mxu0 %v828
      %860 = vmatprep.subr.bf16.mxu0 0
      %861 = vmatpush2.bf16.msra.mxu0 0
      %862 = vmatprep.subr.bf16.mxu0 0
      %863 = vmatpush2.bf16.msra.mxu0 0
      %864 = vmatprep.subr.bf16.mxu0 0
      %865 = vmatpush2.bf16.msra.mxu0 0
      %866 = vmatprep.subr.bf16.mxu0 0
      %867 = vmatpush2.bf16.msra.mxu0 0
      %868 = vmatprep.subr.bf16.mxu0 0
      %869 = vmatpush2.bf16.msra.mxu0 0
      %870 = vmatprep.subr.bf16.mxu0 0
      %871 = vmatpush2.bf16.msra.mxu0 0
      %872 = vmatprep.subr.bf16.mxu0 0
      %873 = vmatpush2.bf16.msra.mxu0 0
      %874 = vmatprep.subr.bf16.mxu0 0
      %875 = vmatpush2.bf16.msra.mxu0 0
      %876 = vmatprep.mubr.bf16.mxu0 0
      %877 = vmatmul.mubr.bf16.gmra.mxu0 %v794
      %v878 = vpop.f32.mrf.mxu0
      %v879 = vadd.f32 0.0, %v878
      %v880 = vpop.f32.mrf.mxu0
      %v881 = vpop.f32.mrf.mxu0
      %v882 = vadd.f32 0.0, %v881
      %v883 = vpop.f32.mrf.mxu0
      %884 = vdwg.mxu0
      %v885 = vadd.f32 %v737, %v879
      %v886 = vadd.f32 %v738, %v882
      %v887 = vld [vmem:[%s2] sm:$0x1]
      %v889 = vlaneseq
      %v890 = vshrl.u32 %v889, 7
      %v891 = vsub.s32 0, %v890
      %v892 = vrot.slane %v887, %v891
      %v894 = vadd.f32 %v885, %v892
      %v895 = vadd.f32 %v886, %v892
      %v896 = vpack.c.bf16 %v895, %v894
      %v898 = vunpack.c.l.b16 %v896
      %v899 = vunpack.c.h.b16 %v896
      %v900 = vpack.c.b16 %v898, %v898
      %v901 = vpack.c.b16 %v899, %v899
      %vm904 = vcmask 519168
      %905 = vst.msk [vmem:[%s226] sm:$0xf] %vm904, %v900
      %906 = vst.msk [vmem:[%s226 + $0x4] sm:$0xf] %vm904, %v901
      %p907 = scmp.eq.s32.totalorder %s21, 0
      // Predicated region
      $region33: #{_lambda_.7} parent=31 // pred_check
        %p908 = pneg %p907
      $region34: #{_lambda_.7} parent=31 // pred_check_branch
        %910 = sbr.rel (%p908) target = $region36
      $region35: #{_lambda_.7} parent=31 // pred_region
        %vm911 = vcmask 517120
        %912 = vst.msk [vmem:[%s231] sm:$0x3] %vm911, 0.0
      $region36: #{_lambda_.7} parent=31 // pred_fallthru
        _
      %vm913 = vcmask 523264
      %v914 = vsel %vm913, %v894, 0.0
      %v915 = vsel %vm913, %v895, 0.0
      %v916 = vadd.f32 %v914, %v915
      %v917 = vrot.slane %v916, 4
      %v918 = vadd.f32 %v916, %v917
      %v919 = vrot.slane %v918, 2
      %v920 = vadd.f32 %v918, %v919
      %v921 = vrot.slane %v920, 1
      %v922 = vadd.f32 %v920, %v921
      %v923 = vmul.f32 %v894, %v894
      %v924 = vmul.f32 %v895, %v895
      %v925 = vsel %vm913, %v923, 0.0
      %v926 = vsel %vm913, %v924, 0.0
      %v927 = vadd.f32 %v925, %v926
      %v928 = vrot.slane %v927, 4
      %v929 = vadd.f32 %v927, %v928
      %v930 = vrot.slane %v929, 2
      %v931 = vadd.f32 %v929, %v930
      %v932 = vrot.slane %v931, 1
      %v933 = vadd.f32 %v931, %v932
      %v934 = vld [vmem:[%s231] sm:$0x3]
      %vm935 = vcmask 1040384
      %v936 = vsel %vm935, %v922, %v933
      %v937 = vadd.f32 %v934, %v936
      %vm938 = vcmask 517120
      %939 = vst.msk [vmem:[%s231] sm:$0x3] %vm938, %v937
      %s940 = smul.u32 2, %s21
      %p941 = scmp.lt.s32.totalorder %s20, 1
      %s942 = scalar_select %p941, %s20, 1
      %p943 = scmp.lt.s32.totalorder %s940, 1
      %s944 = scalar_select %p943, %s940, 1
      %s945 = smul.addr %s942, 2
      %s946 = sadd.s32 %s944, %s945
      %s947 = smul.addr %s946, 4
      %s948 = scalar_lea.vmem %s3, %s947
      %p949 = scmp.lt.s32.totalorder %s20, 1
      %s950 = scalar_select %p949, %s20, 1
      %s951 = smul.addr %s950, 2
      %s952 = scalar_lea.vmem %s4, %s951
      // Predicated region
      $region37: #{_lambda_.7} parent=31 // pred_check
        %p953 = pneg %p116
      $region38: #{_lambda_.7} parent=31 // pred_check_branch
        %955 = sbr.rel (%p953) target = $region40
      $region39: #{_lambda_.7} parent=31 // pred_region
        %s956 = smul.u32 2, %s21
      $region40: #{_lambda_.7} parent=31 // pred_fallthru
        _
      // Predicated region
      $region41: #{_lambda_.7} parent=31 // pred_check
        %p957 = pneg %p142
      $region42: #{_lambda_.7} parent=31 // pred_check_branch
        %959 = sbr.rel (%p957) target = $region44
      $region43: #{_lambda_.7} parent=31 // pred_region
        _
      $region44: #{_lambda_.7} parent=31 // pred_fallthru
        _
    $region32: #{_lambda_.7} parent=5 // pred_fallthru
      _
    %p960 = scmp.le.s32.totalorder 2, %s11
    // Predicated region
    $region45: #{_lambda_.7} parent=5 // pred_check
      %p961 = pneg %p960
    $region46: #{_lambda_.7} parent=5 // pred_check_branch
      %963 = sbr.rel (%p961) target = $region48
    $region47: #{_lambda_.7} parent=5 // pred_region
      %s964 = ssub.s32 %s11, 2
      // Predicated region
      $region49: #{_lambda_.7} parent=47 // pred_check
        %p965 = pneg %p122
      $region50: #{_lambda_.7} parent=47 // pred_check_branch
        %967 = sbr.rel (%p965) target = $region52
      $region51: #{_lambda_.7} parent=47 // pred_region
        %s968 = smul.u32 2, %s23
        %p969 = scmp.lt.s32.totalorder %s22, 1
        %s970 = scalar_select %p969, %s22, 1
        %p971 = scmp.lt.s32.totalorder %s968, 1
        %s972 = scalar_select %p971, %s968, 1
        %s973 = smul.addr %s970, 2
        %s974 = sadd.s32 %s972, %s973
        %s975 = smul.addr %s974, 4
        %s976 = scalar_lea.vmem %s3, %s975
      $region52: #{_lambda_.7} parent=47 // pred_fallthru
        _
      // Predicated region
      $region53: #{_lambda_.7} parent=47 // pred_check
        %p977 = pneg %p148
      $region54: #{_lambda_.7} parent=47 // pred_check_branch
        %979 = sbr.rel (%p977) target = $region56
      $region55: #{_lambda_.7} parent=47 // pred_region
        %p980 = scmp.lt.s32.totalorder %s22, 1
        %s981 = scalar_select %p980, %s22, 1
        %s982 = smul.addr %s981, 2
        %s983 = scalar_lea.vmem %s4, %s982
      $region56: #{_lambda_.7} parent=47 // pred_fallthru
        _
    $region48: #{_lambda_.7} parent=5 // pred_fallthru
      _
  $region6: #{_lambda_.7} parent=0 // loop_footer
    %s15 = sadd.s32 1, %s11
  $region7: #{_lambda_.7} parent=0 // loop_footer_branch
    %10 = sbr.rel target = $region3
  $region8: #{_lambda_.7} parent=0 // loop_exit
    _

// kernel: _lambda_.8
$region0: #{_lambda_.8}
  #allocation0 [shape = 'u32[]', space=smem, size = 0x4, offset = 0x4, fixed_abs, tag = 'smem constant byte address 0x4 - core index']
  #allocation1 [shape = 'u32[144,128]{1,0:T(1,128)}', space=vmem, size = 0x12000, scoped, tag = 'internal scratch']
  %s0 = inlined_call_operand.vmem [shape: bf16[2,6,6,64], index: 0, kind: input, shape index: {}]
  %s1 = inlined_call_operand.vmem [shape: bf16[16,64,128], index: 1, kind: input, shape index: {}]
  %s2 = inlined_call_operand.vmem [shape: f32[1,128], index: 2, kind: input, shape index: {}]
  %s3 = inlined_call_operand.vmem [shape: bf16[2,9,128], index: 3, kind: output, shape index: {0}]
  %s4 = inlined_call_operand.vmem [shape: f32[2,2,128], index: 4, kind: output, shape index: {1}]
  %5 = xla_tuple %s3, %s4
  %s6 = sld [smem:[#allocation0]]
  $region57: #{_lambda_.8} parent=0
    _
  %s8 = ssub.s32 1, %s6
  %s9 = scalar_select 0, %s8, %s6
  loop: start=0, step=1, limit=4
  $region2: #{_lambda_.8} parent=0 // loop_pre_header
    _
  $region3: #{_lambda_.8} parent=0 // loop_header
    %s11 = sphi 0, %s15
    %p12 = scmp.ge.s32.totalorder %s11, 4
    %s18 = sphi 0, %s30
    %s19 = sphi 0, %s26
    %s20 = sphi 0, %s18
    %s21 = sphi 0, %s19
    %s22 = sphi 0, %s20
    %s23 = sphi 0, %s21
    %s33 = sphi 0, %s35
    %s36 = sphi 0, %s33
    %s37 = sphi 0, %s36
    %s53 = sphi 0, %s37
    %s57 = sphi 0, %s57
    %s59 = sphi 0, %s57
    %s60 = sphi 0, %s59
    %s74 = sphi 0, %s60
    %s78 = sphi 0, %s78
    %s80 = sphi 0, %s78
    %s81 = sphi 0, %s80
    %s95 = sphi 0, %s81
    %s103 = sphi 0, %s105
    %s106 = sphi 0, %s103
    %s107 = sphi 0, %s106
    %s123 = sphi 0, %s107
    %s129 = sphi 0, %s131
    %s132 = sphi 0, %s129
    %s133 = sphi 0, %s132
    %s149 = sphi 0, %s133
  $region4: #{_lambda_.8} parent=0 // loop_header_branch
    %14 = sbr.rel (%p12) target = $region8
  $region5: #{_lambda_.8} parent=0 // loop_body
    %s16 = ssub.s32 %s11, 1
    %s17 = ssub.s32 %s11, 2
    %s24 = sadd.s32 1, %s19
    %p25 = scmp.ge.s32.totalorder %s24, 1
    %s26 = scalar_select %p25, 0, %s24
    %s27 = sadd.s32 1, %s18
    %s28 = scalar_select %p25, %s27, %s18
    %p29 = scmp.ge.s32.totalorder %s28, 2
    %s30 = scalar_select %p29, 0, %s28
    %s31 = ssub.s32 %s18, %s30
    %p32 = scmp.eq.s32.totalorder %s31, 0
    %s34 = sadd.s32 %s33, 1
    %s35 = scalar_select %p32, %s33, %s34
    %p38 = pneg %p32
    %p39 = scmp.eq.s32.totalorder %s11, 1
    %p40 = por %p38, %p39
    %p41 = scmp.ne.s32.totalorder %s33, %s36
    %p42 = scmp.eq.s32.totalorder %s11, 0
    %p43 = por %p41, %p42
    %p44 = scmp.ne.s32.totalorder %s33, %s36
    %p45 = scmp.eq.s32.totalorder %s16, 1
    %p46 = por %p44, %p45
    %p47 = scmp.ne.s32.totalorder %s36, %s37
    %p48 = scmp.eq.s32.totalorder %s16, 0
    %p49 = por %p47, %p48
    %p50 = scmp.ne.s32.totalorder %s36, %s37
    %p51 = scmp.eq.s32.totalorder %s17, 1
    %p52 = por %p50, %p51
    %p54 = scmp.ne.s32.totalorder %s37, %s53
    %p55 = scmp.eq.s32.totalorder %s17, 0
    %p56 = por %p54, %p55
    %s58 = sadd.s32 %s57, 1
    %p61 = scmp.eq.s32.totalorder %s11, 1
    %p62 = scmp.ne.s32.totalorder %s57, %s59
    %p63 = scmp.eq.s32.totalorder %s11, 0
    %p64 = por %p62, %p63
    %p65 = scmp.ne.s32.totalorder %s57, %s59
    %p66 = scmp.eq.s32.totalorder %s16, 1
    %p67 = por %p65, %p66
    %p68 = scmp.ne.s32.totalorder %s59, %s60
    %p69 = scmp.eq.s32.totalorder %s16, 0
    %p70 = por %p68, %p69
    %p71 = scmp.ne.s32.totalorder %s59, %s60
    %p72 = scmp.eq.s32.totalorder %s17, 1
    %p73 = por %p71, %p72
    %p75 = scmp.ne.s32.totalorder %s60, %s74
    %p76 = scmp.eq.s32.totalorder %s17, 0
    %p77 = por %p75, %p76
    %s79 = sadd.s32 %s78, 1
    %p82 = scmp.eq.s32.totalorder %s11, 1
    %p83 = scmp.ne.s32.totalorder %s78, %s80
    %p84 = scmp.eq.s32.totalorder %s11, 0
    %p85 = por %p83, %p84
    %p86 = scmp.ne.s32.totalorder %s78, %s80
    %p87 = scmp.eq.s32.totalorder %s16, 1
    %p88 = por %p86, %p87
    %p89 = scmp.ne.s32.totalorder %s80, %s81
    %p90 = scmp.eq.s32.totalorder %s16, 0
    %p91 = por %p89, %p90
    %p92 = scmp.ne.s32.totalorder %s80, %s81
    %p93 = scmp.eq.s32.totalorder %s17, 1
    %p94 = por %p92, %p93
    %p96 = scmp.ne.s32.totalorder %s81, %s95
    %p97 = scmp.eq.s32.totalorder %s17, 0
    %p98 = por %p96, %p97
    %s99 = ssub.s32 %s18, %s30
    %s100 = ssub.s32 %s19, %s26
    %s101 = sor.u32 %s99, %s100
    %p102 = scmp.eq.s32.totalorder %s101, 0
    %s104 = sadd.s32 %s103, 1
    %s105 = scalar_select %p102, %s103, %s104
    %p108 = pneg %p102
    %p109 = scmp.eq.s32.totalorder %s11, 1
    %p110 = por %p108, %p109
    %p111 = scmp.ne.s32.totalorder %s103, %s106
    %p112 = scmp.eq.s32.totalorder %s11, 0
    %p113 = por %p111, %p112
    %p114 = scmp.ne.s32.totalorder %s103, %s106
    %p115 = scmp.eq.s32.totalorder %s16, 1
    %p116 = por %p114, %p115
    %p117 = scmp.ne.s32.totalorder %s106, %s107
    %p118 = scmp.eq.s32.totalorder %s16, 0
    %p119 = por %p117, %p118
    %p120 = scmp.ne.s32.totalorder %s106, %s107
    %p121 = scmp.eq.s32.totalorder %s17, 1
    %p122 = por %p120, %p121
    %p124 = scmp.ne.s32.totalorder %s107, %s123
    %p125 = scmp.eq.s32.totalorder %s17, 0
    %p126 = por %p124, %p125
    %s127 = ssub.s32 %s18, %s30
    %p128 = scmp.eq.s32.totalorder %s127, 0
    %s130 = sadd.s32 %s129, 1
    %s131 = scalar_select %p128, %s129, %s130
    %p134 = pneg %p128
    %p135 = scmp.eq.s32.totalorder %s11, 1
    %p136 = por %p134, %p135
    %p137 = scmp.ne.s32.totalorder %s129, %s132
    %p138 = scmp.eq.s32.totalorder %s11, 0
    %p139 = por %p137, %p138
    %p140 = scmp.ne.s32.totalorder %s129, %s132
    %p141 = scmp.eq.s32.totalorder %s16, 1
    %p142 = por %p140, %p141
    %p143 = scmp.ne.s32.totalorder %s132, %s133
    %p144 = scmp.eq.s32.totalorder %s16, 0
    %p145 = por %p143, %p144
    %p146 = scmp.ne.s32.totalorder %s132, %s133
    %p147 = scmp.eq.s32.totalorder %s17, 1
    %p148 = por %p146, %p147
    %p150 = scmp.ne.s32.totalorder %s133, %s149
    %p151 = scmp.eq.s32.totalorder %s17, 0
    %p152 = por %p150, %p151
    %p153 = scmp.le.s32.totalorder 1, %s11
    %p154 = scmp.lt.s32.totalorder %s11, 3
    %p155 = pnand %p153, %p154
    %p156 = pneg %p155
    // Predicated region
    $region9: #{_lambda_.8} parent=5 // pred_check
      _
    $region10: #{_lambda_.8} parent=5 // pred_check_branch
      %158 = sbr.rel (%p155) target = $region12
    $region11: #{_lambda_.8} parent=5 // pred_region
      %s159 = ssub.s32 %s11, 1
      // Predicated region
      $region13: #{_lambda_.8} parent=11 // pred_check
        %p160 = pneg %p70
      $region14: #{_lambda_.8} parent=11 // pred_check_branch
        %162 = sbr.rel (%p160) target = $region16
      $region15: #{_lambda_.8} parent=11 // pred_region
        _
      $region16: #{_lambda_.8} parent=11 // pred_fallthru
        _
      // Predicated region
      $region17: #{_lambda_.8} parent=11 // pred_check
        %p163 = pneg %p91
      $region18: #{_lambda_.8} parent=11 // pred_check_branch
        %165 = sbr.rel (%p163) target = $region20
      $region19: #{_lambda_.8} parent=11 // pred_region
        _
      $region20: #{_lambda_.8} parent=11 // pred_fallthru
        _
    $region12: #{_lambda_.8} parent=5 // pred_fallthru
      _
    %p166 = scmp.lt.s32.totalorder %s11, 2
    // Predicated region
    $region21: #{_lambda_.8} parent=5 // pred_check
      %p167 = pneg %p166
    $region22: #{_lambda_.8} parent=5 // pred_check_branch
      %169 = sbr.rel (%p167) target = $region24
    $region23: #{_lambda_.8} parent=5 // pred_region
      // Predicated region
      $region25: #{_lambda_.8} parent=23 // pred_check
        %p170 = pneg %p43
      $region26: #{_lambda_.8} parent=23 // pred_check_branch
        %172 = sbr.rel (%p170) target = $region28
      $region27: #{_lambda_.8} parent=23 // pred_region
        %p173 = scmp.lt.s32.totalorder %s18, 1
        %s174 = scalar_select %p173, %s18, 1
        %s175 = smul.addr %s174, 6
        %s176 = smul.addr %s175, 4
        %s177 = scalar_lea.vmem %s0, %s176
      $region28: #{_lambda_.8} parent=23 // pred_fallthru
        _
    $region24: #{_lambda_.8} parent=5 // pred_fallthru
      _
    %p178 = scmp.le.s32.totalorder 1, %s11
    %p179 = scmp.lt.s32.totalorder %s11, 3
    %p180 = pnand %p178, %p179
    %p181 = pneg %p180
    // Predicated region
    $region29: #{_lambda_.8} parent=5 // pred_check
      _
    $region30: #{_lambda_.8} parent=5 // pred_check_branch
      %183 = sbr.rel (%p180) target = $region32
    $region31: #{_lambda_.8} parent=5 // pred_region
      %s184 = ssub.s32 %s11, 1
      %p185 = scmp.lt.s32.totalorder %s20, 1
      %s186 = scalar_select %p185, %s20, 1
      %s187 = smul.addr %s186, 6
      %s188 = smul.addr %s187, 4
      %s189 = scalar_lea.vmem %s0, %s188
      %p190 = pneg %p49
      %p191 = pneg %p46
      %p192 = pneg %p70
      %p193 = pneg %p67
      %p194 = pneg %p91
      %p195 = pneg %p88
      %p196 = pneg %p119
      %p197 = pneg %p116
      %s198 = smul.u32 2, %s21
      %p199 = scmp.lt.s32.totalorder %s20, 1
      %s200 = scalar_select %p199, %s20, 1
      %p201 = scmp.lt.s32.totalorder %s198, 1
      %s202 = scalar_select %p201, %s198, 1
      %s203 = smul.addr %s200, 2
      %s204 = sadd.s32 %s202, %s203
      %s205 = smul.addr %s204, 4
      %s206 = scalar_lea.vmem %s3, %s205
      %p207 = pneg %p145
      %p208 = pneg %p142
      %p209 = scmp.lt.s32.totalorder %s20, 1
      %s210 = scalar_select %p209, %s20, 1
      %s211 = smul.addr %s210, 2
      %s212 = scalar_lea.vmem %s4, %s211
      %p213 = scmp.lt.s32.totalorder %s20, 1
      %s214 = scalar_select %p213, %s20, 1
      %s215 = smul.addr %s214, 6
      %s216 = smul.addr %s215, 4
      %s217 = scalar_lea.vmem %s0, %s216
      %s218 = smul.u32 2, %s21
      %p219 = scmp.lt.s32.totalorder %s20, 1
      %s220 = scalar_select %p219, %s20, 1
      %p221 = scmp.lt.s32.totalorder %s218, 1
      %s222 = scalar_select %p221, %s218, 1
      %s223 = smul.addr %s220, 2
      %s224 = sadd.s32 %s222, %s223
      %s225 = smul.addr %s224, 4
      %s226 = scalar_lea.vmem %s3, %s225
      %s227 = smul.u32 2, %s21
      %p228 = scmp.lt.s32.totalorder %s20, 1
      %s229 = scalar_select %p228, %s20, 1
      %s230 = smul.addr %s229, 2
      %s231 = scalar_lea.vmem %s4, %s230
      %s233 = smul.u32 %s21, 3
      %s234 = smul.addr %s233, 4
      %s235 = scalar_lea.vmem %s217, %s234
      %v236 = vld [vmem:[%s235] sm:$0x7]
      %v237 = vld [vmem:[%s235 + $0x4] sm:$0x7]
      %v238 = vld [vmem:[%s235 + $0x8] sm:$0x7]
      %v239 = vld [vmem:[%s235 + $0xc] sm:$0x7]
      %v240 = vld [vmem:[%s235 + $0x10] sm:$0x7]
      %v241 = vld [vmem:[%s235 + $0x14] sm:$0x7]
      %v242 = vunpack.c.l.bf16 %v236
      %v243 = vunpack.c.l.bf16 %v237
      %v244 = vunpack.c.l.bf16 %v238
      %v245 = vunpack.c.l.bf16 %v239
      %v246 = vunpack.c.l.bf16 %v240
      %v247 = vunpack.c.l.bf16 %v241
      %vm248 = vcmp.ge.f32.partialorder %v242, 0.0
      %vm249 = vcmp.ge.f32.partialorder %v243, 0.0
      %vm250 = vcmp.ge.f32.partialorder %v244, 0.0
      %vm251 = vcmp.ge.f32.partialorder %v245, 0.0
      %vm252 = vcmp.ge.f32.partialorder %v246, 0.0
      %vm253 = vcmp.ge.f32.partialorder %v247, 0.0
      %v254 = vmul.f32 %v242, 0.2
      %v255 = vmul.f32 %v243, 0.2
      %v256 = vmul.f32 %v244, 0.2
      %v257 = vmul.f32 %v245, 0.2
      %v258 = vmul.f32 %v246, 0.2
      %v259 = vmul.f32 %v247, 0.2
      %v260 = vsel %vm248, %v242, %v254
      %v261 = vsel %vm249, %v243, %v255
      %v262 = vsel %vm250, %v244, %v256
      %v263 = vsel %vm251, %v245, %v257
      %v264 = vsel %vm252, %v246, %v258
      %v265 = vsel %vm253, %v247, %v259
      %v266 = vpack.c.bf16 %v260, %v260
      %v267 = vpack.c.bf16 %v261, %v261
      %v268 = vpack.c.bf16 %v262, %v262
      %v269 = vpack.c.bf16 %v263, %v263
      %v270 = vpack.c.bf16 %v264, %v264
      %v271 = vpack.c.bf16 %v265, %v265
      %v276 = vunpack.c.l.s4 1966171168
      %v277 = vunpack.c.0.s8 %v276
      %v278 = vlaneseq
      %v279 = vshrl.u32 %v278, 7
      %v280 = vsub.s32 %v277, %v279
      %v281 = vrot.slane %v266, %v280
      %v282 = vcombine.high %v281, %v281
      %v284 = vunpack.c.l.s4 1966171168
      %v285 = vunpack.c.0.s8 %v284
      %v286 = vlaneseq
      %v287 = vshrl.u32 %v286, 7
      %v288 = vsub.s32 %v285, %v287
      %v289 = vrot.slane %v281, %v288
      %v291 = vunpack.c.l.s4 1966171168
      %v292 = vunpack.c.0.s8 %v291
      %v293 = vlaneseq
      %v294 = vshrl.u32 %v293, 7
      %v295 = vsub.s32 %v292, %v294
      %v296 = vrot.slane %v282, %v295
      %v298 = vunpack.c.l.s4 1966171168
      %v299 = vunpack.c.0.s8 %v298
      %v300 = vlaneseq
      %v301 = vshrl.u32 %v300, 7
      %v302 = vsub.s32 %v299, %v301
      %v303 = vrot.slane %v267, %v302
      %v304 = vcombine.high %v303, %v303
      %v306 = vunpack.c.l.s4 1966171168
      %v307 = vunpack.c.0.s8 %v306
      %v308 = vlaneseq
      %v309 = vshrl.u32 %v308, 7
      %v310 = vsub.s32 %v307, %v309
      %v311 = vrot.slane %v303, %v310
      %v313 = vunpack.c.l.s4 1966171168
      %v314 = vunpack.c.0.s8 %v313
      %v315 = vlaneseq
      %v316 = vshrl.u32 %v315, 7
      %v317 = vsub.s32 %v314, %v316
      %v318 = vrot.slane %v304, %v317
      %v320 = vunpack.c.l.s4 1966171168
      %v321 = vunpack.c.0.s8 %v320
      %v322 = vlaneseq
      %v323 = vshrl.u32 %v322, 7
      %v324 = vsub.s32 %v321, %v323
      %v325 = vrot.slane %v268, %v324
      %v326 = vcombine.high %v325, %v325
      %v328 = vunpack.c.l.s4 1966171168
      %v329 = vunpack.c.0.s8 %v328
      %v330 = vlaneseq
      %v331 = vshrl.u32 %v330, 7
      %v332 = vsub.s32 %v329, %v331
      %v333 = vrot.slane %v325, %v332
      %v335 = vunpack.c.l.s4 1966171168
      %v336 = vunpack.c.0.s8 %v335
      %v337 = vlaneseq
      %v338 = vshrl.u32 %v337, 7
      %v339 = vsub.s32 %v336, %v338
      %v340 = vrot.slane %v326, %v339
      %v341 = vunpack.i.l.s16 %v289
      %v342 = vunpack.i.h.s16 %v289
      %v343 = vunpack.i.l.s16 %v296
      %v344 = vunpack.i.l.s16 %v311
      %v345 = vunpack.i.h.s16 %v311
      %v346 = vunpack.i.l.s16 %v318
      %v347 = vunpack.i.l.s16 %v333
      %v348 = vunpack.i.h.s16 %v333
      %v349 = vunpack.i.l.s16 %v340
      %v350 = vld [vmem:[%s1] sm:$0xf]
      %v351 = vld [vmem:[%s1 + $0x4] sm:$0xf]
      %v352 = vld [vmem:[%s1 + $0x8] sm:$0xf]
      %v353 = vld [vmem:[%s1 + $0xc] sm:$0xf]
      %v354 = vld [vmem:[%s1 + $0x10] sm:$0xf]
      %v355 = vld [vmem:[%s1 + $0x14] sm:$0xf]
      %v356 = vld [vmem:[%s1 + $0x18] sm:$0xf]
      %v357 = vld [vmem:[%s1 + $0x1c] sm:$0xf]
      %v358 = vunpack.i.h.s16 %v296
      %v359 = vunpack.i.h.s16 %v318
      %v360 = vunpack.i.h.s16 %v340
      %s361 = scalar_lea.vmem %s1, 32
      %v362 = vld [vmem:[%s361] sm:$0xf]
      %v363 = vld [vmem:[%s361 + $0x4] sm:$0xf]
      %v364 = vld [vmem:[%s361 + $0x8] sm:$0xf]
      %v365 = vld [vmem:[%s361 + $0xc] sm:$0xf]
      %v366 = vld [vmem:[%s361 + $0x10] sm:$0xf]
      %v367 = vld [vmem:[%s361 + $0x14] sm:$0xf]
      %v368 = vld [vmem:[%s361 + $0x18] sm:$0xf]
      %v369 = vld [vmem:[%s361 + $0x1c] sm:$0xf]
      %v370 = vpack.i.b16 %v343, %v342
      %v371 = vpack.i.b16 %v345, %v358
      %v372 = vpack.i.b16 %v359, %v346
      %v373 = vpack.i.b16 %v349, %v348
      %v375 = vcombine.low %v370, %v371
      %v376 = vcombine.low %v372, %v373
      %v378 = vunpack.c.l.s4 1966171168
      %v379 = vunpack.c.0.s8 %v378
      %v380 = vlaneseq
      %v381 = vshrl.u32 %v380, 7
      %v382 = vsub.s32 %v379, %v381
      %v383 = vrot.slane %v375, %v382
      %v385 = vunpack.c.l.s4 1966171168
      %v386 = vunpack.c.0.s8 %v385
      %v387 = vlaneseq
      %v388 = vshrl.u32 %v387, 7
      %v389 = vsub.s32 %v386, %v388
      %v390 = vrot.slane %v376, %v389
      %v392 = vunpack.c.l.s4 1966171168
      %v393 = vunpack.c.0.s8 %v392
      %v394 = vlaneseq
      %v395 = vshrl.u32 %v394, 7
      %v396 = vsub.s32 %v393, %v395
      %v397 = vrot.slane %v360, %v396
      %v398 = vcombine.low %v383, %v390
      %v400 = vunpack.c.l.s4 1966171168
      %v401 = vunpack.c.0.s8 %v400
      %v402 = vlaneseq
      %v403 = vshrl.u32 %v402, 7
      %v404 = vsub.s32 %v401, %v403
      %v405 = vrot.slane %v398, %v404
      %v407 = vunpack.c.l.s4 1966171168
      %v408 = vunpack.c.0.s8 %v407
      %v409 = vlaneseq
      %v410 = vshrl.u32 %v409, 7
      %v411 = vsub.s32 %v408, %v410
      %v412 = vrot.slane %v397, %v411
      %v413 = vcombine.low %v405, %v412
      %v422 = vunpack.c.l.b16 %v362
      %v423 = vunpack.c.l.b16 %v363
      %v424 = vunpack.c.l.b16 %v364
      %v425 = vunpack.c.l.b16 %v365
      %v426 = vunpack.c.l.b16 %v366
      %v427 = vunpack.c.l.b16 %v367
      %v428 = vunpack.c.l.b16 %v368
      %v429 = vunpack.c.l.b16 %v369
      %v430 = vpack.c.b16 %v423, %v422
      %v431 = vpack.c.b16 %v425, %v424
      %v432 = vpack.c.b16 %v427, %v426
      %v433 = vpack.c.b16 %v429, %v428
      %vm438 = vcmask 523264
      %v440 = vsel %vm438, %v413, 0
      %442 = vmatprep.subr.bf16.mxu0 0
      %443 = vmatpush1.bf16.msra.mxu0 0
      %444 = vmatprep.subr.bf16.mxu0 0
      %445 = vmatpush1.bf16.msra.mxu0 0
      %446 = vmatprep.subr.bf16.mxu0 0
      %447 = vmatpush1.bf16.msra.mxu0 0
      %448 = vmatprep.subr.bf16.mxu0 0
      %449 = vmatpush1.bf16.msra.mxu0 0
      %450 = vmatprep.subr.bf16.mxu0 0
      %451 = vmatpush1.bf16.msra.mxu0 %v433
      %452 = vmatprep.subr.bf16.mxu0 0
      %453 = vmatpush1.bf16.msra.mxu0 %v432
      %454 = vmatprep.subr.bf16.mxu0 0
      %455 = vmatpush1.bf16.msra.mxu0 %v431
      %456 = vmatprep.subr.bf16.mxu0 0
      %457 = vmatpush1.bf16.msra.mxu0 %v430
      %458 = vmatprep.subr.bf16.mxu0 0
      %459 = vmatpush2.bf16.msra.mxu0 0
      %460 = vmatprep.subr.bf16.mxu0 0
      %461 = vmatpush2.bf16.msra.mxu0 0
      %462 = vmatprep.subr.bf16.mxu0 0
      %463 = vmatpush2.bf16.msra.mxu0 0
      %464 = vmatprep.subr.bf16.mxu0 0
      %465 = vmatpush2.bf16.msra.mxu0 0
      %466 = vmatprep.subr.bf16.mxu0 0
      %467 = vmatpush2.bf16.msra.mxu0 0
      %468 = vmatprep.subr.bf16.mxu0 0
      %469 = vmatpush2.bf16.msra.mxu0 0
      %470 = vmatprep.subr.bf16.mxu0 0
      %471 = vmatpush2.bf16.msra.mxu0 0
      %472 = vmatprep.subr.bf16.mxu0 0
      %473 = vmatpush2.bf16.msra.mxu0 0
      %474 = vmatprep.mubr.bf16.mxu0 0
      %475 = vmatmul.mubr.bf16.gmra.mxu0 %v440
      %v476 = vpop.f32.mrf.mxu0
      %v477 = vadd.f32 0.0, %v476
      %v478 = vpop.f32.mrf.mxu0
      %v479 = vpop.f32.mrf.mxu0
      %v480 = vadd.f32 0.0, %v479
      %v481 = vpop.f32.mrf.mxu0
      %482 = vdwg.mxu0
      %v483 = vpack.i.b16 %v342, %v341
      %v484 = vpack.i.b16 %v344, %v343
      %v485 = vpack.i.b16 %v346, %v345
      %v486 = vpack.i.b16 %v348, %v347
      %v488 = vcombine.low %v483, %v484
      %v489 = vcombine.low %v485, %v486
      %v491 = vunpack.c.l.s4 1966171168
      %v492 = vunpack.c.0.s8 %v491
      %v493 = vlaneseq
      %v494 = vshrl.u32 %v493, 7
      %v495 = vsub.s32 %v492, %v494
      %v496 = vrot.slane %v488, %v495
      %v498 = vunpack.c.l.s4 1966171168
      %v499 = vunpack.c.0.s8 %v498
      %v500 = vlaneseq
      %v501 = vshrl.u32 %v500, 7
      %v502 = vsub.s32 %v499, %v501
      %v503 = vrot.slane %v489, %v502
      %v505 = vunpack.c.l.s4 1966171168
      %v506 = vunpack.c.0.s8 %v505
      %v507 = vlaneseq
      %v508 = vshrl.u32 %v507, 7
      %v509 = vsub.s32 %v506, %v508
      %v510 = vrot.slane %v349, %v509
      %v511 = vcombine.low %v496, %v503
      %v513 = vunpack.c.l.s4 1966171168
      %v514 = vunpack.c.0.s8 %v513
      %v515 = vlaneseq
      %v516 = vshrl.u32 %v515, 7
      %v517 = vsub.s32 %v514, %v516
      %v518 = vrot.slane %v511, %v517
      %v520 = vunpack.c.l.s4 1966171168
      %v521 = vunpack.c.0.s8 %v520
      %v522 = vlaneseq
      %v523 = vshrl.u32 %v522, 7
      %v524 = vsub.s32 %v521, %v523
      %v525 = vrot.slane %v510, %v524
      %v526 = vcombine.low %v518, %v525
      %v535 = vunpack.c.l.b16 %v350
      %v536 = vunpack.c.l.b16 %v351
      %v537 = vunpack.c.l.b16 %v352
      %v538 = vunpack.c.l.b16 %v353
      %v539 = vunpack.c.l.b16 %v354
      %v540 = vunpack.c.l.b16 %v355
      %v541 = vunpack.c.l.b16 %v356
      %v542 = vunpack.c.l.b16 %v357
      %v543 = vpack.c.b16 %v536, %v535
      %v544 = vpack.c.b16 %v538, %v537
      %v545 = vpack.c.b16 %v540, %v539
      %v546 = vpack.c.b16 %v542, %v541
      %v552 = vsel %vm438, %v526, 0
      %554 = vmatprep.subr.bf16.mxu0 0
      %555 = vmatpush1.bf16.msra.mxu0 0
      %556 = vmatprep.subr.bf16.mxu0 0
      %557 = vmatpush1.bf16.msra.mxu0 0
      %558 = vmatprep.subr.bf16.mxu0 0
      %559 = vmatpush1.bf16.msra.mxu0 0
      %560 = vmatprep.subr.bf16.mxu0 0
      %561 = vmatpush1.bf16.msra.mxu0 0
      %562 = vmatprep.subr.bf16.mxu0 0
      %563 = vmatpush1.bf16.msra.mxu0 %v546
      %564 = vmatprep.subr.bf16.mxu0 0
      %565 = vmatpush1.bf16.msra.mxu0 %v545
      %566 = vmatprep.subr.bf16.mxu0 0
      %567 = vmatpush1.bf16.msra.mxu0 %v544
      %568 = vmatprep.subr.bf16.mxu0 0
      %569 = vmatpush1.bf16.msra.mxu0 %v543
      %570 = vmatprep.subr.bf16.mxu0 0
      %571 = vmatpush2.bf16.msra.mxu0 0
      %572 = vmatprep.subr.bf16.mxu0 0
      %573 = vmatpush2.bf16.msra.mxu0 0
      %574 = vmatprep.subr.bf16.mxu0 0
      %575 = vmatpush2.bf16.msra.mxu0 0
      %576 = vmatprep.subr.bf16.mxu0 0
      %577 = vmatpush2.bf16.msra.mxu0 0
      %578 = vmatprep.subr.bf16.mxu0 0
      %579 = vmatpush2.bf16.msra.mxu0 0
      %580 = vmatprep.subr.bf16.mxu0 0
      %581 = vmatpush2.bf16.msra.mxu0 0
      %582 = vmatprep.subr.bf16.mxu0 0
      %583 = vmatpush2.bf16.msra.mxu0 0
      %584 = vmatprep.subr.bf16.mxu0 0
      %585 = vmatpush2.bf16.msra.mxu0 0
      %586 = vmatprep.mubr.bf16.mxu0 0
      %587 = vmatmul.mubr.bf16.gmra.mxu0 %v552
      %v588 = vpop.f32.mrf.mxu0
      %v589 = vadd.f32 %v477, %v588
      %v590 = vpop.f32.mrf.mxu0
      %v591 = vpop.f32.mrf.mxu0
      %v592 = vadd.f32 %v480, %v591
      %v593 = vpop.f32.mrf.mxu0
      %594 = vdwg.mxu0
      %v595 = vcombine.high %v289, %v289
      %v596 = vcombine.high %v311, %v311
      %v597 = vcombine.high %v333, %v333
      %v598 = vunpack.i.l.s16 %v595
      %v599 = vunpack.i.l.s16 %v596
      %v600 = vunpack.i.l.s16 %v597
      %s601 = scalar_lea.vmem %s1, 64
      %v602 = vld [vmem:[%s601] sm:$0xf]
      %v603 = vld [vmem:[%s601 + $0x4] sm:$0xf]
      %v604 = vld [vmem:[%s601 + $0x8] sm:$0xf]
      %v605 = vld [vmem:[%s601 + $0xc] sm:$0xf]
      %v606 = vld [vmem:[%s601 + $0x10] sm:$0xf]
      %v607 = vld [vmem:[%s601 + $0x14] sm:$0xf]
      %v608 = vld [vmem:[%s601 + $0x18] sm:$0xf]
      %v609 = vld [vmem:[%s601 + $0x1c] sm:$0xf]
      %v610 = vpack.i.b16 %v358, %v343
      %v611 = vpack.i.b16 %v346, %v598
      %v612 = vpack.i.b16 %v599, %v359
      %v613 = vpack.i.b16 %v360, %v349
      %v615 = vcombine.low %v610, %v611
      %v616 = vcombine.low %v612, %v613
      %v618 = vunpack.c.l.s4 1966171168
      %v619 = vunpack.c.0.s8 %v618
      %v620 = vlaneseq
      %v621 = vshrl.u32 %v620, 7
      %v622 = vsub.s32 %v619, %v621
      %v623 = vrot.slane %v615, %v622
      %v625 = vunpack.c.l.s4 1966171168
      %v626 = vunpack.c.0.s8 %v625
      %v627 = vlaneseq
      %v628 = vshrl.u32 %v627, 7
      %v629 = vsub.s32 %v626, %v628
      %v630 = vrot.slane %v616, %v629
      %v632 = vunpack.c.l.s4 1966171168
      %v633 = vunpack.c.0.s8 %v632
      %v634 = vlaneseq
      %v635 = vshrl.u32 %v634, 7
      %v636 = vsub.s32 %v633, %v635
      %v637 = vrot.slane %v600, %v636
      %v638 = vcombine.low %v623, %v630
      %v640 = vunpack.c.l.s4 1966171168
      %v641 = vunpack.c.0.s8 %v640
      %v642 = vlaneseq
      %v643 = vshrl.u32 %v642, 7
      %v644 = vsub.s32 %v641, %v643
      %v645 = vrot.slane %v638, %v644
      %v647 = vunpack.c.l.s4 1966171168
      %v648 = vunpack.c.0.s8 %v647
      %v649 = vlaneseq
      %v650 = vshrl.u32 %v649, 7
      %v651 = vsub.s32 %v648, %v650
      %v652 = vrot.slane %v637, %v651
      %v653 = vcombine.low %v645, %v652
      %v662 = vunpack.c.l.b16 %v602
      %v663 = vunpack.c.l.b16 %v603
      %v664 = vunpack.c.l.b16 %v604
      %v665 = vunpack.c.l.b16 %v605
      %v666 = vunpack.c.l.b16 %v606
      %v667 = vunpack.c.l.b16 %v607
      %v668 = vunpack.c.l.b16 %v608
      %v669 = vunpack.c.l.b16 %v609
      %v670 = vpack.c.b16 %v663, %v662
      %v671 = vpack.c.b16 %v665, %v664
      %v672 = vpack.c.b16 %v667, %v666
      %v673 = vpack.c.b16 %v669, %v668
      %v679 = vsel %vm438, %v653, 0
      %681 = vmatprep.subr.bf16.mxu0 0
      %682 = vmatpush1.bf16.msra.mxu0 0
      %683 = vmatprep.subr.bf16.mxu0 0
      %684 = vmatpush1.bf16.msra.mxu0 0
      %685 = vmatprep.subr.bf16.mxu0 0
      %686 = vmatpush1.bf16.msra.mxu0 0
      %687 = vmatprep.subr.bf16.mxu0 0
      %688 = vmatpush1.bf16.msra.mxu0 0
      %689 = vmatprep.subr.bf16.mxu0 0
      %690 = vmatpush1.bf16.msra.mxu0 %v673
      %691 = vmatprep.subr.bf16.mxu0 0
      %692 = vmatpush1.bf16.msra.mxu0 %v672
      %693 = vmatprep.subr.bf16.mxu0 0
      %694 = vmatpush1.bf16.msra.mxu0 %v671
      %695 = vmatprep.subr.bf16.mxu0 0
      %696 = vmatpush1.bf16.msra.mxu0 %v670
      %697 = vmatprep.subr.bf16.mxu0 0
      %698 = vmatpush2.bf16.msra.mxu0 0
      %699 = vmatprep.subr.bf16.mxu0 0
      %700 = vmatpush2.bf16.msra.mxu0 0
      %701 = vmatprep.subr.bf16.mxu0 0
      %702 = vmatpush2.bf16.msra.mxu0 0
      %703 = vmatprep.subr.bf16.mxu0 0
      %704 = vmatpush2.bf16.msra.mxu0 0
      %705 = vmatprep.subr.bf16.mxu0 0
      %706 = vmatpush2.bf16.msra.mxu0 0
      %707 = vmatprep.subr.bf16.mxu0 0
      %708 = vmatpush2.bf16.msra.mxu0 0
      %709 = vmatprep.subr.bf16.mxu0 0
      %710 = vmatpush2.bf16.msra.mxu0 0
      %711 = vmatprep.subr.bf16.mxu0 0
      %712 = vmatpush2.bf16.msra.mxu0 0
      %713 = vmatprep.mubr.bf16.mxu0 0
      %714 = vmatmul.mubr.bf16.gmra.mxu0 %v679
      %v715 = vpop.f32.mrf.mxu0
      %v716 = vadd.f32 0.0, %v715
      %v717 = vpop.f32.mrf.mxu0
      %v718 = vpop.f32.mrf.mxu0
      %v719 = vadd.f32 0.0, %v718
      %v720 = vpop.f32.mrf.mxu0
      %721 = vdwg.mxu0
      %v722 = vadd.f32 %v589, %v716
      %v723 = vadd.f32 %v592, %v719
      %v724 = vunpack.i.h.s16 %v595
      %v725 = vunpack.i.h.s16 %v596
      %v726 = vunpack.i.h.s16 %v597
      %s727 = scalar_lea.vmem %s1, 96
      %v728 = vld [vmem:[%s727] sm:$0xf]
      %v729 = vld [vmem:[%s727 + $0x4] sm:$0xf]
      %v730 = vld [vmem:[%s727 + $0x8] sm:$0xf]
      %v731 = vld [vmem:[%s727 + $0xc] sm:$0xf]
      %v732 = vld [vmem:[%s727 + $0x10] sm:$0xf]
      %v733 = vld [vmem:[%s727 + $0x14] sm:$0xf]
      %v734 = vld [vmem:[%s727 + $0x18] sm:$0xf]
      %v735 = vld [vmem:[%s727 + $0x1c] sm:$0xf]
      %v736 = vpack.i.b16 %v598, %v358
      %v737 = vpack.i.b16 %v359, %v724
      %v738 = vpack.i.b16 %v725, %v599
      %v739 = vpack.i.b16 %v600, %v360
      %v741 = vcombine.low %v736, %v737
      %v742 = vcombine.low %v738, %v739
      %v744 = vunpack.c.l.s4 1966171168
      %v745 = vunpack.c.0.s8 %v744
      %v746 = vlaneseq
      %v747 = vshrl.u32 %v746, 7
      %v748 = vsub.s32 %v745, %v747
      %v749 = vrot.slane %v741, %v748
      %v751 = vunpack.c.l.s4 1966171168
      %v752 = vunpack.c.0.s8 %v751
      %v753 = vlaneseq
      %v754 = vshrl.u32 %v753, 7
      %v755 = vsub.s32 %v752, %v754
      %v756 = vrot.slane %v742, %v755
      %v758 = vunpack.c.l.s4 1966171168
      %v759 = vunpack.c.0.s8 %v758
      %v760 = vlaneseq
      %v761 = vshrl.u32 %v760, 7
      %v762 = vsub.s32 %v759, %v761
      %v763 = vrot.slane %v726, %v762
      %v764 = vcombine.low %v749, %v756
      %v766 = vunpack.c.l.s4 1966171168
      %v767 = vunpack.c.0.s8 %v766
      %v768 = vlaneseq
      %v769 = vshrl.u32 %v768, 7
      %v770 = vsub.s32 %v767, %v769
      %v771 = vrot.slane %v764, %v770
      %v773 = vunpack.c.l.s4 1966171168
      %v774 = vunpack.c.0.s8 %v773
      %v775 = vlaneseq
      %v776 = vshrl.u32 %v775, 7
      %v777 = vsub.s32 %v774, %v776
      %v778 = vrot.slane %v763, %v777
      %v779 = vcombine.low %v771, %v778
      %v788 = vunpack.c.l.b16 %v728
      %v789 = vunpack.c.l.b16 %v729
      %v790 = vunpack.c.l.b16 %v730
      %v791 = vunpack.c.l.b16 %v731
      %v792 = vunpack.c.l.b16 %v732
      %v793 = vunpack.c.l.b16 %v733
      %v794 = vunpack.c.l.b16 %v734
      %v795 = vunpack.c.l.b16 %v735
      %v796 = vpack.c.b16 %v789, %v788
      %v797 = vpack.c.b16 %v791, %v790
      %v798 = vpack.c.b16 %v793, %v792
      %v799 = vpack.c.b16 %v795, %v794
      %v805 = vsel %vm438, %v779, 0
      %807 = vmatprep.subr.bf16.mxu0 0
      %808 = vmatpush1.bf16.msra.mxu0 0
      %809 = vmatprep.subr.bf16.mxu0 0
      %810 = vmatpush1.bf16.msra.mxu0 0
      %811 = vmatprep.subr.bf16.mxu0 0
      %812 = vmatpush1.bf16.msra.mxu0 0
      %813 = vmatprep.subr.bf16.mxu0 0
      %814 = vmatpush1.bf16.msra.mxu0 0
      %815 = vmatprep.subr.bf16.mxu0 0
      %816 = vmatpush1.bf16.msra.mxu0 %v799
      %817 = vmatprep.subr.bf16.mxu0 0
      %818 = vmatpush1.bf16.msra.mxu0 %v798
      %819 = vmatprep.subr.bf16.mxu0 0
      %820 = vmatpush1.bf16.msra.mxu0 %v797
      %821 = vmatprep.subr.bf16.mxu0 0
      %822 = vmatpush1.bf16.msra.mxu0 %v796
      %823 = vmatprep.subr.bf16.mxu0 0
      %824 = vmatpush2.bf16.msra.mxu0 0
      %825 = vmatprep.subr.bf16.mxu0 0
      %826 = vmatpush2.bf16.msra.mxu0 0
      %827 = vmatprep.subr.bf16.mxu0 0
      %828 = vmatpush2.bf16.msra.mxu0 0
      %829 = vmatprep.subr.bf16.mxu0 0
      %830 = vmatpush2.bf16.msra.mxu0 0
      %831 = vmatprep.subr.bf16.mxu0 0
      %832 = vmatpush2.bf16.msra.mxu0 0
      %833 = vmatprep.subr.bf16.mxu0 0
      %834 = vmatpush2.bf16.msra.mxu0 0
      %835 = vmatprep.subr.bf16.mxu0 0
      %836 = vmatpush2.bf16.msra.mxu0 0
      %837 = vmatprep.subr.bf16.mxu0 0
      %838 = vmatpush2.bf16.msra.mxu0 0
      %839 = vmatprep.mubr.bf16.mxu0 0
      %840 = vmatmul.mubr.bf16.gmra.mxu0 %v805
      %v841 = vpop.f32.mrf.mxu0
      %v842 = vadd.f32 0.0, %v841
      %v843 = vpop.f32.mrf.mxu0
      %v844 = vpop.f32.mrf.mxu0
      %v845 = vadd.f32 0.0, %v844
      %v846 = vpop.f32.mrf.mxu0
      %847 = vdwg.mxu0
      %v848 = vadd.f32 %v722, %v842
      %v849 = vadd.f32 %v723, %v845
      %v852 = vunpack.c.l.s4 1966171168
      %v853 = vunpack.c.0.s8 %v852
      %v854 = vlaneseq
      %v855 = vshrl.u32 %v854, 7
      %v856 = vsub.s32 %v853, %v855
      %v857 = vrot.slane %v269, %v856
      %v858 = vcombine.high %v857, %v857
      %v860 = vunpack.c.l.s4 1966171168
      %v861 = vunpack.c.0.s8 %v860
      %v862 = vlaneseq
      %v863 = vshrl.u32 %v862, 7
      %v864 = vsub.s32 %v861, %v863
      %v865 = vrot.slane %v857, %v864
      %v867 = vunpack.c.l.s4 1966171168
      %v868 = vunpack.c.0.s8 %v867
      %v869 = vlaneseq
      %v870 = vshrl.u32 %v869, 7
      %v871 = vsub.s32 %v868, %v870
      %v872 = vrot.slane %v858, %v871
      %v873 = vunpack.i.l.s16 %v865
      %v874 = vunpack.i.h.s16 %v865
      %v875 = vunpack.i.l.s16 %v872
      %s876 = scalar_lea.vmem %s1, 128
      %v877 = vld [vmem:[%s876] sm:$0xf]
      %v878 = vld [vmem:[%s876 + $0x4] sm:$0xf]
      %v879 = vld [vmem:[%s876 + $0x8] sm:$0xf]
      %v880 = vld [vmem:[%s876 + $0xc] sm:$0xf]
      %v881 = vld [vmem:[%s876 + $0x10] sm:$0xf]
      %v882 = vld [vmem:[%s876 + $0x14] sm:$0xf]
      %v883 = vld [vmem:[%s876 + $0x18] sm:$0xf]
      %v884 = vld [vmem:[%s876 + $0x1c] sm:$0xf]
      %v885 = vpack.i.b16 %v345, %v344
      %v886 = vpack.i.b16 %v347, %v346
      %v887 = vpack.i.b16 %v874, %v873
      %v889 = vcombine.low %v885, %v886
      %v890 = vcombine.low %v373, %v887
      %v892 = vunpack.c.l.s4 1966171168
      %v893 = vunpack.c.0.s8 %v892
      %v894 = vlaneseq
      %v895 = vshrl.u32 %v894, 7
      %v896 = vsub.s32 %v893, %v895
      %v897 = vrot.slane %v889, %v896
      %v899 = vunpack.c.l.s4 1966171168
      %v900 = vunpack.c.0.s8 %v899
      %v901 = vlaneseq
      %v902 = vshrl.u32 %v901, 7
      %v903 = vsub.s32 %v900, %v902
      %v904 = vrot.slane %v890, %v903
      %v906 = vunpack.c.l.s4 1966171168
      %v907 = vunpack.c.0.s8 %v906
      %v908 = vlaneseq
      %v909 = vshrl.u32 %v908, 7
      %v910 = vsub.s32 %v907, %v909
      %v911 = vrot.slane %v875, %v910
      %v912 = vcombine.low %v897, %v904
      %v914 = vunpack.c.l.s4 1966171168
      %v915 = vunpack.c.0.s8 %v914
      %v916 = vlaneseq
      %v917 = vshrl.u32 %v916, 7
      %v918 = vsub.s32 %v915, %v917
      %v919 = vrot.slane %v912, %v918
      %v921 = vunpack.c.l.s4 1966171168
      %v922 = vunpack.c.0.s8 %v921
      %v923 = vlaneseq
      %v924 = vshrl.u32 %v923, 7
      %v925 = vsub.s32 %v922, %v924
      %v926 = vrot.slane %v911, %v925
      %v927 = vcombine.low %v919, %v926
      %v936 = vunpack.c.l.b16 %v877
      %v937 = vunpack.c.l.b16 %v878
      %v938 = vunpack.c.l.b16 %v879
      %v939 = vunpack.c.l.b16 %v880
      %v940 = vunpack.c.l.b16 %v881
      %v941 = vunpack.c.l.b16 %v882
      %v942 = vunpack.c.l.b16 %v883
      %v943 = vunpack.c.l.b16 %v884
      %v944 = vpack.c.b16 %v937, %v936
      %v945 = vpack.c.b16 %v939, %v938
      %v946 = vpack.c.b16 %v941, %v940
      %v947 = vpack.c.b16 %v943, %v942
      %v953 = vsel %vm438, %v927, 0
      %955 = vmatprep.subr.bf16.mxu0 0
      %956 = vmatpush1.bf16.msra.mxu0 0
      %957 = vmatprep.subr.bf16.mxu0 0
      %958 = vmatpush1.bf16.msra.mxu0 0
      %959 = vmatprep.subr.bf16.mxu0 0
      %960 = vmatpush1.bf16.msra.mxu0 0
      %961 = vmatprep.subr.bf16.mxu0 0
      %962 = vmatpush1.bf16.msra.mxu0 0
      %963 = vmatprep.subr.bf16.mxu0 0
      %964 = vmatpush1.bf16.msra.mxu0 %v947
      %965 = vmatprep.subr.bf16.mxu0 0
      %966 = vmatpush1.bf16.msra.mxu0 %v946
      %967 = vmatprep.subr.bf16.mxu0 0
      %968 = vmatpush1.bf16.msra.mxu0 %v945
      %969 = vmatprep.subr.bf16.mxu0 0
      %970 = vmatpush1.bf16.msra.mxu0 %v944
      %971 = vmatprep.subr.bf16.mxu0 0
      %972 = vmatpush2.bf16.msra.mxu0 0
      %973 = vmatprep.subr.bf16.mxu0 0
      %974 = vmatpush2.bf16.msra.mxu0 0
      %975 = vmatprep.subr.bf16.mxu0 0
      %976 = vmatpush2.bf16.msra.mxu0 0
      %977 = vmatprep.subr.bf16.mxu0 0
      %978 = vmatpush2.bf16.msra.mxu0 0
      %979 = vmatprep.subr.bf16.mxu0 0
      %980 = vmatpush2.bf16.msra.mxu0 0
      %981 = vmatprep.subr.bf16.mxu0 0
      %982 = vmatpush2.bf16.msra.mxu0 0
      %983 = vmatprep.subr.bf16.mxu0 0
      %984 = vmatpush2.bf16.msra.mxu0 0
      %985 = vmatprep.subr.bf16.mxu0 0
      %986 = vmatpush2.bf16.msra.mxu0 0
      %987 = vmatprep.mubr.bf16.mxu0 0
      %988 = vmatmul.mubr.bf16.gmra.mxu0 %v953
      %v989 = vpop.f32.mrf.mxu0
      %v990 = vadd.f32 0.0, %v989
      %v991 = vpop.f32.mrf.mxu0
      %v992 = vpop.f32.mrf.mxu0
      %v993 = vadd.f32 0.0, %v992
      %v994 = vpop.f32.mrf.mxu0
      %995 = vdwg.mxu0
      %v996 = vadd.f32 %v848, %v990
      %v997 = vadd.f32 %v849, %v993
      %v998 = vunpack.i.h.s16 %v872
      %s999 = scalar_lea.vmem %s1, 160
      %v1000 = vld [vmem:[%s999] sm:$0xf]
      %v1001 = vld [vmem:[%s999 + $0x4] sm:$0xf]
      %v1002 = vld [vmem:[%s999 + $0x8] sm:$0xf]
      %v1003 = vld [vmem:[%s999 + $0xc] sm:$0xf]
      %v1004 = vld [vmem:[%s999 + $0x10] sm:$0xf]
      %v1005 = vld [vmem:[%s999 + $0x14] sm:$0xf]
      %v1006 = vld [vmem:[%s999 + $0x18] sm:$0xf]
      %v1007 = vld [vmem:[%s999 + $0x1c] sm:$0xf]
      %v1008 = vpack.i.b16 %v348, %v359
      %v1009 = vpack.i.b16 %v875, %v874
      %v1011 = vcombine.low %v485, %v1008
      %v1012 = vcombine.low %v613, %v1009
      %v1014 = vunpack.c.l.s4 1966171168
      %v1015 = vunpack.c.0.s8 %v1014
      %v1016 = vlaneseq
      %v1017 = vshrl.u32 %v1016, 7
      %v1018 = vsub.s32 %v1015, %v1017
      %v1019 = vrot.slane %v1011, %v1018
      %v1021 = vunpack.c.l.s4 1966171168
      %v1022 = vunpack.c.0.s8 %v1021
      %v1023 = vlaneseq
      %v1024 = vshrl.u32 %v1023, 7
      %v1025 = vsub.s32 %v1022, %v1024
      %v1026 = vrot.slane %v1012, %v1025
      %v1028 = vunpack.c.l.s4 1966171168
      %v1029 = vunpack.c.0.s8 %v1028
      %v1030 = vlaneseq
      %v1031 = vshrl.u32 %v1030, 7
      %v1032 = vsub.s32 %v1029, %v1031
      %v1033 = vrot.slane %v998, %v1032
      %v1034 = vcombine.low %v1019, %v1026
      %v1036 = vunpack.c.l.s4 1966171168
      %v1037 = vunpack.c.0.s8 %v1036
      %v1038 = vlaneseq
      %v1039 = vshrl.u32 %v1038, 7
      %v1040 = vsub.s32 %v1037, %v1039
      %v1041 = vrot.slane %v1034, %v1040
      %v1043 = vunpack.c.l.s4 1966171168
      %v1044 = vunpack.c.0.s8 %v1043
      %v1045 = vlaneseq
      %v1046 = vshrl.u32 %v1045, 7
      %v1047 = vsub.s32 %v1044, %v1046
      %v1048 = vrot.slane %v1033, %v1047
      %v1049 = vcombine.low %v1041, %v1048
      %v1058 = vunpack.c.l.b16 %v1000
      %v1059 = vunpack.c.l.b16 %v1001
      %v1060 = vunpack.c.l.b16 %v1002
      %v1061 = vunpack.c.l.b16 %v1003
      %v1062 = vunpack.c.l.b16 %v1004
      %v1063 = vunpack.c.l.b16 %v1005
      %v1064 = vunpack.c.l.b16 %v1006
      %v1065 = vunpack.c.l.b16 %v1007
      %v1066 = vpack.c.b16 %v1059, %v1058
      %v1067 = vpack.c.b16 %v1061, %v1060
      %v1068 = vpack.c.b16 %v1063, %v1062
      %v1069 = vpack.c.b16 %v1065, %v1064
      %v1075 = vsel %vm438, %v1049, 0
      %1077 = vmatprep.subr.bf16.mxu0 0
      %1078 = vmatpush1.bf16.msra.mxu0 0
      %1079 = vmatprep.subr.bf16.mxu0 0
      %1080 = vmatpush1.bf16.msra.mxu0 0
      %1081 = vmatprep.subr.bf16.mxu0 0
      %1082 = vmatpush1.bf16.msra.mxu0 0
      %1083 = vmatprep.subr.bf16.mxu0 0
      %1084 = vmatpush1.bf16.msra.mxu0 0
      %1085 = vmatprep.subr.bf16.mxu0 0
      %1086 = vmatpush1.bf16.msra.mxu0 %v1069
      %1087 = vmatprep.subr.bf16.mxu0 0
      %1088 = vmatpush1.bf16.msra.mxu0 %v1068
      %1089 = vmatprep.subr.bf16.mxu0 0
      %1090 = vmatpush1.bf16.msra.mxu0 %v1067
      %1091 = vmatprep.subr.bf16.mxu0 0
      %1092 = vmatpush1.bf16.msra.mxu0 %v1066
      %1093 = vmatprep.subr.bf16.mxu0 0
      %1094 = vmatpush2.bf16.msra.mxu0 0
      %1095 = vmatprep.subr.bf16.mxu0 0
      %1096 = vmatpush2.bf16.msra.mxu0 0
      %1097 = vmatprep.subr.bf16.mxu0 0
      %1098 = vmatpush2.bf16.msra.mxu0 0
      %1099 = vmatprep.subr.bf16.mxu0 0
      %1100 = vmatpush2.bf16.msra.mxu0 0
      %1101 = vmatprep.subr.bf16.mxu0 0
      %1102 = vmatpush2.bf16.msra.mxu0 0
      %1103 = vmatprep.subr.bf16.mxu0 0
      %1104 = vmatpush2.bf16.msra.mxu0 0
      %1105 = vmatprep.subr.bf16.mxu0 0
      %1106 = vmatpush2.bf16.msra.mxu0 0
      %1107 = vmatprep.subr.bf16.mxu0 0
      %1108 = vmatpush2.bf16.msra.mxu0 0
      %1109 = vmatprep.mubr.bf16.mxu0 0
      %1110 = vmatmul.mubr.bf16.gmra.mxu0 %v1075
      %v1111 = vpop.f32.mrf.mxu0
      %v1112 = vadd.f32 0.0, %v1111
      %v1113 = vpop.f32.mrf.mxu0
      %v1114 = vpop.f32.mrf.mxu0
      %v1115 = vadd.f32 0.0, %v1114
      %v1116 = vpop.f32.mrf.mxu0
      %1117 = vdwg.mxu0
      %v1118 = vadd.f32 %v996, %v1112
      %v1119 = vadd.f32 %v997, %v1115
      %v1120 = vcombine.high %v865, %v865
      %v1121 = vunpack.i.l.s16 %v1120
      %s1122 = scalar_lea.vmem %s1, 192
      %v1123 = vld [vmem:[%s1122] sm:$0xf]
      %v1124 = vld [vmem:[%s1122 + $0x4] sm:$0xf]
      %v1125 = vld [vmem:[%s1122 + $0x8] sm:$0xf]
      %v1126 = vld [vmem:[%s1122 + $0xc] sm:$0xf]
      %v1127 = vld [vmem:[%s1122 + $0x10] sm:$0xf]
      %v1128 = vld [vmem:[%s1122 + $0x14] sm:$0xf]
      %v1129 = vld [vmem:[%s1122 + $0x18] sm:$0xf]
      %v1130 = vld [vmem:[%s1122 + $0x1c] sm:$0xf]
      %v1131 = vpack.i.b16 %v349, %v599
      %v1132 = vpack.i.b16 %v998, %v875
      %v1134 = vcombine.low %v372, %v1131
      %v1135 = vcombine.low %v739, %v1132
      %v1137 = vunpack.c.l.s4 1966171168
      %v1138 = vunpack.c.0.s8 %v1137
      %v1139 = vlaneseq
      %v1140 = vshrl.u32 %v1139, 7
      %v1141 = vsub.s32 %v1138, %v1140
      %v1142 = vrot.slane %v1134, %v1141
      %v1144 = vunpack.c.l.s4 1966171168
      %v1145 = vunpack.c.0.s8 %v1144
      %v1146 = vlaneseq
      %v1147 = vshrl.u32 %v1146, 7
      %v1148 = vsub.s32 %v1145, %v1147
      %v1149 = vrot.slane %v1135, %v1148
      %v1151 = vunpack.c.l.s4 1966171168
      %v1152 = vunpack.c.0.s8 %v1151
      %v1153 = vlaneseq
      %v1154 = vshrl.u32 %v1153, 7
      %v1155 = vsub.s32 %v1152, %v1154
      %v1156 = vrot.slane %v1121, %v1155
      %v1157 = vcombine.low %v1142, %v1149
      %v1159 = vunpack.c.l.s4 1966171168
      %v1160 = vunpack.c.0.s8 %v1159
      %v1161 = vlaneseq
      %v1162 = vshrl.u32 %v1161, 7
      %v1163 = vsub.s32 %v1160, %v1162
      %v1164 = vrot.slane %v1157, %v1163
      %v1166 = vunpack.c.l.s4 1966171168
      %v1167 = vunpack.c.0.s8 %v1166
      %v1168 = vlaneseq
      %v1169 = vshrl.u32 %v1168, 7
      %v1170 = vsub.s32 %v1167, %v1169
      %v1171 = vrot.slane %v1156, %v1170
      %v1172 = vcombine.low %v1164, %v1171
      %v1181 = vunpack.c.l.b16 %v1123
      %v1182 = vunpack.c.l.b16 %v1124
      %v1183 = vunpack.c.l.b16 %v1125
      %v1184 = vunpack.c.l.b16 %v1126
      %v1185 = vunpack.c.l.b16 %v1127
      %v1186 = vunpack.c.l.b16 %v1128
      %v1187 = vunpack.c.l.b16 %v1129
      %v1188 = vunpack.c.l.b16 %v1130
      %v1189 = vpack.c.b16 %v1182, %v1181
      %v1190 = vpack.c.b16 %v1184, %v1183
      %v1191 = vpack.c.b16 %v1186, %v1185
      %v1192 = vpack.c.b16 %v1188, %v1187
      %v1198 = vsel %vm438, %v1172, 0
      %1200 = vmatprep.subr.bf16.mxu0 0
      %1201 = vmatpush1.bf16.msra.mxu0 0
      %1202 = vmatprep.subr.bf16.mxu0 0
      %1203 = vmatpush1.bf16.msra.mxu0 0
      %1204 = vmatprep.subr.bf16.mxu0 0
      %1205 = vmatpush1.bf16.msra.mxu0 0
      %1206 = vmatprep.subr.bf16.mxu0 0
      %1207 = vmatpush1.bf16.msra.mxu0 0
      %1208 = vmatprep.subr.bf16.mxu0 0
      %1209 = vmatpush1.bf16.msra.mxu0 %v1192
      %1210 = vmatprep.subr.bf16.mxu0 0
      %1211 = vmatpush1.bf16.msra.mxu0 %v1191
      %1212 = vmatprep.subr.bf16.mxu0 0
      %1213 = vmatpush1.bf16.msra.mxu0 %v1190
      %1214 = vmatprep.subr.bf16.mxu0 0
      %1215 = vmatpush1.bf16.msra.mxu0 %v1189
      %1216 = vmatprep.subr.bf16.mxu0 0
      %1217 = vmatpush2.bf16.msra.mxu0 0
      %1218 = vmatprep.subr.bf16.mxu0 0
      %1219 = vmatpush2.bf16.msra.mxu0 0
      %1220 = vmatprep.subr.bf16.mxu0 0
      %1221 = vmatpush2.bf16.msra.mxu0 0
      %1222 = vmatprep.subr.bf16.mxu0 0
      %1223 = vmatpush2.bf16.msra.mxu0 0
      %1224 = vmatprep.subr.bf16.mxu0 0
      %1225 = vmatpush2.bf16.msra.mxu0 0
      %1226 = vmatprep.subr.bf16.mxu0 0
      %1227 = vmatpush2.bf16.msra.mxu0 0
      %1228 = vmatprep.subr.bf16.mxu0 0
      %1229 = vmatpush2.bf16.msra.mxu0 0
      %1230 = vmatprep.subr.bf16.mxu0 0
      %1231 = vmatpush2.bf16.msra.mxu0 0
      %1232 = vmatprep.mubr.bf16.mxu0 0
      %1233 = vmatmul.mubr.bf16.gmra.mxu0 %v1198
      %v1234 = vpop.f32.mrf.mxu0
      %v1235 = vadd.f32 0.0, %v1234
      %v1236 = vpop.f32.mrf.mxu0
      %v1237 = vpop.f32.mrf.mxu0
      %v1238 = vadd.f32 0.0, %v1237
      %v1239 = vpop.f32.mrf.mxu0
      %1240 = vdwg.mxu0
      %v1241 = vadd.f32 %v1118, %v1235
      %v1242 = vadd.f32 %v1119, %v1238
      %v1243 = vunpack.i.h.s16 %v1120
      %s1244 = scalar_lea.vmem %s1, 224
      %v1245 = vld [vmem:[%s1244] sm:$0xf]
      %v1246 = vld [vmem:[%s1244 + $0x4] sm:$0xf]
      %v1247 = vld [vmem:[%s1244 + $0x8] sm:$0xf]
      %v1248 = vld [vmem:[%s1244 + $0xc] sm:$0xf]
      %v1249 = vld [vmem:[%s1244 + $0x10] sm:$0xf]
      %v1250 = vld [vmem:[%s1244 + $0x14] sm:$0xf]
      %v1251 = vld [vmem:[%s1244 + $0x18] sm:$0xf]
      %v1252 = vld [vmem:[%s1244 + $0x1c] sm:$0xf]
      %v1253 = vpack.i.b16 %v360, %v725
      %v1254 = vpack.i.b16 %v726, %v600
      %v1255 = vpack.i.b16 %v1121, %v998
      %v1257 = vcombine.low %v612, %v1253
      %v1258 = vcombine.low %v1254, %v1255
      %v1260 = vunpack.c.l.s4 1966171168
      %v1261 = vunpack.c.0.s8 %v1260
      %v1262 = vlaneseq
      %v1263 = vshrl.u32 %v1262, 7
      %v1264 = vsub.s32 %v1261, %v1263
      %v1265 = vrot.slane %v1257, %v1264
      %v1267 = vunpack.c.l.s4 1966171168
      %v1268 = vunpack.c.0.s8 %v1267
      %v1269 = vlaneseq
      %v1270 = vshrl.u32 %v1269, 7
      %v1271 = vsub.s32 %v1268, %v1270
      %v1272 = vrot.slane %v1258, %v1271
      %v1274 = vunpack.c.l.s4 1966171168
      %v1275 = vunpack.c.0.s8 %v1274
      %v1276 = vlaneseq
      %v1277 = vshrl.u32 %v1276, 7
      %v1278 = vsub.s32 %v1275, %v1277
      %v1279 = vrot.slane %v1243, %v1278
      %v1280 = vcombine.low %v1265, %v1272
      %v1282 = vunpack.c.l.s4 1966171168
      %v1283 = vunpack.c.0.s8 %v1282
      %v1284 = vlaneseq
      %v1285 = vshrl.u32 %v1284, 7
      %v1286 = vsub.s32 %v1283, %v1285
      %v1287 = vrot.slane %v1280, %v1286
      %v1289 = vunpack.c.l.s4 1966171168
      %v1290 = vunpack.c.0.s8 %v1289
      %v1291 = vlaneseq
      %v1292 = vshrl.u32 %v1291, 7
      %v1293 = vsub.s32 %v1290, %v1292
      %v1294 = vrot.slane %v1279, %v1293
      %v1295 = vcombine.low %v1287, %v1294
      %v1304 = vunpack.c.l.b16 %v1245
      %v1305 = vunpack.c.l.b16 %v1246
      %v1306 = vunpack.c.l.b16 %v1247
      %v1307 = vunpack.c.l.b16 %v1248
      %v1308 = vunpack.c.l.b16 %v1249
      %v1309 = vunpack.c.l.b16 %v1250
      %v1310 = vunpack.c.l.b16 %v1251
      %v1311 = vunpack.c.l.b16 %v1252
      %v1312 = vpack.c.b16 %v1305, %v1304
      %v1313 = vpack.c.b16 %v1307, %v1306
      %v1314 = vpack.c.b16 %v1309, %v1308
      %v1315 = vpack.c.b16 %v1311, %v1310
      %v1321 = vsel %vm438, %v1295, 0
      %1323 = vmatprep.subr.bf16.mxu0 0
      %1324 = vmatpush1.bf16.msra.mxu0 0
      %1325 = vmatprep.subr.bf16.mxu0 0
      %1326 = vmatpush1.bf16.msra.mxu0 0
      %1327 = vmatprep.subr.bf16.mxu0 0
      %1328 = vmatpush1.bf16.msra.mxu0 0
      %1329 = vmatprep.subr.bf16.mxu0 0
      %1330 = vmatpush1.bf16.msra.mxu0 0
      %1331 = vmatprep.subr.bf16.mxu0 0
      %1332 = vmatpush1.bf16.msra.mxu0 %v1315
      %1333 = vmatprep.subr.bf16.mxu0 0
      %1334 = vmatpush1.bf16.msra.mxu0 %v1314
      %1335 = vmatprep.subr.bf16.mxu0 0
      %1336 = vmatpush1.bf16.msra.mxu0 %v1313
      %1337 = vmatprep.subr.bf16.mxu0 0
      %1338 = vmatpush1.bf16.msra.mxu0 %v1312
      %1339 = vmatprep.subr.bf16.mxu0 0
      %1340 = vmatpush2.bf16.msra.mxu0 0
      %1341 = vmatprep.subr.bf16.mxu0 0
      %1342 = vmatpush2.bf16.msra.mxu0 0
      %1343 = vmatprep.subr.bf16.mxu0 0
      %1344 = vmatpush2.bf16.msra.mxu0 0
      %1345 = vmatprep.subr.bf16.mxu0 0
      %1346 = vmatpush2.bf16.msra.mxu0 0
      %1347 = vmatprep.subr.bf16.mxu0 0
      %1348 = vmatpush2.bf16.msra.mxu0 0
      %1349 = vmatprep.subr.bf16.mxu0 0
      %1350 = vmatpush2.bf16.msra.mxu0 0
      %1351 = vmatprep.subr.bf16.mxu0 0
      %1352 = vmatpush2.bf16.msra.mxu0 0
      %1353 = vmatprep.subr.bf16.mxu0 0
      %1354 = vmatpush2.bf16.msra.mxu0 0
      %1355 = vmatprep.mubr.bf16.mxu0 0
      %1356 = vmatmul.mubr.bf16.gmra.mxu0 %v1321
      %v1357 = vpop.f32.mrf.mxu0
      %v1358 = vadd.f32 0.0, %v1357
      %v1359 = vpop.f32.mrf.mxu0
      %v1360 = vpop.f32.mrf.mxu0
      %v1361 = vadd.f32 0.0, %v1360
      %v1362 = vpop.f32.mrf.mxu0
      %1363 = vdwg.mxu0
      %v1364 = vadd.f32 %v1241, %v1358
      %v1365 = vadd.f32 %v1242, %v1361
      %v1368 = vunpack.c.l.s4 1966171168
      %v1369 = vunpack.c.0.s8 %v1368
      %v1370 = vlaneseq
      %v1371 = vshrl.u32 %v1370, 7
      %v1372 = vsub.s32 %v1369, %v1371
      %v1373 = vrot.slane %v270, %v1372
      %v1374 = vcombine.high %v1373, %v1373
      %v1376 = vunpack.c.l.s4 1966171168
      %v1377 = vunpack.c.0.s8 %v1376
      %v1378 = vlaneseq
      %v1379 = vshrl.u32 %v1378, 7
      %v1380 = vsub.s32 %v1377, %v1379
      %v1381 = vrot.slane %v1373, %v1380
      %v1383 = vunpack.c.l.s4 1966171168
      %v1384 = vunpack.c.0.s8 %v1383
      %v1385 = vlaneseq
      %v1386 = vshrl.u32 %v1385, 7
      %v1387 = vsub.s32 %v1384, %v1386
      %v1388 = vrot.slane %v1374, %v1387
      %v1389 = vunpack.i.l.s16 %v1381
      %v1390 = vunpack.i.h.s16 %v1381
      %v1391 = vunpack.i.l.s16 %v1388
      %s1392 = scalar_lea.vmem %s1, 256
      %v1393 = vld [vmem:[%s1392] sm:$0xf]
      %v1394 = vld [vmem:[%s1392 + $0x4] sm:$0xf]
      %v1395 = vld [vmem:[%s1392 + $0x8] sm:$0xf]
      %v1396 = vld [vmem:[%s1392 + $0xc] sm:$0xf]
      %v1397 = vld [vmem:[%s1392 + $0x10] sm:$0xf]
      %v1398 = vld [vmem:[%s1392 + $0x14] sm:$0xf]
      %v1399 = vld [vmem:[%s1392 + $0x18] sm:$0xf]
      %v1400 = vld [vmem:[%s1392 + $0x1c] sm:$0xf]
      %v1401 = vpack.i.b16 %v873, %v349
      %v1402 = vpack.i.b16 %v1390, %v1389
      %v1404 = vcombine.low %v486, %v1401
      %v1405 = vcombine.low %v1009, %v1402
      %v1407 = vunpack.c.l.s4 1966171168
      %v1408 = vunpack.c.0.s8 %v1407
      %v1409 = vlaneseq
      %v1410 = vshrl.u32 %v1409, 7
      %v1411 = vsub.s32 %v1408, %v1410
      %v1412 = vrot.slane %v1404, %v1411
      %v1414 = vunpack.c.l.s4 1966171168
      %v1415 = vunpack.c.0.s8 %v1414
      %v1416 = vlaneseq
      %v1417 = vshrl.u32 %v1416, 7
      %v1418 = vsub.s32 %v1415, %v1417
      %v1419 = vrot.slane %v1405, %v1418
      %v1421 = vunpack.c.l.s4 1966171168
      %v1422 = vunpack.c.0.s8 %v1421
      %v1423 = vlaneseq
      %v1424 = vshrl.u32 %v1423, 7
      %v1425 = vsub.s32 %v1422, %v1424
      %v1426 = vrot.slane %v1391, %v1425
      %v1427 = vcombine.low %v1412, %v1419
      %v1429 = vunpack.c.l.s4 1966171168
      %v1430 = vunpack.c.0.s8 %v1429
      %v1431 = vlaneseq
      %v1432 = vshrl.u32 %v1431, 7
      %v1433 = vsub.s32 %v1430, %v1432
      %v1434 = vrot.slane %v1427, %v1433
      %v1436 = vunpack.c.l.s4 1966171168
      %v1437 = vunpack.c.0.s8 %v1436
      %v1438 = vlaneseq
      %v1439 = vshrl.u32 %v1438, 7
      %v1440 = vsub.s32 %v1437, %v1439
      %v1441 = vrot.slane %v1426, %v1440
      %v1442 = vcombine.low %v1434, %v1441
      %v1451 = vunpack.c.l.b16 %v1393
      %v1452 = vunpack.c.l.b16 %v1394
      %v1453 = vunpack.c.l.b16 %v1395
      %v1454 = vunpack.c.l.b16 %v1396
      %v1455 = vunpack.c.l.b16 %v1397
      %v1456 = vunpack.c.l.b16 %v1398
      %v1457 = vunpack.c.l.b16 %v1399
      %v1458 = vunpack.c.l.b16 %v1400
      %v1459 = vpack.c.b16 %v1452, %v1451
      %v1460 = vpack.c.b16 %v1454, %v1453
      %v1461 = vpack.c.b16 %v1456, %v1455
      %v1462 = vpack.c.b16 %v1458, %v1457
      %v1468 = vsel %vm438, %v1442, 0
      %1470 = vmatprep.subr.bf16.mxu0 0
      %1471 = vmatpush1.bf16.msra.mxu0 0
      %1472 = vmatprep.subr.bf16.mxu0 0
      %1473 = vmatpush1.bf16.msra.mxu0 0
      %1474 = vmatprep.subr.bf16.mxu0 0
      %1475 = vmatpush1.bf16.msra.mxu0 0
      %1476 = vmatprep.subr.bf16.mxu0 0
      %1477 = vmatpush1.bf16.msra.mxu0 0
      %1478 = vmatprep.subr.bf16.mxu0 0
      %1479 = vmatpush1.bf16.msra.mxu0 %v1462
      %1480 = vmatprep.subr.bf16.mxu0 0
      %1481 = vmatpush1.bf16.msra.mxu0 %v1461
      %1482 = vmatprep.subr.bf16.mxu0 0
      %1483 = vmatpush1.bf16.msra.mxu0 %v1460
      %1484 = vmatprep.subr.bf16.mxu0 0
      %1485 = vmatpush1.bf16.msra.mxu0 %v1459
      %1486 = vmatprep.subr.bf16.mxu0 0
      %1487 = vmatpush2.bf16.msra.mxu0 0
      %1488 = vmatprep.subr.bf16.mxu0 0
      %1489 = vmatpush2.bf16.msra.mxu0 0
      %1490 = vmatprep.subr.bf16.mxu0 0
      %1491 = vmatpush2.bf16.msra.mxu0 0
      %1492 = vmatprep.subr.bf16.mxu0 0
      %1493 = vmatpush2.bf16.msra.mxu0 0
      %1494 = vmatprep.subr.bf16.mxu0 0
      %1495 = vmatpush2.bf16.msra.mxu0 0
      %1496 = vmatprep.subr.bf16.mxu0 0
      %1497 = vmatpush2.bf16.msra.mxu0 0
      %1498 = vmatprep.subr.bf16.mxu0 0
      %1499 = vmatpush2.bf16.msra.mxu0 0
      %1500 = vmatprep.subr.bf16.mxu0 0
      %1501 = vmatpush2.bf16.msra.mxu0 0
      %1502 = vmatprep.mubr.bf16.mxu0 0
      %1503 = vmatmul.mubr.bf16.gmra.mxu0 %v1468
      %v1504 = vpop.f32.mrf.mxu0
      %v1505 = vadd.f32 0.0, %v1504
      %v1506 = vpop.f32.mrf.mxu0
      %v1507 = vpop.f32.mrf.mxu0
      %v1508 = vadd.f32 0.0, %v1507
      %v1509 = vpop.f32.mrf.mxu0
      %1510 = vdwg.mxu0
      %v1511 = vadd.f32 %v1364, %v1505
      %v1512 = vadd.f32 %v1365, %v1508
      %v1513 = vunpack.i.h.s16 %v1388
      %s1514 = scalar_lea.vmem %s1, 288
      %v1515 = vld [vmem:[%s1514] sm:$0xf]
      %v1516 = vld [vmem:[%s1514 + $0x4] sm:$0xf]
      %v1517 = vld [vmem:[%s1514 + $0x8] sm:$0xf]
      %v1518 = vld [vmem:[%s1514 + $0xc] sm:$0xf]
      %v1519 = vld [vmem:[%s1514 + $0x10] sm:$0xf]
      %v1520 = vld [vmem:[%s1514 + $0x14] sm:$0xf]
      %v1521 = vld [vmem:[%s1514 + $0x18] sm:$0xf]
      %v1522 = vld [vmem:[%s1514 + $0x1c] sm:$0xf]
      %v1523 = vpack.i.b16 %v874, %v360
      %v1524 = vpack.i.b16 %v1391, %v1390
      %v1526 = vcombine.low %v373, %v1523
      %v1527 = vcombine.low %v1132, %v1524
      %v1529 = vunpack.c.l.s4 1966171168
      %v1530 = vunpack.c.0.s8 %v1529
      %v1531 = vlaneseq
      %v1532 = vshrl.u32 %v1531, 7
      %v1533 = vsub.s32 %v1530, %v1532
      %v1534 = vrot.slane %v1526, %v1533
      %v1536 = vunpack.c.l.s4 1966171168
      %v1537 = vunpack.c.0.s8 %v1536
      %v1538 = vlaneseq
      %v1539 = vshrl.u32 %v1538, 7
      %v1540 = vsub.s32 %v1537, %v1539
      %v1541 = vrot.slane %v1527, %v1540
      %v1543 = vunpack.c.l.s4 1966171168
      %v1544 = vunpack.c.0.s8 %v1543
      %v1545 = vlaneseq
      %v1546 = vshrl.u32 %v1545, 7
      %v1547 = vsub.s32 %v1544, %v1546
      %v1548 = vrot.slane %v1513, %v1547
      %v1549 = vcombine.low %v1534, %v1541
      %v1551 = vunpack.c.l.s4 1966171168
      %v1552 = vunpack.c.0.s8 %v1551
      %v1553 = vlaneseq
      %v1554 = vshrl.u32 %v1553, 7
      %v1555 = vsub.s32 %v1552, %v1554
      %v1556 = vrot.slane %v1549, %v1555
      %v1558 = vunpack.c.l.s4 1966171168
      %v1559 = vunpack.c.0.s8 %v1558
      %v1560 = vlaneseq
      %v1561 = vshrl.u32 %v1560, 7
      %v1562 = vsub.s32 %v1559, %v1561
      %v1563 = vrot.slane %v1548, %v1562
      %v1564 = vcombine.low %v1556, %v1563
      %v1573 = vunpack.c.l.b16 %v1515
      %v1574 = vunpack.c.l.b16 %v1516
      %v1575 = vunpack.c.l.b16 %v1517
      %v1576 = vunpack.c.l.b16 %v1518
      %v1577 = vunpack.c.l.b16 %v1519
      %v1578 = vunpack.c.l.b16 %v1520
      %v1579 = vunpack.c.l.b16 %v1521
      %v1580 = vunpack.c.l.b16 %v1522
      %v1581 = vpack.c.b16 %v1574, %v1573
      %v1582 = vpack.c.b16 %v1576, %v1575
      %v1583 = vpack.c.b16 %v1578, %v1577
      %v1584 = vpack.c.b16 %v1580, %v1579
      %v1590 = vsel %vm438, %v1564, 0
      %1592 = vmatprep.subr.bf16.mxu0 0
      %1593 = vmatpush1.bf16.msra.mxu0 0
      %1594 = vmatprep.subr.bf16.mxu0 0
      %1595 = vmatpush1.bf16.msra.mxu0 0
      %1596 = vmatprep.subr.bf16.mxu0 0
      %1597 = vmatpush1.bf16.msra.mxu0 0
      %1598 = vmatprep.subr.bf16.mxu0 0
      %1599 = vmatpush1.bf16.msra.mxu0 0
      %1600 = vmatprep.subr.bf16.mxu0 0
      %1601 = vmatpush1.bf16.msra.mxu0 %v1584
      %1602 = vmatprep.subr.bf16.mxu0 0
      %1603 = vmatpush1.bf16.msra.mxu0 %v1583
      %1604 = vmatprep.subr.bf16.mxu0 0
      %1605 = vmatpush1.bf16.msra.mxu0 %v1582
      %1606 = vmatprep.subr.bf16.mxu0 0
      %1607 = vmatpush1.bf16.msra.mxu0 %v1581
      %1608 = vmatprep.subr.bf16.mxu0 0
      %1609 = vmatpush2.bf16.msra.mxu0 0
      %1610 = vmatprep.subr.bf16.mxu0 0
      %1611 = vmatpush2.bf16.msra.mxu0 0
      %1612 = vmatprep.subr.bf16.mxu0 0
      %1613 = vmatpush2.bf16.msra.mxu0 0
      %1614 = vmatprep.subr.bf16.mxu0 0
      %1615 = vmatpush2.bf16.msra.mxu0 0
      %1616 = vmatprep.subr.bf16.mxu0 0
      %1617 = vmatpush2.bf16.msra.mxu0 0
      %1618 = vmatprep.subr.bf16.mxu0 0
      %1619 = vmatpush2.bf16.msra.mxu0 0
      %1620 = vmatprep.subr.bf16.mxu0 0
      %1621 = vmatpush2.bf16.msra.mxu0 0
      %1622 = vmatprep.subr.bf16.mxu0 0
      %1623 = vmatpush2.bf16.msra.mxu0 0
      %1624 = vmatprep.mubr.bf16.mxu0 0
      %1625 = vmatmul.mubr.bf16.gmra.mxu0 %v1590
      %v1626 = vpop.f32.mrf.mxu0
      %v1627 = vadd.f32 0.0, %v1626
      %v1628 = vpop.f32.mrf.mxu0
      %v1629 = vpop.f32.mrf.mxu0
      %v1630 = vadd.f32 0.0, %v1629
      %v1631 = vpop.f32.mrf.mxu0
      %1632 = vdwg.mxu0
      %v1633 = vadd.f32 %v1511, %v1627
      %v1634 = vadd.f32 %v1512, %v1630
      %v1635 = vcombine.high %v1381, %v1381
      %v1636 = vunpack.i.l.s16 %v1635
      %s1637 = scalar_lea.vmem %s1, 320
      %v1638 = vld [vmem:[%s1637] sm:$0xf]
      %v1639 = vld [vmem:[%s1637 + $0x4] sm:$0xf]
      %v1640 = vld [vmem:[%s1637 + $0x8] sm:$0xf]
      %v1641 = vld [vmem:[%s1637 + $0xc] sm:$0xf]
      %v1642 = vld [vmem:[%s1637 + $0x10] sm:$0xf]
      %v1643 = vld [vmem:[%s1637 + $0x14] sm:$0xf]
      %v1644 = vld [vmem:[%s1637 + $0x18] sm:$0xf]
      %v1645 = vld [vmem:[%s1637 + $0x1c] sm:$0xf]
      %v1646 = vpack.i.b16 %v875, %v600
      %v1647 = vpack.i.b16 %v1513, %v1391
      %v1649 = vcombine.low %v613, %v1646
      %v1650 = vcombine.low %v1255, %v1647
      %v1652 = vunpack.c.l.s4 1966171168
      %v1653 = vunpack.c.0.s8 %v1652
      %v1654 = vlaneseq
      %v1655 = vshrl.u32 %v1654, 7
      %v1656 = vsub.s32 %v1653, %v1655
      %v1657 = vrot.slane %v1649, %v1656
      %v1659 = vunpack.c.l.s4 1966171168
      %v1660 = vunpack.c.0.s8 %v1659
      %v1661 = vlaneseq
      %v1662 = vshrl.u32 %v1661, 7
      %v1663 = vsub.s32 %v1660, %v1662
      %v1664 = vrot.slane %v1650, %v1663
      %v1666 = vunpack.c.l.s4 1966171168
      %v1667 = vunpack.c.0.s8 %v1666
      %v1668 = vlaneseq
      %v1669 = vshrl.u32 %v1668, 7
      %v1670 = vsub.s32 %v1667, %v1669
      %v1671 = vrot.slane %v1636, %v1670
      %v1672 = vcombine.low %v1657, %v1664
      %v1674 = vunpack.c.l.s4 1966171168
      %v1675 = vunpack.c.0.s8 %v1674
      %v1676 = vlaneseq
      %v1677 = vshrl.u32 %v1676, 7
      %v1678 = vsub.s32 %v1675, %v1677
      %v1679 = vrot.slane %v1672, %v1678
      %v1681 = vunpack.c.l.s4 1966171168
      %v1682 = vunpack.c.0.s8 %v1681
      %v1683 = vlaneseq
      %v1684 = vshrl.u32 %v1683, 7
      %v1685 = vsub.s32 %v1682, %v1684
      %v1686 = vrot.slane %v1671, %v1685
      %v1687 = vcombine.low %v1679, %v1686
      %v1696 = vunpack.c.l.b16 %v1638
      %v1697 = vunpack.c.l.b16 %v1639
      %v1698 = vunpack.c.l.b16 %v1640
      %v1699 = vunpack.c.l.b16 %v1641
      %v1700 = vunpack.c.l.b16 %v1642
      %v1701 = vunpack.c.l.b16 %v1643
      %v1702 = vunpack.c.l.b16 %v1644
      %v1703 = vunpack.c.l.b16 %v1645
      %v1704 = vpack.c.b16 %v1697, %v1696
      %v1705 = vpack.c.b16 %v1699, %v1698
      %v1706 = vpack.c.b16 %v1701, %v1700
      %v1707 = vpack.c.b16 %v1703, %v1702
      %v1713 = vsel %vm438, %v1687, 0
      %1715 = vmatprep.subr.bf16.mxu0 0
      %1716 = vmatpush1.bf16.msra.mxu0 0
      %1717 = vmatprep.subr.bf16.mxu0 0
      %1718 = vmatpush1.bf16.msra.mxu0 0
      %1719 = vmatprep.subr.bf16.mxu0 0
      %1720 = vmatpush1.bf16.msra.mxu0 0
      %1721 = vmatprep.subr.bf16.mxu0 0
      %1722 = vmatpush1.bf16.msra.mxu0 0
      %1723 = vmatprep.subr.bf16.mxu0 0
      %1724 = vmatpush1.bf16.msra.mxu0 %v1707
      %1725 = vmatprep.subr.bf16.mxu0 0
      %1726 = vmatpush1.bf16.msra.mxu0 %v1706
      %1727 = vmatprep.subr.bf16.mxu0 0
      %1728 = vmatpush1.bf16.msra.mxu0 %v1705
      %1729 = vmatprep.subr.bf16.mxu0 0
      %1730 = vmatpush1.bf16.msra.mxu0 %v1704
      %1731 = vmatprep.subr.bf16.mxu0 0
      %1732 = vmatpush2.bf16.msra.mxu0 0
      %1733 = vmatprep.subr.bf16.mxu0 0
      %1734 = vmatpush2.bf16.msra.mxu0 0
      %1735 = vmatprep.subr.bf16.mxu0 0
      %1736 = vmatpush2.bf16.msra.mxu0 0
      %1737 = vmatprep.subr.bf16.mxu0 0
      %1738 = vmatpush2.bf16.msra.mxu0 0
      %1739 = vmatprep.subr.bf16.mxu0 0
      %1740 = vmatpush2.bf16.msra.mxu0 0
      %1741 = vmatprep.subr.bf16.mxu0 0
      %1742 = vmatpush2.bf16.msra.mxu0 0
      %1743 = vmatprep.subr.bf16.mxu0 0
      %1744 = vmatpush2.bf16.msra.mxu0 0
      %1745 = vmatprep.subr.bf16.mxu0 0
      %1746 = vmatpush2.bf16.msra.mxu0 0
      %1747 = vmatprep.mubr.bf16.mxu0 0
      %1748 = vmatmul.mubr.bf16.gmra.mxu0 %v1713
      %v1749 = vpop.f32.mrf.mxu0
      %v1750 = vadd.f32 0.0, %v1749
      %v1751 = vpop.f32.mrf.mxu0
      %v1752 = vpop.f32.mrf.mxu0
      %v1753 = vadd.f32 0.0, %v1752
      %v1754 = vpop.f32.mrf.mxu0
      %1755 = vdwg.mxu0
      %v1756 = vadd.f32 %v1633, %v1750
      %v1757 = vadd.f32 %v1634, %v1753
      %v1758 = vunpack.i.h.s16 %v1635
      %s1759 = scalar_lea.vmem %s1, 352
      %v1760 = vld [vmem:[%s1759] sm:$0xf]
      %v1761 = vld [vmem:[%s1759 + $0x4] sm:$0xf]
      %v1762 = vld [vmem:[%s1759 + $0x8] sm:$0xf]
      %v1763 = vld [vmem:[%s1759 + $0xc] sm:$0xf]
      %v1764 = vld [vmem:[%s1759 + $0x10] sm:$0xf]
      %v1765 = vld [vmem:[%s1759 + $0x14] sm:$0xf]
      %v1766 = vld [vmem:[%s1759 + $0x18] sm:$0xf]
      %v1767 = vld [vmem:[%s1759 + $0x1c] sm:$0xf]
      %v1768 = vpack.i.b16 %v998, %v726
      %v1769 = vpack.i.b16 %v1243, %v1121
      %v1770 = vpack.i.b16 %v1636, %v1513
      %v1772 = vcombine.low %v739, %v1768
      %v1773 = vcombine.low %v1769, %v1770
      %v1775 = vunpack.c.l.s4 1966171168
      %v1776 = vunpack.c.0.s8 %v1775
      %v1777 = vlaneseq
      %v1778 = vshrl.u32 %v1777, 7
      %v1779 = vsub.s32 %v1776, %v1778
      %v1780 = vrot.slane %v1772, %v1779
      %v1782 = vunpack.c.l.s4 1966171168
      %v1783 = vunpack.c.0.s8 %v1782
      %v1784 = vlaneseq
      %v1785 = vshrl.u32 %v1784, 7
      %v1786 = vsub.s32 %v1783, %v1785
      %v1787 = vrot.slane %v1773, %v1786
      %v1789 = vunpack.c.l.s4 1966171168
      %v1790 = vunpack.c.0.s8 %v1789
      %v1791 = vlaneseq
      %v1792 = vshrl.u32 %v1791, 7
      %v1793 = vsub.s32 %v1790, %v1792
      %v1794 = vrot.slane %v1758, %v1793
      %v1795 = vcombine.low %v1780, %v1787
      %v1797 = vunpack.c.l.s4 1966171168
      %v1798 = vunpack.c.0.s8 %v1797
      %v1799 = vlaneseq
      %v1800 = vshrl.u32 %v1799, 7
      %v1801 = vsub.s32 %v1798, %v1800
      %v1802 = vrot.slane %v1795, %v1801
      %v1804 = vunpack.c.l.s4 1966171168
      %v1805 = vunpack.c.0.s8 %v1804
      %v1806 = vlaneseq
      %v1807 = vshrl.u32 %v1806, 7
      %v1808 = vsub.s32 %v1805, %v1807
      %v1809 = vrot.slane %v1794, %v1808
      %v1810 = vcombine.low %v1802, %v1809
      %v1819 = vunpack.c.l.b16 %v1760
      %v1820 = vunpack.c.l.b16 %v1761
      %v1821 = vunpack.c.l.b16 %v1762
      %v1822 = vunpack.c.l.b16 %v1763
      %v1823 = vunpack.c.l.b16 %v1764
      %v1824 = vunpack.c.l.b16 %v1765
      %v1825 = vunpack.c.l.b16 %v1766
      %v1826 = vunpack.c.l.b16 %v1767
      %v1827 = vpack.c.b16 %v1820, %v1819
      %v1828 = vpack.c.b16 %v1822, %v1821
      %v1829 = vpack.c.b16 %v1824, %v1823
      %v1830 = vpack.c.b16 %v1826, %v1825
      %v1836 = vsel %vm438, %v1810, 0
      %1838 = vmatprep.subr.bf16.mxu0 0
      %1839 = vmatpush1.bf16.msra.mxu0 0
      %1840 = vmatprep.subr.bf16.mxu0 0
      %1841 = vmatpush1.bf16.msra.mxu0 0
      %1842 = vmatprep.subr.bf16.mxu0 0
      %1843 = vmatpush1.bf16.msra.mxu0 0
      %1844 = vmatprep.subr.bf16.mxu0 0
      %1845 = vmatpush1.bf16.msra.mxu0 0
      %1846 = vmatprep.subr.bf16.mxu0 0
      %1847 = vmatpush1.bf16.msra.mxu0 %v1830
      %1848 = vmatprep.subr.bf16.mxu0 0
      %1849 = vmatpush1.bf16.msra.mxu0 %v1829
      %1850 = vmatprep.subr.bf16.mxu0 0
      %1851 = vmatpush1.bf16.msra.mxu0 %v1828
      %1852 = vmatprep.subr.bf16.mxu0 0
      %1853 = vmatpush1.bf16.msra.mxu0 %v1827
      %1854 = vmatprep.subr.bf16.mxu0 0
      %1855 = vmatpush2.bf16.msra.mxu0 0
      %1856 = vmatprep.subr.bf16.mxu0 0
      %1857 = vmatpush2.bf16.msra.mxu0 0
      %1858 = vmatprep.subr.bf16.mxu0 0
      %1859 = vmatpush2.bf16.msra.mxu0 0
      %1860 = vmatprep.subr.bf16.mxu0 0
      %1861 = vmatpush2.bf16.msra.mxu0 0
      %1862 = vmatprep.subr.bf16.mxu0 0
      %1863 = vmatpush2.bf16.msra.mxu0 0
      %1864 = vmatprep.subr.bf16.mxu0 0
      %1865 = vmatpush2.bf16.msra.mxu0 0
      %1866 = vmatprep.subr.bf16.mxu0 0
      %1867 = vmatpush2.bf16.msra.mxu0 0
      %1868 = vmatprep.subr.bf16.mxu0 0
      %1869 = vmatpush2.bf16.msra.mxu0 0
      %1870 = vmatprep.mubr.bf16.mxu0 0
      %1871 = vmatmul.mubr.bf16.gmra.mxu0 %v1836
      %v1872 = vpop.f32.mrf.mxu0
      %v1873 = vadd.f32 0.0, %v1872
      %v1874 = vpop.f32.mrf.mxu0
      %v1875 = vpop.f32.mrf.mxu0
      %v1876 = vadd.f32 0.0, %v1875
      %v1877 = vpop.f32.mrf.mxu0
      %1878 = vdwg.mxu0
      %v1879 = vadd.f32 %v1756, %v1873
      %v1880 = vadd.f32 %v1757, %v1876
      %v1883 = vunpack.c.l.s4 1966171168
      %v1884 = vunpack.c.0.s8 %v1883
      %v1885 = vlaneseq
      %v1886 = vshrl.u32 %v1885, 7
      %v1887 = vsub.s32 %v1884, %v1886
      %v1888 = vrot.slane %v271, %v1887
      %v1889 = vcombine.high %v1888, %v1888
      %v1891 = vunpack.c.l.s4 1966171168
      %v1892 = vunpack.c.0.s8 %v1891
      %v1893 = vlaneseq
      %v1894 = vshrl.u32 %v1893, 7
      %v1895 = vsub.s32 %v1892, %v1894
      %v1896 = vrot.slane %v1888, %v1895
      %v1898 = vunpack.c.l.s4 1966171168
      %v1899 = vunpack.c.0.s8 %v1898
      %v1900 = vlaneseq
      %v1901 = vshrl.u32 %v1900, 7
      %v1902 = vsub.s32 %v1899, %v1901
      %v1903 = vrot.slane %v1889, %v1902
      %v1904 = vunpack.i.l.s16 %v1896
      %v1905 = vunpack.i.h.s16 %v1896
      %v1906 = vunpack.i.l.s16 %v1903
      %s1907 = scalar_lea.vmem %s1, 384
      %v1908 = vld [vmem:[%s1907] sm:$0xf]
      %v1909 = vld [vmem:[%s1907 + $0x4] sm:$0xf]
      %v1910 = vld [vmem:[%s1907 + $0x8] sm:$0xf]
      %v1911 = vld [vmem:[%s1907 + $0xc] sm:$0xf]
      %v1912 = vld [vmem:[%s1907 + $0x10] sm:$0xf]
      %v1913 = vld [vmem:[%s1907 + $0x14] sm:$0xf]
      %v1914 = vld [vmem:[%s1907 + $0x18] sm:$0xf]
      %v1915 = vld [vmem:[%s1907 + $0x1c] sm:$0xf]
      %v1916 = vpack.i.b16 %v1389, %v875
      %v1917 = vpack.i.b16 %v1905, %v1904
      %v1919 = vcombine.low %v887, %v1916
      %v1920 = vcombine.low %v1524, %v1917
      %v1922 = vunpack.c.l.s4 1966171168
      %v1923 = vunpack.c.0.s8 %v1922
      %v1924 = vlaneseq
      %v1925 = vshrl.u32 %v1924, 7
      %v1926 = vsub.s32 %v1923, %v1925
      %v1927 = vrot.slane %v1919, %v1926
      %v1929 = vunpack.c.l.s4 1966171168
      %v1930 = vunpack.c.0.s8 %v1929
      %v1931 = vlaneseq
      %v1932 = vshrl.u32 %v1931, 7
      %v1933 = vsub.s32 %v1930, %v1932
      %v1934 = vrot.slane %v1920, %v1933
      %v1936 = vunpack.c.l.s4 1966171168
      %v1937 = vunpack.c.0.s8 %v1936
      %v1938 = vlaneseq
      %v1939 = vshrl.u32 %v1938, 7
      %v1940 = vsub.s32 %v1937, %v1939
      %v1941 = vrot.slane %v1906, %v1940
      %v1942 = vcombine.low %v1927, %v1934
      %v1944 = vunpack.c.l.s4 1966171168
      %v1945 = vunpack.c.0.s8 %v1944
      %v1946 = vlaneseq
      %v1947 = vshrl.u32 %v1946, 7
      %v1948 = vsub.s32 %v1945, %v1947
      %v1949 = vrot.slane %v1942, %v1948
      %v1951 = vunpack.c.l.s4 1966171168
      %v1952 = vunpack.c.0.s8 %v1951
      %v1953 = vlaneseq
      %v1954 = vshrl.u32 %v1953, 7
      %v1955 = vsub.s32 %v1952, %v1954
      %v1956 = vrot.slane %v1941, %v1955
      %v1957 = vcombine.low %v1949, %v1956
      %v1966 = vunpack.c.l.b16 %v1908
      %v1967 = vunpack.c.l.b16 %v1909
      %v1968 = vunpack.c.l.b16 %v1910
      %v1969 = vunpack.c.l.b16 %v1911
      %v1970 = vunpack.c.l.b16 %v1912
      %v1971 = vunpack.c.l.b16 %v1913
      %v1972 = vunpack.c.l.b16 %v1914
      %v1973 = vunpack.c.l.b16 %v1915
      %v1974 = vpack.c.b16 %v1967, %v1966
      %v1975 = vpack.c.b16 %v1969, %v1968
      %v1976 = vpack.c.b16 %v1971, %v1970
      %v1977 = vpack.c.b16 %v1973, %v1972
      %v1983 = vsel %vm438, %v1957, 0
      %1985 = vmatprep.subr.bf16.mxu0 0
      %1986 = vmatpush1.bf16.msra.mxu0 0
      %1987 = vmatprep.subr.bf16.mxu0 0
      %1988 = vmatpush1.bf16.msra.mxu0 0
      %1989 = vmatprep.subr.bf16.mxu0 0
      %1990 = vmatpush1.bf16.msra.mxu0 0
      %1991 = vmatprep.subr.bf16.mxu0 0
      %1992 = vmatpush1.bf16.msra.mxu0 0
      %1993 = vmatprep.subr.bf16.mxu0 0
      %1994 = vmatpush1.bf16.msra.mxu0 %v1977
      %1995 = vmatprep.subr.bf16.mxu0 0
      %1996 = vmatpush1.bf16.msra.mxu0 %v1976
      %1997 = vmatprep.subr.bf16.mxu0 0
      %1998 = vmatpush1.bf16.msra.mxu0 %v1975
      %1999 = vmatprep.subr.bf16.mxu0 0
      %2000 = vmatpush1.bf16.msra.mxu0 %v1974
      %2001 = vmatprep.subr.bf16.mxu0 0
      %2002 = vmatpush2.bf16.msra.mxu0 0
      %2003 = vmatprep.subr.bf16.mxu0 0
      %2004 = vmatpush2.bf16.msra.mxu0 0
      %2005 = vmatprep.subr.bf16.mxu0 0
      %2006 = vmatpush2.bf16.msra.mxu0 0
      %2007 = vmatprep.subr.bf16.mxu0 0
      %2008 = vmatpush2.bf16.msra.mxu0 0
      %2009 = vmatprep.subr.bf16.mxu0 0
      %2010 = vmatpush2.bf16.msra.mxu0 0
      %2011 = vmatprep.subr.bf16.mxu0 0
      %2012 = vmatpush2.bf16.msra.mxu0 0
      %2013 = vmatprep.subr.bf16.mxu0 0
      %2014 = vmatpush2.bf16.msra.mxu0 0
      %2015 = vmatprep.subr.bf16.mxu0 0
      %2016 = vmatpush2.bf16.msra.mxu0 0
      %2017 = vmatprep.mubr.bf16.mxu0 0
      %2018 = vmatmul.mubr.bf16.gmra.mxu0 %v1983
      %v2019 = vpop.f32.mrf.mxu0
      %v2020 = vadd.f32 0.0, %v2019
      %v2021 = vpop.f32.mrf.mxu0
      %v2022 = vpop.f32.mrf.mxu0
      %v2023 = vadd.f32 0.0, %v2022
      %v2024 = vpop.f32.mrf.mxu0
      %2025 = vdwg.mxu0
      %v2026 = vadd.f32 %v1879, %v2020
      %v2027 = vadd.f32 %v1880, %v2023
      %v2028 = vunpack.i.h.s16 %v1903
      %s2029 = scalar_lea.vmem %s1, 416
      %v2030 = vld [vmem:[%s2029] sm:$0xf]
      %v2031 = vld [vmem:[%s2029 + $0x4] sm:$0xf]
      %v2032 = vld [vmem:[%s2029 + $0x8] sm:$0xf]
      %v2033 = vld [vmem:[%s2029 + $0xc] sm:$0xf]
      %v2034 = vld [vmem:[%s2029 + $0x10] sm:$0xf]
      %v2035 = vld [vmem:[%s2029 + $0x14] sm:$0xf]
      %v2036 = vld [vmem:[%s2029 + $0x18] sm:$0xf]
      %v2037 = vld [vmem:[%s2029 + $0x1c] sm:$0xf]
      %v2038 = vpack.i.b16 %v1390, %v998
      %v2039 = vpack.i.b16 %v1906, %v1905
      %v2041 = vcombine.low %v1009, %v2038
      %v2042 = vcombine.low %v1647, %v2039
      %v2044 = vunpack.c.l.s4 1966171168
      %v2045 = vunpack.c.0.s8 %v2044
      %v2046 = vlaneseq
      %v2047 = vshrl.u32 %v2046, 7
      %v2048 = vsub.s32 %v2045, %v2047
      %v2049 = vrot.slane %v2041, %v2048
      %v2051 = vunpack.c.l.s4 1966171168
      %v2052 = vunpack.c.0.s8 %v2051
      %v2053 = vlaneseq
      %v2054 = vshrl.u32 %v2053, 7
      %v2055 = vsub.s32 %v2052, %v2054
      %v2056 = vrot.slane %v2042, %v2055
      %v2058 = vunpack.c.l.s4 1966171168
      %v2059 = vunpack.c.0.s8 %v2058
      %v2060 = vlaneseq
      %v2061 = vshrl.u32 %v2060, 7
      %v2062 = vsub.s32 %v2059, %v2061
      %v2063 = vrot.slane %v2028, %v2062
      %v2064 = vcombine.low %v2049, %v2056
      %v2066 = vunpack.c.l.s4 1966171168
      %v2067 = vunpack.c.0.s8 %v2066
      %v2068 = vlaneseq
      %v2069 = vshrl.u32 %v2068, 7
      %v2070 = vsub.s32 %v2067, %v2069
      %v2071 = vrot.slane %v2064, %v2070
      %v2073 = vunpack.c.l.s4 1966171168
      %v2074 = vunpack.c.0.s8 %v2073
      %v2075 = vlaneseq
      %v2076 = vshrl.u32 %v2075, 7
      %v2077 = vsub.s32 %v2074, %v2076
      %v2078 = vrot.slane %v2063, %v2077
      %v2079 = vcombine.low %v2071, %v2078
      %v2088 = vunpack.c.l.b16 %v2030
      %v2089 = vunpack.c.l.b16 %v2031
      %v2090 = vunpack.c.l.b16 %v2032
      %v2091 = vunpack.c.l.b16 %v2033
      %v2092 = vunpack.c.l.b16 %v2034
      %v2093 = vunpack.c.l.b16 %v2035
      %v2094 = vunpack.c.l.b16 %v2036
      %v2095 = vunpack.c.l.b16 %v2037
      %v2096 = vpack.c.b16 %v2089, %v2088
      %v2097 = vpack.c.b16 %v2091, %v2090
      %v2098 = vpack.c.b16 %v2093, %v2092
      %v2099 = vpack.c.b16 %v2095, %v2094
      %v2105 = vsel %vm438, %v2079, 0
      %2107 = vmatprep.subr.bf16.mxu0 0
      %2108 = vmatpush1.bf16.msra.mxu0 0
      %2109 = vmatprep.subr.bf16.mxu0 0
      %2110 = vmatpush1.bf16.msra.mxu0 0
      %2111 = vmatprep.subr.bf16.mxu0 0
      %2112 = vmatpush1.bf16.msra.mxu0 0
      %2113 = vmatprep.subr.bf16.mxu0 0
      %2114 = vmatpush1.bf16.msra.mxu0 0
      %2115 = vmatprep.subr.bf16.mxu0 0
      %2116 = vmatpush1.bf16.msra.mxu0 %v2099
      %2117 = vmatprep.subr.bf16.mxu0 0
      %2118 = vmatpush1.bf16.msra.mxu0 %v2098
      %2119 = vmatprep.subr.bf16.mxu0 0
      %2120 = vmatpush1.bf16.msra.mxu0 %v2097
      %2121 = vmatprep.subr.bf16.mxu0 0
      %2122 = vmatpush1.bf16.msra.mxu0 %v2096
      %2123 = vmatprep.subr.bf16.mxu0 0
      %2124 = vmatpush2.bf16.msra.mxu0 0
      %2125 = vmatprep.subr.bf16.mxu0 0
      %2126 = vmatpush2.bf16.msra.mxu0 0
      %2127 = vmatprep.subr.bf16.mxu0 0
      %2128 = vmatpush2.bf16.msra.mxu0 0
      %2129 = vmatprep.subr.bf16.mxu0 0
      %2130 = vmatpush2.bf16.msra.mxu0 0
      %2131 = vmatprep.subr.bf16.mxu0 0
      %2132 = vmatpush2.bf16.msra.mxu0 0
      %2133 = vmatprep.subr.bf16.mxu0 0
      %2134 = vmatpush2.bf16.msra.mxu0 0
      %2135 = vmatprep.subr.bf16.mxu0 0
      %2136 = vmatpush2.bf16.msra.mxu0 0
      %2137 = vmatprep.subr.bf16.mxu0 0
      %2138 = vmatpush2.bf16.msra.mxu0 0
      %2139 = vmatprep.mubr.bf16.mxu0 0
      %2140 = vmatmul.mubr.bf16.gmra.mxu0 %v2105
      %v2141 = vpop.f32.mrf.mxu0
      %v2142 = vadd.f32 0.0, %v2141
      %v2143 = vpop.f32.mrf.mxu0
      %v2144 = vpop.f32.mrf.mxu0
      %v2145 = vadd.f32 0.0, %v2144
      %v2146 = vpop.f32.mrf.mxu0
      %2147 = vdwg.mxu0
      %v2148 = vadd.f32 %v2026, %v2142
      %v2149 = vadd.f32 %v2027, %v2145
      %v2150 = vcombine.high %v1896, %v1896
      %v2151 = vunpack.i.l.s16 %v2150
      %s2152 = scalar_lea.vmem %s1, 448
      %v2153 = vld [vmem:[%s2152] sm:$0xf]
      %v2154 = vld [vmem:[%s2152 + $0x4] sm:$0xf]
      %v2155 = vld [vmem:[%s2152 + $0x8] sm:$0xf]
      %v2156 = vld [vmem:[%s2152 + $0xc] sm:$0xf]
      %v2157 = vld [vmem:[%s2152 + $0x10] sm:$0xf]
      %v2158 = vld [vmem:[%s2152 + $0x14] sm:$0xf]
      %v2159 = vld [vmem:[%s2152 + $0x18] sm:$0xf]
      %v2160 = vld [vmem:[%s2152 + $0x1c] sm:$0xf]
      %v2161 = vpack.i.b16 %v1391, %v1121
      %v2162 = vpack.i.b16 %v2028, %v1906
      %v2164 = vcombine.low %v1132, %v2161
      %v2165 = vcombine.low %v1770, %v2162
      %v2167 = vunpack.c.l.s4 1966171168
      %v2168 = vunpack.c.0.s8 %v2167
      %v2169 = vlaneseq
      %v2170 = vshrl.u32 %v2169, 7
      %v2171 = vsub.s32 %v2168, %v2170
      %v2172 = vrot.slane %v2164, %v2171
      %v2174 = vunpack.c.l.s4 1966171168
      %v2175 = vunpack.c.0.s8 %v2174
      %v2176 = vlaneseq
      %v2177 = vshrl.u32 %v2176, 7
      %v2178 = vsub.s32 %v2175, %v2177
      %v2179 = vrot.slane %v2165, %v2178
      %v2181 = vunpack.c.l.s4 1966171168
      %v2182 = vunpack.c.0.s8 %v2181
      %v2183 = vlaneseq
      %v2184 = vshrl.u32 %v2183, 7
      %v2185 = vsub.s32 %v2182, %v2184
      %v2186 = vrot.slane %v2151, %v2185
      %v2187 = vcombine.low %v2172, %v2179
      %v2189 = vunpack.c.l.s4 1966171168
      %v2190 = vunpack.c.0.s8 %v2189
      %v2191 = vlaneseq
      %v2192 = vshrl.u32 %v2191, 7
      %v2193 = vsub.s32 %v2190, %v2192
      %v2194 = vrot.slane %v2187, %v2193
      %v2196 = vunpack.c.l.s4 1966171168
      %v2197 = vunpack.c.0.s8 %v2196
      %v2198 = vlaneseq
      %v2199 = vshrl.u32 %v2198, 7
      %v2200 = vsub.s32 %v2197, %v2199
      %v2201 = vrot.slane %v2186, %v2200
      %v2202 = vcombine.low %v2194, %v2201
      %v2211 = vunpack.c.l.b16 %v2153
      %v2212 = vunpack.c.l.b16 %v2154
      %v2213 = vunpack.c.l.b16 %v2155
      %v2214 = vunpack.c.l.b16 %v2156
      %v2215 = vunpack.c.l.b16 %v2157
      %v2216 = vunpack.c.l.b16 %v2158
      %v2217 = vunpack.c.l.b16 %v2159
      %v2218 = vunpack.c.l.b16 %v2160
      %v2219 = vpack.c.b16 %v2212, %v2211
      %v2220 = vpack.c.b16 %v2214, %v2213
      %v2221 = vpack.c.b16 %v2216, %v2215
      %v2222 = vpack.c.b16 %v2218, %v2217
      %v2228 = vsel %vm438, %v2202, 0
      %2230 = vmatprep.subr.bf16.mxu0 0
      %2231 = vmatpush1.bf16.msra.mxu0 0
      %2232 = vmatprep.subr.bf16.mxu0 0
      %2233 = vmatpush1.bf16.msra.mxu0 0
      %2234 = vmatprep.subr.bf16.mxu0 0
      %2235 = vmatpush1.bf16.msra.mxu0 0
      %2236 = vmatprep.subr.bf16.mxu0 0
      %2237 = vmatpush1.bf16.msra.mxu0 0
      %2238 = vmatprep.subr.bf16.mxu0 0
      %2239 = vmatpush1.bf16.msra.mxu0 %v2222
      %2240 = vmatprep.subr.bf16.mxu0 0
      %2241 = vmatpush1.bf16.msra.mxu0 %v2221
      %2242 = vmatprep.subr.bf16.mxu0 0
      %2243 = vmatpush1.bf16.msra.mxu0 %v2220
      %2244 = vmatprep.subr.bf16.mxu0 0
      %2245 = vmatpush1.bf16.msra.mxu0 %v2219
      %2246 = vmatprep.subr.bf16.mxu0 0
      %2247 = vmatpush2.bf16.msra.mxu0 0
      %2248 = vmatprep.subr.bf16.mxu0 0
      %2249 = vmatpush2.bf16.msra.mxu0 0
      %2250 = vmatprep.subr.bf16.mxu0 0
      %2251 = vmatpush2.bf16.msra.mxu0 0
      %2252 = vmatprep.subr.bf16.mxu0 0
      %2253 = vmatpush2.bf16.msra.mxu0 0
      %2254 = vmatprep.subr.bf16.mxu0 0
      %2255 = vmatpush2.bf16.msra.mxu0 0
      %2256 = vmatprep.subr.bf16.mxu0 0
      %2257 = vmatpush2.bf16.msra.mxu0 0
      %2258 = vmatprep.subr.bf16.mxu0 0
      %2259 = vmatpush2.bf16.msra.mxu0 0
      %2260 = vmatprep.subr.bf16.mxu0 0
      %2261 = vmatpush2.bf16.msra.mxu0 0
      %2262 = vmatprep.mubr.bf16.mxu0 0
      %2263 = vmatmul.mubr.bf16.gmra.mxu0 %v2228
      %v2264 = vpop.f32.mrf.mxu0
      %v2265 = vadd.f32 0.0, %v2264
      %v2266 = vpop.f32.mrf.mxu0
      %v2267 = vpop.f32.mrf.mxu0
      %v2268 = vadd.f32 0.0, %v2267
      %v2269 = vpop.f32.mrf.mxu0
      %2270 = vdwg.mxu0
      %v2271 = vadd.f32 %v2148, %v2265
      %v2272 = vadd.f32 %v2149, %v2268
      %v2273 = vunpack.i.h.s16 %v2150
      %s2274 = scalar_lea.vmem %s1, 480
      %v2275 = vld [vmem:[%s2274] sm:$0xf]
      %v2276 = vld [vmem:[%s2274 + $0x4] sm:$0xf]
      %v2277 = vld [vmem:[%s2274 + $0x8] sm:$0xf]
      %v2278 = vld [vmem:[%s2274 + $0xc] sm:$0xf]
      %v2279 = vld [vmem:[%s2274 + $0x10] sm:$0xf]
      %v2280 = vld [vmem:[%s2274 + $0x14] sm:$0xf]
      %v2281 = vld [vmem:[%s2274 + $0x18] sm:$0xf]
      %v2282 = vld [vmem:[%s2274 + $0x1c] sm:$0xf]
      %v2283 = vpack.i.b16 %v1513, %v1243
      %v2284 = vpack.i.b16 %v1758, %v1636
      %v2285 = vpack.i.b16 %v2151, %v2028
      %v2287 = vcombine.low %v1255, %v2283
      %v2288 = vcombine.low %v2284, %v2285
      %v2290 = vunpack.c.l.s4 1966171168
      %v2291 = vunpack.c.0.s8 %v2290
      %v2292 = vlaneseq
      %v2293 = vshrl.u32 %v2292, 7
      %v2294 = vsub.s32 %v2291, %v2293
      %v2295 = vrot.slane %v2287, %v2294
      %v2297 = vunpack.c.l.s4 1966171168
      %v2298 = vunpack.c.0.s8 %v2297
      %v2299 = vlaneseq
      %v2300 = vshrl.u32 %v2299, 7
      %v2301 = vsub.s32 %v2298, %v2300
      %v2302 = vrot.slane %v2288, %v2301
      %v2304 = vunpack.c.l.s4 1966171168
      %v2305 = vunpack.c.0.s8 %v2304
      %v2306 = vlaneseq
      %v2307 = vshrl.u32 %v2306, 7
      %v2308 = vsub.s32 %v2305, %v2307
      %v2309 = vrot.slane %v2273, %v2308
      %v2310 = vcombine.low %v2295, %v2302
      %v2312 = vunpack.c.l.s4 1966171168
      %v2313 = vunpack.c.0.s8 %v2312
      %v2314 = vlaneseq
      %v2315 = vshrl.u32 %v2314, 7
      %v2316 = vsub.s32 %v2313, %v2315
      %v2317 = vrot.slane %v2310, %v2316
      %v2319 = vunpack.c.l.s4 1966171168
      %v2320 = vunpack.c.0.s8 %v2319
      %v2321 = vlaneseq
      %v2322 = vshrl.u32 %v2321, 7
      %v2323 = vsub.s32 %v2320, %v2322
      %v2324 = vrot.slane %v2309, %v2323
      %v2325 = vcombine.low %v2317, %v2324
      %v2334 = vunpack.c.l.b16 %v2275
      %v2335 = vunpack.c.l.b16 %v2276
      %v2336 = vunpack.c.l.b16 %v2277
      %v2337 = vunpack.c.l.b16 %v2278
      %v2338 = vunpack.c.l.b16 %v2279
      %v2339 = vunpack.c.l.b16 %v2280
      %v2340 = vunpack.c.l.b16 %v2281
      %v2341 = vunpack.c.l.b16 %v2282
      %v2342 = vpack.c.b16 %v2335, %v2334
      %v2343 = vpack.c.b16 %v2337, %v2336
      %v2344 = vpack.c.b16 %v2339, %v2338
      %v2345 = vpack.c.b16 %v2341, %v2340
      %v2351 = vsel %vm438, %v2325, 0
      %2353 = vmatprep.subr.bf16.mxu0 0
      %2354 = vmatpush1.bf16.msra.mxu0 0
      %2355 = vmatprep.subr.bf16.mxu0 0
      %2356 = vmatpush1.bf16.msra.mxu0 0
      %2357 = vmatprep.subr.bf16.mxu0 0
      %2358 = vmatpush1.bf16.msra.mxu0 0
      %2359 = vmatprep.subr.bf16.mxu0 0
      %2360 = vmatpush1.bf16.msra.mxu0 0
      %2361 = vmatprep.subr.bf16.mxu0 0
      %2362 = vmatpush1.bf16.msra.mxu0 %v2345
      %2363 = vmatprep.subr.bf16.mxu0 0
      %2364 = vmatpush1.bf16.msra.mxu0 %v2344
      %2365 = vmatprep.subr.bf16.mxu0 0
      %2366 = vmatpush1.bf16.msra.mxu0 %v2343
      %2367 = vmatprep.subr.bf16.mxu0 0
      %2368 = vmatpush1.bf16.msra.mxu0 %v2342
      %2369 = vmatprep.subr.bf16.mxu0 0
      %2370 = vmatpush2.bf16.msra.mxu0 0
      %2371 = vmatprep.subr.bf16.mxu0 0
      %2372 = vmatpush2.bf16.msra.mxu0 0
      %2373 = vmatprep.subr.bf16.mxu0 0
      %2374 = vmatpush2.bf16.msra.mxu0 0
      %2375 = vmatprep.subr.bf16.mxu0 0
      %2376 = vmatpush2.bf16.msra.mxu0 0
      %2377 = vmatprep.subr.bf16.mxu0 0
      %2378 = vmatpush2.bf16.msra.mxu0 0
      %2379 = vmatprep.subr.bf16.mxu0 0
      %2380 = vmatpush2.bf16.msra.mxu0 0
      %2381 = vmatprep.subr.bf16.mxu0 0
      %2382 = vmatpush2.bf16.msra.mxu0 0
      %2383 = vmatprep.subr.bf16.mxu0 0
      %2384 = vmatpush2.bf16.msra.mxu0 0
      %2385 = vmatprep.mubr.bf16.mxu0 0
      %2386 = vmatmul.mubr.bf16.gmra.mxu0 %v2351
      %v2387 = vpop.f32.mrf.mxu0
      %v2388 = vadd.f32 0.0, %v2387
      %v2389 = vpop.f32.mrf.mxu0
      %v2390 = vpop.f32.mrf.mxu0
      %v2391 = vadd.f32 0.0, %v2390
      %v2392 = vpop.f32.mrf.mxu0
      %2393 = vdwg.mxu0
      %v2394 = vadd.f32 %v2271, %v2388
      %v2395 = vadd.f32 %v2272, %v2391
      %v2396 = vld [vmem:[%s2] sm:$0x1]
      %v2398 = vlaneseq
      %v2399 = vshrl.u32 %v2398, 7
      %v2400 = vsub.s32 0, %v2399
      %v2401 = vrot.slane %v2396, %v2400
      %v2403 = vadd.f32 %v2394, %v2401
      %v2404 = vadd.f32 %v2395, %v2401
      %v2405 = vpack.c.bf16 %v2404, %v2403
      %v2407 = vunpack.c.l.b16 %v2405
      %v2408 = vunpack.c.h.b16 %v2405
      %v2409 = vpack.c.b16 %v2407, %v2407
      %v2410 = vpack.c.b16 %v2408, %v2408
      %2413 = vst [vmem:[%s226] sm:$0xf] %v2409
      %vm2414 = vcmask 1040384
      %vm2415 = vsmask.f32 256
      %vm2416 = vmand %vm2414, %vm2415
      %v2417 = vld [vmem:[%s226 + $0x4] sm:$0x1]
      %v2418 = vsel %vm2416, %v2410, %v2417
      %2419 = vst [vmem:[%s226 + $0x4] sm:$0x1] %v2418
      %p2420 = scmp.eq.s32.totalorder %s21, 0
      // Predicated region
      $region33: #{_lambda_.8} parent=31 // pred_check
        %p2421 = pneg %p2420
      $region34: #{_lambda_.8} parent=31 // pred_check_branch
        %2423 = sbr.rel (%p2421) target = $region36
      $region35: #{_lambda_.8} parent=31 // pred_region
        %2424 = vst [vmem:[%s231] sm:$0x3] 0.0
      $region36: #{_lambda_.8} parent=31 // pred_fallthru
        _
      %vm2425 = vcmask 1040384
      %v2426 = vsel %vm2425, %v2404, 0.0
      %v2427 = vadd.f32 %v2403, %v2426
      %v2428 = vrot.slane %v2427, 4
      %v2429 = vadd.f32 %v2427, %v2428
      %v2430 = vrot.slane %v2429, 2
      %v2431 = vadd.f32 %v2429, %v2430
      %v2432 = vrot.slane %v2431, 1
      %v2433 = vadd.f32 %v2431, %v2432
      %v2434 = vmul.f32 %v2403, %v2403
      %v2435 = vmul.f32 %v2404, %v2404
      %v2436 = vsel %vm2425, %v2435, 0.0
      %v2437 = vadd.f32 %v2434, %v2436
      %v2438 = vrot.slane %v2437, 4
      %v2439 = vadd.f32 %v2437, %v2438
      %v2440 = vrot.slane %v2439, 2
      %v2441 = vadd.f32 %v2439, %v2440
      %v2442 = vrot.slane %v2441, 1
      %v2443 = vadd.f32 %v2441, %v2442
      %v2444 = vld [vmem:[%s231] sm:$0x3]
      %v2445 = vsel %vm2425, %v2433, %v2443
      %v2446 = vadd.f32 %v2444, %v2445
      %2447 = vst [vmem:[%s231] sm:$0x3] %v2446
      %s2448 = smul.u32 2, %s21
      %p2449 = scmp.lt.s32.totalorder %s20, 1
      %s2450 = scalar_select %p2449, %s20, 1
      %p2451 = scmp.lt.s32.totalorder %s2448, 1
      %s2452 = scalar_select %p2451, %s2448, 1
      %s2453 = smul.addr %s2450, 2
      %s2454 = sadd.s32 %s2452, %s2453
      %s2455 = smul.addr %s2454, 4
      %s2456 = scalar_lea.vmem %s3, %s2455
      %p2457 = scmp.lt.s32.totalorder %s20, 1
      %s2458 = scalar_select %p2457, %s20, 1
      %s2459 = smul.addr %s2458, 2
      %s2460 = scalar_lea.vmem %s4, %s2459
      // Predicated region
      $region37: #{_lambda_.8} parent=31 // pred_check
        %p2461 = pneg %p116
      $region38: #{_lambda_.8} parent=31 // pred_check_branch
        %2463 = sbr.rel (%p2461) target = $region40
      $region39: #{_lambda_.8} parent=31 // pred_region
        %s2464 = smul.u32 2, %s21
      $region40: #{_lambda_.8} parent=31 // pred_fallthru
        _
      // Predicated region
      $region41: #{_lambda_.8} parent=31 // pred_check
        %p2465 = pneg %p142
      $region42: #{_lambda_.8} parent=31 // pred_check_branch
        %2467 = sbr.rel (%p2465) target = $region44
      $region43: #{_lambda_.8} parent=31 // pred_region
        _
      $region44: #{_lambda_.8} parent=31 // pred_fallthru
        _
    $region32: #{_lambda_.8} parent=5 // pred_fallthru
      _
    %p2468 = scmp.le.s32.totalorder 2, %s11
    // Predicated region
    $region45: #{_lambda_.8} parent=5 // pred_check
      %p2469 = pneg %p2468
    $region46: #{_lambda_.8} parent=5 // pred_check_branch
      %2471 = sbr.rel (%p2469) target = $region48
    $region47: #{_lambda_.8} parent=5 // pred_region
      %s2472 = ssub.s32 %s11, 2
      // Predicated region
      $region49: #{_lambda_.8} parent=47 // pred_check
        %p2473 = pneg %p122
      $region50: #{_lambda_.8} parent=47 // pred_check_branch
        %2475 = sbr.rel (%p2473) target = $region52
      $region51: #{_lambda_.8} parent=47 // pred_region
        %s2476 = smul.u32 2, %s23
        %p2477 = scmp.lt.s32.totalorder %s22, 1
        %s2478 = scalar_select %p2477, %s22, 1
        %p2479 = scmp.lt.s32.totalorder %s2476, 1
        %s2480 = scalar_select %p2479, %s2476, 1
        %s2481 = smul.addr %s2478, 2
        %s2482 = sadd.s32 %s2480, %s2481
        %s2483 = smul.addr %s2482, 4
        %s2484 = scalar_lea.vmem %s3, %s2483
      $region52: #{_lambda_.8} parent=47 // pred_fallthru
        _
      // Predicated region
      $region53: #{_lambda_.8} parent=47 // pred_check
        %p2485 = pneg %p148
      $region54: #{_lambda_.8} parent=47 // pred_check_branch
        %2487 = sbr.rel (%p2485) target = $region56
      $region55: #{_lambda_.8} parent=47 // pred_region
        %p2488 = scmp.lt.s32.totalorder %s22, 1
        %s2489 = scalar_select %p2488, %s22, 1
        %s2490 = smul.addr %s2489, 2
        %s2491 = scalar_lea.vmem %s4, %s2490
      $region56: #{_lambda_.8} parent=47 // pred_fallthru
        _
    $region48: #{_lambda_.8} parent=5 // pred_fallthru
      _
  $region6: #{_lambda_.8} parent=0 // loop_footer
    %s15 = sadd.s32 1, %s11
  $region7: #{_lambda_.8} parent=0 // loop_footer_branch
    %10 = sbr.rel target = $region3
  $region8: #{_lambda_.8} parent=0 // loop_exit
    _

// kernel: _lambda_.9
$region0: #{_lambda_.9}
  #allocation0 [shape = 'u32[]', space=smem, size = 0x4, offset = 0x4, fixed_abs, tag = 'smem constant byte address 0x4 - core index']
  #allocation1 [shape = 'u32[144,128]{1,0:T(1,128)}', space=vmem, size = 0x12000, scoped, tag = 'internal scratch']
  %s0 = inlined_call_operand.vmem [shape: bf16[2,5,5,128], index: 0, kind: input, shape index: {}]
  %s1 = inlined_call_operand.vmem [shape: bf16[16,128,128], index: 1, kind: input, shape index: {}]
  %s2 = inlined_call_operand.vmem [shape: f32[1,128], index: 2, kind: input, shape index: {}]
  %s3 = inlined_call_operand.vmem [shape: f32[2,4,128], index: 3, kind: output, shape index: {}]
  %s4 = sld [smem:[#allocation0]]
  $region45: #{_lambda_.9} parent=0
    _
  %s6 = ssub.s32 1, %s4
  %s7 = scalar_select 0, %s6, %s4
  loop: start=0, step=1, limit=4
  $region2: #{_lambda_.9} parent=0 // loop_pre_header
    _
  $region3: #{_lambda_.9} parent=0 // loop_header
    %s9 = sphi 0, %s13
    %p10 = scmp.ge.s32.totalorder %s9, 4
    %s16 = sphi 0, %s28
    %s17 = sphi 0, %s24
    %s18 = sphi 0, %s16
    %s19 = sphi 0, %s17
    %s20 = sphi 0, %s18
    %s21 = sphi 0, %s19
    %s31 = sphi 0, %s33
    %s34 = sphi 0, %s31
    %s35 = sphi 0, %s34
    %s51 = sphi 0, %s35
    %s55 = sphi 0, %s55
    %s57 = sphi 0, %s55
    %s58 = sphi 0, %s57
    %s72 = sphi 0, %s58
    %s76 = sphi 0, %s76
    %s78 = sphi 0, %s76
    %s79 = sphi 0, %s78
    %s93 = sphi 0, %s79
    %s101 = sphi 0, %s103
    %s104 = sphi 0, %s101
    %s105 = sphi 0, %s104
    %s121 = sphi 0, %s105
  $region4: #{_lambda_.9} parent=0 // loop_header_branch
    %12 = sbr.rel (%p10) target = $region8
  $region5: #{_lambda_.9} parent=0 // loop_body
    %s14 = ssub.s32 %s9, 1
    %s15 = ssub.s32 %s9, 2
    %s22 = sadd.s32 1, %s17
    %p23 = scmp.ge.s32.totalorder %s22, 1
    %s24 = scalar_select %p23, 0, %s22
    %s25 = sadd.s32 1, %s16
    %s26 = scalar_select %p23, %s25, %s16
    %p27 = scmp.ge.s32.totalorder %s26, 2
    %s28 = scalar_select %p27, 0, %s26
    %s29 = ssub.s32 %s16, %s28
    %p30 = scmp.eq.s32.totalorder %s29, 0
    %s32 = sadd.s32 %s31, 1
    %s33 = scalar_select %p30, %s31, %s32
    %p36 = pneg %p30
    %p37 = scmp.eq.s32.totalorder %s9, 1
    %p38 = por %p36, %p37
    %p39 = scmp.ne.s32.totalorder %s31, %s34
    %p40 = scmp.eq.s32.totalorder %s9, 0
    %p41 = por %p39, %p40
    %p42 = scmp.ne.s32.totalorder %s31, %s34
    %p43 = scmp.eq.s32.totalorder %s14, 1
    %p44 = por %p42, %p43
    %p45 = scmp.ne.s32.totalorder %s34, %s35
    %p46 = scmp.eq.s32.totalorder %s14, 0
    %p47 = por %p45, %p46
    %p48 = scmp.ne.s32.totalorder %s34, %s35
    %p49 = scmp.eq.s32.totalorder %s15, 1
    %p50 = por %p48, %p49
    %p52 = scmp.ne.s32.totalorder %s35, %s51
    %p53 = scmp.eq.s32.totalorder %s15, 0
    %p54 = por %p52, %p53
    %s56 = sadd.s32 %s55, 1
    %p59 = scmp.eq.s32.totalorder %s9, 1
    %p60 = scmp.ne.s32.totalorder %s55, %s57
    %p61 = scmp.eq.s32.totalorder %s9, 0
    %p62 = por %p60, %p61
    %p63 = scmp.ne.s32.totalorder %s55, %s57
    %p64 = scmp.eq.s32.totalorder %s14, 1
    %p65 = por %p63, %p64
    %p66 = scmp.ne.s32.totalorder %s57, %s58
    %p67 = scmp.eq.s32.totalorder %s14, 0
    %p68 = por %p66, %p67
    %p69 = scmp.ne.s32.totalorder %s57, %s58
    %p70 = scmp.eq.s32.totalorder %s15, 1
    %p71 = por %p69, %p70
    %p73 = scmp.ne.s32.totalorder %s58, %s72
    %p74 = scmp.eq.s32.totalorder %s15, 0
    %p75 = por %p73, %p74
    %s77 = sadd.s32 %s76, 1
    %p80 = scmp.eq.s32.totalorder %s9, 1
    %p81 = scmp.ne.s32.totalorder %s76, %s78
    %p82 = scmp.eq.s32.totalorder %s9, 0
    %p83 = por %p81, %p82
    %p84 = scmp.ne.s32.totalorder %s76, %s78
    %p85 = scmp.eq.s32.totalorder %s14, 1
    %p86 = por %p84, %p85
    %p87 = scmp.ne.s32.totalorder %s78, %s79
    %p88 = scmp.eq.s32.totalorder %s14, 0
    %p89 = por %p87, %p88
    %p90 = scmp.ne.s32.totalorder %s78, %s79
    %p91 = scmp.eq.s32.totalorder %s15, 1
    %p92 = por %p90, %p91
    %p94 = scmp.ne.s32.totalorder %s79, %s93
    %p95 = scmp.eq.s32.totalorder %s15, 0
    %p96 = por %p94, %p95
    %s97 = ssub.s32 %s16, %s28
    %s98 = ssub.s32 %s17, %s24
    %s99 = sor.u32 %s97, %s98
    %p100 = scmp.eq.s32.totalorder %s99, 0
    %s102 = sadd.s32 %s101, 1
    %s103 = scalar_select %p100, %s101, %s102
    %p106 = pneg %p100
    %p107 = scmp.eq.s32.totalorder %s9, 1
    %p108 = por %p106, %p107
    %p109 = scmp.ne.s32.totalorder %s101, %s104
    %p110 = scmp.eq.s32.totalorder %s9, 0
    %p111 = por %p109, %p110
    %p112 = scmp.ne.s32.totalorder %s101, %s104
    %p113 = scmp.eq.s32.totalorder %s14, 1
    %p114 = por %p112, %p113
    %p115 = scmp.ne.s32.totalorder %s104, %s105
    %p116 = scmp.eq.s32.totalorder %s14, 0
    %p117 = por %p115, %p116
    %p118 = scmp.ne.s32.totalorder %s104, %s105
    %p119 = scmp.eq.s32.totalorder %s15, 1
    %p120 = por %p118, %p119
    %p122 = scmp.ne.s32.totalorder %s105, %s121
    %p123 = scmp.eq.s32.totalorder %s15, 0
    %p124 = por %p122, %p123
    %p125 = scmp.le.s32.totalorder 1, %s9
    %p126 = scmp.lt.s32.totalorder %s9, 3
    %p127 = pnand %p125, %p126
    %p128 = pneg %p127
    // Predicated region
    $region9: #{_lambda_.9} parent=5 // pred_check
      _
    $region10: #{_lambda_.9} parent=5 // pred_check_branch
      %130 = sbr.rel (%p127) target = $region12
    $region11: #{_lambda_.9} parent=5 // pred_region
      %s131 = ssub.s32 %s9, 1
      // Predicated region
      $region13: #{_lambda_.9} parent=11 // pred_check
        %p132 = pneg %p68
      $region14: #{_lambda_.9} parent=11 // pred_check_branch
        %134 = sbr.rel (%p132) target = $region16
      $region15: #{_lambda_.9} parent=11 // pred_region
        _
      $region16: #{_lambda_.9} parent=11 // pred_fallthru
        _
      // Predicated region
      $region17: #{_lambda_.9} parent=11 // pred_check
        %p135 = pneg %p89
      $region18: #{_lambda_.9} parent=11 // pred_check_branch
        %137 = sbr.rel (%p135) target = $region20
      $region19: #{_lambda_.9} parent=11 // pred_region
        _
      $region20: #{_lambda_.9} parent=11 // pred_fallthru
        _
    $region12: #{_lambda_.9} parent=5 // pred_fallthru
      _
    %p138 = scmp.lt.s32.totalorder %s9, 2
    // Predicated region
    $region21: #{_lambda_.9} parent=5 // pred_check
      %p139 = pneg %p138
    $region22: #{_lambda_.9} parent=5 // pred_check_branch
      %141 = sbr.rel (%p139) target = $region24
    $region23: #{_lambda_.9} parent=5 // pred_region
      // Predicated region
      $region25: #{_lambda_.9} parent=23 // pred_check
        %p142 = pneg %p41
      $region26: #{_lambda_.9} parent=23 // pred_check_branch
        %144 = sbr.rel (%p142) target = $region28
      $region27: #{_lambda_.9} parent=23 // pred_region
        %p145 = scmp.lt.s32.totalorder %s16, 1
        %s146 = scalar_select %p145, %s16, 1
        %s147 = smul.addr %s146, 5
        %s148 = smul.addr %s147, 4
        %s149 = scalar_lea.vmem %s0, %s148
      $region28: #{_lambda_.9} parent=23 // pred_fallthru
        _
    $region24: #{_lambda_.9} parent=5 // pred_fallthru
      _
    %p150 = scmp.le.s32.totalorder 1, %s9
    %p151 = scmp.lt.s32.totalorder %s9, 3
    %p152 = pnand %p150, %p151
    %p153 = pneg %p152
    // Predicated region
    $region29: #{_lambda_.9} parent=5 // pred_check
      _
    $region30: #{_lambda_.9} parent=5 // pred_check_branch
      %155 = sbr.rel (%p152) target = $region32
    $region31: #{_lambda_.9} parent=5 // pred_region
      %s156 = ssub.s32 %s9, 1
      %p157 = scmp.lt.s32.totalorder %s18, 1
      %s158 = scalar_select %p157, %s18, 1
      %s159 = smul.addr %s158, 5
      %s160 = smul.addr %s159, 4
      %s161 = scalar_lea.vmem %s0, %s160
      %p162 = pneg %p47
      %p163 = pneg %p44
      %p164 = pneg %p68
      %p165 = pneg %p65
      %p166 = pneg %p89
      %p167 = pneg %p86
      %p168 = pneg %p117
      %p169 = pneg %p114
      %p170 = scmp.lt.s32.totalorder %s18, 1
      %s171 = scalar_select %p170, %s18, 1
      %p172 = scmp.lt.s32.totalorder %s19, 0
      %s173 = scalar_select %p172, %s19, 0
      %s174 = sadd.s32 %s173, %s171
      %s175 = smul.addr %s174, 4
      %s176 = scalar_lea.vmem %s3, %s175
      %p177 = scmp.lt.s32.totalorder %s18, 1
      %s178 = scalar_select %p177, %s18, 1
      %s179 = smul.addr %s178, 5
      %s180 = smul.addr %s179, 4
      %s181 = scalar_lea.vmem %s0, %s180
      %p182 = scmp.lt.s32.totalorder %s18, 1
      %s183 = scalar_select %p182, %s18, 1
      %p184 = scmp.lt.s32.totalorder %s19, 0
      %s185 = scalar_select %p184, %s19, 0
      %s186 = sadd.s32 %s185, %s183
      %s187 = smul.addr %s186, 4
      %s188 = scalar_lea.vmem %s3, %s187
      %s190 = smul.u32 %s19, 2
      %s191 = smul.addr %s190, 4
      %s192 = scalar_lea.vmem %s181, %s191
      %v193 = vld [vmem:[%s192] sm:$0x7]
      %v194 = vld [vmem:[%s192 + $0x4] sm:$0x7]
      %v195 = vld [vmem:[%s192 + $0x8] sm:$0x7]
      %v196 = vld [vmem:[%s192 + $0xc] sm:$0x7]
      %v197 = vld [vmem:[%s192 + $0x10] sm:$0x7]
      %v198 = vunpack.c.l.bf16 %v193
      %v199 = vunpack.c.l.bf16 %v194
      %v200 = vunpack.c.l.bf16 %v195
      %v201 = vunpack.c.l.bf16 %v196
      %v202 = vunpack.c.l.bf16 %v197
      %vm203 = vcmp.ge.f32.partialorder %v198, 0.0
      %vm204 = vcmp.ge.f32.partialorder %v199, 0.0
      %vm205 = vcmp.ge.f32.partialorder %v200, 0.0
      %vm206 = vcmp.ge.f32.partialorder %v201, 0.0
      %vm207 = vcmp.ge.f32.partialorder %v202, 0.0
      %v208 = vmul.f32 %v198, 0.2
      %v209 = vmul.f32 %v199, 0.2
      %v210 = vmul.f32 %v200, 0.2
      %v211 = vmul.f32 %v201, 0.2
      %v212 = vmul.f32 %v202, 0.2
      %v213 = vsel %vm203, %v198, %v208
      %v214 = vsel %vm204, %v199, %v209
      %v215 = vsel %vm205, %v200, %v210
      %v216 = vsel %vm206, %v201, %v211
      %v217 = vsel %vm207, %v202, %v212
      %v218 = vpack.c.bf16 %v213, %v213
      %v219 = vpack.c.bf16 %v214, %v214
      %v220 = vpack.c.bf16 %v215, %v215
      %v221 = vpack.c.bf16 %v216, %v216
      %v222 = vpack.c.bf16 %v217, %v217
      %v223 = vld [vmem:[%s1] sm:$0xf]
      %v224 = vld [vmem:[%s1 + $0x4] sm:$0xf]
      %v225 = vld [vmem:[%s1 + $0x8] sm:$0xf]
      %v226 = vld [vmem:[%s1 + $0xc] sm:$0xf]
      %v227 = vld [vmem:[%s1 + $0x10] sm:$0xf]
      %v228 = vld [vmem:[%s1 + $0x14] sm:$0xf]
      %v229 = vld [vmem:[%s1 + $0x18] sm:$0xf]
      %v230 = vld [vmem:[%s1 + $0x1c] sm:$0xf]
      %v231 = vld [vmem:[%s1 + $0x20] sm:$0xf]
      %v232 = vld [vmem:[%s1 + $0x24] sm:$0xf]
      %v233 = vld [vmem:[%s1 + $0x28] sm:$0xf]
      %v234 = vld [vmem:[%s1 + $0x2c] sm:$0xf]
      %v235 = vld [vmem:[%s1 + $0x30] sm:$0xf]
      %v236 = vld [vmem:[%s1 + $0x34] sm:$0xf]
      %v237 = vld [vmem:[%s1 + $0x38] sm:$0xf]
      %v238 = vld [vmem:[%s1 + $0x3c] sm:$0xf]
      %v242 = vunpack.c.l.s4 1966171168
      %v243 = vunpack.c.0.s8 %v242
      %v244 = vlaneseq
      %v245 = vshrl.u32 %v244, 7
      %v246 = vsub.s32 %v243, %v245
      %v247 = vrot.slane %v218, %v246
      %v248 = vcombine.high %v247, %v247
      %v250 = vunpack.c.l.s4 1966171168
      %v251 = vunpack.c.0.s8 %v250
      %v252 = vlaneseq
      %v253 = vshrl.u32 %v252, 7
      %v254 = vsub.s32 %v251, %v253
      %v255 = vrot.slane %v247, %v254
      %v257 = vunpack.c.l.s4 1966171168
      %v258 = vunpack.c.0.s8 %v257
      %v259 = vlaneseq
      %v260 = vshrl.u32 %v259, 7
      %v261 = vsub.s32 %v258, %v260
      %v262 = vrot.slane %v248, %v261
      %v264 = vunpack.c.l.s4 1966171168
      %v265 = vunpack.c.0.s8 %v264
      %v266 = vlaneseq
      %v267 = vshrl.u32 %v266, 7
      %v268 = vsub.s32 %v265, %v267
      %v269 = vrot.slane %v219, %v268
      %v270 = vcombine.high %v269, %v269
      %v272 = vunpack.c.l.s4 1966171168
      %v273 = vunpack.c.0.s8 %v272
      %v274 = vlaneseq
      %v275 = vshrl.u32 %v274, 7
      %v276 = vsub.s32 %v273, %v275
      %v277 = vrot.slane %v269, %v276
      %v279 = vunpack.c.l.s4 1966171168
      %v280 = vunpack.c.0.s8 %v279
      %v281 = vlaneseq
      %v282 = vshrl.u32 %v281, 7
      %v283 = vsub.s32 %v280, %v282
      %v284 = vrot.slane %v270, %v283
      %vm285 = vsmask.f32 256
      %vm286 = vsmask.f32 1284
      %vm287 = vmor %vm285, %vm286
      %vm288 = vsmask.f32 2312
      %vm289 = vmor %vm287, %vm288
      %vm290 = vsmask.f32 3340
      %vm291 = vmor %vm289, %vm290
      %vm292 = vsmask.f32 4368
      %vm293 = vmor %vm291, %vm292
      %vm294 = vsmask.f32 5396
      %vm295 = vmor %vm293, %vm294
      %vm296 = vsmask.f32 6424
      %vm297 = vmor %vm295, %vm296
      %vm298 = vsmask.f32 7452
      %vm299 = vmor %vm297, %vm298
      %v301 = vshrl.u32 %v255, 16
      %v303 = vrot.slane %v301, 7
      %v304 = vrot.slane %v303, 1
      %v306 = vshll.u32 %v262, 16
      %v308 = vsel %vm299, %v304, %v306
      %v310 = vshrl.u32 %v277, 16
      %v312 = vrot.slane %v310, 7
      %v313 = vrot.slane %v312, 1
      %v315 = vshll.u32 %v284, 16
      %v317 = vsel %vm299, %v313, %v315
      %s318 = scalar_lea.vmem %s1, 64
      %v319 = vld [vmem:[%s318] sm:$0xf]
      %v320 = vld [vmem:[%s318 + $0x4] sm:$0xf]
      %v321 = vld [vmem:[%s318 + $0x8] sm:$0xf]
      %v322 = vld [vmem:[%s318 + $0xc] sm:$0xf]
      %v323 = vld [vmem:[%s318 + $0x10] sm:$0xf]
      %v324 = vld [vmem:[%s318 + $0x14] sm:$0xf]
      %v325 = vld [vmem:[%s318 + $0x18] sm:$0xf]
      %v326 = vld [vmem:[%s318 + $0x1c] sm:$0xf]
      %v327 = vld [vmem:[%s318 + $0x20] sm:$0xf]
      %v328 = vld [vmem:[%s318 + $0x24] sm:$0xf]
      %v329 = vld [vmem:[%s318 + $0x28] sm:$0xf]
      %v330 = vld [vmem:[%s318 + $0x2c] sm:$0xf]
      %v331 = vld [vmem:[%s318 + $0x30] sm:$0xf]
      %v332 = vld [vmem:[%s318 + $0x34] sm:$0xf]
      %v333 = vld [vmem:[%s318 + $0x38] sm:$0xf]
      %v334 = vld [vmem:[%s318 + $0x3c] sm:$0xf]
      %v335 = vcombine.low %v308, %v317
      %v337 = vunpack.c.l.s4 1966171168
      %v338 = vunpack.c.0.s8 %v337
      %v339 = vlaneseq
      %v340 = vshrl.u32 %v339, 7
      %v341 = vsub.s32 %v338, %v340
      %v342 = vrot.slane %v335, %v341
      %v344 = vunpack.c.l.s4 1966171168
      %v345 = vunpack.c.0.s8 %v344
      %v346 = vlaneseq
      %v347 = vshrl.u32 %v346, 7
      %v348 = vsub.s32 %v345, %v347
      %v349 = vrot.slane %v342, %v348
      %v367 = vunpack.c.l.b16 %v319
      %v368 = vunpack.c.l.b16 %v320
      %v369 = vunpack.c.l.b16 %v321
      %v370 = vunpack.c.l.b16 %v322
      %v371 = vunpack.c.l.b16 %v323
      %v372 = vunpack.c.l.b16 %v324
      %v373 = vunpack.c.l.b16 %v325
      %v374 = vunpack.c.l.b16 %v326
      %v375 = vunpack.c.l.b16 %v327
      %v376 = vunpack.c.l.b16 %v328
      %v377 = vunpack.c.l.b16 %v329
      %v378 = vunpack.c.l.b16 %v330
      %v379 = vunpack.c.l.b16 %v331
      %v380 = vunpack.c.l.b16 %v332
      %v381 = vunpack.c.l.b16 %v333
      %v382 = vunpack.c.l.b16 %v334
      %v383 = vpack.c.b16 %v368, %v367
      %v384 = vpack.c.b16 %v370, %v369
      %v385 = vpack.c.b16 %v372, %v371
      %v386 = vpack.c.b16 %v374, %v373
      %v387 = vpack.c.b16 %v376, %v375
      %v388 = vpack.c.b16 %v378, %v377
      %v389 = vpack.c.b16 %v380, %v379
      %v390 = vpack.c.b16 %v382, %v381
      %399 = vmatprep.subr.bf16.mxu0 0
      %400 = vmatpush1.bf16.msra.mxu0 %v390
      %401 = vmatprep.subr.bf16.mxu0 0
      %402 = vmatpush1.bf16.msra.mxu0 %v389
      %403 = vmatprep.subr.bf16.mxu0 0
      %404 = vmatpush1.bf16.msra.mxu0 %v388
      %405 = vmatprep.subr.bf16.mxu0 0
      %406 = vmatpush1.bf16.msra.mxu0 %v387
      %407 = vmatprep.subr.bf16.mxu0 0
      %408 = vmatpush1.bf16.msra.mxu0 %v386
      %409 = vmatprep.subr.bf16.mxu0 0
      %410 = vmatpush1.bf16.msra.mxu0 %v385
      %411 = vmatprep.subr.bf16.mxu0 0
      %412 = vmatpush1.bf16.msra.mxu0 %v384
      %413 = vmatprep.subr.bf16.mxu0 0
      %414 = vmatpush1.bf16.msra.mxu0 %v383
      %415 = vmatprep.subr.bf16.mxu0 0
      %416 = vmatpush2.bf16.msra.mxu0 0
      %417 = vmatprep.subr.bf16.mxu0 0
      %418 = vmatpush2.bf16.msra.mxu0 0
      %419 = vmatprep.subr.bf16.mxu0 0
      %420 = vmatpush2.bf16.msra.mxu0 0
      %421 = vmatprep.subr.bf16.mxu0 0
      %422 = vmatpush2.bf16.msra.mxu0 0
      %423 = vmatprep.subr.bf16.mxu0 0
      %424 = vmatpush2.bf16.msra.mxu0 0
      %425 = vmatprep.subr.bf16.mxu0 0
      %426 = vmatpush2.bf16.msra.mxu0 0
      %427 = vmatprep.subr.bf16.mxu0 0
      %428 = vmatpush2.bf16.msra.mxu0 0
      %429 = vmatprep.subr.bf16.mxu0 0
      %430 = vmatpush2.bf16.msra.mxu0 0
      %431 = vmatprep.mubr.bf16.mxu0 0
      %432 = vmatmul.mubr.bf16.gmra.mxu0 %v349
      %v433 = vpop.f32.mrf.mxu0
      %v434 = vadd.f32 0.0, %v433
      %v435 = vpop.f32.mrf.mxu0
      %v436 = vpop.f32.mrf.mxu0
      %v437 = vpop.f32.mrf.mxu0
      %438 = vdwg.mxu0
      %v439 = vcombine.low %v218, %v219
      %v441 = vunpack.c.l.s4 1966171168
      %v442 = vunpack.c.0.s8 %v441
      %v443 = vlaneseq
      %v444 = vshrl.u32 %v443, 7
      %v445 = vsub.s32 %v442, %v444
      %v446 = vrot.slane %v439, %v445
      %v448 = vunpack.c.l.s4 1966171168
      %v449 = vunpack.c.0.s8 %v448
      %v450 = vlaneseq
      %v451 = vshrl.u32 %v450, 7
      %v452 = vsub.s32 %v449, %v451
      %v453 = vrot.slane %v446, %v452
      %v471 = vunpack.c.l.b16 %v223
      %v472 = vunpack.c.l.b16 %v224
      %v473 = vunpack.c.l.b16 %v225
      %v474 = vunpack.c.l.b16 %v226
      %v475 = vunpack.c.l.b16 %v227
      %v476 = vunpack.c.l.b16 %v228
      %v477 = vunpack.c.l.b16 %v229
      %v478 = vunpack.c.l.b16 %v230
      %v479 = vunpack.c.l.b16 %v231
      %v480 = vunpack.c.l.b16 %v232
      %v481 = vunpack.c.l.b16 %v233
      %v482 = vunpack.c.l.b16 %v234
      %v483 = vunpack.c.l.b16 %v235
      %v484 = vunpack.c.l.b16 %v236
      %v485 = vunpack.c.l.b16 %v237
      %v486 = vunpack.c.l.b16 %v238
      %v487 = vpack.c.b16 %v472, %v471
      %v488 = vpack.c.b16 %v474, %v473
      %v489 = vpack.c.b16 %v476, %v475
      %v490 = vpack.c.b16 %v478, %v477
      %v491 = vpack.c.b16 %v480, %v479
      %v492 = vpack.c.b16 %v482, %v481
      %v493 = vpack.c.b16 %v484, %v483
      %v494 = vpack.c.b16 %v486, %v485
      %503 = vmatprep.subr.bf16.mxu0 0
      %504 = vmatpush1.bf16.msra.mxu0 %v494
      %505 = vmatprep.subr.bf16.mxu0 0
      %506 = vmatpush1.bf16.msra.mxu0 %v493
      %507 = vmatprep.subr.bf16.mxu0 0
      %508 = vmatpush1.bf16.msra.mxu0 %v492
      %509 = vmatprep.subr.bf16.mxu0 0
      %510 = vmatpush1.bf16.msra.mxu0 %v491
      %511 = vmatprep.subr.bf16.mxu0 0
      %512 = vmatpush1.bf16.msra.mxu0 %v490
      %513 = vmatprep.subr.bf16.mxu0 0
      %514 = vmatpush1.bf16.msra.mxu0 %v489
      %515 = vmatprep.subr.bf16.mxu0 0
      %516 = vmatpush1.bf16.msra.mxu0 %v488
      %517 = vmatprep.subr.bf16.mxu0 0
      %518 = vmatpush1.bf16.msra.mxu0 %v487
      %519 = vmatprep.subr.bf16.mxu0 0
      %520 = vmatpush2.bf16.msra.mxu0 0
      %521 = vmatprep.subr.bf16.mxu0 0
      %522 = vmatpush2.bf16.msra.mxu0 0
      %523 = vmatprep.subr.bf16.mxu0 0
      %524 = vmatpush2.bf16.msra.mxu0 0
      %525 = vmatprep.subr.bf16.mxu0 0
      %526 = vmatpush2.bf16.msra.mxu0 0
      %527 = vmatprep.subr.bf16.mxu0 0
      %528 = vmatpush2.bf16.msra.mxu0 0
      %529 = vmatprep.subr.bf16.mxu0 0
      %530 = vmatpush2.bf16.msra.mxu0 0
      %531 = vmatprep.subr.bf16.mxu0 0
      %532 = vmatpush2.bf16.msra.mxu0 0
      %533 = vmatprep.subr.bf16.mxu0 0
      %534 = vmatpush2.bf16.msra.mxu0 0
      %535 = vmatprep.mubr.bf16.mxu0 0
      %536 = vmatmul.mubr.bf16.gmra.mxu0 %v453
      %v537 = vpop.f32.mrf.mxu0
      %v538 = vadd.f32 %v434, %v537
      %v539 = vpop.f32.mrf.mxu0
      %v540 = vpop.f32.mrf.mxu0
      %v541 = vpop.f32.mrf.mxu0
      %542 = vdwg.mxu0
      %s543 = scalar_lea.vmem %s1, 128
      %v544 = vld [vmem:[%s543] sm:$0xf]
      %v545 = vld [vmem:[%s543 + $0x4] sm:$0xf]
      %v546 = vld [vmem:[%s543 + $0x8] sm:$0xf]
      %v547 = vld [vmem:[%s543 + $0xc] sm:$0xf]
      %v548 = vld [vmem:[%s543 + $0x10] sm:$0xf]
      %v549 = vld [vmem:[%s543 + $0x14] sm:$0xf]
      %v550 = vld [vmem:[%s543 + $0x18] sm:$0xf]
      %v551 = vld [vmem:[%s543 + $0x1c] sm:$0xf]
      %v552 = vld [vmem:[%s543 + $0x20] sm:$0xf]
      %v553 = vld [vmem:[%s543 + $0x24] sm:$0xf]
      %v554 = vld [vmem:[%s543 + $0x28] sm:$0xf]
      %v555 = vld [vmem:[%s543 + $0x2c] sm:$0xf]
      %v556 = vld [vmem:[%s543 + $0x30] sm:$0xf]
      %v557 = vld [vmem:[%s543 + $0x34] sm:$0xf]
      %v558 = vld [vmem:[%s543 + $0x38] sm:$0xf]
      %v559 = vld [vmem:[%s543 + $0x3c] sm:$0xf]
      %v560 = vcombine.low %v262, %v284
      %v562 = vunpack.c.l.s4 1966171168
      %v563 = vunpack.c.0.s8 %v562
      %v564 = vlaneseq
      %v565 = vshrl.u32 %v564, 7
      %v566 = vsub.s32 %v563, %v565
      %v567 = vrot.slane %v560, %v566
      %v569 = vunpack.c.l.s4 1966171168
      %v570 = vunpack.c.0.s8 %v569
      %v571 = vlaneseq
      %v572 = vshrl.u32 %v571, 7
      %v573 = vsub.s32 %v570, %v572
      %v574 = vrot.slane %v567, %v573
      %v592 = vunpack.c.l.b16 %v544
      %v593 = vunpack.c.l.b16 %v545
      %v594 = vunpack.c.l.b16 %v546
      %v595 = vunpack.c.l.b16 %v547
      %v596 = vunpack.c.l.b16 %v548
      %v597 = vunpack.c.l.b16 %v549
      %v598 = vunpack.c.l.b16 %v550
      %v599 = vunpack.c.l.b16 %v551
      %v600 = vunpack.c.l.b16 %v552
      %v601 = vunpack.c.l.b16 %v553
      %v602 = vunpack.c.l.b16 %v554
      %v603 = vunpack.c.l.b16 %v555
      %v604 = vunpack.c.l.b16 %v556
      %v605 = vunpack.c.l.b16 %v557
      %v606 = vunpack.c.l.b16 %v558
      %v607 = vunpack.c.l.b16 %v559
      %v608 = vpack.c.b16 %v593, %v592
      %v609 = vpack.c.b16 %v595, %v594
      %v610 = vpack.c.b16 %v597, %v596
      %v611 = vpack.c.b16 %v599, %v598
      %v612 = vpack.c.b16 %v601, %v600
      %v613 = vpack.c.b16 %v603, %v602
      %v614 = vpack.c.b16 %v605, %v604
      %v615 = vpack.c.b16 %v607, %v606
      %624 = vmatprep.subr.bf16.mxu0 0
      %625 = vmatpush1.bf16.msra.mxu0 %v615
      %626 = vmatprep.subr.bf16.mxu0 0
      %627 = vmatpush1.bf16.msra.mxu0 %v614
      %628 = vmatprep.subr.bf16.mxu0 0
      %629 = vmatpush1.bf16.msra.mxu0 %v613
      %630 = vmatprep.subr.bf16.mxu0 0
      %631 = vmatpush1.bf16.msra.mxu0 %v612
      %632 = vmatprep.subr.bf16.mxu0 0
      %633 = vmatpush1.bf16.msra.mxu0 %v611
      %634 = vmatprep.subr.bf16.mxu0 0
      %635 = vmatpush1.bf16.msra.mxu0 %v610
      %636 = vmatprep.subr.bf16.mxu0 0
      %637 = vmatpush1.bf16.msra.mxu0 %v609
      %638 = vmatprep.subr.bf16.mxu0 0
      %639 = vmatpush1.bf16.msra.mxu0 %v608
      %640 = vmatprep.subr.bf16.mxu0 0
      %641 = vmatpush2.bf16.msra.mxu0 0
      %642 = vmatprep.subr.bf16.mxu0 0
      %643 = vmatpush2.bf16.msra.mxu0 0
      %644 = vmatprep.subr.bf16.mxu0 0
      %645 = vmatpush2.bf16.msra.mxu0 0
      %646 = vmatprep.subr.bf16.mxu0 0
      %647 = vmatpush2.bf16.msra.mxu0 0
      %648 = vmatprep.subr.bf16.mxu0 0
      %649 = vmatpush2.bf16.msra.mxu0 0
      %650 = vmatprep.subr.bf16.mxu0 0
      %651 = vmatpush2.bf16.msra.mxu0 0
      %652 = vmatprep.subr.bf16.mxu0 0
      %653 = vmatpush2.bf16.msra.mxu0 0
      %654 = vmatprep.subr.bf16.mxu0 0
      %655 = vmatpush2.bf16.msra.mxu0 0
      %656 = vmatprep.mubr.bf16.mxu0 0
      %657 = vmatmul.mubr.bf16.gmra.mxu0 %v574
      %v658 = vpop.f32.mrf.mxu0
      %v659 = vadd.f32 0.0, %v658
      %v660 = vpop.f32.mrf.mxu0
      %v661 = vpop.f32.mrf.mxu0
      %v662 = vpop.f32.mrf.mxu0
      %663 = vdwg.mxu0
      %v664 = vadd.f32 %v538, %v659
      %v665 = vcombine.high %v255, %v255
      %v666 = vcombine.high %v277, %v277
      %v667 = vshrl.u32 %v262, 16
      %v669 = vrot.slane %v667, 7
      %v670 = vrot.slane %v669, 1
      %v672 = vshll.u32 %v665, 16
      %v674 = vsel %vm299, %v670, %v672
      %v675 = vshrl.u32 %v284, 16
      %v677 = vrot.slane %v675, 7
      %v678 = vrot.slane %v677, 1
      %v680 = vshll.u32 %v666, 16
      %v682 = vsel %vm299, %v678, %v680
      %s683 = scalar_lea.vmem %s1, 192
      %v684 = vld [vmem:[%s683] sm:$0xf]
      %v685 = vld [vmem:[%s683 + $0x4] sm:$0xf]
      %v686 = vld [vmem:[%s683 + $0x8] sm:$0xf]
      %v687 = vld [vmem:[%s683 + $0xc] sm:$0xf]
      %v688 = vld [vmem:[%s683 + $0x10] sm:$0xf]
      %v689 = vld [vmem:[%s683 + $0x14] sm:$0xf]
      %v690 = vld [vmem:[%s683 + $0x18] sm:$0xf]
      %v691 = vld [vmem:[%s683 + $0x1c] sm:$0xf]
      %v692 = vld [vmem:[%s683 + $0x20] sm:$0xf]
      %v693 = vld [vmem:[%s683 + $0x24] sm:$0xf]
      %v694 = vld [vmem:[%s683 + $0x28] sm:$0xf]
      %v695 = vld [vmem:[%s683 + $0x2c] sm:$0xf]
      %v696 = vld [vmem:[%s683 + $0x30] sm:$0xf]
      %v697 = vld [vmem:[%s683 + $0x34] sm:$0xf]
      %v698 = vld [vmem:[%s683 + $0x38] sm:$0xf]
      %v699 = vld [vmem:[%s683 + $0x3c] sm:$0xf]
      %v700 = vcombine.low %v674, %v682
      %v702 = vunpack.c.l.s4 1966171168
      %v703 = vunpack.c.0.s8 %v702
      %v704 = vlaneseq
      %v705 = vshrl.u32 %v704, 7
      %v706 = vsub.s32 %v703, %v705
      %v707 = vrot.slane %v700, %v706
      %v709 = vunpack.c.l.s4 1966171168
      %v710 = vunpack.c.0.s8 %v709
      %v711 = vlaneseq
      %v712 = vshrl.u32 %v711, 7
      %v713 = vsub.s32 %v710, %v712
      %v714 = vrot.slane %v707, %v713
      %v732 = vunpack.c.l.b16 %v684
      %v733 = vunpack.c.l.b16 %v685
      %v734 = vunpack.c.l.b16 %v686
      %v735 = vunpack.c.l.b16 %v687
      %v736 = vunpack.c.l.b16 %v688
      %v737 = vunpack.c.l.b16 %v689
      %v738 = vunpack.c.l.b16 %v690
      %v739 = vunpack.c.l.b16 %v691
      %v740 = vunpack.c.l.b16 %v692
      %v741 = vunpack.c.l.b16 %v693
      %v742 = vunpack.c.l.b16 %v694
      %v743 = vunpack.c.l.b16 %v695
      %v744 = vunpack.c.l.b16 %v696
      %v745 = vunpack.c.l.b16 %v697
      %v746 = vunpack.c.l.b16 %v698
      %v747 = vunpack.c.l.b16 %v699
      %v748 = vpack.c.b16 %v733, %v732
      %v749 = vpack.c.b16 %v735, %v734
      %v750 = vpack.c.b16 %v737, %v736
      %v751 = vpack.c.b16 %v739, %v738
      %v752 = vpack.c.b16 %v741, %v740
      %v753 = vpack.c.b16 %v743, %v742
      %v754 = vpack.c.b16 %v745, %v744
      %v755 = vpack.c.b16 %v747, %v746
      %764 = vmatprep.subr.bf16.mxu0 0
      %765 = vmatpush1.bf16.msra.mxu0 %v755
      %766 = vmatprep.subr.bf16.mxu0 0
      %767 = vmatpush1.bf16.msra.mxu0 %v754
      %768 = vmatprep.subr.bf16.mxu0 0
      %769 = vmatpush1.bf16.msra.mxu0 %v753
      %770 = vmatprep.subr.bf16.mxu0 0
      %771 = vmatpush1.bf16.msra.mxu0 %v752
      %772 = vmatprep.subr.bf16.mxu0 0
      %773 = vmatpush1.bf16.msra.mxu0 %v751
      %774 = vmatprep.subr.bf16.mxu0 0
      %775 = vmatpush1.bf16.msra.mxu0 %v750
      %776 = vmatprep.subr.bf16.mxu0 0
      %777 = vmatpush1.bf16.msra.mxu0 %v749
      %778 = vmatprep.subr.bf16.mxu0 0
      %779 = vmatpush1.bf16.msra.mxu0 %v748
      %780 = vmatprep.subr.bf16.mxu0 0
      %781 = vmatpush2.bf16.msra.mxu0 0
      %782 = vmatprep.subr.bf16.mxu0 0
      %783 = vmatpush2.bf16.msra.mxu0 0
      %784 = vmatprep.subr.bf16.mxu0 0
      %785 = vmatpush2.bf16.msra.mxu0 0
      %786 = vmatprep.subr.bf16.mxu0 0
      %787 = vmatpush2.bf16.msra.mxu0 0
      %788 = vmatprep.subr.bf16.mxu0 0
      %789 = vmatpush2.bf16.msra.mxu0 0
      %790 = vmatprep.subr.bf16.mxu0 0
      %791 = vmatpush2.bf16.msra.mxu0 0
      %792 = vmatprep.subr.bf16.mxu0 0
      %793 = vmatpush2.bf16.msra.mxu0 0
      %794 = vmatprep.subr.bf16.mxu0 0
      %795 = vmatpush2.bf16.msra.mxu0 0
      %796 = vmatprep.mubr.bf16.mxu0 0
      %797 = vmatmul.mubr.bf16.gmra.mxu0 %v714
      %v798 = vpop.f32.mrf.mxu0
      %v799 = vadd.f32 0.0, %v798
      %v800 = vpop.f32.mrf.mxu0
      %v801 = vpop.f32.mrf.mxu0
      %v802 = vpop.f32.mrf.mxu0
      %803 = vdwg.mxu0
      %v804 = vadd.f32 %v664, %v799
      %s805 = scalar_lea.vmem %s1, 256
      %v806 = vld [vmem:[%s805] sm:$0xf]
      %v807 = vld [vmem:[%s805 + $0x4] sm:$0xf]
      %v808 = vld [vmem:[%s805 + $0x8] sm:$0xf]
      %v809 = vld [vmem:[%s805 + $0xc] sm:$0xf]
      %v810 = vld [vmem:[%s805 + $0x10] sm:$0xf]
      %v811 = vld [vmem:[%s805 + $0x14] sm:$0xf]
      %v812 = vld [vmem:[%s805 + $0x18] sm:$0xf]
      %v813 = vld [vmem:[%s805 + $0x1c] sm:$0xf]
      %v814 = vld [vmem:[%s805 + $0x20] sm:$0xf]
      %v815 = vld [vmem:[%s805 + $0x24] sm:$0xf]
      %v816 = vld [vmem:[%s805 + $0x28] sm:$0xf]
      %v817 = vld [vmem:[%s805 + $0x2c] sm:$0xf]
      %v818 = vld [vmem:[%s805 + $0x30] sm:$0xf]
      %v819 = vld [vmem:[%s805 + $0x34] sm:$0xf]
      %v820 = vld [vmem:[%s805 + $0x38] sm:$0xf]
      %v821 = vld [vmem:[%s805 + $0x3c] sm:$0xf]
      %v823 = vcombine.low %v219, %v220
      %v825 = vunpack.c.l.s4 1966171168
      %v826 = vunpack.c.0.s8 %v825
      %v827 = vlaneseq
      %v828 = vshrl.u32 %v827, 7
      %v829 = vsub.s32 %v826, %v828
      %v830 = vrot.slane %v823, %v829
      %v832 = vunpack.c.l.s4 1966171168
      %v833 = vunpack.c.0.s8 %v832
      %v834 = vlaneseq
      %v835 = vshrl.u32 %v834, 7
      %v836 = vsub.s32 %v833, %v835
      %v837 = vrot.slane %v830, %v836
      %v855 = vunpack.c.l.b16 %v806
      %v856 = vunpack.c.l.b16 %v807
      %v857 = vunpack.c.l.b16 %v808
      %v858 = vunpack.c.l.b16 %v809
      %v859 = vunpack.c.l.b16 %v810
      %v860 = vunpack.c.l.b16 %v811
      %v861 = vunpack.c.l.b16 %v812
      %v862 = vunpack.c.l.b16 %v813
      %v863 = vunpack.c.l.b16 %v814
      %v864 = vunpack.c.l.b16 %v815
      %v865 = vunpack.c.l.b16 %v816
      %v866 = vunpack.c.l.b16 %v817
      %v867 = vunpack.c.l.b16 %v818
      %v868 = vunpack.c.l.b16 %v819
      %v869 = vunpack.c.l.b16 %v820
      %v870 = vunpack.c.l.b16 %v821
      %v871 = vpack.c.b16 %v856, %v855
      %v872 = vpack.c.b16 %v858, %v857
      %v873 = vpack.c.b16 %v860, %v859
      %v874 = vpack.c.b16 %v862, %v861
      %v875 = vpack.c.b16 %v864, %v863
      %v876 = vpack.c.b16 %v866, %v865
      %v877 = vpack.c.b16 %v868, %v867
      %v878 = vpack.c.b16 %v870, %v869
      %887 = vmatprep.subr.bf16.mxu0 0
      %888 = vmatpush1.bf16.msra.mxu0 %v878
      %889 = vmatprep.subr.bf16.mxu0 0
      %890 = vmatpush1.bf16.msra.mxu0 %v877
      %891 = vmatprep.subr.bf16.mxu0 0
      %892 = vmatpush1.bf16.msra.mxu0 %v876
      %893 = vmatprep.subr.bf16.mxu0 0
      %894 = vmatpush1.bf16.msra.mxu0 %v875
      %895 = vmatprep.subr.bf16.mxu0 0
      %896 = vmatpush1.bf16.msra.mxu0 %v874
      %897 = vmatprep.subr.bf16.mxu0 0
      %898 = vmatpush1.bf16.msra.mxu0 %v873
      %899 = vmatprep.subr.bf16.mxu0 0
      %900 = vmatpush1.bf16.msra.mxu0 %v872
      %901 = vmatprep.subr.bf16.mxu0 0
      %902 = vmatpush1.bf16.msra.mxu0 %v871
      %903 = vmatprep.subr.bf16.mxu0 0
      %904 = vmatpush2.bf16.msra.mxu0 0
      %905 = vmatprep.subr.bf16.mxu0 0
      %906 = vmatpush2.bf16.msra.mxu0 0
      %907 = vmatprep.subr.bf16.mxu0 0
      %908 = vmatpush2.bf16.msra.mxu0 0
      %909 = vmatprep.subr.bf16.mxu0 0
      %910 = vmatpush2.bf16.msra.mxu0 0
      %911 = vmatprep.subr.bf16.mxu0 0
      %912 = vmatpush2.bf16.msra.mxu0 0
      %913 = vmatprep.subr.bf16.mxu0 0
      %914 = vmatpush2.bf16.msra.mxu0 0
      %915 = vmatprep.subr.bf16.mxu0 0
      %916 = vmatpush2.bf16.msra.mxu0 0
      %917 = vmatprep.subr.bf16.mxu0 0
      %918 = vmatpush2.bf16.msra.mxu0 0
      %919 = vmatprep.mubr.bf16.mxu0 0
      %920 = vmatmul.mubr.bf16.gmra.mxu0 %v837
      %v921 = vpop.f32.mrf.mxu0
      %v922 = vadd.f32 0.0, %v921
      %v923 = vpop.f32.mrf.mxu0
      %v924 = vpop.f32.mrf.mxu0
      %v925 = vpop.f32.mrf.mxu0
      %926 = vdwg.mxu0
      %v927 = vadd.f32 %v804, %v922
      %v929 = vunpack.c.l.s4 1966171168
      %v930 = vunpack.c.0.s8 %v929
      %v931 = vlaneseq
      %v932 = vshrl.u32 %v931, 7
      %v933 = vsub.s32 %v930, %v932
      %v934 = vrot.slane %v220, %v933
      %v935 = vcombine.high %v934, %v934
      %v937 = vunpack.c.l.s4 1966171168
      %v938 = vunpack.c.0.s8 %v937
      %v939 = vlaneseq
      %v940 = vshrl.u32 %v939, 7
      %v941 = vsub.s32 %v938, %v940
      %v942 = vrot.slane %v934, %v941
      %v944 = vunpack.c.l.s4 1966171168
      %v945 = vunpack.c.0.s8 %v944
      %v946 = vlaneseq
      %v947 = vshrl.u32 %v946, 7
      %v948 = vsub.s32 %v945, %v947
      %v949 = vrot.slane %v935, %v948
      %v951 = vshrl.u32 %v942, 16
      %v953 = vrot.slane %v951, 7
      %v954 = vrot.slane %v953, 1
      %v956 = vshll.u32 %v949, 16
      %v958 = vsel %vm299, %v954, %v956
      %s959 = scalar_lea.vmem %s1, 320
      %v960 = vld [vmem:[%s959] sm:$0xf]
      %v961 = vld [vmem:[%s959 + $0x4] sm:$0xf]
      %v962 = vld [vmem:[%s959 + $0x8] sm:$0xf]
      %v963 = vld [vmem:[%s959 + $0xc] sm:$0xf]
      %v964 = vld [vmem:[%s959 + $0x10] sm:$0xf]
      %v965 = vld [vmem:[%s959 + $0x14] sm:$0xf]
      %v966 = vld [vmem:[%s959 + $0x18] sm:$0xf]
      %v967 = vld [vmem:[%s959 + $0x1c] sm:$0xf]
      %v968 = vld [vmem:[%s959 + $0x20] sm:$0xf]
      %v969 = vld [vmem:[%s959 + $0x24] sm:$0xf]
      %v970 = vld [vmem:[%s959 + $0x28] sm:$0xf]
      %v971 = vld [vmem:[%s959 + $0x2c] sm:$0xf]
      %v972 = vld [vmem:[%s959 + $0x30] sm:$0xf]
      %v973 = vld [vmem:[%s959 + $0x34] sm:$0xf]
      %v974 = vld [vmem:[%s959 + $0x38] sm:$0xf]
      %v975 = vld [vmem:[%s959 + $0x3c] sm:$0xf]
      %v976 = vcombine.low %v317, %v958
      %v978 = vunpack.c.l.s4 1966171168
      %v979 = vunpack.c.0.s8 %v978
      %v980 = vlaneseq
      %v981 = vshrl.u32 %v980, 7
      %v982 = vsub.s32 %v979, %v981
      %v983 = vrot.slane %v976, %v982
      %v985 = vunpack.c.l.s4 1966171168
      %v986 = vunpack.c.0.s8 %v985
      %v987 = vlaneseq
      %v988 = vshrl.u32 %v987, 7
      %v989 = vsub.s32 %v986, %v988
      %v990 = vrot.slane %v983, %v989
      %v1008 = vunpack.c.l.b16 %v960
      %v1009 = vunpack.c.l.b16 %v961
      %v1010 = vunpack.c.l.b16 %v962
      %v1011 = vunpack.c.l.b16 %v963
      %v1012 = vunpack.c.l.b16 %v964
      %v1013 = vunpack.c.l.b16 %v965
      %v1014 = vunpack.c.l.b16 %v966
      %v1015 = vunpack.c.l.b16 %v967
      %v1016 = vunpack.c.l.b16 %v968
      %v1017 = vunpack.c.l.b16 %v969
      %v1018 = vunpack.c.l.b16 %v970
      %v1019 = vunpack.c.l.b16 %v971
      %v1020 = vunpack.c.l.b16 %v972
      %v1021 = vunpack.c.l.b16 %v973
      %v1022 = vunpack.c.l.b16 %v974
      %v1023 = vunpack.c.l.b16 %v975
      %v1024 = vpack.c.b16 %v1009, %v1008
      %v1025 = vpack.c.b16 %v1011, %v1010
      %v1026 = vpack.c.b16 %v1013, %v1012
      %v1027 = vpack.c.b16 %v1015, %v1014
      %v1028 = vpack.c.b16 %v1017, %v1016
      %v1029 = vpack.c.b16 %v1019, %v1018
      %v1030 = vpack.c.b16 %v1021, %v1020
      %v1031 = vpack.c.b16 %v1023, %v1022
      %1040 = vmatprep.subr.bf16.mxu0 0
      %1041 = vmatpush1.bf16.msra.mxu0 %v1031
      %1042 = vmatprep.subr.bf16.mxu0 0
      %1043 = vmatpush1.bf16.msra.mxu0 %v1030
      %1044 = vmatprep.subr.bf16.mxu0 0
      %1045 = vmatpush1.bf16.msra.mxu0 %v1029
      %1046 = vmatprep.subr.bf16.mxu0 0
      %1047 = vmatpush1.bf16.msra.mxu0 %v1028
      %1048 = vmatprep.subr.bf16.mxu0 0
      %1049 = vmatpush1.bf16.msra.mxu0 %v1027
      %1050 = vmatprep.subr.bf16.mxu0 0
      %1051 = vmatpush1.bf16.msra.mxu0 %v1026
      %1052 = vmatprep.subr.bf16.mxu0 0
      %1053 = vmatpush1.bf16.msra.mxu0 %v1025
      %1054 = vmatprep.subr.bf16.mxu0 0
      %1055 = vmatpush1.bf16.msra.mxu0 %v1024
      %1056 = vmatprep.subr.bf16.mxu0 0
      %1057 = vmatpush2.bf16.msra.mxu0 0
      %1058 = vmatprep.subr.bf16.mxu0 0
      %1059 = vmatpush2.bf16.msra.mxu0 0
      %1060 = vmatprep.subr.bf16.mxu0 0
      %1061 = vmatpush2.bf16.msra.mxu0 0
      %1062 = vmatprep.subr.bf16.mxu0 0
      %1063 = vmatpush2.bf16.msra.mxu0 0
      %1064 = vmatprep.subr.bf16.mxu0 0
      %1065 = vmatpush2.bf16.msra.mxu0 0
      %1066 = vmatprep.subr.bf16.mxu0 0
      %1067 = vmatpush2.bf16.msra.mxu0 0
      %1068 = vmatprep.subr.bf16.mxu0 0
      %1069 = vmatpush2.bf16.msra.mxu0 0
      %1070 = vmatprep.subr.bf16.mxu0 0
      %1071 = vmatpush2.bf16.msra.mxu0 0
      %1072 = vmatprep.mubr.bf16.mxu0 0
      %1073 = vmatmul.mubr.bf16.gmra.mxu0 %v990
      %v1074 = vpop.f32.mrf.mxu0
      %v1075 = vadd.f32 0.0, %v1074
      %v1076 = vpop.f32.mrf.mxu0
      %v1077 = vpop.f32.mrf.mxu0
      %v1078 = vpop.f32.mrf.mxu0
      %1079 = vdwg.mxu0
      %v1080 = vadd.f32 %v927, %v1075
      %s1081 = scalar_lea.vmem %s1, 384
      %v1082 = vld [vmem:[%s1081] sm:$0xf]
      %v1083 = vld [vmem:[%s1081 + $0x4] sm:$0xf]
      %v1084 = vld [vmem:[%s1081 + $0x8] sm:$0xf]
      %v1085 = vld [vmem:[%s1081 + $0xc] sm:$0xf]
      %v1086 = vld [vmem:[%s1081 + $0x10] sm:$0xf]
      %v1087 = vld [vmem:[%s1081 + $0x14] sm:$0xf]
      %v1088 = vld [vmem:[%s1081 + $0x18] sm:$0xf]
      %v1089 = vld [vmem:[%s1081 + $0x1c] sm:$0xf]
      %v1090 = vld [vmem:[%s1081 + $0x20] sm:$0xf]
      %v1091 = vld [vmem:[%s1081 + $0x24] sm:$0xf]
      %v1092 = vld [vmem:[%s1081 + $0x28] sm:$0xf]
      %v1093 = vld [vmem:[%s1081 + $0x2c] sm:$0xf]
      %v1094 = vld [vmem:[%s1081 + $0x30] sm:$0xf]
      %v1095 = vld [vmem:[%s1081 + $0x34] sm:$0xf]
      %v1096 = vld [vmem:[%s1081 + $0x38] sm:$0xf]
      %v1097 = vld [vmem:[%s1081 + $0x3c] sm:$0xf]
      %v1098 = vcombine.low %v284, %v949
      %v1100 = vunpack.c.l.s4 1966171168
      %v1101 = vunpack.c.0.s8 %v1100
      %v1102 = vlaneseq
      %v1103 = vshrl.u32 %v1102, 7
      %v1104 = vsub.s32 %v1101, %v1103
      %v1105 = vrot.slane %v1098, %v1104
      %v1107 = vunpack.c.l.s4 1966171168
      %v1108 = vunpack.c.0.s8 %v1107
      %v1109 = vlaneseq
      %v1110 = vshrl.u32 %v1109, 7
      %v1111 = vsub.s32 %v1108, %v1110
      %v1112 = vrot.slane %v1105, %v1111
      %v1130 = vunpack.c.l.b16 %v1082
      %v1131 = vunpack.c.l.b16 %v1083
      %v1132 = vunpack.c.l.b16 %v1084
      %v1133 = vunpack.c.l.b16 %v1085
      %v1134 = vunpack.c.l.b16 %v1086
      %v1135 = vunpack.c.l.b16 %v1087
      %v1136 = vunpack.c.l.b16 %v1088
      %v1137 = vunpack.c.l.b16 %v1089
      %v1138 = vunpack.c.l.b16 %v1090
      %v1139 = vunpack.c.l.b16 %v1091
      %v1140 = vunpack.c.l.b16 %v1092
      %v1141 = vunpack.c.l.b16 %v1093
      %v1142 = vunpack.c.l.b16 %v1094
      %v1143 = vunpack.c.l.b16 %v1095
      %v1144 = vunpack.c.l.b16 %v1096
      %v1145 = vunpack.c.l.b16 %v1097
      %v1146 = vpack.c.b16 %v1131, %v1130
      %v1147 = vpack.c.b16 %v1133, %v1132
      %v1148 = vpack.c.b16 %v1135, %v1134
      %v1149 = vpack.c.b16 %v1137, %v1136
      %v1150 = vpack.c.b16 %v1139, %v1138
      %v1151 = vpack.c.b16 %v1141, %v1140
      %v1152 = vpack.c.b16 %v1143, %v1142
      %v1153 = vpack.c.b16 %v1145, %v1144
      %1162 = vmatprep.subr.bf16.mxu0 0
      %1163 = vmatpush1.bf16.msra.mxu0 %v1153
      %1164 = vmatprep.subr.bf16.mxu0 0
      %1165 = vmatpush1.bf16.msra.mxu0 %v1152
      %1166 = vmatprep.subr.bf16.mxu0 0
      %1167 = vmatpush1.bf16.msra.mxu0 %v1151
      %1168 = vmatprep.subr.bf16.mxu0 0
      %1169 = vmatpush1.bf16.msra.mxu0 %v1150
      %1170 = vmatprep.subr.bf16.mxu0 0
      %1171 = vmatpush1.bf16.msra.mxu0 %v1149
      %1172 = vmatprep.subr.bf16.mxu0 0
      %1173 = vmatpush1.bf16.msra.mxu0 %v1148
      %1174 = vmatprep.subr.bf16.mxu0 0
      %1175 = vmatpush1.bf16.msra.mxu0 %v1147
      %1176 = vmatprep.subr.bf16.mxu0 0
      %1177 = vmatpush1.bf16.msra.mxu0 %v1146
      %1178 = vmatprep.subr.bf16.mxu0 0
      %1179 = vmatpush2.bf16.msra.mxu0 0
      %1180 = vmatprep.subr.bf16.mxu0 0
      %1181 = vmatpush2.bf16.msra.mxu0 0
      %1182 = vmatprep.subr.bf16.mxu0 0
      %1183 = vmatpush2.bf16.msra.mxu0 0
      %1184 = vmatprep.subr.bf16.mxu0 0
      %1185 = vmatpush2.bf16.msra.mxu0 0
      %1186 = vmatprep.subr.bf16.mxu0 0
      %1187 = vmatpush2.bf16.msra.mxu0 0
      %1188 = vmatprep.subr.bf16.mxu0 0
      %1189 = vmatpush2.bf16.msra.mxu0 0
      %1190 = vmatprep.subr.bf16.mxu0 0
      %1191 = vmatpush2.bf16.msra.mxu0 0
      %1192 = vmatprep.subr.bf16.mxu0 0
      %1193 = vmatpush2.bf16.msra.mxu0 0
      %1194 = vmatprep.mubr.bf16.mxu0 0
      %1195 = vmatmul.mubr.bf16.gmra.mxu0 %v1112
      %v1196 = vpop.f32.mrf.mxu0
      %v1197 = vadd.f32 0.0, %v1196
      %v1198 = vpop.f32.mrf.mxu0
      %v1199 = vpop.f32.mrf.mxu0
      %v1200 = vpop.f32.mrf.mxu0
      %1201 = vdwg.mxu0
      %v1202 = vadd.f32 %v1080, %v1197
      %v1203 = vcombine.high %v942, %v942
      %v1204 = vshrl.u32 %v949, 16
      %v1206 = vrot.slane %v1204, 7
      %v1207 = vrot.slane %v1206, 1
      %v1209 = vshll.u32 %v1203, 16
      %v1211 = vsel %vm299, %v1207, %v1209
      %s1212 = scalar_lea.vmem %s1, 448
      %v1213 = vld [vmem:[%s1212] sm:$0xf]
      %v1214 = vld [vmem:[%s1212 + $0x4] sm:$0xf]
      %v1215 = vld [vmem:[%s1212 + $0x8] sm:$0xf]
      %v1216 = vld [vmem:[%s1212 + $0xc] sm:$0xf]
      %v1217 = vld [vmem:[%s1212 + $0x10] sm:$0xf]
      %v1218 = vld [vmem:[%s1212 + $0x14] sm:$0xf]
      %v1219 = vld [vmem:[%s1212 + $0x18] sm:$0xf]
      %v1220 = vld [vmem:[%s1212 + $0x1c] sm:$0xf]
      %v1221 = vld [vmem:[%s1212 + $0x20] sm:$0xf]
      %v1222 = vld [vmem:[%s1212 + $0x24] sm:$0xf]
      %v1223 = vld [vmem:[%s1212 + $0x28] sm:$0xf]
      %v1224 = vld [vmem:[%s1212 + $0x2c] sm:$0xf]
      %v1225 = vld [vmem:[%s1212 + $0x30] sm:$0xf]
      %v1226 = vld [vmem:[%s1212 + $0x34] sm:$0xf]
      %v1227 = vld [vmem:[%s1212 + $0x38] sm:$0xf]
      %v1228 = vld [vmem:[%s1212 + $0x3c] sm:$0xf]
      %v1229 = vcombine.low %v682, %v1211
      %v1231 = vunpack.c.l.s4 1966171168
      %v1232 = vunpack.c.0.s8 %v1231
      %v1233 = vlaneseq
      %v1234 = vshrl.u32 %v1233, 7
      %v1235 = vsub.s32 %v1232, %v1234
      %v1236 = vrot.slane %v1229, %v1235
      %v1238 = vunpack.c.l.s4 1966171168
      %v1239 = vunpack.c.0.s8 %v1238
      %v1240 = vlaneseq
      %v1241 = vshrl.u32 %v1240, 7
      %v1242 = vsub.s32 %v1239, %v1241
      %v1243 = vrot.slane %v1236, %v1242
      %v1261 = vunpack.c.l.b16 %v1213
      %v1262 = vunpack.c.l.b16 %v1214
      %v1263 = vunpack.c.l.b16 %v1215
      %v1264 = vunpack.c.l.b16 %v1216
      %v1265 = vunpack.c.l.b16 %v1217
      %v1266 = vunpack.c.l.b16 %v1218
      %v1267 = vunpack.c.l.b16 %v1219
      %v1268 = vunpack.c.l.b16 %v1220
      %v1269 = vunpack.c.l.b16 %v1221
      %v1270 = vunpack.c.l.b16 %v1222
      %v1271 = vunpack.c.l.b16 %v1223
      %v1272 = vunpack.c.l.b16 %v1224
      %v1273 = vunpack.c.l.b16 %v1225
      %v1274 = vunpack.c.l.b16 %v1226
      %v1275 = vunpack.c.l.b16 %v1227
      %v1276 = vunpack.c.l.b16 %v1228
      %v1277 = vpack.c.b16 %v1262, %v1261
      %v1278 = vpack.c.b16 %v1264, %v1263
      %v1279 = vpack.c.b16 %v1266, %v1265
      %v1280 = vpack.c.b16 %v1268, %v1267
      %v1281 = vpack.c.b16 %v1270, %v1269
      %v1282 = vpack.c.b16 %v1272, %v1271
      %v1283 = vpack.c.b16 %v1274, %v1273
      %v1284 = vpack.c.b16 %v1276, %v1275
      %1293 = vmatprep.subr.bf16.mxu0 0
      %1294 = vmatpush1.bf16.msra.mxu0 %v1284
      %1295 = vmatprep.subr.bf16.mxu0 0
      %1296 = vmatpush1.bf16.msra.mxu0 %v1283
      %1297 = vmatprep.subr.bf16.mxu0 0
      %1298 = vmatpush1.bf16.msra.mxu0 %v1282
      %1299 = vmatprep.subr.bf16.mxu0 0
      %1300 = vmatpush1.bf16.msra.mxu0 %v1281
      %1301 = vmatprep.subr.bf16.mxu0 0
      %1302 = vmatpush1.bf16.msra.mxu0 %v1280
      %1303 = vmatprep.subr.bf16.mxu0 0
      %1304 = vmatpush1.bf16.msra.mxu0 %v1279
      %1305 = vmatprep.subr.bf16.mxu0 0
      %1306 = vmatpush1.bf16.msra.mxu0 %v1278
      %1307 = vmatprep.subr.bf16.mxu0 0
      %1308 = vmatpush1.bf16.msra.mxu0 %v1277
      %1309 = vmatprep.subr.bf16.mxu0 0
      %1310 = vmatpush2.bf16.msra.mxu0 0
      %1311 = vmatprep.subr.bf16.mxu0 0
      %1312 = vmatpush2.bf16.msra.mxu0 0
      %1313 = vmatprep.subr.bf16.mxu0 0
      %1314 = vmatpush2.bf16.msra.mxu0 0
      %1315 = vmatprep.subr.bf16.mxu0 0
      %1316 = vmatpush2.bf16.msra.mxu0 0
      %1317 = vmatprep.subr.bf16.mxu0 0
      %1318 = vmatpush2.bf16.msra.mxu0 0
      %1319 = vmatprep.subr.bf16.mxu0 0
      %1320 = vmatpush2.bf16.msra.mxu0 0
      %1321 = vmatprep.subr.bf16.mxu0 0
      %1322 = vmatpush2.bf16.msra.mxu0 0
      %1323 = vmatprep.subr.bf16.mxu0 0
      %1324 = vmatpush2.bf16.msra.mxu0 0
      %1325 = vmatprep.mubr.bf16.mxu0 0
      %1326 = vmatmul.mubr.bf16.gmra.mxu0 %v1243
      %v1327 = vpop.f32.mrf.mxu0
      %v1328 = vadd.f32 0.0, %v1327
      %v1329 = vpop.f32.mrf.mxu0
      %v1330 = vpop.f32.mrf.mxu0
      %v1331 = vpop.f32.mrf.mxu0
      %1332 = vdwg.mxu0
      %v1333 = vadd.f32 %v1202, %v1328
      %s1334 = scalar_lea.vmem %s1, 512
      %v1335 = vld [vmem:[%s1334] sm:$0xf]
      %v1336 = vld [vmem:[%s1334 + $0x4] sm:$0xf]
      %v1337 = vld [vmem:[%s1334 + $0x8] sm:$0xf]
      %v1338 = vld [vmem:[%s1334 + $0xc] sm:$0xf]
      %v1339 = vld [vmem:[%s1334 + $0x10] sm:$0xf]
      %v1340 = vld [vmem:[%s1334 + $0x14] sm:$0xf]
      %v1341 = vld [vmem:[%s1334 + $0x18] sm:$0xf]
      %v1342 = vld [vmem:[%s1334 + $0x1c] sm:$0xf]
      %v1343 = vld [vmem:[%s1334 + $0x20] sm:$0xf]
      %v1344 = vld [vmem:[%s1334 + $0x24] sm:$0xf]
      %v1345 = vld [vmem:[%s1334 + $0x28] sm:$0xf]
      %v1346 = vld [vmem:[%s1334 + $0x2c] sm:$0xf]
      %v1347 = vld [vmem:[%s1334 + $0x30] sm:$0xf]
      %v1348 = vld [vmem:[%s1334 + $0x34] sm:$0xf]
      %v1349 = vld [vmem:[%s1334 + $0x38] sm:$0xf]
      %v1350 = vld [vmem:[%s1334 + $0x3c] sm:$0xf]
      %v1352 = vcombine.low %v220, %v221
      %v1354 = vunpack.c.l.s4 1966171168
      %v1355 = vunpack.c.0.s8 %v1354
      %v1356 = vlaneseq
      %v1357 = vshrl.u32 %v1356, 7
      %v1358 = vsub.s32 %v1355, %v1357
      %v1359 = vrot.slane %v1352, %v1358
      %v1361 = vunpack.c.l.s4 1966171168
      %v1362 = vunpack.c.0.s8 %v1361
      %v1363 = vlaneseq
      %v1364 = vshrl.u32 %v1363, 7
      %v1365 = vsub.s32 %v1362, %v1364
      %v1366 = vrot.slane %v1359, %v1365
      %v1384 = vunpack.c.l.b16 %v1335
      %v1385 = vunpack.c.l.b16 %v1336
      %v1386 = vunpack.c.l.b16 %v1337
      %v1387 = vunpack.c.l.b16 %v1338
      %v1388 = vunpack.c.l.b16 %v1339
      %v1389 = vunpack.c.l.b16 %v1340
      %v1390 = vunpack.c.l.b16 %v1341
      %v1391 = vunpack.c.l.b16 %v1342
      %v1392 = vunpack.c.l.b16 %v1343
      %v1393 = vunpack.c.l.b16 %v1344
      %v1394 = vunpack.c.l.b16 %v1345
      %v1395 = vunpack.c.l.b16 %v1346
      %v1396 = vunpack.c.l.b16 %v1347
      %v1397 = vunpack.c.l.b16 %v1348
      %v1398 = vunpack.c.l.b16 %v1349
      %v1399 = vunpack.c.l.b16 %v1350
      %v1400 = vpack.c.b16 %v1385, %v1384
      %v1401 = vpack.c.b16 %v1387, %v1386
      %v1402 = vpack.c.b16 %v1389, %v1388
      %v1403 = vpack.c.b16 %v1391, %v1390
      %v1404 = vpack.c.b16 %v1393, %v1392
      %v1405 = vpack.c.b16 %v1395, %v1394
      %v1406 = vpack.c.b16 %v1397, %v1396
      %v1407 = vpack.c.b16 %v1399, %v1398
      %1416 = vmatprep.subr.bf16.mxu0 0
      %1417 = vmatpush1.bf16.msra.mxu0 %v1407
      %1418 = vmatprep.subr.bf16.mxu0 0
      %1419 = vmatpush1.bf16.msra.mxu0 %v1406
      %1420 = vmatprep.subr.bf16.mxu0 0
      %1421 = vmatpush1.bf16.msra.mxu0 %v1405
      %1422 = vmatprep.subr.bf16.mxu0 0
      %1423 = vmatpush1.bf16.msra.mxu0 %v1404
      %1424 = vmatprep.subr.bf16.mxu0 0
      %1425 = vmatpush1.bf16.msra.mxu0 %v1403
      %1426 = vmatprep.subr.bf16.mxu0 0
      %1427 = vmatpush1.bf16.msra.mxu0 %v1402
      %1428 = vmatprep.subr.bf16.mxu0 0
      %1429 = vmatpush1.bf16.msra.mxu0 %v1401
      %1430 = vmatprep.subr.bf16.mxu0 0
      %1431 = vmatpush1.bf16.msra.mxu0 %v1400
      %1432 = vmatprep.subr.bf16.mxu0 0
      %1433 = vmatpush2.bf16.msra.mxu0 0
      %1434 = vmatprep.subr.bf16.mxu0 0
      %1435 = vmatpush2.bf16.msra.mxu0 0
      %1436 = vmatprep.subr.bf16.mxu0 0
      %1437 = vmatpush2.bf16.msra.mxu0 0
      %1438 = vmatprep.subr.bf16.mxu0 0
      %1439 = vmatpush2.bf16.msra.mxu0 0
      %1440 = vmatprep.subr.bf16.mxu0 0
      %1441 = vmatpush2.bf16.msra.mxu0 0
      %1442 = vmatprep.subr.bf16.mxu0 0
      %1443 = vmatpush2.bf16.msra.mxu0 0
      %1444 = vmatprep.subr.bf16.mxu0 0
      %1445 = vmatpush2.bf16.msra.mxu0 0
      %1446 = vmatprep.subr.bf16.mxu0 0
      %1447 = vmatpush2.bf16.msra.mxu0 0
      %1448 = vmatprep.mubr.bf16.mxu0 0
      %1449 = vmatmul.mubr.bf16.gmra.mxu0 %v1366
      %v1450 = vpop.f32.mrf.mxu0
      %v1451 = vadd.f32 0.0, %v1450
      %v1452 = vpop.f32.mrf.mxu0
      %v1453 = vpop.f32.mrf.mxu0
      %v1454 = vpop.f32.mrf.mxu0
      %1455 = vdwg.mxu0
      %v1456 = vadd.f32 %v1333, %v1451
      %v1458 = vunpack.c.l.s4 1966171168
      %v1459 = vunpack.c.0.s8 %v1458
      %v1460 = vlaneseq
      %v1461 = vshrl.u32 %v1460, 7
      %v1462 = vsub.s32 %v1459, %v1461
      %v1463 = vrot.slane %v221, %v1462
      %v1464 = vcombine.high %v1463, %v1463
      %v1466 = vunpack.c.l.s4 1966171168
      %v1467 = vunpack.c.0.s8 %v1466
      %v1468 = vlaneseq
      %v1469 = vshrl.u32 %v1468, 7
      %v1470 = vsub.s32 %v1467, %v1469
      %v1471 = vrot.slane %v1463, %v1470
      %v1473 = vunpack.c.l.s4 1966171168
      %v1474 = vunpack.c.0.s8 %v1473
      %v1475 = vlaneseq
      %v1476 = vshrl.u32 %v1475, 7
      %v1477 = vsub.s32 %v1474, %v1476
      %v1478 = vrot.slane %v1464, %v1477
      %v1480 = vshrl.u32 %v1471, 16
      %v1482 = vrot.slane %v1480, 7
      %v1483 = vrot.slane %v1482, 1
      %v1485 = vshll.u32 %v1478, 16
      %v1487 = vsel %vm299, %v1483, %v1485
      %s1488 = scalar_lea.vmem %s1, 576
      %v1489 = vld [vmem:[%s1488] sm:$0xf]
      %v1490 = vld [vmem:[%s1488 + $0x4] sm:$0xf]
      %v1491 = vld [vmem:[%s1488 + $0x8] sm:$0xf]
      %v1492 = vld [vmem:[%s1488 + $0xc] sm:$0xf]
      %v1493 = vld [vmem:[%s1488 + $0x10] sm:$0xf]
      %v1494 = vld [vmem:[%s1488 + $0x14] sm:$0xf]
      %v1495 = vld [vmem:[%s1488 + $0x18] sm:$0xf]
      %v1496 = vld [vmem:[%s1488 + $0x1c] sm:$0xf]
      %v1497 = vld [vmem:[%s1488 + $0x20] sm:$0xf]
      %v1498 = vld [vmem:[%s1488 + $0x24] sm:$0xf]
      %v1499 = vld [vmem:[%s1488 + $0x28] sm:$0xf]
      %v1500 = vld [vmem:[%s1488 + $0x2c] sm:$0xf]
      %v1501 = vld [vmem:[%s1488 + $0x30] sm:$0xf]
      %v1502 = vld [vmem:[%s1488 + $0x34] sm:$0xf]
      %v1503 = vld [vmem:[%s1488 + $0x38] sm:$0xf]
      %v1504 = vld [vmem:[%s1488 + $0x3c] sm:$0xf]
      %v1505 = vcombine.low %v958, %v1487
      %v1507 = vunpack.c.l.s4 1966171168
      %v1508 = vunpack.c.0.s8 %v1507
      %v1509 = vlaneseq
      %v1510 = vshrl.u32 %v1509, 7
      %v1511 = vsub.s32 %v1508, %v1510
      %v1512 = vrot.slane %v1505, %v1511
      %v1514 = vunpack.c.l.s4 1966171168
      %v1515 = vunpack.c.0.s8 %v1514
      %v1516 = vlaneseq
      %v1517 = vshrl.u32 %v1516, 7
      %v1518 = vsub.s32 %v1515, %v1517
      %v1519 = vrot.slane %v1512, %v1518
      %v1537 = vunpack.c.l.b16 %v1489
      %v1538 = vunpack.c.l.b16 %v1490
      %v1539 = vunpack.c.l.b16 %v1491
      %v1540 = vunpack.c.l.b16 %v1492
      %v1541 = vunpack.c.l.b16 %v1493
      %v1542 = vunpack.c.l.b16 %v1494
      %v1543 = vunpack.c.l.b16 %v1495
      %v1544 = vunpack.c.l.b16 %v1496
      %v1545 = vunpack.c.l.b16 %v1497
      %v1546 = vunpack.c.l.b16 %v1498
      %v1547 = vunpack.c.l.b16 %v1499
      %v1548 = vunpack.c.l.b16 %v1500
      %v1549 = vunpack.c.l.b16 %v1501
      %v1550 = vunpack.c.l.b16 %v1502
      %v1551 = vunpack.c.l.b16 %v1503
      %v1552 = vunpack.c.l.b16 %v1504
      %v1553 = vpack.c.b16 %v1538, %v1537
      %v1554 = vpack.c.b16 %v1540, %v1539
      %v1555 = vpack.c.b16 %v1542, %v1541
      %v1556 = vpack.c.b16 %v1544, %v1543
      %v1557 = vpack.c.b16 %v1546, %v1545
      %v1558 = vpack.c.b16 %v1548, %v1547
      %v1559 = vpack.c.b16 %v1550, %v1549
      %v1560 = vpack.c.b16 %v1552, %v1551
      %1569 = vmatprep.subr.bf16.mxu0 0
      %1570 = vmatpush1.bf16.msra.mxu0 %v1560
      %1571 = vmatprep.subr.bf16.mxu0 0
      %1572 = vmatpush1.bf16.msra.mxu0 %v1559
      %1573 = vmatprep.subr.bf16.mxu0 0
      %1574 = vmatpush1.bf16.msra.mxu0 %v1558
      %1575 = vmatprep.subr.bf16.mxu0 0
      %1576 = vmatpush1.bf16.msra.mxu0 %v1557
      %1577 = vmatprep.subr.bf16.mxu0 0
      %1578 = vmatpush1.bf16.msra.mxu0 %v1556
      %1579 = vmatprep.subr.bf16.mxu0 0
      %1580 = vmatpush1.bf16.msra.mxu0 %v1555
      %1581 = vmatprep.subr.bf16.mxu0 0
      %1582 = vmatpush1.bf16.msra.mxu0 %v1554
      %1583 = vmatprep.subr.bf16.mxu0 0
      %1584 = vmatpush1.bf16.msra.mxu0 %v1553
      %1585 = vmatprep.subr.bf16.mxu0 0
      %1586 = vmatpush2.bf16.msra.mxu0 0
      %1587 = vmatprep.subr.bf16.mxu0 0
      %1588 = vmatpush2.bf16.msra.mxu0 0
      %1589 = vmatprep.subr.bf16.mxu0 0
      %1590 = vmatpush2.bf16.msra.mxu0 0
      %1591 = vmatprep.subr.bf16.mxu0 0
      %1592 = vmatpush2.bf16.msra.mxu0 0
      %1593 = vmatprep.subr.bf16.mxu0 0
      %1594 = vmatpush2.bf16.msra.mxu0 0
      %1595 = vmatprep.subr.bf16.mxu0 0
      %1596 = vmatpush2.bf16.msra.mxu0 0
      %1597 = vmatprep.subr.bf16.mxu0 0
      %1598 = vmatpush2.bf16.msra.mxu0 0
      %1599 = vmatprep.subr.bf16.mxu0 0
      %1600 = vmatpush2.bf16.msra.mxu0 0
      %1601 = vmatprep.mubr.bf16.mxu0 0
      %1602 = vmatmul.mubr.bf16.gmra.mxu0 %v1519
      %v1603 = vpop.f32.mrf.mxu0
      %v1604 = vadd.f32 0.0, %v1603
      %v1605 = vpop.f32.mrf.mxu0
      %v1606 = vpop.f32.mrf.mxu0
      %v1607 = vpop.f32.mrf.mxu0
      %1608 = vdwg.mxu0
      %v1609 = vadd.f32 %v1456, %v1604
      %s1610 = scalar_lea.vmem %s1, 640
      %v1611 = vld [vmem:[%s1610] sm:$0xf]
      %v1612 = vld [vmem:[%s1610 + $0x4] sm:$0xf]
      %v1613 = vld [vmem:[%s1610 + $0x8] sm:$0xf]
      %v1614 = vld [vmem:[%s1610 + $0xc] sm:$0xf]
      %v1615 = vld [vmem:[%s1610 + $0x10] sm:$0xf]
      %v1616 = vld [vmem:[%s1610 + $0x14] sm:$0xf]
      %v1617 = vld [vmem:[%s1610 + $0x18] sm:$0xf]
      %v1618 = vld [vmem:[%s1610 + $0x1c] sm:$0xf]
      %v1619 = vld [vmem:[%s1610 + $0x20] sm:$0xf]
      %v1620 = vld [vmem:[%s1610 + $0x24] sm:$0xf]
      %v1621 = vld [vmem:[%s1610 + $0x28] sm:$0xf]
      %v1622 = vld [vmem:[%s1610 + $0x2c] sm:$0xf]
      %v1623 = vld [vmem:[%s1610 + $0x30] sm:$0xf]
      %v1624 = vld [vmem:[%s1610 + $0x34] sm:$0xf]
      %v1625 = vld [vmem:[%s1610 + $0x38] sm:$0xf]
      %v1626 = vld [vmem:[%s1610 + $0x3c] sm:$0xf]
      %v1627 = vcombine.low %v949, %v1478
      %v1629 = vunpack.c.l.s4 1966171168
      %v1630 = vunpack.c.0.s8 %v1629
      %v1631 = vlaneseq
      %v1632 = vshrl.u32 %v1631, 7
      %v1633 = vsub.s32 %v1630, %v1632
      %v1634 = vrot.slane %v1627, %v1633
      %v1636 = vunpack.c.l.s4 1966171168
      %v1637 = vunpack.c.0.s8 %v1636
      %v1638 = vlaneseq
      %v1639 = vshrl.u32 %v1638, 7
      %v1640 = vsub.s32 %v1637, %v1639
      %v1641 = vrot.slane %v1634, %v1640
      %v1659 = vunpack.c.l.b16 %v1611
      %v1660 = vunpack.c.l.b16 %v1612
      %v1661 = vunpack.c.l.b16 %v1613
      %v1662 = vunpack.c.l.b16 %v1614
      %v1663 = vunpack.c.l.b16 %v1615
      %v1664 = vunpack.c.l.b16 %v1616
      %v1665 = vunpack.c.l.b16 %v1617
      %v1666 = vunpack.c.l.b16 %v1618
      %v1667 = vunpack.c.l.b16 %v1619
      %v1668 = vunpack.c.l.b16 %v1620
      %v1669 = vunpack.c.l.b16 %v1621
      %v1670 = vunpack.c.l.b16 %v1622
      %v1671 = vunpack.c.l.b16 %v1623
      %v1672 = vunpack.c.l.b16 %v1624
      %v1673 = vunpack.c.l.b16 %v1625
      %v1674 = vunpack.c.l.b16 %v1626
      %v1675 = vpack.c.b16 %v1660, %v1659
      %v1676 = vpack.c.b16 %v1662, %v1661
      %v1677 = vpack.c.b16 %v1664, %v1663
      %v1678 = vpack.c.b16 %v1666, %v1665
      %v1679 = vpack.c.b16 %v1668, %v1667
      %v1680 = vpack.c.b16 %v1670, %v1669
      %v1681 = vpack.c.b16 %v1672, %v1671
      %v1682 = vpack.c.b16 %v1674, %v1673
      %1691 = vmatprep.subr.bf16.mxu0 0
      %1692 = vmatpush1.bf16.msra.mxu0 %v1682
      %1693 = vmatprep.subr.bf16.mxu0 0
      %1694 = vmatpush1.bf16.msra.mxu0 %v1681
      %1695 = vmatprep.subr.bf16.mxu0 0
      %1696 = vmatpush1.bf16.msra.mxu0 %v1680
      %1697 = vmatprep.subr.bf16.mxu0 0
      %1698 = vmatpush1.bf16.msra.mxu0 %v1679
      %1699 = vmatprep.subr.bf16.mxu0 0
      %1700 = vmatpush1.bf16.msra.mxu0 %v1678
      %1701 = vmatprep.subr.bf16.mxu0 0
      %1702 = vmatpush1.bf16.msra.mxu0 %v1677
      %1703 = vmatprep.subr.bf16.mxu0 0
      %1704 = vmatpush1.bf16.msra.mxu0 %v1676
      %1705 = vmatprep.subr.bf16.mxu0 0
      %1706 = vmatpush1.bf16.msra.mxu0 %v1675
      %1707 = vmatprep.subr.bf16.mxu0 0
      %1708 = vmatpush2.bf16.msra.mxu0 0
      %1709 = vmatprep.subr.bf16.mxu0 0
      %1710 = vmatpush2.bf16.msra.mxu0 0
      %1711 = vmatprep.subr.bf16.mxu0 0
      %1712 = vmatpush2.bf16.msra.mxu0 0
      %1713 = vmatprep.subr.bf16.mxu0 0
      %1714 = vmatpush2.bf16.msra.mxu0 0
      %1715 = vmatprep.subr.bf16.mxu0 0
      %1716 = vmatpush2.bf16.msra.mxu0 0
      %1717 = vmatprep.subr.bf16.mxu0 0
      %1718 = vmatpush2.bf16.msra.mxu0 0
      %1719 = vmatprep.subr.bf16.mxu0 0
      %1720 = vmatpush2.bf16.msra.mxu0 0
      %1721 = vmatprep.subr.bf16.mxu0 0
      %1722 = vmatpush2.bf16.msra.mxu0 0
      %1723 = vmatprep.mubr.bf16.mxu0 0
      %1724 = vmatmul.mubr.bf16.gmra.mxu0 %v1641
      %v1725 = vpop.f32.mrf.mxu0
      %v1726 = vadd.f32 0.0, %v1725
      %v1727 = vpop.f32.mrf.mxu0
      %v1728 = vpop.f32.mrf.mxu0
      %v1729 = vpop.f32.mrf.mxu0
      %1730 = vdwg.mxu0
      %v1731 = vadd.f32 %v1609, %v1726
      %v1732 = vcombine.high %v1471, %v1471
      %v1733 = vshrl.u32 %v1478, 16
      %v1735 = vrot.slane %v1733, 7
      %v1736 = vrot.slane %v1735, 1
      %v1738 = vshll.u32 %v1732, 16
      %v1740 = vsel %vm299, %v1736, %v1738
      %s1741 = scalar_lea.vmem %s1, 704
      %v1742 = vld [vmem:[%s1741] sm:$0xf]
      %v1743 = vld [vmem:[%s1741 + $0x4] sm:$0xf]
      %v1744 = vld [vmem:[%s1741 + $0x8] sm:$0xf]
      %v1745 = vld [vmem:[%s1741 + $0xc] sm:$0xf]
      %v1746 = vld [vmem:[%s1741 + $0x10] sm:$0xf]
      %v1747 = vld [vmem:[%s1741 + $0x14] sm:$0xf]
      %v1748 = vld [vmem:[%s1741 + $0x18] sm:$0xf]
      %v1749 = vld [vmem:[%s1741 + $0x1c] sm:$0xf]
      %v1750 = vld [vmem:[%s1741 + $0x20] sm:$0xf]
      %v1751 = vld [vmem:[%s1741 + $0x24] sm:$0xf]
      %v1752 = vld [vmem:[%s1741 + $0x28] sm:$0xf]
      %v1753 = vld [vmem:[%s1741 + $0x2c] sm:$0xf]
      %v1754 = vld [vmem:[%s1741 + $0x30] sm:$0xf]
      %v1755 = vld [vmem:[%s1741 + $0x34] sm:$0xf]
      %v1756 = vld [vmem:[%s1741 + $0x38] sm:$0xf]
      %v1757 = vld [vmem:[%s1741 + $0x3c] sm:$0xf]
      %v1758 = vcombine.low %v1211, %v1740
      %v1760 = vunpack.c.l.s4 1966171168
      %v1761 = vunpack.c.0.s8 %v1760
      %v1762 = vlaneseq
      %v1763 = vshrl.u32 %v1762, 7
      %v1764 = vsub.s32 %v1761, %v1763
      %v1765 = vrot.slane %v1758, %v1764
      %v1767 = vunpack.c.l.s4 1966171168
      %v1768 = vunpack.c.0.s8 %v1767
      %v1769 = vlaneseq
      %v1770 = vshrl.u32 %v1769, 7
      %v1771 = vsub.s32 %v1768, %v1770
      %v1772 = vrot.slane %v1765, %v1771
      %v1790 = vunpack.c.l.b16 %v1742
      %v1791 = vunpack.c.l.b16 %v1743
      %v1792 = vunpack.c.l.b16 %v1744
      %v1793 = vunpack.c.l.b16 %v1745
      %v1794 = vunpack.c.l.b16 %v1746
      %v1795 = vunpack.c.l.b16 %v1747
      %v1796 = vunpack.c.l.b16 %v1748
      %v1797 = vunpack.c.l.b16 %v1749
      %v1798 = vunpack.c.l.b16 %v1750
      %v1799 = vunpack.c.l.b16 %v1751
      %v1800 = vunpack.c.l.b16 %v1752
      %v1801 = vunpack.c.l.b16 %v1753
      %v1802 = vunpack.c.l.b16 %v1754
      %v1803 = vunpack.c.l.b16 %v1755
      %v1804 = vunpack.c.l.b16 %v1756
      %v1805 = vunpack.c.l.b16 %v1757
      %v1806 = vpack.c.b16 %v1791, %v1790
      %v1807 = vpack.c.b16 %v1793, %v1792
      %v1808 = vpack.c.b16 %v1795, %v1794
      %v1809 = vpack.c.b16 %v1797, %v1796
      %v1810 = vpack.c.b16 %v1799, %v1798
      %v1811 = vpack.c.b16 %v1801, %v1800
      %v1812 = vpack.c.b16 %v1803, %v1802
      %v1813 = vpack.c.b16 %v1805, %v1804
      %1822 = vmatprep.subr.bf16.mxu0 0
      %1823 = vmatpush1.bf16.msra.mxu0 %v1813
      %1824 = vmatprep.subr.bf16.mxu0 0
      %1825 = vmatpush1.bf16.msra.mxu0 %v1812
      %1826 = vmatprep.subr.bf16.mxu0 0
      %1827 = vmatpush1.bf16.msra.mxu0 %v1811
      %1828 = vmatprep.subr.bf16.mxu0 0
      %1829 = vmatpush1.bf16.msra.mxu0 %v1810
      %1830 = vmatprep.subr.bf16.mxu0 0
      %1831 = vmatpush1.bf16.msra.mxu0 %v1809
      %1832 = vmatprep.subr.bf16.mxu0 0
      %1833 = vmatpush1.bf16.msra.mxu0 %v1808
      %1834 = vmatprep.subr.bf16.mxu0 0
      %1835 = vmatpush1.bf16.msra.mxu0 %v1807
      %1836 = vmatprep.subr.bf16.mxu0 0
      %1837 = vmatpush1.bf16.msra.mxu0 %v1806
      %1838 = vmatprep.subr.bf16.mxu0 0
      %1839 = vmatpush2.bf16.msra.mxu0 0
      %1840 = vmatprep.subr.bf16.mxu0 0
      %1841 = vmatpush2.bf16.msra.mxu0 0
      %1842 = vmatprep.subr.bf16.mxu0 0
      %1843 = vmatpush2.bf16.msra.mxu0 0
      %1844 = vmatprep.subr.bf16.mxu0 0
      %1845 = vmatpush2.bf16.msra.mxu0 0
      %1846 = vmatprep.subr.bf16.mxu0 0
      %1847 = vmatpush2.bf16.msra.mxu0 0
      %1848 = vmatprep.subr.bf16.mxu0 0
      %1849 = vmatpush2.bf16.msra.mxu0 0
      %1850 = vmatprep.subr.bf16.mxu0 0
      %1851 = vmatpush2.bf16.msra.mxu0 0
      %1852 = vmatprep.subr.bf16.mxu0 0
      %1853 = vmatpush2.bf16.msra.mxu0 0
      %1854 = vmatprep.mubr.bf16.mxu0 0
      %1855 = vmatmul.mubr.bf16.gmra.mxu0 %v1772
      %v1856 = vpop.f32.mrf.mxu0
      %v1857 = vadd.f32 0.0, %v1856
      %v1858 = vpop.f32.mrf.mxu0
      %v1859 = vpop.f32.mrf.mxu0
      %v1860 = vpop.f32.mrf.mxu0
      %1861 = vdwg.mxu0
      %v1862 = vadd.f32 %v1731, %v1857
      %s1863 = scalar_lea.vmem %s1, 768
      %v1864 = vld [vmem:[%s1863] sm:$0xf]
      %v1865 = vld [vmem:[%s1863 + $0x4] sm:$0xf]
      %v1866 = vld [vmem:[%s1863 + $0x8] sm:$0xf]
      %v1867 = vld [vmem:[%s1863 + $0xc] sm:$0xf]
      %v1868 = vld [vmem:[%s1863 + $0x10] sm:$0xf]
      %v1869 = vld [vmem:[%s1863 + $0x14] sm:$0xf]
      %v1870 = vld [vmem:[%s1863 + $0x18] sm:$0xf]
      %v1871 = vld [vmem:[%s1863 + $0x1c] sm:$0xf]
      %v1872 = vld [vmem:[%s1863 + $0x20] sm:$0xf]
      %v1873 = vld [vmem:[%s1863 + $0x24] sm:$0xf]
      %v1874 = vld [vmem:[%s1863 + $0x28] sm:$0xf]
      %v1875 = vld [vmem:[%s1863 + $0x2c] sm:$0xf]
      %v1876 = vld [vmem:[%s1863 + $0x30] sm:$0xf]
      %v1877 = vld [vmem:[%s1863 + $0x34] sm:$0xf]
      %v1878 = vld [vmem:[%s1863 + $0x38] sm:$0xf]
      %v1879 = vld [vmem:[%s1863 + $0x3c] sm:$0xf]
      %v1881 = vcombine.low %v221, %v222
      %v1883 = vunpack.c.l.s4 1966171168
      %v1884 = vunpack.c.0.s8 %v1883
      %v1885 = vlaneseq
      %v1886 = vshrl.u32 %v1885, 7
      %v1887 = vsub.s32 %v1884, %v1886
      %v1888 = vrot.slane %v1881, %v1887
      %v1890 = vunpack.c.l.s4 1966171168
      %v1891 = vunpack.c.0.s8 %v1890
      %v1892 = vlaneseq
      %v1893 = vshrl.u32 %v1892, 7
      %v1894 = vsub.s32 %v1891, %v1893
      %v1895 = vrot.slane %v1888, %v1894
      %v1913 = vunpack.c.l.b16 %v1864
      %v1914 = vunpack.c.l.b16 %v1865
      %v1915 = vunpack.c.l.b16 %v1866
      %v1916 = vunpack.c.l.b16 %v1867
      %v1917 = vunpack.c.l.b16 %v1868
      %v1918 = vunpack.c.l.b16 %v1869
      %v1919 = vunpack.c.l.b16 %v1870
      %v1920 = vunpack.c.l.b16 %v1871
      %v1921 = vunpack.c.l.b16 %v1872
      %v1922 = vunpack.c.l.b16 %v1873
      %v1923 = vunpack.c.l.b16 %v1874
      %v1924 = vunpack.c.l.b16 %v1875
      %v1925 = vunpack.c.l.b16 %v1876
      %v1926 = vunpack.c.l.b16 %v1877
      %v1927 = vunpack.c.l.b16 %v1878
      %v1928 = vunpack.c.l.b16 %v1879
      %v1929 = vpack.c.b16 %v1914, %v1913
      %v1930 = vpack.c.b16 %v1916, %v1915
      %v1931 = vpack.c.b16 %v1918, %v1917
      %v1932 = vpack.c.b16 %v1920, %v1919
      %v1933 = vpack.c.b16 %v1922, %v1921
      %v1934 = vpack.c.b16 %v1924, %v1923
      %v1935 = vpack.c.b16 %v1926, %v1925
      %v1936 = vpack.c.b16 %v1928, %v1927
      %1945 = vmatprep.subr.bf16.mxu0 0
      %1946 = vmatpush1.bf16.msra.mxu0 %v1936
      %1947 = vmatprep.subr.bf16.mxu0 0
      %1948 = vmatpush1.bf16.msra.mxu0 %v1935
      %1949 = vmatprep.subr.bf16.mxu0 0
      %1950 = vmatpush1.bf16.msra.mxu0 %v1934
      %1951 = vmatprep.subr.bf16.mxu0 0
      %1952 = vmatpush1.bf16.msra.mxu0 %v1933
      %1953 = vmatprep.subr.bf16.mxu0 0
      %1954 = vmatpush1.bf16.msra.mxu0 %v1932
      %1955 = vmatprep.subr.bf16.mxu0 0
      %1956 = vmatpush1.bf16.msra.mxu0 %v1931
      %1957 = vmatprep.subr.bf16.mxu0 0
      %1958 = vmatpush1.bf16.msra.mxu0 %v1930
      %1959 = vmatprep.subr.bf16.mxu0 0
      %1960 = vmatpush1.bf16.msra.mxu0 %v1929
      %1961 = vmatprep.subr.bf16.mxu0 0
      %1962 = vmatpush2.bf16.msra.mxu0 0
      %1963 = vmatprep.subr.bf16.mxu0 0
      %1964 = vmatpush2.bf16.msra.mxu0 0
      %1965 = vmatprep.subr.bf16.mxu0 0
      %1966 = vmatpush2.bf16.msra.mxu0 0
      %1967 = vmatprep.subr.bf16.mxu0 0
      %1968 = vmatpush2.bf16.msra.mxu0 0
      %1969 = vmatprep.subr.bf16.mxu0 0
      %1970 = vmatpush2.bf16.msra.mxu0 0
      %1971 = vmatprep.subr.bf16.mxu0 0
      %1972 = vmatpush2.bf16.msra.mxu0 0
      %1973 = vmatprep.subr.bf16.mxu0 0
      %1974 = vmatpush2.bf16.msra.mxu0 0
      %1975 = vmatprep.subr.bf16.mxu0 0
      %1976 = vmatpush2.bf16.msra.mxu0 0
      %1977 = vmatprep.mubr.bf16.mxu0 0
      %1978 = vmatmul.mubr.bf16.gmra.mxu0 %v1895
      %v1979 = vpop.f32.mrf.mxu0
      %v1980 = vadd.f32 0.0, %v1979
      %v1981 = vpop.f32.mrf.mxu0
      %v1982 = vpop.f32.mrf.mxu0
      %v1983 = vpop.f32.mrf.mxu0
      %1984 = vdwg.mxu0
      %v1985 = vadd.f32 %v1862, %v1980
      %v1987 = vunpack.c.l.s4 1966171168
      %v1988 = vunpack.c.0.s8 %v1987
      %v1989 = vlaneseq
      %v1990 = vshrl.u32 %v1989, 7
      %v1991 = vsub.s32 %v1988, %v1990
      %v1992 = vrot.slane %v222, %v1991
      %v1993 = vcombine.high %v1992, %v1992
      %v1995 = vunpack.c.l.s4 1966171168
      %v1996 = vunpack.c.0.s8 %v1995
      %v1997 = vlaneseq
      %v1998 = vshrl.u32 %v1997, 7
      %v1999 = vsub.s32 %v1996, %v1998
      %v2000 = vrot.slane %v1992, %v1999
      %v2002 = vunpack.c.l.s4 1966171168
      %v2003 = vunpack.c.0.s8 %v2002
      %v2004 = vlaneseq
      %v2005 = vshrl.u32 %v2004, 7
      %v2006 = vsub.s32 %v2003, %v2005
      %v2007 = vrot.slane %v1993, %v2006
      %v2009 = vshrl.u32 %v2000, 16
      %v2011 = vrot.slane %v2009, 7
      %v2012 = vrot.slane %v2011, 1
      %v2014 = vshll.u32 %v2007, 16
      %v2016 = vsel %vm299, %v2012, %v2014
      %s2017 = scalar_lea.vmem %s1, 832
      %v2018 = vld [vmem:[%s2017] sm:$0xf]
      %v2019 = vld [vmem:[%s2017 + $0x4] sm:$0xf]
      %v2020 = vld [vmem:[%s2017 + $0x8] sm:$0xf]
      %v2021 = vld [vmem:[%s2017 + $0xc] sm:$0xf]
      %v2022 = vld [vmem:[%s2017 + $0x10] sm:$0xf]
      %v2023 = vld [vmem:[%s2017 + $0x14] sm:$0xf]
      %v2024 = vld [vmem:[%s2017 + $0x18] sm:$0xf]
      %v2025 = vld [vmem:[%s2017 + $0x1c] sm:$0xf]
      %v2026 = vld [vmem:[%s2017 + $0x20] sm:$0xf]
      %v2027 = vld [vmem:[%s2017 + $0x24] sm:$0xf]
      %v2028 = vld [vmem:[%s2017 + $0x28] sm:$0xf]
      %v2029 = vld [vmem:[%s2017 + $0x2c] sm:$0xf]
      %v2030 = vld [vmem:[%s2017 + $0x30] sm:$0xf]
      %v2031 = vld [vmem:[%s2017 + $0x34] sm:$0xf]
      %v2032 = vld [vmem:[%s2017 + $0x38] sm:$0xf]
      %v2033 = vld [vmem:[%s2017 + $0x3c] sm:$0xf]
      %v2034 = vcombine.low %v1487, %v2016
      %v2036 = vunpack.c.l.s4 1966171168
      %v2037 = vunpack.c.0.s8 %v2036
      %v2038 = vlaneseq
      %v2039 = vshrl.u32 %v2038, 7
      %v2040 = vsub.s32 %v2037, %v2039
      %v2041 = vrot.slane %v2034, %v2040
      %v2043 = vunpack.c.l.s4 1966171168
      %v2044 = vunpack.c.0.s8 %v2043
      %v2045 = vlaneseq
      %v2046 = vshrl.u32 %v2045, 7
      %v2047 = vsub.s32 %v2044, %v2046
      %v2048 = vrot.slane %v2041, %v2047
      %v2066 = vunpack.c.l.b16 %v2018
      %v2067 = vunpack.c.l.b16 %v2019
      %v2068 = vunpack.c.l.b16 %v2020
      %v2069 = vunpack.c.l.b16 %v2021
      %v2070 = vunpack.c.l.b16 %v2022
      %v2071 = vunpack.c.l.b16 %v2023
      %v2072 = vunpack.c.l.b16 %v2024
      %v2073 = vunpack.c.l.b16 %v2025
      %v2074 = vunpack.c.l.b16 %v2026
      %v2075 = vunpack.c.l.b16 %v2027
      %v2076 = vunpack.c.l.b16 %v2028
      %v2077 = vunpack.c.l.b16 %v2029
      %v2078 = vunpack.c.l.b16 %v2030
      %v2079 = vunpack.c.l.b16 %v2031
      %v2080 = vunpack.c.l.b16 %v2032
      %v2081 = vunpack.c.l.b16 %v2033
      %v2082 = vpack.c.b16 %v2067, %v2066
      %v2083 = vpack.c.b16 %v2069, %v2068
      %v2084 = vpack.c.b16 %v2071, %v2070
      %v2085 = vpack.c.b16 %v2073, %v2072
      %v2086 = vpack.c.b16 %v2075, %v2074
      %v2087 = vpack.c.b16 %v2077, %v2076
      %v2088 = vpack.c.b16 %v2079, %v2078
      %v2089 = vpack.c.b16 %v2081, %v2080
      %2098 = vmatprep.subr.bf16.mxu0 0
      %2099 = vmatpush1.bf16.msra.mxu0 %v2089
      %2100 = vmatprep.subr.bf16.mxu0 0
      %2101 = vmatpush1.bf16.msra.mxu0 %v2088
      %2102 = vmatprep.subr.bf16.mxu0 0
      %2103 = vmatpush1.bf16.msra.mxu0 %v2087
      %2104 = vmatprep.subr.bf16.mxu0 0
      %2105 = vmatpush1.bf16.msra.mxu0 %v2086
      %2106 = vmatprep.subr.bf16.mxu0 0
      %2107 = vmatpush1.bf16.msra.mxu0 %v2085
      %2108 = vmatprep.subr.bf16.mxu0 0
      %2109 = vmatpush1.bf16.msra.mxu0 %v2084
      %2110 = vmatprep.subr.bf16.mxu0 0
      %2111 = vmatpush1.bf16.msra.mxu0 %v2083
      %2112 = vmatprep.subr.bf16.mxu0 0
      %2113 = vmatpush1.bf16.msra.mxu0 %v2082
      %2114 = vmatprep.subr.bf16.mxu0 0
      %2115 = vmatpush2.bf16.msra.mxu0 0
      %2116 = vmatprep.subr.bf16.mxu0 0
      %2117 = vmatpush2.bf16.msra.mxu0 0
      %2118 = vmatprep.subr.bf16.mxu0 0
      %2119 = vmatpush2.bf16.msra.mxu0 0
      %2120 = vmatprep.subr.bf16.mxu0 0
      %2121 = vmatpush2.bf16.msra.mxu0 0
      %2122 = vmatprep.subr.bf16.mxu0 0
      %2123 = vmatpush2.bf16.msra.mxu0 0
      %2124 = vmatprep.subr.bf16.mxu0 0
      %2125 = vmatpush2.bf16.msra.mxu0 0
      %2126 = vmatprep.subr.bf16.mxu0 0
      %2127 = vmatpush2.bf16.msra.mxu0 0
      %2128 = vmatprep.subr.bf16.mxu0 0
      %2129 = vmatpush2.bf16.msra.mxu0 0
      %2130 = vmatprep.mubr.bf16.mxu0 0
      %2131 = vmatmul.mubr.bf16.gmra.mxu0 %v2048
      %v2132 = vpop.f32.mrf.mxu0
      %v2133 = vadd.f32 0.0, %v2132
      %v2134 = vpop.f32.mrf.mxu0
      %v2135 = vpop.f32.mrf.mxu0
      %v2136 = vpop.f32.mrf.mxu0
      %2137 = vdwg.mxu0
      %v2138 = vadd.f32 %v1985, %v2133
      %s2139 = scalar_lea.vmem %s1, 896
      %v2140 = vld [vmem:[%s2139] sm:$0xf]
      %v2141 = vld [vmem:[%s2139 + $0x4] sm:$0xf]
      %v2142 = vld [vmem:[%s2139 + $0x8] sm:$0xf]
      %v2143 = vld [vmem:[%s2139 + $0xc] sm:$0xf]
      %v2144 = vld [vmem:[%s2139 + $0x10] sm:$0xf]
      %v2145 = vld [vmem:[%s2139 + $0x14] sm:$0xf]
      %v2146 = vld [vmem:[%s2139 + $0x18] sm:$0xf]
      %v2147 = vld [vmem:[%s2139 + $0x1c] sm:$0xf]
      %v2148 = vld [vmem:[%s2139 + $0x20] sm:$0xf]
      %v2149 = vld [vmem:[%s2139 + $0x24] sm:$0xf]
      %v2150 = vld [vmem:[%s2139 + $0x28] sm:$0xf]
      %v2151 = vld [vmem:[%s2139 + $0x2c] sm:$0xf]
      %v2152 = vld [vmem:[%s2139 + $0x30] sm:$0xf]
      %v2153 = vld [vmem:[%s2139 + $0x34] sm:$0xf]
      %v2154 = vld [vmem:[%s2139 + $0x38] sm:$0xf]
      %v2155 = vld [vmem:[%s2139 + $0x3c] sm:$0xf]
      %v2156 = vcombine.low %v1478, %v2007
      %v2158 = vunpack.c.l.s4 1966171168
      %v2159 = vunpack.c.0.s8 %v2158
      %v2160 = vlaneseq
      %v2161 = vshrl.u32 %v2160, 7
      %v2162 = vsub.s32 %v2159, %v2161
      %v2163 = vrot.slane %v2156, %v2162
      %v2165 = vunpack.c.l.s4 1966171168
      %v2166 = vunpack.c.0.s8 %v2165
      %v2167 = vlaneseq
      %v2168 = vshrl.u32 %v2167, 7
      %v2169 = vsub.s32 %v2166, %v2168
      %v2170 = vrot.slane %v2163, %v2169
      %v2188 = vunpack.c.l.b16 %v2140
      %v2189 = vunpack.c.l.b16 %v2141
      %v2190 = vunpack.c.l.b16 %v2142
      %v2191 = vunpack.c.l.b16 %v2143
      %v2192 = vunpack.c.l.b16 %v2144
      %v2193 = vunpack.c.l.b16 %v2145
      %v2194 = vunpack.c.l.b16 %v2146
      %v2195 = vunpack.c.l.b16 %v2147
      %v2196 = vunpack.c.l.b16 %v2148
      %v2197 = vunpack.c.l.b16 %v2149
      %v2198 = vunpack.c.l.b16 %v2150
      %v2199 = vunpack.c.l.b16 %v2151
      %v2200 = vunpack.c.l.b16 %v2152
      %v2201 = vunpack.c.l.b16 %v2153
      %v2202 = vunpack.c.l.b16 %v2154
      %v2203 = vunpack.c.l.b16 %v2155
      %v2204 = vpack.c.b16 %v2189, %v2188
      %v2205 = vpack.c.b16 %v2191, %v2190
      %v2206 = vpack.c.b16 %v2193, %v2192
      %v2207 = vpack.c.b16 %v2195, %v2194
      %v2208 = vpack.c.b16 %v2197, %v2196
      %v2209 = vpack.c.b16 %v2199, %v2198
      %v2210 = vpack.c.b16 %v2201, %v2200
      %v2211 = vpack.c.b16 %v2203, %v2202
      %2220 = vmatprep.subr.bf16.mxu0 0
      %2221 = vmatpush1.bf16.msra.mxu0 %v2211
      %2222 = vmatprep.subr.bf16.mxu0 0
      %2223 = vmatpush1.bf16.msra.mxu0 %v2210
      %2224 = vmatprep.subr.bf16.mxu0 0
      %2225 = vmatpush1.bf16.msra.mxu0 %v2209
      %2226 = vmatprep.subr.bf16.mxu0 0
      %2227 = vmatpush1.bf16.msra.mxu0 %v2208
      %2228 = vmatprep.subr.bf16.mxu0 0
      %2229 = vmatpush1.bf16.msra.mxu0 %v2207
      %2230 = vmatprep.subr.bf16.mxu0 0
      %2231 = vmatpush1.bf16.msra.mxu0 %v2206
      %2232 = vmatprep.subr.bf16.mxu0 0
      %2233 = vmatpush1.bf16.msra.mxu0 %v2205
      %2234 = vmatprep.subr.bf16.mxu0 0
      %2235 = vmatpush1.bf16.msra.mxu0 %v2204
      %2236 = vmatprep.subr.bf16.mxu0 0
      %2237 = vmatpush2.bf16.msra.mxu0 0
      %2238 = vmatprep.subr.bf16.mxu0 0
      %2239 = vmatpush2.bf16.msra.mxu0 0
      %2240 = vmatprep.subr.bf16.mxu0 0
      %2241 = vmatpush2.bf16.msra.mxu0 0
      %2242 = vmatprep.subr.bf16.mxu0 0
      %2243 = vmatpush2.bf16.msra.mxu0 0
      %2244 = vmatprep.subr.bf16.mxu0 0
      %2245 = vmatpush2.bf16.msra.mxu0 0
      %2246 = vmatprep.subr.bf16.mxu0 0
      %2247 = vmatpush2.bf16.msra.mxu0 0
      %2248 = vmatprep.subr.bf16.mxu0 0
      %2249 = vmatpush2.bf16.msra.mxu0 0
      %2250 = vmatprep.subr.bf16.mxu0 0
      %2251 = vmatpush2.bf16.msra.mxu0 0
      %2252 = vmatprep.mubr.bf16.mxu0 0
      %2253 = vmatmul.mubr.bf16.gmra.mxu0 %v2170
      %v2254 = vpop.f32.mrf.mxu0
      %v2255 = vadd.f32 0.0, %v2254
      %v2256 = vpop.f32.mrf.mxu0
      %v2257 = vpop.f32.mrf.mxu0
      %v2258 = vpop.f32.mrf.mxu0
      %2259 = vdwg.mxu0
      %v2260 = vadd.f32 %v2138, %v2255
      %v2261 = vcombine.high %v2000, %v2000
      %v2262 = vshrl.u32 %v2007, 16
      %v2264 = vrot.slane %v2262, 7
      %v2265 = vrot.slane %v2264, 1
      %v2267 = vshll.u32 %v2261, 16
      %v2269 = vsel %vm299, %v2265, %v2267
      %s2270 = scalar_lea.vmem %s1, 960
      %v2271 = vld [vmem:[%s2270] sm:$0xf]
      %v2272 = vld [vmem:[%s2270 + $0x4] sm:$0xf]
      %v2273 = vld [vmem:[%s2270 + $0x8] sm:$0xf]
      %v2274 = vld [vmem:[%s2270 + $0xc] sm:$0xf]
      %v2275 = vld [vmem:[%s2270 + $0x10] sm:$0xf]
      %v2276 = vld [vmem:[%s2270 + $0x14] sm:$0xf]
      %v2277 = vld [vmem:[%s2270 + $0x18] sm:$0xf]
      %v2278 = vld [vmem:[%s2270 + $0x1c] sm:$0xf]
      %v2279 = vld [vmem:[%s2270 + $0x20] sm:$0xf]
      %v2280 = vld [vmem:[%s2270 + $0x24] sm:$0xf]
      %v2281 = vld [vmem:[%s2270 + $0x28] sm:$0xf]
      %v2282 = vld [vmem:[%s2270 + $0x2c] sm:$0xf]
      %v2283 = vld [vmem:[%s2270 + $0x30] sm:$0xf]
      %v2284 = vld [vmem:[%s2270 + $0x34] sm:$0xf]
      %v2285 = vld [vmem:[%s2270 + $0x38] sm:$0xf]
      %v2286 = vld [vmem:[%s2270 + $0x3c] sm:$0xf]
      %v2287 = vcombine.low %v1740, %v2269
      %v2289 = vunpack.c.l.s4 1966171168
      %v2290 = vunpack.c.0.s8 %v2289
      %v2291 = vlaneseq
      %v2292 = vshrl.u32 %v2291, 7
      %v2293 = vsub.s32 %v2290, %v2292
      %v2294 = vrot.slane %v2287, %v2293
      %v2296 = vunpack.c.l.s4 1966171168
      %v2297 = vunpack.c.0.s8 %v2296
      %v2298 = vlaneseq
      %v2299 = vshrl.u32 %v2298, 7
      %v2300 = vsub.s32 %v2297, %v2299
      %v2301 = vrot.slane %v2294, %v2300
      %v2319 = vunpack.c.l.b16 %v2271
      %v2320 = vunpack.c.l.b16 %v2272
      %v2321 = vunpack.c.l.b16 %v2273
      %v2322 = vunpack.c.l.b16 %v2274
      %v2323 = vunpack.c.l.b16 %v2275
      %v2324 = vunpack.c.l.b16 %v2276
      %v2325 = vunpack.c.l.b16 %v2277
      %v2326 = vunpack.c.l.b16 %v2278
      %v2327 = vunpack.c.l.b16 %v2279
      %v2328 = vunpack.c.l.b16 %v2280
      %v2329 = vunpack.c.l.b16 %v2281
      %v2330 = vunpack.c.l.b16 %v2282
      %v2331 = vunpack.c.l.b16 %v2283
      %v2332 = vunpack.c.l.b16 %v2284
      %v2333 = vunpack.c.l.b16 %v2285
      %v2334 = vunpack.c.l.b16 %v2286
      %v2335 = vpack.c.b16 %v2320, %v2319
      %v2336 = vpack.c.b16 %v2322, %v2321
      %v2337 = vpack.c.b16 %v2324, %v2323
      %v2338 = vpack.c.b16 %v2326, %v2325
      %v2339 = vpack.c.b16 %v2328, %v2327
      %v2340 = vpack.c.b16 %v2330, %v2329
      %v2341 = vpack.c.b16 %v2332, %v2331
      %v2342 = vpack.c.b16 %v2334, %v2333
      %2351 = vmatprep.subr.bf16.mxu0 0
      %2352 = vmatpush1.bf16.msra.mxu0 %v2342
      %2353 = vmatprep.subr.bf16.mxu0 0
      %2354 = vmatpush1.bf16.msra.mxu0 %v2341
      %2355 = vmatprep.subr.bf16.mxu0 0
      %2356 = vmatpush1.bf16.msra.mxu0 %v2340
      %2357 = vmatprep.subr.bf16.mxu0 0
      %2358 = vmatpush1.bf16.msra.mxu0 %v2339
      %2359 = vmatprep.subr.bf16.mxu0 0
      %2360 = vmatpush1.bf16.msra.mxu0 %v2338
      %2361 = vmatprep.subr.bf16.mxu0 0
      %2362 = vmatpush1.bf16.msra.mxu0 %v2337
      %2363 = vmatprep.subr.bf16.mxu0 0
      %2364 = vmatpush1.bf16.msra.mxu0 %v2336
      %2365 = vmatprep.subr.bf16.mxu0 0
      %2366 = vmatpush1.bf16.msra.mxu0 %v2335
      %2367 = vmatprep.subr.bf16.mxu0 0
      %2368 = vmatpush2.bf16.msra.mxu0 0
      %2369 = vmatprep.subr.bf16.mxu0 0
      %2370 = vmatpush2.bf16.msra.mxu0 0
      %2371 = vmatprep.subr.bf16.mxu0 0
      %2372 = vmatpush2.bf16.msra.mxu0 0
      %2373 = vmatprep.subr.bf16.mxu0 0
      %2374 = vmatpush2.bf16.msra.mxu0 0
      %2375 = vmatprep.subr.bf16.mxu0 0
      %2376 = vmatpush2.bf16.msra.mxu0 0
      %2377 = vmatprep.subr.bf16.mxu0 0
      %2378 = vmatpush2.bf16.msra.mxu0 0
      %2379 = vmatprep.subr.bf16.mxu0 0
      %2380 = vmatpush2.bf16.msra.mxu0 0
      %2381 = vmatprep.subr.bf16.mxu0 0
      %2382 = vmatpush2.bf16.msra.mxu0 0
      %2383 = vmatprep.mubr.bf16.mxu0 0
      %2384 = vmatmul.mubr.bf16.gmra.mxu0 %v2301
      %v2385 = vpop.f32.mrf.mxu0
      %v2386 = vadd.f32 0.0, %v2385
      %v2387 = vpop.f32.mrf.mxu0
      %v2388 = vpop.f32.mrf.mxu0
      %v2389 = vpop.f32.mrf.mxu0
      %2390 = vdwg.mxu0
      %v2391 = vadd.f32 %v2260, %v2386
      %v2392 = vld [vmem:[%s2] sm:$0x1]
      %v2394 = vlaneseq
      %v2395 = vshrl.u32 %v2394, 7
      %v2396 = vsub.s32 0, %v2395
      %v2397 = vrot.slane %v2392, %v2396
      %v2399 = vadd.f32 %v2391, %v2397
      %2400 = vst [vmem:[%s188] sm:$0xf] %v2399
      %p2401 = scmp.lt.s32.totalorder %s18, 1
      %s2402 = scalar_select %p2401, %s18, 1
      %p2403 = scmp.lt.s32.totalorder %s19, 0
      %s2404 = scalar_select %p2403, %s19, 0
      %s2405 = sadd.s32 %s2404, %s2402
      %s2406 = smul.addr %s2405, 4
      %s2407 = scalar_lea.vmem %s3, %s2406
      // Predicated region
      $region33: #{_lambda_.9} parent=31 // pred_check
        %p2408 = pneg %p114
      $region34: #{_lambda_.9} parent=31 // pred_check_branch
        %2410 = sbr.rel (%p2408) target = $region36
      $region35: #{_lambda_.9} parent=31 // pred_region
        _
      $region36: #{_lambda_.9} parent=31 // pred_fallthru
        _
    $region32: #{_lambda_.9} parent=5 // pred_fallthru
      _
    %p2411 = scmp.le.s32.totalorder 2, %s9
    // Predicated region
    $region37: #{_lambda_.9} parent=5 // pred_check
      %p2412 = pneg %p2411
    $region38: #{_lambda_.9} parent=5 // pred_check_branch
      %2414 = sbr.rel (%p2412) target = $region40
    $region39: #{_lambda_.9} parent=5 // pred_region
      %s2415 = ssub.s32 %s9, 2
      // Predicated region
      $region41: #{_lambda_.9} parent=39 // pred_check
        %p2416 = pneg %p120
      $region42: #{_lambda_.9} parent=39 // pred_check_branch
        %2418 = sbr.rel (%p2416) target = $region44
      $region43: #{_lambda_.9} parent=39 // pred_region
        %p2419 = scmp.lt.s32.totalorder %s20, 1
        %s2420 = scalar_select %p2419, %s20, 1
        %p2421 = scmp.lt.s32.totalorder %s21, 0
        %s2422 = scalar_select %p2421, %s21, 0
        %s2423 = sadd.s32 %s2422, %s2420
        %s2424 = smul.addr %s2423, 4
        %s2425 = scalar_lea.vmem %s3, %s2424
      $region44: #{_lambda_.9} parent=39 // pred_fallthru
        _
    $region40: #{_lambda_.9} parent=5 // pred_fallthru
      _
  $region6: #{_lambda_.9} parent=0 // loop_footer
    %s13 = sadd.s32 1, %s9
  $region7: #{_lambda_.9} parent=0 // loop_footer_branch
    %8 = sbr.rel target = $region3
  $region8: #{_lambda_.9} parent=0 // loop_exit
    _

</llo_original>
